<compile_context>
chip_gen: v7x
topology: tpu7x:2x2x1
jax: 0.10.0
libtpu: 0.0.40
codegen_flags: <defaults>
</compile_context>

<pallas_src>
import numpy as np

import jax
import jax.numpy as jnp
from jax.experimental import pallas as pl
from jax.experimental.pallas import tpu as pltpu

# ----------------------------- config ---------------------------------------
D_MODEL   = 32
N_HEADS   = 4
HEAD_DIM  = D_MODEL // N_HEADS
FFN_DIM   = 64
N_LAYERS  = 2
VOCAB     = 50
ENT_VOCAB = 40
MAX_POS   = 64
PAD_IDX   = 1
EXTRA_POS = 2                     # config.extra_pos_embeddings
EMBED_SCALE = 1.0                 # config.scale_embedding = False
SCALING   = HEAD_DIM ** (-0.5)
EPS       = 1e-5
NEG_INF   = -1e30                 # finite "masked" logit -> no NaN on fully-masked rows

BSZ, TGT_LEN, SRC_LEN, ENT_LEN = 2, 8, 16, 8


# --------------------------- fused pallas kernel -----------------------------
def _decoder_kernel(x_ref, enc_ref, sbias_ref, cbias_ref, embln_ref,
                    As_ref, rs_ref, Bs_ref, bso_ref,
                    Ac_ref, rc_ref, Bc_ref, bco_ref,
                    w1_ref, b1_ref, w2_ref, b2_ref, ln_ref,
                    out_ref):
    f32 = jnp.float32

    def layer_norm(h, g, b):
        mu = jnp.mean(h, axis=-1, keepdims=True)
        var = jnp.mean((h - mu) ** 2, axis=-1, keepdims=True)
        return (h - mu) * jax.lax.rsqrt(var + EPS) * g + b

    def masked_softmax(s, bias):
        s = s + bias                                   # additive mask (finite NEG_INF)
        m = jnp.max(s, axis=-1, keepdims=True)
        e = jnp.exp(s - m)
        denom = jnp.sum(e, axis=-1, keepdims=True)
        return e * pl.reciprocal(denom, approx=True)   # EUP slot, ~free

    def attention(xq, kv, A_ref, r_ref, B_ref, l, b_out, bias):
        # b_out = bv @ Wo + bo (value-bias + output-bias fold); starts the accum.
        out = b_out                                    # (1, D) -> broadcasts
        for h in range(N_HEADS):
            # t = x A_h + rho_h ; s = t kv^T      (K = D contractions, no lane slices)
            t = jnp.dot(xq, A_ref[l, h], preferred_element_type=f32) + r_ref[l, h]
            s = jax.lax.dot_general(t, kv, (((1,), (1,)), ((), ())),
                                    preferred_element_type=f32)
            p = masked_softmax(s, bias)
            vB = jnp.dot(kv, B_ref[l, h], preferred_element_type=f32)   # (Nk, D)
            out = out + jnp.dot(p, vB, preferred_element_type=f32)
        return out

    # embedding layernorm
    x = layer_norm(x_ref[...], embln_ref[0:1, :], embln_ref[1:2, :])
    enc = enc_ref[...]
    sbias = sbias_ref[...]
    cbias = cbias_ref[...]

    # decoder layers (static unroll; all params indexed along leading axes)
    for l in range(N_LAYERS):
        # self-attention (post-LN)
        h = attention(x, x, As_ref, rs_ref, Bs_ref, l, bso_ref[l], sbias)
        x = layer_norm(x + h, ln_ref[l, 0:1, :], ln_ref[l, 1:2, :])

        # encoder-decoder cross-attention (post-LN); enc is never re-projected
        h = attention(x, enc, Ac_ref, rc_ref, Bc_ref, l, bco_ref[l], cbias)
        x = layer_norm(x + h, ln_ref[l, 2:3, :], ln_ref[l, 3:4, :])

        # feed-forward (post-LN)
        # TODO(synk): transformers 'gelu' is erf-based; tanh-approx GELU is used
        # here and in the pure-JAX reference below.
        f = jnp.dot(x, w1_ref[l], preferred_element_type=f32) + b1_ref[l]
        f = jax.nn.gelu(f, approximate=True)
        f = jnp.dot(f, w2_ref[l], preferred_element_type=f32) + b2_ref[l]
        x = layer_norm(x + f, ln_ref[l, 4:5, :], ln_ref[l, 5:6, :])

    out_ref[...] = x


# ------------------------- BartDecoder forward (Pallas) ----------------------
@jax.jit
def bart_decoder_forward(packed, input_ids, input_entity_ids, encoder_hidden_states,
                         encoder_padding_mask, decoder_padding_mask, decoder_causal_mask):
    B, T = input_ids.shape
    S = encoder_hidden_states.shape[1]
    BT, BS = B * T, B * S

    # token + learned positional embedding gathers (plain JAX glue)
    positions = packed['pos_table'][jnp.arange(T) + EXTRA_POS]              # (T, D)
    x = packed['tok_table'][input_ids] * EMBED_SCALE + positions[None]      # (B, T, D)
    x = x.reshape(BT, D_MODEL).astype(jnp.float32)
    enc = encoder_hidden_states.reshape(BS, D_MODEL).astype(jnp.float32)

    # entity embeddings are computed by the PyTorch forward but never consumed
    # inside DecoderLayer; compute for parity, do not use.
    _entity_embeds = packed['ent_table'][input_entity_ids]

    # -------- host-built additive attention biases (DMA'd, clamped finite) ----
    q_bid = jnp.repeat(jnp.arange(B), T)                                    # (BT,)
    k_bid_cross = jnp.repeat(jnp.arange(B), S)                              # (BS,)
    same_b_self = q_bid[:, None] == q_bid[None, :]
    same_b_cross = q_bid[:, None] == k_bid_cross[None, :]

    causal_blocked = jnp.tile(decoder_causal_mask.astype(jnp.float32), (B, B))  # (BT, BT)
    dec_kpad = decoder_padding_mask.reshape(BT).astype(jnp.float32) > 0.5        # True = pad
    enc_kpad = (encoder_padding_mask == 0).reshape(BS)                           # invert_mask

    self_bias = (causal_blocked
                 + jnp.where(same_b_self, 0.0, NEG_INF)
                 + jnp.where(dec_kpad[None, :], NEG_INF, 0.0))
    self_bias = jnp.maximum(self_bias, NEG_INF)          # -inf -> -1e30, NaN-proof
    cross_bias = jnp.where(same_b_cross & (~enc_kpad[None, :]), 0.0, NEG_INF)

    inputs = (x, enc, self_bias, cross_bias, packed['emb_ln'],
              packed['A_self'], packed['r_self'], packed['B_self'], packed['bo_self'],
              packed['A_cross'], packed['r_cross'], packed['B_cross'], packed['bo_cross'],
              packed['w1'], packed['b1'], packed['w2'], packed['b2'], packed['ln'])

    vmem_spec = pl.BlockSpec(memory_space=pltpu.MemorySpace.VMEM)
    out = pl.pallas_call(
        _decoder_kernel,
        out_shape=jax.ShapeDtypeStruct((BT, D_MODEL), jnp.float32),
        in_specs=[vmem_spec] * len(inputs),
        out_specs=vmem_spec,
        compiler_params=pltpu.CompilerParams(vmem_limit_bytes=16 * 1024 * 1024),
    )(*inputs)

    # add_final_layer_norm = False -> no final layer_norm; use_cache=False
    return out.reshape(B, T, D_MODEL)


# --------------------------- pure-JAX reference ------------------------------
def _ref_ln(x, g, b):
    mu = jnp.mean(x, axis=-1, keepdims=True)
    var = jnp.mean((x - mu) ** 2, axis=-1, keepdims=True)
    return (x - mu) / jnp.sqrt(var + EPS) * g + b


def _ref_mha(q_in, kv_in, wq, bq, wk, bk, wv, bv, wo, bo, add_mask, pad_mask):
    q = (q_in @ wq + bq) * SCALING
    k = kv_in @ wk + bk
    v = kv_in @ wv + bv
    B, Tq, D = q.shape
    Tk = k.shape[1]
    qh = q.reshape(B, Tq, N_HEADS, HEAD_DIM).transpose(0, 2, 1, 3)
    kh = k.reshape(B, Tk, N_HEADS, HEAD_DIM).transpose(0, 2, 1, 3)
    vh = v.reshape(B, Tk, N_HEADS, HEAD_DIM).transpose(0, 2, 1, 3)
    s = jnp.einsum('bhqd,bhkd->bhqk', qh, kh)
    if add_mask is not None:
        s = s + add_mask[None, None]
    if pad_mask is not None:
        s = jnp.where(pad_mask[:, None, None, :] > 0.5, -jnp.inf, s)
    p = jax.nn.softmax(s, axis=-1)
    o = jnp.einsum('bhqk,bhkd->bhqd', p, vh)
    return o.transpose(0, 2, 1, 3).reshape(B, Tq, D) @ wo + bo


def ref_decoder_forward(params, input_ids, input_entity_ids, encoder_hidden_states,
                        encoder_padding_mask, decoder_padding_mask, decoder_causal_mask):
    B, T = input_ids.shape
    enc_pad = (encoder_padding_mask == 0).astype(jnp.float32)
    dec_pad = decoder_padding_mask.astype(jnp.float32)
    positions = params['pos_table'][jnp.arange(T) + EXTRA_POS]
    x = params['tok_table'][input_ids] * EMBED_SCALE + positions[None]
    x = _ref_ln(x, params['emb_ln_g'], params['emb_ln_b'])
    for lp in params['layers']:
        h = _ref_mha(x, x, lp['wq'], lp['bq'], lp['wk'], lp['bk'], lp['wv'], lp['bv'],
                     lp['wo'], lp['bo'], decoder_causal_mask, dec_pad)
        x = _ref_ln(x + h, lp['ln1_g'], lp['ln1_b'])
        h = _ref_mha(x, encoder_hidden_states, lp['cwq'], lp['cbq'], lp['cwk'], lp['cbk'],
                     lp['cwv'], lp['cbv'], lp['cwo'], lp['cbo'], None, enc_pad)
        x = _ref_ln(x + h, lp['ln2_g'], lp['ln2_b'])
        f = jax.nn.gelu(x @ lp['w1'] + lp['b1'], approximate=True)
        f = f @ lp['w2'] + lp['b2']
        x = _ref_ln(x + f, lp['ln3_g'], lp['ln3_b'])
    return x


# ------------------------------ params init & packing -------------------------
def _linear(key, din, dout):
    k1, k2 = jax.random.split(key)
    # stored pre-transposed so kernels compute x @ W + b  (== PyTorch x @ W.T + b)
    w = jax.random.normal(k1, (din, dout), jnp.float32) * 0.05
    b = jax.random.normal(k2, (1, dout), jnp.float32) * 0.05
    return w, b


def _ln_param(key):
    k1, k2 = jax.random.split(key)
    g = 1.0 + 0.1 * jax.random.normal(k1, (1, D_MODEL), jnp.float32)
    b = 0.05 * jax.random.normal(k2, (1, D_MODEL), jnp.float32)
    return g, b


def init_params(key):
    keys = iter(jax.random.split(key, 64))
    tok_table = jax.random.normal(next(keys), (VOCAB, D_MODEL), jnp.float32) * 0.1
    tok_table = tok_table.at[PAD_IDX].set(0.0)                 # padding_idx row
    pos_table = jax.random.normal(next(keys), (MAX_POS + EXTRA_POS, D_MODEL), jnp.float32) * 0.1
    pos_table = pos_table.at[PAD_IDX].set(0.0)
    ent_table = jax.random.normal(next(keys), (ENT_VOCAB, D_MODEL), jnp.float32) * 0.1
    emb_ln_g, emb_ln_b = _ln_param(next(keys))

    layers = []
    for _ in range(N_LAYERS):
        lp = {}
        lp['wq'], lp['bq'] = _linear(next(keys), D_MODEL, D_MODEL)
        lp['wk'], lp['bk'] = _linear(next(keys), D_MODEL, D_MODEL)
        lp['wv'], lp['bv'] = _linear(next(keys), D_MODEL, D_MODEL)
        lp['wo'], lp['bo'] = _linear(next(keys), D_MODEL, D_MODEL)
        lp['ln1_g'], lp['ln1_b'] = _ln_param(next(keys))
        lp['cwq'], lp['cbq'] = _linear(next(keys), D_MODEL, D_MODEL)
        lp['cwk'], lp['cbk'] = _linear(next(keys), D_MODEL, D_MODEL)
        lp['cwv'], lp['cbv'] = _linear(next(keys), D_MODEL, D_MODEL)
        lp['cwo'], lp['cbo'] = _linear(next(keys), D_MODEL, D_MODEL)
        lp['ln2_g'], lp['ln2_b'] = _ln_param(next(keys))
        lp['w1'], lp['b1'] = _linear(next(keys), D_MODEL, FFN_DIM)
        lp['w2'], lp['b2'] = _linear(next(keys), FFN_DIM, D_MODEL)
        lp['ln3_g'], lp['ln3_b'] = _ln_param(next(keys))
        layers.append(lp)

    return {'tok_table': tok_table, 'pos_table': pos_table, 'ent_table': ent_table,
            'emb_ln_g': emb_ln_g, 'emb_ln_b': emb_ln_b, 'layers': layers}


def pack_params(params):
    """One-time host-side packing.

    Per head:  A_h = scaling * Wq_h Wk_h^T,  rho_h = scaling * bq_h Wk_h^T,
               B_h = Wv_h Wo_h,              bo'  = bv Wo + bo
    Compositions are done in float64 so the only runtime precision loss is the
    single-pass MXU matmul in the kernel."""
    def f64(a):
        return np.asarray(a, dtype=np.float64)

    def fold(wq, bq, wk, wv, bv, wo, bo):
        wq, bq, wk, wv, bv, wo, bo = map(f64, (wq, bq, wk, wv, bv, wo, bo))
        A, r, Bm = [], [], []
        for h in range(N_HEADS):
            sl = slice(h * HEAD_DIM, (h + 1) * HEAD_DIM)
            A.append(SCALING * (wq[:, sl] @ wk[:, sl].T))       # (D, D)
            r.append(SCALING * (bq[:, sl] @ wk[:, sl].T))       # (1, D)
            Bm.append(wv[:, sl] @ wo[sl, :])                    # (D, D)
        return np.stack(A), np.stack(r), np.stack(Bm), bv @ wo + bo

    A_s, r_s, B_s, bo_s = [], [], [], []
    A_c, r_c, B_c, bo_c = [], [], [], []
    w1, b1, w2, b2, ln = [], [], [], [], []
    for lp in params['layers']:
        a, r, bm, bo = fold(lp['wq'], lp['bq'], lp['wk'], lp['wv'], lp['bv'], lp['wo'], lp['bo'])
        A_s.append(a); r_s.append(r); B_s.append(bm); bo_s.append(bo)
        a, r, bm, bo = fold(lp['cwq'], lp['cbq'], lp['cwk'], lp['cwv'], lp['cbv'], lp['cwo'], lp['cbo'])
        A_c.append(a); r_c.append(r); B_c.append(bm); bo_c.append(bo)
        w1.append(np.asarray(lp['w1'])); b1.append(np.asarray(lp['b1']))
        w2.append(np.asarray(lp['w2'])); b2.append(np.asarray(lp['b2']))
        ln.append(np.concatenate([np.asarray(lp['ln1_g']), np.asarray(lp['ln1_b']),
                                  np.asarray(lp['ln2_g']), np.asarray(lp['ln2_b']),
                                  np.asarray(lp['ln3_g']), np.asarray(lp['ln3_b'])], axis=0))

    def j32(xs):
        return jnp.asarray(np.stack(xs), dtype=jnp.float32)

    return {
        'tok_table': params['tok_table'],
        'pos_table': params['pos_table'],
        'ent_table': params['ent_table'],
        'emb_ln': jnp.concatenate([params['emb_ln_g'], params['emb_ln_b']], axis=0),  # (2, D)
        'A_self': j32(A_s),    # (L, H, D, D)
        'r_self': j32(r_s),    # (L, H, 1, D)
        'B_self': j32(B_s),    # (L, H, D, D)
        'bo_self': j32(bo_s),  # (L, 1, D)
        'A_cross': j32(A_c), 'r_cross': j32(r_c), 'B_cross': j32(B_c), 'bo_cross': j32(bo_c),
        'w1': j32(w1),         # (L, D, FFN)
        'b1': j32(b1),         # (L, 1, FFN)
        'w2': j32(w2),         # (L, FFN, D)
        'b2': j32(b2),         # (L, 1, D)
        'ln': j32(ln),         # (L, 6, D)  rows: ln1g,ln1b,ln2g,ln2b,ln3g,ln3b
    }


# --------------------------------- main --------------------------------------
if __name__ == "__main__":
    root = jax.random.PRNGKey(0)
    kp, k1, k2, k3 = jax.random.split(root, 4)

    params = init_params(kp)
    packed = pack_params(params)

    input_ids = jax.random.randint(k1, (BSZ, TGT_LEN), 2, VOCAB)
    input_entity_ids = jax.random.randint(k2, (BSZ, ENT_LEN), 0, ENT_VOCAB)
    encoder_hidden_states = jax.random.normal(k3, (BSZ, SRC_LEN, D_MODEL), jnp.float32)

    # encoder attention mask: 1 = keep, 0 = pad (the module inverts it)
    encoder_padding_mask = jnp.ones((BSZ, SRC_LEN), jnp.int32)
    encoder_padding_mask = encoder_padding_mask.at[1, SRC_LEN - 4:].set(0)
    # decoder padding mask: True/1 where pad (none here, avoids fully-masked rows)
    decoder_padding_mask = jnp.zeros((BSZ, TGT_LEN), jnp.float32)
    # additive causal mask: -inf above the diagonal (standard BART causal mask)
    decoder_causal_mask = jnp.where(
        jnp.triu(jnp.ones((TGT_LEN, TGT_LEN), jnp.bool_), k=1), -jnp.inf, 0.0
    ).astype(jnp.float32)

    out = bart_decoder_forward(packed, input_ids, input_entity_ids, encoder_hidden_states,
                               encoder_padding_mask, decoder_padding_mask, decoder_causal_mask)
    out = jax.block_until_ready(out)

    ref = ref_decoder_forward(params, input_ids, input_entity_ids, encoder_hidden_states,
                              encoder_padding_mask, decoder_padding_mask, decoder_causal_mask)
    ref = jax.block_until_ready(ref)

    assert out.shape == (BSZ, TGT_LEN, D_MODEL)
    np.testing.assert_allclose(np.asarray(out), np.asarray(ref), rtol=2e-2, atol=2e-2)
    print("KERNEL_OK")
</pallas_src>

<mosaic_0001>
module attributes {stable_mosaic.version = 11 : i64} {
  func.func @_decoder_kernel(%arg0: memref<16x32xf32, #tpu.memory_space<vmem>>, %arg1: memref<32x32xf32, #tpu.memory_space<vmem>>, %arg2: memref<16x16xf32, #tpu.memory_space<vmem>>, %arg3: memref<16x32xf32, #tpu.memory_space<vmem>>, %arg4: memref<2x32xf32, #tpu.memory_space<vmem>>, %arg5: memref<2x4x32x32xf32, #tpu.memory_space<vmem>>, %arg6: memref<2x4x1x32xf32, #tpu.memory_space<vmem>>, %arg7: memref<2x4x32x32xf32, #tpu.memory_space<vmem>>, %arg8: memref<2x1x32xf32, #tpu.memory_space<vmem>>, %arg9: memref<2x4x32x32xf32, #tpu.memory_space<vmem>>, %arg10: memref<2x4x1x32xf32, #tpu.memory_space<vmem>>, %arg11: memref<2x4x32x32xf32, #tpu.memory_space<vmem>>, %arg12: memref<2x1x32xf32, #tpu.memory_space<vmem>>, %arg13: memref<2x32x64xf32, #tpu.memory_space<vmem>>, %arg14: memref<2x1x64xf32, #tpu.memory_space<vmem>>, %arg15: memref<2x64x32xf32, #tpu.memory_space<vmem>>, %arg16: memref<2x1x32xf32, #tpu.memory_space<vmem>>, %arg17: memref<2x6x32xf32, #tpu.memory_space<vmem>>, %arg18: memref<16x32xf32, #tpu.memory_space<vmem>>) attributes {dimension_semantics = [], scalar_prefetch = 0 : i64, scratch_operands = 0 : i64, tpu.core_type = #tpu.core_type<tc>} {
    %c0 = arith.constant 0 : index
    %c0_0 = arith.constant 0 : index
    %0 = vector.load %arg0[%c0, %c0_0] : memref<16x32xf32, #tpu.memory_space<vmem>>, vector<16x32xf32>
    %c0_1 = arith.constant 0 : index
    %c0_2 = arith.constant 0 : index
    %1 = vector.load %arg4[%c0_1, %c0_2] : memref<2x32xf32, #tpu.memory_space<vmem>>, vector<1x32xf32>
    %c1 = arith.constant 1 : index
    %c0_3 = arith.constant 0 : index
    %2 = vector.load %arg4[%c1, %c0_3] : memref<2x32xf32, #tpu.memory_space<vmem>>, vector<1x32xf32>
    %cst = arith.constant dense<0.000000e+00> : vector<16xf32>
    %3 = vector.multi_reduction <add>, %0, %cst [1] : vector<16x32xf32> to vector<16xf32>
    %4 = vector.shape_cast %3 : vector<16xf32> to vector<16x1xf32>
    %cst_4 = arith.constant 3.200000e+01 : f32
    %5 = vector.broadcast %cst_4 : f32 to vector<16x1xf32>
    %6 = arith.divf %4, %5 : vector<16x1xf32>
    %7 = vector.broadcast %6 : vector<16x1xf32> to vector<16x32xf32>
    %8 = arith.subf %0, %7 : vector<16x32xf32>
    %9 = arith.mulf %8, %8 : vector<16x32xf32>
    %cst_5 = arith.constant dense<0.000000e+00> : vector<16xf32>
    %10 = vector.multi_reduction <add>, %9, %cst_5 [1] : vector<16x32xf32> to vector<16xf32>
    %11 = vector.shape_cast %10 : vector<16xf32> to vector<16x1xf32>
    %cst_6 = arith.constant 3.200000e+01 : f32
    %12 = vector.broadcast %cst_6 : f32 to vector<16x1xf32>
    %13 = arith.divf %11, %12 : vector<16x1xf32>
    %14 = vector.broadcast %6 : vector<16x1xf32> to vector<16x32xf32>
    %15 = arith.subf %0, %14 : vector<16x32xf32>
    %cst_7 = arith.constant 9.99999974E-6 : f32
    %16 = vector.broadcast %cst_7 : f32 to vector<16x1xf32>
    %17 = arith.addf %13, %16 : vector<16x1xf32>
    %18 = math.rsqrt %17 : vector<16x1xf32>
    %19 = vector.broadcast %18 : vector<16x1xf32> to vector<16x32xf32>
    %20 = arith.mulf %15, %19 : vector<16x32xf32>
    %21 = vector.broadcast %1 : vector<1x32xf32> to vector<16x32xf32>
    %22 = arith.mulf %20, %21 : vector<16x32xf32>
    %23 = vector.broadcast %2 : vector<1x32xf32> to vector<16x32xf32>
    %24 = arith.addf %22, %23 : vector<16x32xf32>
    %c0_8 = arith.constant 0 : index
    %c0_9 = arith.constant 0 : index
    %25 = vector.load %arg1[%c0_8, %c0_9] : memref<32x32xf32, #tpu.memory_space<vmem>>, vector<32x32xf32>
    %c0_10 = arith.constant 0 : index
    %c0_11 = arith.constant 0 : index
    %26 = vector.load %arg2[%c0_10, %c0_11] : memref<16x16xf32, #tpu.memory_space<vmem>>, vector<16x16xf32>
    %c0_12 = arith.constant 0 : index
    %c0_13 = arith.constant 0 : index
    %27 = vector.load %arg3[%c0_12, %c0_13] : memref<16x32xf32, #tpu.memory_space<vmem>>, vector<16x32xf32>
    %28 = vector.shape_cast %27 : vector<16x32xf32> to vector<16x32xf32>
    %c0_14 = arith.constant 0 : index
    %c0_15 = arith.constant 0 : index
    %c0_16 = arith.constant 0 : index
    %29 = vector.load %arg8[%c0_14, %c0_15, %c0_16] : memref<2x1x32xf32, #tpu.memory_space<vmem>>, vector<1x1x32xf32>
    %30 = vector.shape_cast %29 : vector<1x1x32xf32> to vector<1x32xf32>
    %c0_17 = arith.constant 0 : index
    %c0_18 = arith.constant 0 : index
    %c0_19 = arith.constant 0 : index
    %c0_20 = arith.constant 0 : index
    %31 = vector.load %arg5[%c0_17, %c0_18, %c0_19, %c0_20] : memref<2x4x32x32xf32, #tpu.memory_space<vmem>>, vector<1x1x32x32xf32>
    %32 = vector.shape_cast %31 : vector<1x1x32x32xf32> to vector<32x32xf32>
    %cst_21 = arith.constant dense<0.000000e+00> : vector<16x32xf32>
    %33 = tpu.matmul %24, %32, %cst_21 {dimension_numbers = #tpu.dot_dimension_numbers<[1], [0], [0], [1], [0, 0, 1, 1], [], []>} : vector<16x32xf32>, vector<32x32xf32>, vector<16x32xf32> -> vector<16x32xf32>
    %c0_22 = arith.constant 0 : index
    %c0_23 = arith.constant 0 : index
    %c0_24 = arith.constant 0 : index
    %c0_25 = arith.constant 0 : index
    %34 = vector.load %arg6[%c0_22, %c0_23, %c0_24, %c0_25] : memref<2x4x1x32xf32, #tpu.memory_space<vmem>>, vector<1x1x1x32xf32>
    %35 = vector.shape_cast %34 : vector<1x1x1x32xf32> to vector<1x32xf32>
    %36 = vector.broadcast %35 : vector<1x32xf32> to vector<16x32xf32>
    %37 = arith.addf %33, %36 : vector<16x32xf32>
    %cst_26 = arith.constant dense<0.000000e+00> : vector<16x16xf32>
    %38 = tpu.matmul %37, %24, %cst_26 {dimension_numbers = #tpu.dot_dimension_numbers<[1], [1], [0], [0], [0, 0, 1, 0], [], []>} : vector<16x32xf32>, vector<16x32xf32>, vector<16x16xf32> -> vector<16x16xf32>
    %39 = arith.addf %38, %26 : vector<16x16xf32>
    %cst_27 = arith.constant dense<0xFF800000> : vector<16xf32>
    %40 = vector.multi_reduction <maximumf>, %39, %cst_27 [1] : vector<16x16xf32> to vector<16xf32>
    %41 = vector.shape_cast %40 : vector<16xf32> to vector<16x1xf32>
    %42 = vector.broadcast %41 : vector<16x1xf32> to vector<16x16xf32>
    %43 = arith.subf %39, %42 : vector<16x16xf32>
    %44 = math.exp %43 : vector<16x16xf32>
    %cst_28 = arith.constant dense<0.000000e+00> : vector<16xf32>
    %45 = vector.multi_reduction <add>, %44, %cst_28 [1] : vector<16x16xf32> to vector<16xf32>
    %46 = vector.shape_cast %45 : vector<16xf32> to vector<16x1xf32>
    %47 = tpu.reciprocal %46 {approx = true} : vector<16x1xf32> -> vector<16x1xf32>
    %48 = vector.broadcast %47 : vector<16x1xf32> to vector<16x16xf32>
    %49 = arith.mulf %44, %48 : vector<16x16xf32>
    %c0_29 = arith.constant 0 : index
    %c0_30 = arith.constant 0 : index
    %c0_31 = arith.constant 0 : index
    %c0_32 = arith.constant 0 : index
    %50 = vector.load %arg7[%c0_29, %c0_30, %c0_31, %c0_32] : memref<2x4x32x32xf32, #tpu.memory_space<vmem>>, vector<1x1x32x32xf32>
    %51 = vector.shape_cast %50 : vector<1x1x32x32xf32> to vector<32x32xf32>
    %cst_33 = arith.constant dense<0.000000e+00> : vector<16x32xf32>
    %52 = tpu.matmul %24, %51, %cst_33 {dimension_numbers = #tpu.dot_dimension_numbers<[1], [0], [0], [1], [0, 0, 1, 1], [], []>} : vector<16x32xf32>, vector<32x32xf32>, vector<16x32xf32> -> vector<16x32xf32>
    %cst_34 = arith.constant dense<0.000000e+00> : vector<16x32xf32>
    %53 = tpu.matmul %49, %52, %cst_34 {dimension_numbers = #tpu.dot_dimension_numbers<[1], [0], [0], [1], [0, 0, 1, 1], [], []>} : vector<16x16xf32>, vector<16x32xf32>, vector<16x32xf32> -> vector<16x32xf32>
    %54 = vector.broadcast %30 : vector<1x32xf32> to vector<16x32xf32>
    %55 = arith.addf %54, %53 : vector<16x32xf32>
    %c0_35 = arith.constant 0 : index
    %c1_36 = arith.constant 1 : index
    %c0_37 = arith.constant 0 : index
    %c0_38 = arith.constant 0 : index
    %56 = vector.load %arg5[%c0_35, %c1_36, %c0_37, %c0_38] : memref<2x4x32x32xf32, #tpu.memory_space<vmem>>, vector<1x1x32x32xf32>
    %57 = vector.shape_cast %56 : vector<1x1x32x32xf32> to vector<32x32xf32>
    %cst_39 = arith.constant dense<0.000000e+00> : vector<16x32xf32>
    %58 = tpu.matmul %24, %57, %cst_39 {dimension_numbers = #tpu.dot_dimension_numbers<[1], [0], [0], [1], [0, 0, 1, 1], [], []>} : vector<16x32xf32>, vector<32x32xf32>, vector<16x32xf32> -> vector<16x32xf32>
    %c0_40 = arith.constant 0 : index
    %c1_41 = arith.constant 1 : index
    %c0_42 = arith.constant 0 : index
    %c0_43 = arith.constant 0 : index
    %59 = vector.load %arg6[%c0_40, %c1_41, %c0_42, %c0_43] : memref<2x4x1x32xf32, #tpu.memory_space<vmem>>, vector<1x1x1x32xf32>
    %60 = vector.shape_cast %59 : vector<1x1x1x32xf32> to vector<1x32xf32>
    %61 = vector.broadcast %60 : vector<1x32xf32> to vector<16x32xf32>
    %62 = arith.addf %58, %61 : vector<16x32xf32>
    %cst_44 = arith.constant dense<0.000000e+00> : vector<16x16xf32>
    %63 = tpu.matmul %62, %24, %cst_44 {dimension_numbers = #tpu.dot_dimension_numbers<[1], [1], [0], [0], [0, 0, 1, 0], [], []>} : vector<16x32xf32>, vector<16x32xf32>, vector<16x16xf32> -> vector<16x16xf32>
    %64 = arith.addf %63, %26 : vector<16x16xf32>
    %cst_45 = arith.constant dense<0xFF800000> : vector<16xf32>
    %65 = vector.multi_reduction <maximumf>, %64, %cst_45 [1] : vector<16x16xf32> to vector<16xf32>
    %66 = vector.shape_cast %65 : vector<16xf32> to vector<16x1xf32>
    %67 = vector.broadcast %66 : vector<16x1xf32> to vector<16x16xf32>
    %68 = arith.subf %64, %67 : vector<16x16xf32>
    %69 = math.exp %68 : vector<16x16xf32>
    %cst_46 = arith.constant dense<0.000000e+00> : vector<16xf32>
    %70 = vector.multi_reduction <add>, %69, %cst_46 [1] : vector<16x16xf32> to vector<16xf32>
    %71 = vector.shape_cast %70 : vector<16xf32> to vector<16x1xf32>
    %72 = tpu.reciprocal %71 {approx = true} : vector<16x1xf32> -> vector<16x1xf32>
    %73 = vector.broadcast %72 : vector<16x1xf32> to vector<16x16xf32>
    %74 = arith.mulf %69, %73 : vector<16x16xf32>
    %c0_47 = arith.constant 0 : index
    %c1_48 = arith.constant 1 : index
    %c0_49 = arith.constant 0 : index
    %c0_50 = arith.constant 0 : index
    %75 = vector.load %arg7[%c0_47, %c1_48, %c0_49, %c0_50] : memref<2x4x32x32xf32, #tpu.memory_space<vmem>>, vector<1x1x32x32xf32>
    %76 = vector.shape_cast %75 : vector<1x1x32x32xf32> to vector<32x32xf32>
    %cst_51 = arith.constant dense<0.000000e+00> : vector<16x32xf32>
    %77 = tpu.matmul %24, %76, %cst_51 {dimension_numbers = #tpu.dot_dimension_numbers<[1], [0], [0], [1], [0, 0, 1, 1], [], []>} : vector<16x32xf32>, vector<32x32xf32>, vector<16x32xf32> -> vector<16x32xf32>
    %cst_52 = arith.constant dense<0.000000e+00> : vector<16x32xf32>
    %78 = tpu.matmul %74, %77, %cst_52 {dimension_numbers = #tpu.dot_dimension_numbers<[1], [0], [0], [1], [0, 0, 1, 1], [], []>} : vector<16x16xf32>, vector<16x32xf32>, vector<16x32xf32> -> vector<16x32xf32>
    %79 = arith.addf %55, %78 : vector<16x32xf32>
    %c0_53 = arith.constant 0 : index
    %c2 = arith.constant 2 : index
    %c0_54 = arith.constant 0 : index
    %c0_55 = arith.constant 0 : index
    %80 = vector.load %arg5[%c0_53, %c2, %c0_54, %c0_55] : memref<2x4x32x32xf32, #tpu.memory_space<vmem>>, vector<1x1x32x32xf32>
    %81 = vector.shape_cast %80 : vector<1x1x32x32xf32> to vector<32x32xf32>
    %cst_56 = arith.constant dense<0.000000e+00> : vector<16x32xf32>
    %82 = tpu.matmul %24, %81, %cst_56 {dimension_numbers = #tpu.dot_dimension_numbers<[1], [0], [0], [1], [0, 0, 1, 1], [], []>} : vector<16x32xf32>, vector<32x32xf32>, vector<16x32xf32> -> vector<16x32xf32>
    %c0_57 = arith.constant 0 : index
    %c2_58 = arith.constant 2 : index
    %c0_59 = arith.constant 0 : index
    %c0_60 = arith.constant 0 : index
    %83 = vector.load %arg6[%c0_57, %c2_58, %c0_59, %c0_60] : memref<2x4x1x32xf32, #tpu.memory_space<vmem>>, vector<1x1x1x32xf32>
    %84 = vector.shape_cast %83 : vector<1x1x1x32xf32> to vector<1x32xf32>
    %85 = vector.broadcast %84 : vector<1x32xf32> to vector<16x32xf32>
    %86 = arith.addf %82, %85 : vector<16x32xf32>
    %cst_61 = arith.constant dense<0.000000e+00> : vector<16x16xf32>
    %87 = tpu.matmul %86, %24, %cst_61 {dimension_numbers = #tpu.dot_dimension_numbers<[1], [1], [0], [0], [0, 0, 1, 0], [], []>} : vector<16x32xf32>, vector<16x32xf32>, vector<16x16xf32> -> vector<16x16xf32>
    %88 = arith.addf %87, %26 : vector<16x16xf32>
    %cst_62 = arith.constant dense<0xFF800000> : vector<16xf32>
    %89 = vector.multi_reduction <maximumf>, %88, %cst_62 [1] : vector<16x16xf32> to vector<16xf32>
    %90 = vector.shape_cast %89 : vector<16xf32> to vector<16x1xf32>
    %91 = vector.broadcast %90 : vector<16x1xf32> to vector<16x16xf32>
    %92 = arith.subf %88, %91 : vector<16x16xf32>
    %93 = math.exp %92 : vector<16x16xf32>
    %cst_63 = arith.constant dense<0.000000e+00> : vector<16xf32>
    %94 = vector.multi_reduction <add>, %93, %cst_63 [1] : vector<16x16xf32> to vector<16xf32>
    %95 = vector.shape_cast %94 : vector<16xf32> to vector<16x1xf32>
    %96 = tpu.reciprocal %95 {approx = true} : vector<16x1xf32> -> vector<16x1xf32>
    %97 = vector.broadcast %96 : vector<16x1xf32> to vector<16x16xf32>
    %98 = arith.mulf %93, %97 : vector<16x16xf32>
    %c0_64 = arith.constant 0 : index
    %c2_65 = arith.constant 2 : index
    %c0_66 = arith.constant 0 : index
    %c0_67 = arith.constant 0 : index
    %99 = vector.load %arg7[%c0_64, %c2_65, %c0_66, %c0_67] : memref<2x4x32x32xf32, #tpu.memory_space<vmem>>, vector<1x1x32x32xf32>
    %100 = vector.shape_cast %99 : vector<1x1x32x32xf32> to vector<32x32xf32>
    %cst_68 = arith.constant dense<0.000000e+00> : vector<16x32xf32>
    %101 = tpu.matmul %24, %100, %cst_68 {dimension_numbers = #tpu.dot_dimension_numbers<[1], [0], [0], [1], [0, 0, 1, 1], [], []>} : vector<16x32xf32>, vector<32x32xf32>, vector<16x32xf32> -> vector<16x32xf32>
    %cst_69 = arith.constant dense<0.000000e+00> : vector<16x32xf32>
    %102 = tpu.matmul %98, %101, %cst_69 {dimension_numbers = #tpu.dot_dimension_numbers<[1], [0], [0], [1], [0, 0, 1, 1], [], []>} : vector<16x16xf32>, vector<16x32xf32>, vector<16x32xf32> -> vector<16x32xf32>
    %103 = arith.addf %79, %102 : vector<16x32xf32>
    %c0_70 = arith.constant 0 : index
    %c3 = arith.constant 3 : index
    %c0_71 = arith.constant 0 : index
    %c0_72 = arith.constant 0 : index
    %104 = vector.load %arg5[%c0_70, %c3, %c0_71, %c0_72] : memref<2x4x32x32xf32, #tpu.memory_space<vmem>>, vector<1x1x32x32xf32>
    %105 = vector.shape_cast %104 : vector<1x1x32x32xf32> to vector<32x32xf32>
    %cst_73 = arith.constant dense<0.000000e+00> : vector<16x32xf32>
    %106 = tpu.matmul %24, %105, %cst_73 {dimension_numbers = #tpu.dot_dimension_numbers<[1], [0], [0], [1], [0, 0, 1, 1], [], []>} : vector<16x32xf32>, vector<32x32xf32>, vector<16x32xf32> -> vector<16x32xf32>
    %c0_74 = arith.constant 0 : index
    %c3_75 = arith.constant 3 : index
    %c0_76 = arith.constant 0 : index
    %c0_77 = arith.constant 0 : index
    %107 = vector.load %arg6[%c0_74, %c3_75, %c0_76, %c0_77] : memref<2x4x1x32xf32, #tpu.memory_space<vmem>>, vector<1x1x1x32xf32>
    %108 = vector.shape_cast %107 : vector<1x1x1x32xf32> to vector<1x32xf32>
    %109 = vector.broadcast %108 : vector<1x32xf32> to vector<16x32xf32>
    %110 = arith.addf %106, %109 : vector<16x32xf32>
    %cst_78 = arith.constant dense<0.000000e+00> : vector<16x16xf32>
    %111 = tpu.matmul %110, %24, %cst_78 {dimension_numbers = #tpu.dot_dimension_numbers<[1], [1], [0], [0], [0, 0, 1, 0], [], []>} : vector<16x32xf32>, vector<16x32xf32>, vector<16x16xf32> -> vector<16x16xf32>
    %112 = arith.addf %111, %26 : vector<16x16xf32>
    %cst_79 = arith.constant dense<0xFF800000> : vector<16xf32>
    %113 = vector.multi_reduction <maximumf>, %112, %cst_79 [1] : vector<16x16xf32> to vector<16xf32>
    %114 = vector.shape_cast %113 : vector<16xf32> to vector<16x1xf32>
    %115 = vector.broadcast %114 : vector<16x1xf32> to vector<16x16xf32>
    %116 = arith.subf %112, %115 : vector<16x16xf32>
    %117 = math.exp %116 : vector<16x16xf32>
    %cst_80 = arith.constant dense<0.000000e+00> : vector<16xf32>
    %118 = vector.multi_reduction <add>, %117, %cst_80 [1] : vector<16x16xf32> to vector<16xf32>
    %119 = vector.shape_cast %118 : vector<16xf32> to vector<16x1xf32>
    %120 = tpu.reciprocal %119 {approx = true} : vector<16x1xf32> -> vector<16x1xf32>
    %121 = vector.broadcast %120 : vector<16x1xf32> to vector<16x16xf32>
    %122 = arith.mulf %117, %121 : vector<16x16xf32>
    %c0_81 = arith.constant 0 : index
    %c3_82 = arith.constant 3 : index
    %c0_83 = arith.constant 0 : index
    %c0_84 = arith.constant 0 : index
    %123 = vector.load %arg7[%c0_81, %c3_82, %c0_83, %c0_84] : memref<2x4x32x32xf32, #tpu.memory_space<vmem>>, vector<1x1x32x32xf32>
    %124 = vector.shape_cast %123 : vector<1x1x32x32xf32> to vector<32x32xf32>
    %cst_85 = arith.constant dense<0.000000e+00> : vector<16x32xf32>
    %125 = tpu.matmul %24, %124, %cst_85 {dimension_numbers = #tpu.dot_dimension_numbers<[1], [0], [0], [1], [0, 0, 1, 1], [], []>} : vector<16x32xf32>, vector<32x32xf32>, vector<16x32xf32> -> vector<16x32xf32>
    %cst_86 = arith.constant dense<0.000000e+00> : vector<16x32xf32>
    %126 = tpu.matmul %122, %125, %cst_86 {dimension_numbers = #tpu.dot_dimension_numbers<[1], [0], [0], [1], [0, 0, 1, 1], [], []>} : vector<16x16xf32>, vector<16x32xf32>, vector<16x32xf32> -> vector<16x32xf32>
    %127 = arith.addf %103, %126 : vector<16x32xf32>
    %128 = arith.addf %24, %127 : vector<16x32xf32>
    %c0_87 = arith.constant 0 : index
    %c0_88 = arith.constant 0 : index
    %c0_89 = arith.constant 0 : index
    %129 = vector.load %arg17[%c0_87, %c0_88, %c0_89] : memref<2x6x32xf32, #tpu.memory_space<vmem>>, vector<1x1x32xf32>
    %130 = vector.shape_cast %129 : vector<1x1x32xf32> to vector<1x32xf32>
    %c0_90 = arith.constant 0 : index
    %c1_91 = arith.constant 1 : index
    %c0_92 = arith.constant 0 : index
    %131 = vector.load %arg17[%c0_90, %c1_91, %c0_92] : memref<2x6x32xf32, #tpu.memory_space<vmem>>, vector<1x1x32xf32>
    %132 = vector.shape_cast %131 : vector<1x1x32xf32> to vector<1x32xf32>
    %cst_93 = arith.constant dense<0.000000e+00> : vector<16xf32>
    %133 = vector.multi_reduction <add>, %128, %cst_93 [1] : vector<16x32xf32> to vector<16xf32>
    %134 = vector.shape_cast %133 : vector<16xf32> to vector<16x1xf32>
    %cst_94 = arith.constant 3.200000e+01 : f32
    %135 = vector.broadcast %cst_94 : f32 to vector<16x1xf32>
    %136 = arith.divf %134, %135 : vector<16x1xf32>
    %137 = vector.broadcast %136 : vector<16x1xf32> to vector<16x32xf32>
    %138 = arith.subf %128, %137 : vector<16x32xf32>
    %139 = arith.mulf %138, %138 : vector<16x32xf32>
    %cst_95 = arith.constant dense<0.000000e+00> : vector<16xf32>
    %140 = vector.multi_reduction <add>, %139, %cst_95 [1] : vector<16x32xf32> to vector<16xf32>
    %141 = vector.shape_cast %140 : vector<16xf32> to vector<16x1xf32>
    %cst_96 = arith.constant 3.200000e+01 : f32
    %142 = vector.broadcast %cst_96 : f32 to vector<16x1xf32>
    %143 = arith.divf %141, %142 : vector<16x1xf32>
    %144 = vector.broadcast %136 : vector<16x1xf32> to vector<16x32xf32>
    %145 = arith.subf %128, %144 : vector<16x32xf32>
    %cst_97 = arith.constant 9.99999974E-6 : f32
    %146 = vector.broadcast %cst_97 : f32 to vector<16x1xf32>
    %147 = arith.addf %143, %146 : vector<16x1xf32>
    %148 = math.rsqrt %147 : vector<16x1xf32>
    %149 = vector.broadcast %148 : vector<16x1xf32> to vector<16x32xf32>
    %150 = arith.mulf %145, %149 : vector<16x32xf32>
    %151 = vector.broadcast %130 : vector<1x32xf32> to vector<16x32xf32>
    %152 = arith.mulf %150, %151 : vector<16x32xf32>
    %153 = vector.broadcast %132 : vector<1x32xf32> to vector<16x32xf32>
    %154 = arith.addf %152, %153 : vector<16x32xf32>
    %c0_98 = arith.constant 0 : index
    %c0_99 = arith.constant 0 : index
    %c0_100 = arith.constant 0 : index
    %155 = vector.load %arg12[%c0_98, %c0_99, %c0_100] : memref<2x1x32xf32, #tpu.memory_space<vmem>>, vector<1x1x32xf32>
    %156 = vector.shape_cast %155 : vector<1x1x32xf32> to vector<1x32xf32>
    %c0_101 = arith.constant 0 : index
    %c0_102 = arith.constant 0 : index
    %c0_103 = arith.constant 0 : index
    %c0_104 = arith.constant 0 : index
    %157 = vector.load %arg9[%c0_101, %c0_102, %c0_103, %c0_104] : memref<2x4x32x32xf32, #tpu.memory_space<vmem>>, vector<1x1x32x32xf32>
    %158 = vector.shape_cast %157 : vector<1x1x32x32xf32> to vector<32x32xf32>
    %cst_105 = arith.constant dense<0.000000e+00> : vector<16x32xf32>
    %159 = tpu.matmul %154, %158, %cst_105 {dimension_numbers = #tpu.dot_dimension_numbers<[1], [0], [0], [1], [0, 0, 1, 1], [], []>} : vector<16x32xf32>, vector<32x32xf32>, vector<16x32xf32> -> vector<16x32xf32>
    %c0_106 = arith.constant 0 : index
    %c0_107 = arith.constant 0 : index
    %c0_108 = arith.constant 0 : index
    %c0_109 = arith.constant 0 : index
    %160 = vector.load %arg10[%c0_106, %c0_107, %c0_108, %c0_109] : memref<2x4x1x32xf32, #tpu.memory_space<vmem>>, vector<1x1x1x32xf32>
    %161 = vector.shape_cast %160 : vector<1x1x1x32xf32> to vector<1x32xf32>
    %162 = vector.broadcast %161 : vector<1x32xf32> to vector<16x32xf32>
    %163 = arith.addf %159, %162 : vector<16x32xf32>
    %cst_110 = arith.constant dense<0.000000e+00> : vector<16x32xf32>
    %164 = tpu.matmul %163, %25, %cst_110 {dimension_numbers = #tpu.dot_dimension_numbers<[1], [1], [0], [0], [0, 0, 1, 0], [], []>} : vector<16x32xf32>, vector<32x32xf32>, vector<16x32xf32> -> vector<16x32xf32>
    %165 = arith.addf %164, %28 : vector<16x32xf32>
    %cst_111 = arith.constant dense<0xFF800000> : vector<16xf32>
    %166 = vector.multi_reduction <maximumf>, %165, %cst_111 [1] : vector<16x32xf32> to vector<16xf32>
    %167 = vector.shape_cast %166 : vector<16xf32> to vector<16x1xf32>
    %168 = vector.broadcast %167 : vector<16x1xf32> to vector<16x32xf32>
    %169 = arith.subf %165, %168 : vector<16x32xf32>
    %170 = math.exp %169 : vector<16x32xf32>
    %cst_112 = arith.constant dense<0.000000e+00> : vector<16xf32>
    %171 = vector.multi_reduction <add>, %170, %cst_112 [1] : vector<16x32xf32> to vector<16xf32>
    %172 = vector.shape_cast %171 : vector<16xf32> to vector<16x1xf32>
    %173 = tpu.reciprocal %172 {approx = true} : vector<16x1xf32> -> vector<16x1xf32>
    %174 = vector.broadcast %173 : vector<16x1xf32> to vector<16x32xf32>
    %175 = arith.mulf %170, %174 : vector<16x32xf32>
    %c0_113 = arith.constant 0 : index
    %c0_114 = arith.constant 0 : index
    %c0_115 = arith.constant 0 : index
    %c0_116 = arith.constant 0 : index
    %176 = vector.load %arg11[%c0_113, %c0_114, %c0_115, %c0_116] : memref<2x4x32x32xf32, #tpu.memory_space<vmem>>, vector<1x1x32x32xf32>
    %177 = vector.shape_cast %176 : vector<1x1x32x32xf32> to vector<32x32xf32>
    %cst_117 = arith.constant dense<0.000000e+00> : vector<32x32xf32>
    %178 = tpu.matmul %25, %177, %cst_117 {dimension_numbers = #tpu.dot_dimension_numbers<[1], [0], [0], [1], [0, 0, 1, 1], [], []>} : vector<32x32xf32>, vector<32x32xf32>, vector<32x32xf32> -> vector<32x32xf32>
    %cst_118 = arith.constant dense<0.000000e+00> : vector<16x32xf32>
    %179 = tpu.matmul %175, %178, %cst_118 {dimension_numbers = #tpu.dot_dimension_numbers<[1], [0], [0], [1], [0, 0, 1, 1], [], []>} : vector<16x32xf32>, vector<32x32xf32>, vector<16x32xf32> -> vector<16x32xf32>
    %180 = vector.broadcast %156 : vector<1x32xf32> to vector<16x32xf32>
    %181 = arith.addf %180, %179 : vector<16x32xf32>
    %c0_119 = arith.constant 0 : index
    %c1_120 = arith.constant 1 : index
    %c0_121 = arith.constant 0 : index
    %c0_122 = arith.constant 0 : index
    %182 = vector.load %arg9[%c0_119, %c1_120, %c0_121, %c0_122] : memref<2x4x32x32xf32, #tpu.memory_space<vmem>>, vector<1x1x32x32xf32>
    %183 = vector.shape_cast %182 : vector<1x1x32x32xf32> to vector<32x32xf32>
    %cst_123 = arith.constant dense<0.000000e+00> : vector<16x32xf32>
    %184 = tpu.matmul %154, %183, %cst_123 {dimension_numbers = #tpu.dot_dimension_numbers<[1], [0], [0], [1], [0, 0, 1, 1], [], []>} : vector<16x32xf32>, vector<32x32xf32>, vector<16x32xf32> -> vector<16x32xf32>
    %c0_124 = arith.constant 0 : index
    %c1_125 = arith.constant 1 : index
    %c0_126 = arith.constant 0 : index
    %c0_127 = arith.constant 0 : index
    %185 = vector.load %arg10[%c0_124, %c1_125, %c0_126, %c0_127] : memref<2x4x1x32xf32, #tpu.memory_space<vmem>>, vector<1x1x1x32xf32>
    %186 = vector.shape_cast %185 : vector<1x1x1x32xf32> to vector<1x32xf32>
    %187 = vector.broadcast %186 : vector<1x32xf32> to vector<16x32xf32>
    %188 = arith.addf %184, %187 : vector<16x32xf32>
    %cst_128 = arith.constant dense<0.000000e+00> : vector<16x32xf32>
    %189 = tpu.matmul %188, %25, %cst_128 {dimension_numbers = #tpu.dot_dimension_numbers<[1], [1], [0], [0], [0, 0, 1, 0], [], []>} : vector<16x32xf32>, vector<32x32xf32>, vector<16x32xf32> -> vector<16x32xf32>
    %190 = arith.addf %189, %28 : vector<16x32xf32>
    %cst_129 = arith.constant dense<0xFF800000> : vector<16xf32>
    %191 = vector.multi_reduction <maximumf>, %190, %cst_129 [1] : vector<16x32xf32> to vector<16xf32>
    %192 = vector.shape_cast %191 : vector<16xf32> to vector<16x1xf32>
    %193 = vector.broadcast %192 : vector<16x1xf32> to vector<16x32xf32>
    %194 = arith.subf %190, %193 : vector<16x32xf32>
    %195 = math.exp %194 : vector<16x32xf32>
    %cst_130 = arith.constant dense<0.000000e+00> : vector<16xf32>
    %196 = vector.multi_reduction <add>, %195, %cst_130 [1] : vector<16x32xf32> to vector<16xf32>
    %197 = vector.shape_cast %196 : vector<16xf32> to vector<16x1xf32>
    %198 = tpu.reciprocal %197 {approx = true} : vector<16x1xf32> -> vector<16x1xf32>
    %199 = vector.broadcast %198 : vector<16x1xf32> to vector<16x32xf32>
    %200 = arith.mulf %195, %199 : vector<16x32xf32>
    %c0_131 = arith.constant 0 : index
    %c1_132 = arith.constant 1 : index
    %c0_133 = arith.constant 0 : index
    %c0_134 = arith.constant 0 : index
    %201 = vector.load %arg11[%c0_131, %c1_132, %c0_133, %c0_134] : memref<2x4x32x32xf32, #tpu.memory_space<vmem>>, vector<1x1x32x32xf32>
    %202 = vector.shape_cast %201 : vector<1x1x32x32xf32> to vector<32x32xf32>
    %cst_135 = arith.constant dense<0.000000e+00> : vector<32x32xf32>
    %203 = tpu.matmul %25, %202, %cst_135 {dimension_numbers = #tpu.dot_dimension_numbers<[1], [0], [0], [1], [0, 0, 1, 1], [], []>} : vector<32x32xf32>, vector<32x32xf32>, vector<32x32xf32> -> vector<32x32xf32>
    %cst_136 = arith.constant dense<0.000000e+00> : vector<16x32xf32>
    %204 = tpu.matmul %200, %203, %cst_136 {dimension_numbers = #tpu.dot_dimension_numbers<[1], [0], [0], [1], [0, 0, 1, 1], [], []>} : vector<16x32xf32>, vector<32x32xf32>, vector<16x32xf32> -> vector<16x32xf32>
    %205 = arith.addf %181, %204 : vector<16x32xf32>
    %c0_137 = arith.constant 0 : index
    %c2_138 = arith.constant 2 : index
    %c0_139 = arith.constant 0 : index
    %c0_140 = arith.constant 0 : index
    %206 = vector.load %arg9[%c0_137, %c2_138, %c0_139, %c0_140] : memref<2x4x32x32xf32, #tpu.memory_space<vmem>>, vector<1x1x32x32xf32>
    %207 = vector.shape_cast %206 : vector<1x1x32x32xf32> to vector<32x32xf32>
    %cst_141 = arith.constant dense<0.000000e+00> : vector<16x32xf32>
    %208 = tpu.matmul %154, %207, %cst_141 {dimension_numbers = #tpu.dot_dimension_numbers<[1], [0], [0], [1], [0, 0, 1, 1], [], []>} : vector<16x32xf32>, vector<32x32xf32>, vector<16x32xf32> -> vector<16x32xf32>
    %c0_142 = arith.constant 0 : index
    %c2_143 = arith.constant 2 : index
    %c0_144 = arith.constant 0 : index
    %c0_145 = arith.constant 0 : index
    %209 = vector.load %arg10[%c0_142, %c2_143, %c0_144, %c0_145] : memref<2x4x1x32xf32, #tpu.memory_space<vmem>>, vector<1x1x1x32xf32>
    %210 = vector.shape_cast %209 : vector<1x1x1x32xf32> to vector<1x32xf32>
    %211 = vector.broadcast %210 : vector<1x32xf32> to vector<16x32xf32>
    %212 = arith.addf %208, %211 : vector<16x32xf32>
    %cst_146 = arith.constant dense<0.000000e+00> : vector<16x32xf32>
    %213 = tpu.matmul %212, %25, %cst_146 {dimension_numbers = #tpu.dot_dimension_numbers<[1], [1], [0], [0], [0, 0, 1, 0], [], []>} : vector<16x32xf32>, vector<32x32xf32>, vector<16x32xf32> -> vector<16x32xf32>
    %214 = arith.addf %213, %28 : vector<16x32xf32>
    %cst_147 = arith.constant dense<0xFF800000> : vector<16xf32>
    %215 = vector.multi_reduction <maximumf>, %214, %cst_147 [1] : vector<16x32xf32> to vector<16xf32>
    %216 = vector.shape_cast %215 : vector<16xf32> to vector<16x1xf32>
    %217 = vector.broadcast %216 : vector<16x1xf32> to vector<16x32xf32>
    %218 = arith.subf %214, %217 : vector<16x32xf32>
    %219 = math.exp %218 : vector<16x32xf32>
    %cst_148 = arith.constant dense<0.000000e+00> : vector<16xf32>
    %220 = vector.multi_reduction <add>, %219, %cst_148 [1] : vector<16x32xf32> to vector<16xf32>
    %221 = vector.shape_cast %220 : vector<16xf32> to vector<16x1xf32>
    %222 = tpu.reciprocal %221 {approx = true} : vector<16x1xf32> -> vector<16x1xf32>
    %223 = vector.broadcast %222 : vector<16x1xf32> to vector<16x32xf32>
    %224 = arith.mulf %219, %223 : vector<16x32xf32>
    %c0_149 = arith.constant 0 : index
    %c2_150 = arith.constant 2 : index
    %c0_151 = arith.constant 0 : index
    %c0_152 = arith.constant 0 : index
    %225 = vector.load %arg11[%c0_149, %c2_150, %c0_151, %c0_152] : memref<2x4x32x32xf32, #tpu.memory_space<vmem>>, vector<1x1x32x32xf32>
    %226 = vector.shape_cast %225 : vector<1x1x32x32xf32> to vector<32x32xf32>
    %cst_153 = arith.constant dense<0.000000e+00> : vector<32x32xf32>
    %227 = tpu.matmul %25, %226, %cst_153 {dimension_numbers = #tpu.dot_dimension_numbers<[1], [0], [0], [1], [0, 0, 1, 1], [], []>} : vector<32x32xf32>, vector<32x32xf32>, vector<32x32xf32> -> vector<32x32xf32>
    %cst_154 = arith.constant dense<0.000000e+00> : vector<16x32xf32>
    %228 = tpu.matmul %224, %227, %cst_154 {dimension_numbers = #tpu.dot_dimension_numbers<[1], [0], [0], [1], [0, 0, 1, 1], [], []>} : vector<16x32xf32>, vector<32x32xf32>, vector<16x32xf32> -> vector<16x32xf32>
    %229 = arith.addf %205, %228 : vector<16x32xf32>
    %c0_155 = arith.constant 0 : index
    %c3_156 = arith.constant 3 : index
    %c0_157 = arith.constant 0 : index
    %c0_158 = arith.constant 0 : index
    %230 = vector.load %arg9[%c0_155, %c3_156, %c0_157, %c0_158] : memref<2x4x32x32xf32, #tpu.memory_space<vmem>>, vector<1x1x32x32xf32>
    %231 = vector.shape_cast %230 : vector<1x1x32x32xf32> to vector<32x32xf32>
    %cst_159 = arith.constant dense<0.000000e+00> : vector<16x32xf32>
    %232 = tpu.matmul %154, %231, %cst_159 {dimension_numbers = #tpu.dot_dimension_numbers<[1], [0], [0], [1], [0, 0, 1, 1], [], []>} : vector<16x32xf32>, vector<32x32xf32>, vector<16x32xf32> -> vector<16x32xf32>
    %c0_160 = arith.constant 0 : index
    %c3_161 = arith.constant 3 : index
    %c0_162 = arith.constant 0 : index
    %c0_163 = arith.constant 0 : index
    %233 = vector.load %arg10[%c0_160, %c3_161, %c0_162, %c0_163] : memref<2x4x1x32xf32, #tpu.memory_space<vmem>>, vector<1x1x1x32xf32>
    %234 = vector.shape_cast %233 : vector<1x1x1x32xf32> to vector<1x32xf32>
    %235 = vector.broadcast %234 : vector<1x32xf32> to vector<16x32xf32>
    %236 = arith.addf %232, %235 : vector<16x32xf32>
    %cst_164 = arith.constant dense<0.000000e+00> : vector<16x32xf32>
    %237 = tpu.matmul %236, %25, %cst_164 {dimension_numbers = #tpu.dot_dimension_numbers<[1], [1], [0], [0], [0, 0, 1, 0], [], []>} : vector<16x32xf32>, vector<32x32xf32>, vector<16x32xf32> -> vector<16x32xf32>
    %238 = arith.addf %237, %28 : vector<16x32xf32>
    %cst_165 = arith.constant dense<0xFF800000> : vector<16xf32>
    %239 = vector.multi_reduction <maximumf>, %238, %cst_165 [1] : vector<16x32xf32> to vector<16xf32>
    %240 = vector.shape_cast %239 : vector<16xf32> to vector<16x1xf32>
    %241 = vector.broadcast %240 : vector<16x1xf32> to vector<16x32xf32>
    %242 = arith.subf %238, %241 : vector<16x32xf32>
    %243 = math.exp %242 : vector<16x32xf32>
    %cst_166 = arith.constant dense<0.000000e+00> : vector<16xf32>
    %244 = vector.multi_reduction <add>, %243, %cst_166 [1] : vector<16x32xf32> to vector<16xf32>
    %245 = vector.shape_cast %244 : vector<16xf32> to vector<16x1xf32>
    %246 = tpu.reciprocal %245 {approx = true} : vector<16x1xf32> -> vector<16x1xf32>
    %247 = vector.broadcast %246 : vector<16x1xf32> to vector<16x32xf32>
    %248 = arith.mulf %243, %247 : vector<16x32xf32>
    %c0_167 = arith.constant 0 : index
    %c3_168 = arith.constant 3 : index
    %c0_169 = arith.constant 0 : index
    %c0_170 = arith.constant 0 : index
    %249 = vector.load %arg11[%c0_167, %c3_168, %c0_169, %c0_170] : memref<2x4x32x32xf32, #tpu.memory_space<vmem>>, vector<1x1x32x32xf32>
    %250 = vector.shape_cast %249 : vector<1x1x32x32xf32> to vector<32x32xf32>
    %cst_171 = arith.constant dense<0.000000e+00> : vector<32x32xf32>
    %251 = tpu.matmul %25, %250, %cst_171 {dimension_numbers = #tpu.dot_dimension_numbers<[1], [0], [0], [1], [0, 0, 1, 1], [], []>} : vector<32x32xf32>, vector<32x32xf32>, vector<32x32xf32> -> vector<32x32xf32>
    %cst_172 = arith.constant dense<0.000000e+00> : vector<16x32xf32>
    %252 = tpu.matmul %248, %251, %cst_172 {dimension_numbers = #tpu.dot_dimension_numbers<[1], [0], [0], [1], [0, 0, 1, 1], [], []>} : vector<16x32xf32>, vector<32x32xf32>, vector<16x32xf32> -> vector<16x32xf32>
    %253 = arith.addf %229, %252 : vector<16x32xf32>
    %254 = arith.addf %154, %253 : vector<16x32xf32>
    %c0_173 = arith.constant 0 : index
    %c2_174 = arith.constant 2 : index
    %c0_175 = arith.constant 0 : index
    %255 = vector.load %arg17[%c0_173, %c2_174, %c0_175] : memref<2x6x32xf32, #tpu.memory_space<vmem>>, vector<1x1x32xf32>
    %256 = vector.shape_cast %255 : vector<1x1x32xf32> to vector<1x32xf32>
    %c0_176 = arith.constant 0 : index
    %c3_177 = arith.constant 3 : index
    %c0_178 = arith.constant 0 : index
    %257 = vector.load %arg17[%c0_176, %c3_177, %c0_178] : memref<2x6x32xf32, #tpu.memory_space<vmem>>, vector<1x1x32xf32>
    %258 = vector.shape_cast %257 : vector<1x1x32xf32> to vector<1x32xf32>
    %cst_179 = arith.constant dense<0.000000e+00> : vector<16xf32>
    %259 = vector.multi_reduction <add>, %254, %cst_179 [1] : vector<16x32xf32> to vector<16xf32>
    %260 = vector.shape_cast %259 : vector<16xf32> to vector<16x1xf32>
    %cst_180 = arith.constant 3.200000e+01 : f32
    %261 = vector.broadcast %cst_180 : f32 to vector<16x1xf32>
    %262 = arith.divf %260, %261 : vector<16x1xf32>
    %263 = vector.broadcast %262 : vector<16x1xf32> to vector<16x32xf32>
    %264 = arith.subf %254, %263 : vector<16x32xf32>
    %265 = arith.mulf %264, %264 : vector<16x32xf32>
    %cst_181 = arith.constant dense<0.000000e+00> : vector<16xf32>
    %266 = vector.multi_reduction <add>, %265, %cst_181 [1] : vector<16x32xf32> to vector<16xf32>
    %267 = vector.shape_cast %266 : vector<16xf32> to vector<16x1xf32>
    %cst_182 = arith.constant 3.200000e+01 : f32
    %268 = vector.broadcast %cst_182 : f32 to vector<16x1xf32>
    %269 = arith.divf %267, %268 : vector<16x1xf32>
    %270 = vector.broadcast %262 : vector<16x1xf32> to vector<16x32xf32>
    %271 = arith.subf %254, %270 : vector<16x32xf32>
    %cst_183 = arith.constant 9.99999974E-6 : f32
    %272 = vector.broadcast %cst_183 : f32 to vector<16x1xf32>
    %273 = arith.addf %269, %272 : vector<16x1xf32>
    %274 = math.rsqrt %273 : vector<16x1xf32>
    %275 = vector.broadcast %274 : vector<16x1xf32> to vector<16x32xf32>
    %276 = arith.mulf %271, %275 : vector<16x32xf32>
    %277 = vector.broadcast %256 : vector<1x32xf32> to vector<16x32xf32>
    %278 = arith.mulf %276, %277 : vector<16x32xf32>
    %279 = vector.broadcast %258 : vector<1x32xf32> to vector<16x32xf32>
    %280 = arith.addf %278, %279 : vector<16x32xf32>
    %c0_184 = arith.constant 0 : index
    %c0_185 = arith.constant 0 : index
    %c0_186 = arith.constant 0 : index
    %281 = vector.load %arg13[%c0_184, %c0_185, %c0_186] : memref<2x32x64xf32, #tpu.memory_space<vmem>>, vector<1x32x64xf32>
    %282 = vector.shape_cast %281 : vector<1x32x64xf32> to vector<32x64xf32>
    %cst_187 = arith.constant dense<0.000000e+00> : vector<16x64xf32>
    %283 = tpu.matmul %280, %282, %cst_187 {dimension_numbers = #tpu.dot_dimension_numbers<[1], [0], [0], [1], [0, 0, 1, 1], [], []>} : vector<16x32xf32>, vector<32x64xf32>, vector<16x64xf32> -> vector<16x64xf32>
    %c0_188 = arith.constant 0 : index
    %c0_189 = arith.constant 0 : index
    %c0_190 = arith.constant 0 : index
    %284 = vector.load %arg14[%c0_188, %c0_189, %c0_190] : memref<2x1x64xf32, #tpu.memory_space<vmem>>, vector<1x1x64xf32>
    %285 = vector.shape_cast %284 : vector<1x1x64xf32> to vector<1x64xf32>
    %286 = vector.broadcast %285 : vector<1x64xf32> to vector<16x64xf32>
    %287 = arith.addf %283, %286 : vector<16x64xf32>
    %288 = arith.mulf %287, %287 : vector<16x64xf32>
    %289 = arith.mulf %287, %288 : vector<16x64xf32>
    %cst_191 = arith.constant 4.471500e-02 : f32
    %290 = vector.broadcast %cst_191 : f32 to vector<16x64xf32>
    %291 = arith.mulf %290, %289 : vector<16x64xf32>
    %292 = arith.addf %287, %291 : vector<16x64xf32>
    %cst_192 = arith.constant 0.797884583 : f32
    %293 = vector.broadcast %cst_192 : f32 to vector<16x64xf32>
    %294 = arith.mulf %293, %292 : vector<16x64xf32>
    %295 = math.tanh %294 : vector<16x64xf32>
    %cst_193 = arith.constant 1.000000e+00 : f32
    %296 = vector.broadcast %cst_193 : f32 to vector<16x64xf32>
    %297 = arith.addf %296, %295 : vector<16x64xf32>
    %cst_194 = arith.constant 5.000000e-01 : f32
    %298 = vector.broadcast %cst_194 : f32 to vector<16x64xf32>
    %299 = arith.mulf %298, %297 : vector<16x64xf32>
    %300 = arith.mulf %287, %299 : vector<16x64xf32>
    %c0_195 = arith.constant 0 : index
    %c0_196 = arith.constant 0 : index
    %c0_197 = arith.constant 0 : index
    %301 = vector.load %arg15[%c0_195, %c0_196, %c0_197] : memref<2x64x32xf32, #tpu.memory_space<vmem>>, vector<1x64x32xf32>
    %302 = vector.shape_cast %301 : vector<1x64x32xf32> to vector<64x32xf32>
    %cst_198 = arith.constant dense<0.000000e+00> : vector<16x32xf32>
    %303 = tpu.matmul %300, %302, %cst_198 {dimension_numbers = #tpu.dot_dimension_numbers<[1], [0], [0], [1], [0, 0, 1, 1], [], []>} : vector<16x64xf32>, vector<64x32xf32>, vector<16x32xf32> -> vector<16x32xf32>
    %c0_199 = arith.constant 0 : index
    %c0_200 = arith.constant 0 : index
    %c0_201 = arith.constant 0 : index
    %304 = vector.load %arg16[%c0_199, %c0_200, %c0_201] : memref<2x1x32xf32, #tpu.memory_space<vmem>>, vector<1x1x32xf32>
    %305 = vector.shape_cast %304 : vector<1x1x32xf32> to vector<1x32xf32>
    %306 = vector.broadcast %305 : vector<1x32xf32> to vector<16x32xf32>
    %307 = arith.addf %303, %306 : vector<16x32xf32>
    %308 = arith.addf %280, %307 : vector<16x32xf32>
    %c0_202 = arith.constant 0 : index
    %c4 = arith.constant 4 : index
    %c0_203 = arith.constant 0 : index
    %309 = vector.load %arg17[%c0_202, %c4, %c0_203] : memref<2x6x32xf32, #tpu.memory_space<vmem>>, vector<1x1x32xf32>
    %310 = vector.shape_cast %309 : vector<1x1x32xf32> to vector<1x32xf32>
    %c0_204 = arith.constant 0 : index
    %c5 = arith.constant 5 : index
    %c0_205 = arith.constant 0 : index
    %311 = vector.load %arg17[%c0_204, %c5, %c0_205] : memref<2x6x32xf32, #tpu.memory_space<vmem>>, vector<1x1x32xf32>
    %312 = vector.shape_cast %311 : vector<1x1x32xf32> to vector<1x32xf32>
    %cst_206 = arith.constant dense<0.000000e+00> : vector<16xf32>
    %313 = vector.multi_reduction <add>, %308, %cst_206 [1] : vector<16x32xf32> to vector<16xf32>
    %314 = vector.shape_cast %313 : vector<16xf32> to vector<16x1xf32>
    %cst_207 = arith.constant 3.200000e+01 : f32
    %315 = vector.broadcast %cst_207 : f32 to vector<16x1xf32>
    %316 = arith.divf %314, %315 : vector<16x1xf32>
    %317 = vector.broadcast %316 : vector<16x1xf32> to vector<16x32xf32>
    %318 = arith.subf %308, %317 : vector<16x32xf32>
    %319 = arith.mulf %318, %318 : vector<16x32xf32>
    %cst_208 = arith.constant dense<0.000000e+00> : vector<16xf32>
    %320 = vector.multi_reduction <add>, %319, %cst_208 [1] : vector<16x32xf32> to vector<16xf32>
    %321 = vector.shape_cast %320 : vector<16xf32> to vector<16x1xf32>
    %cst_209 = arith.constant 3.200000e+01 : f32
    %322 = vector.broadcast %cst_209 : f32 to vector<16x1xf32>
    %323 = arith.divf %321, %322 : vector<16x1xf32>
    %324 = vector.broadcast %316 : vector<16x1xf32> to vector<16x32xf32>
    %325 = arith.subf %308, %324 : vector<16x32xf32>
    %cst_210 = arith.constant 9.99999974E-6 : f32
    %326 = vector.broadcast %cst_210 : f32 to vector<16x1xf32>
    %327 = arith.addf %323, %326 : vector<16x1xf32>
    %328 = math.rsqrt %327 : vector<16x1xf32>
    %329 = vector.broadcast %328 : vector<16x1xf32> to vector<16x32xf32>
    %330 = arith.mulf %325, %329 : vector<16x32xf32>
    %331 = vector.broadcast %310 : vector<1x32xf32> to vector<16x32xf32>
    %332 = arith.mulf %330, %331 : vector<16x32xf32>
    %333 = vector.broadcast %312 : vector<1x32xf32> to vector<16x32xf32>
    %334 = arith.addf %332, %333 : vector<16x32xf32>
    %c1_211 = arith.constant 1 : index
    %c0_212 = arith.constant 0 : index
    %c0_213 = arith.constant 0 : index
    %335 = vector.load %arg8[%c1_211, %c0_212, %c0_213] : memref<2x1x32xf32, #tpu.memory_space<vmem>>, vector<1x1x32xf32>
    %336 = vector.shape_cast %335 : vector<1x1x32xf32> to vector<1x32xf32>
    %c1_214 = arith.constant 1 : index
    %c0_215 = arith.constant 0 : index
    %c0_216 = arith.constant 0 : index
    %c0_217 = arith.constant 0 : index
    %337 = vector.load %arg5[%c1_214, %c0_215, %c0_216, %c0_217] : memref<2x4x32x32xf32, #tpu.memory_space<vmem>>, vector<1x1x32x32xf32>
    %338 = vector.shape_cast %337 : vector<1x1x32x32xf32> to vector<32x32xf32>
    %cst_218 = arith.constant dense<0.000000e+00> : vector<16x32xf32>
    %339 = tpu.matmul %334, %338, %cst_218 {dimension_numbers = #tpu.dot_dimension_numbers<[1], [0], [0], [1], [0, 0, 1, 1], [], []>} : vector<16x32xf32>, vector<32x32xf32>, vector<16x32xf32> -> vector<16x32xf32>
    %c1_219 = arith.constant 1 : index
    %c0_220 = arith.constant 0 : index
    %c0_221 = arith.constant 0 : index
    %c0_222 = arith.constant 0 : index
    %340 = vector.load %arg6[%c1_219, %c0_220, %c0_221, %c0_222] : memref<2x4x1x32xf32, #tpu.memory_space<vmem>>, vector<1x1x1x32xf32>
    %341 = vector.shape_cast %340 : vector<1x1x1x32xf32> to vector<1x32xf32>
    %342 = vector.broadcast %341 : vector<1x32xf32> to vector<16x32xf32>
    %343 = arith.addf %339, %342 : vector<16x32xf32>
    %cst_223 = arith.constant dense<0.000000e+00> : vector<16x16xf32>
    %344 = tpu.matmul %343, %334, %cst_223 {dimension_numbers = #tpu.dot_dimension_numbers<[1], [1], [0], [0], [0, 0, 1, 0], [], []>} : vector<16x32xf32>, vector<16x32xf32>, vector<16x16xf32> -> vector<16x16xf32>
    %345 = arith.addf %344, %26 : vector<16x16xf32>
    %cst_224 = arith.constant dense<0xFF800000> : vector<16xf32>
    %346 = vector.multi_reduction <maximumf>, %345, %cst_224 [1] : vector<16x16xf32> to vector<16xf32>
    %347 = vector.shape_cast %346 : vector<16xf32> to vector<16x1xf32>
    %348 = vector.broadcast %347 : vector<16x1xf32> to vector<16x16xf32>
    %349 = arith.subf %345, %348 : vector<16x16xf32>
    %350 = math.exp %349 : vector<16x16xf32>
    %cst_225 = arith.constant dense<0.000000e+00> : vector<16xf32>
    %351 = vector.multi_reduction <add>, %350, %cst_225 [1] : vector<16x16xf32> to vector<16xf32>
    %352 = vector.shape_cast %351 : vector<16xf32> to vector<16x1xf32>
    %353 = tpu.reciprocal %352 {approx = true} : vector<16x1xf32> -> vector<16x1xf32>
    %354 = vector.broadcast %353 : vector<16x1xf32> to vector<16x16xf32>
    %355 = arith.mulf %350, %354 : vector<16x16xf32>
    %c1_226 = arith.constant 1 : index
    %c0_227 = arith.constant 0 : index
    %c0_228 = arith.constant 0 : index
    %c0_229 = arith.constant 0 : index
    %356 = vector.load %arg7[%c1_226, %c0_227, %c0_228, %c0_229] : memref<2x4x32x32xf32, #tpu.memory_space<vmem>>, vector<1x1x32x32xf32>
    %357 = vector.shape_cast %356 : vector<1x1x32x32xf32> to vector<32x32xf32>
    %cst_230 = arith.constant dense<0.000000e+00> : vector<16x32xf32>
    %358 = tpu.matmul %334, %357, %cst_230 {dimension_numbers = #tpu.dot_dimension_numbers<[1], [0], [0], [1], [0, 0, 1, 1], [], []>} : vector<16x32xf32>, vector<32x32xf32>, vector<16x32xf32> -> vector<16x32xf32>
    %cst_231 = arith.constant dense<0.000000e+00> : vector<16x32xf32>
    %359 = tpu.matmul %355, %358, %cst_231 {dimension_numbers = #tpu.dot_dimension_numbers<[1], [0], [0], [1], [0, 0, 1, 1], [], []>} : vector<16x16xf32>, vector<16x32xf32>, vector<16x32xf32> -> vector<16x32xf32>
    %360 = vector.broadcast %336 : vector<1x32xf32> to vector<16x32xf32>
    %361 = arith.addf %360, %359 : vector<16x32xf32>
    %c1_232 = arith.constant 1 : index
    %c1_233 = arith.constant 1 : index
    %c0_234 = arith.constant 0 : index
    %c0_235 = arith.constant 0 : index
    %362 = vector.load %arg5[%c1_232, %c1_233, %c0_234, %c0_235] : memref<2x4x32x32xf32, #tpu.memory_space<vmem>>, vector<1x1x32x32xf32>
    %363 = vector.shape_cast %362 : vector<1x1x32x32xf32> to vector<32x32xf32>
    %cst_236 = arith.constant dense<0.000000e+00> : vector<16x32xf32>
    %364 = tpu.matmul %334, %363, %cst_236 {dimension_numbers = #tpu.dot_dimension_numbers<[1], [0], [0], [1], [0, 0, 1, 1], [], []>} : vector<16x32xf32>, vector<32x32xf32>, vector<16x32xf32> -> vector<16x32xf32>
    %c1_237 = arith.constant 1 : index
    %c1_238 = arith.constant 1 : index
    %c0_239 = arith.constant 0 : index
    %c0_240 = arith.constant 0 : index
    %365 = vector.load %arg6[%c1_237, %c1_238, %c0_239, %c0_240] : memref<2x4x1x32xf32, #tpu.memory_space<vmem>>, vector<1x1x1x32xf32>
    %366 = vector.shape_cast %365 : vector<1x1x1x32xf32> to vector<1x32xf32>
    %367 = vector.broadcast %366 : vector<1x32xf32> to vector<16x32xf32>
    %368 = arith.addf %364, %367 : vector<16x32xf32>
    %cst_241 = arith.constant dense<0.000000e+00> : vector<16x16xf32>
    %369 = tpu.matmul %368, %334, %cst_241 {dimension_numbers = #tpu.dot_dimension_numbers<[1], [1], [0], [0], [0, 0, 1, 0], [], []>} : vector<16x32xf32>, vector<16x32xf32>, vector<16x16xf32> -> vector<16x16xf32>
    %370 = arith.addf %369, %26 : vector<16x16xf32>
    %cst_242 = arith.constant dense<0xFF800000> : vector<16xf32>
    %371 = vector.multi_reduction <maximumf>, %370, %cst_242 [1] : vector<16x16xf32> to vector<16xf32>
    %372 = vector.shape_cast %371 : vector<16xf32> to vector<16x1xf32>
    %373 = vector.broadcast %372 : vector<16x1xf32> to vector<16x16xf32>
    %374 = arith.subf %370, %373 : vector<16x16xf32>
    %375 = math.exp %374 : vector<16x16xf32>
    %cst_243 = arith.constant dense<0.000000e+00> : vector<16xf32>
    %376 = vector.multi_reduction <add>, %375, %cst_243 [1] : vector<16x16xf32> to vector<16xf32>
    %377 = vector.shape_cast %376 : vector<16xf32> to vector<16x1xf32>
    %378 = tpu.reciprocal %377 {approx = true} : vector<16x1xf32> -> vector<16x1xf32>
    %379 = vector.broadcast %378 : vector<16x1xf32> to vector<16x16xf32>
    %380 = arith.mulf %375, %379 : vector<16x16xf32>
    %c1_244 = arith.constant 1 : index
    %c1_245 = arith.constant 1 : index
    %c0_246 = arith.constant 0 : index
    %c0_247 = arith.constant 0 : index
    %381 = vector.load %arg7[%c1_244, %c1_245, %c0_246, %c0_247] : memref<2x4x32x32xf32, #tpu.memory_space<vmem>>, vector<1x1x32x32xf32>
    %382 = vector.shape_cast %381 : vector<1x1x32x32xf32> to vector<32x32xf32>
    %cst_248 = arith.constant dense<0.000000e+00> : vector<16x32xf32>
    %383 = tpu.matmul %334, %382, %cst_248 {dimension_numbers = #tpu.dot_dimension_numbers<[1], [0], [0], [1], [0, 0, 1, 1], [], []>} : vector<16x32xf32>, vector<32x32xf32>, vector<16x32xf32> -> vector<16x32xf32>
    %cst_249 = arith.constant dense<0.000000e+00> : vector<16x32xf32>
    %384 = tpu.matmul %380, %383, %cst_249 {dimension_numbers = #tpu.dot_dimension_numbers<[1], [0], [0], [1], [0, 0, 1, 1], [], []>} : vector<16x16xf32>, vector<16x32xf32>, vector<16x32xf32> -> vector<16x32xf32>
    %385 = arith.addf %361, %384 : vector<16x32xf32>
    %c1_250 = arith.constant 1 : index
    %c2_251 = arith.constant 2 : index
    %c0_252 = arith.constant 0 : index
    %c0_253 = arith.constant 0 : index
    %386 = vector.load %arg5[%c1_250, %c2_251, %c0_252, %c0_253] : memref<2x4x32x32xf32, #tpu.memory_space<vmem>>, vector<1x1x32x32xf32>
    %387 = vector.shape_cast %386 : vector<1x1x32x32xf32> to vector<32x32xf32>
    %cst_254 = arith.constant dense<0.000000e+00> : vector<16x32xf32>
    %388 = tpu.matmul %334, %387, %cst_254 {dimension_numbers = #tpu.dot_dimension_numbers<[1], [0], [0], [1], [0, 0, 1, 1], [], []>} : vector<16x32xf32>, vector<32x32xf32>, vector<16x32xf32> -> vector<16x32xf32>
    %c1_255 = arith.constant 1 : index
    %c2_256 = arith.constant 2 : index
    %c0_257 = arith.constant 0 : index
    %c0_258 = arith.constant 0 : index
    %389 = vector.load %arg6[%c1_255, %c2_256, %c0_257, %c0_258] : memref<2x4x1x32xf32, #tpu.memory_space<vmem>>, vector<1x1x1x32xf32>
    %390 = vector.shape_cast %389 : vector<1x1x1x32xf32> to vector<1x32xf32>
    %391 = vector.broadcast %390 : vector<1x32xf32> to vector<16x32xf32>
    %392 = arith.addf %388, %391 : vector<16x32xf32>
    %cst_259 = arith.constant dense<0.000000e+00> : vector<16x16xf32>
    %393 = tpu.matmul %392, %334, %cst_259 {dimension_numbers = #tpu.dot_dimension_numbers<[1], [1], [0], [0], [0, 0, 1, 0], [], []>} : vector<16x32xf32>, vector<16x32xf32>, vector<16x16xf32> -> vector<16x16xf32>
    %394 = arith.addf %393, %26 : vector<16x16xf32>
    %cst_260 = arith.constant dense<0xFF800000> : vector<16xf32>
    %395 = vector.multi_reduction <maximumf>, %394, %cst_260 [1] : vector<16x16xf32> to vector<16xf32>
    %396 = vector.shape_cast %395 : vector<16xf32> to vector<16x1xf32>
    %397 = vector.broadcast %396 : vector<16x1xf32> to vector<16x16xf32>
    %398 = arith.subf %394, %397 : vector<16x16xf32>
    %399 = math.exp %398 : vector<16x16xf32>
    %cst_261 = arith.constant dense<0.000000e+00> : vector<16xf32>
    %400 = vector.multi_reduction <add>, %399, %cst_261 [1] : vector<16x16xf32> to vector<16xf32>
    %401 = vector.shape_cast %400 : vector<16xf32> to vector<16x1xf32>
    %402 = tpu.reciprocal %401 {approx = true} : vector<16x1xf32> -> vector<16x1xf32>
    %403 = vector.broadcast %402 : vector<16x1xf32> to vector<16x16xf32>
    %404 = arith.mulf %399, %403 : vector<16x16xf32>
    %c1_262 = arith.constant 1 : index
    %c2_263 = arith.constant 2 : index
    %c0_264 = arith.constant 0 : index
    %c0_265 = arith.constant 0 : index
    %405 = vector.load %arg7[%c1_262, %c2_263, %c0_264, %c0_265] : memref<2x4x32x32xf32, #tpu.memory_space<vmem>>, vector<1x1x32x32xf32>
    %406 = vector.shape_cast %405 : vector<1x1x32x32xf32> to vector<32x32xf32>
    %cst_266 = arith.constant dense<0.000000e+00> : vector<16x32xf32>
    %407 = tpu.matmul %334, %406, %cst_266 {dimension_numbers = #tpu.dot_dimension_numbers<[1], [0], [0], [1], [0, 0, 1, 1], [], []>} : vector<16x32xf32>, vector<32x32xf32>, vector<16x32xf32> -> vector<16x32xf32>
    %cst_267 = arith.constant dense<0.000000e+00> : vector<16x32xf32>
    %408 = tpu.matmul %404, %407, %cst_267 {dimension_numbers = #tpu.dot_dimension_numbers<[1], [0], [0], [1], [0, 0, 1, 1], [], []>} : vector<16x16xf32>, vector<16x32xf32>, vector<16x32xf32> -> vector<16x32xf32>
    %409 = arith.addf %385, %408 : vector<16x32xf32>
    %c1_268 = arith.constant 1 : index
    %c3_269 = arith.constant 3 : index
    %c0_270 = arith.constant 0 : index
    %c0_271 = arith.constant 0 : index
    %410 = vector.load %arg5[%c1_268, %c3_269, %c0_270, %c0_271] : memref<2x4x32x32xf32, #tpu.memory_space<vmem>>, vector<1x1x32x32xf32>
    %411 = vector.shape_cast %410 : vector<1x1x32x32xf32> to vector<32x32xf32>
    %cst_272 = arith.constant dense<0.000000e+00> : vector<16x32xf32>
    %412 = tpu.matmul %334, %411, %cst_272 {dimension_numbers = #tpu.dot_dimension_numbers<[1], [0], [0], [1], [0, 0, 1, 1], [], []>} : vector<16x32xf32>, vector<32x32xf32>, vector<16x32xf32> -> vector<16x32xf32>
    %c1_273 = arith.constant 1 : index
    %c3_274 = arith.constant 3 : index
    %c0_275 = arith.constant 0 : index
    %c0_276 = arith.constant 0 : index
    %413 = vector.load %arg6[%c1_273, %c3_274, %c0_275, %c0_276] : memref<2x4x1x32xf32, #tpu.memory_space<vmem>>, vector<1x1x1x32xf32>
    %414 = vector.shape_cast %413 : vector<1x1x1x32xf32> to vector<1x32xf32>
    %415 = vector.broadcast %414 : vector<1x32xf32> to vector<16x32xf32>
    %416 = arith.addf %412, %415 : vector<16x32xf32>
    %cst_277 = arith.constant dense<0.000000e+00> : vector<16x16xf32>
    %417 = tpu.matmul %416, %334, %cst_277 {dimension_numbers = #tpu.dot_dimension_numbers<[1], [1], [0], [0], [0, 0, 1, 0], [], []>} : vector<16x32xf32>, vector<16x32xf32>, vector<16x16xf32> -> vector<16x16xf32>
    %418 = arith.addf %417, %26 : vector<16x16xf32>
    %cst_278 = arith.constant dense<0xFF800000> : vector<16xf32>
    %419 = vector.multi_reduction <maximumf>, %418, %cst_278 [1] : vector<16x16xf32> to vector<16xf32>
    %420 = vector.shape_cast %419 : vector<16xf32> to vector<16x1xf32>
    %421 = vector.broadcast %420 : vector<16x1xf32> to vector<16x16xf32>
    %422 = arith.subf %418, %421 : vector<16x16xf32>
    %423 = math.exp %422 : vector<16x16xf32>
    %cst_279 = arith.constant dense<0.000000e+00> : vector<16xf32>
    %424 = vector.multi_reduction <add>, %423, %cst_279 [1] : vector<16x16xf32> to vector<16xf32>
    %425 = vector.shape_cast %424 : vector<16xf32> to vector<16x1xf32>
    %426 = tpu.reciprocal %425 {approx = true} : vector<16x1xf32> -> vector<16x1xf32>
    %427 = vector.broadcast %426 : vector<16x1xf32> to vector<16x16xf32>
    %428 = arith.mulf %423, %427 : vector<16x16xf32>
    %c1_280 = arith.constant 1 : index
    %c3_281 = arith.constant 3 : index
    %c0_282 = arith.constant 0 : index
    %c0_283 = arith.constant 0 : index
    %429 = vector.load %arg7[%c1_280, %c3_281, %c0_282, %c0_283] : memref<2x4x32x32xf32, #tpu.memory_space<vmem>>, vector<1x1x32x32xf32>
    %430 = vector.shape_cast %429 : vector<1x1x32x32xf32> to vector<32x32xf32>
    %cst_284 = arith.constant dense<0.000000e+00> : vector<16x32xf32>
    %431 = tpu.matmul %334, %430, %cst_284 {dimension_numbers = #tpu.dot_dimension_numbers<[1], [0], [0], [1], [0, 0, 1, 1], [], []>} : vector<16x32xf32>, vector<32x32xf32>, vector<16x32xf32> -> vector<16x32xf32>
    %cst_285 = arith.constant dense<0.000000e+00> : vector<16x32xf32>
    %432 = tpu.matmul %428, %431, %cst_285 {dimension_numbers = #tpu.dot_dimension_numbers<[1], [0], [0], [1], [0, 0, 1, 1], [], []>} : vector<16x16xf32>, vector<16x32xf32>, vector<16x32xf32> -> vector<16x32xf32>
    %433 = arith.addf %409, %432 : vector<16x32xf32>
    %434 = arith.addf %334, %433 : vector<16x32xf32>
    %c1_286 = arith.constant 1 : index
    %c0_287 = arith.constant 0 : index
    %c0_288 = arith.constant 0 : index
    %435 = vector.load %arg17[%c1_286, %c0_287, %c0_288] : memref<2x6x32xf32, #tpu.memory_space<vmem>>, vector<1x1x32xf32>
    %436 = vector.shape_cast %435 : vector<1x1x32xf32> to vector<1x32xf32>
    %c1_289 = arith.constant 1 : index
    %c1_290 = arith.constant 1 : index
    %c0_291 = arith.constant 0 : index
    %437 = vector.load %arg17[%c1_289, %c1_290, %c0_291] : memref<2x6x32xf32, #tpu.memory_space<vmem>>, vector<1x1x32xf32>
    %438 = vector.shape_cast %437 : vector<1x1x32xf32> to vector<1x32xf32>
    %cst_292 = arith.constant dense<0.000000e+00> : vector<16xf32>
    %439 = vector.multi_reduction <add>, %434, %cst_292 [1] : vector<16x32xf32> to vector<16xf32>
    %440 = vector.shape_cast %439 : vector<16xf32> to vector<16x1xf32>
    %cst_293 = arith.constant 3.200000e+01 : f32
    %441 = vector.broadcast %cst_293 : f32 to vector<16x1xf32>
    %442 = arith.divf %440, %441 : vector<16x1xf32>
    %443 = vector.broadcast %442 : vector<16x1xf32> to vector<16x32xf32>
    %444 = arith.subf %434, %443 : vector<16x32xf32>
    %445 = arith.mulf %444, %444 : vector<16x32xf32>
    %cst_294 = arith.constant dense<0.000000e+00> : vector<16xf32>
    %446 = vector.multi_reduction <add>, %445, %cst_294 [1] : vector<16x32xf32> to vector<16xf32>
    %447 = vector.shape_cast %446 : vector<16xf32> to vector<16x1xf32>
    %cst_295 = arith.constant 3.200000e+01 : f32
    %448 = vector.broadcast %cst_295 : f32 to vector<16x1xf32>
    %449 = arith.divf %447, %448 : vector<16x1xf32>
    %450 = vector.broadcast %442 : vector<16x1xf32> to vector<16x32xf32>
    %451 = arith.subf %434, %450 : vector<16x32xf32>
    %cst_296 = arith.constant 9.99999974E-6 : f32
    %452 = vector.broadcast %cst_296 : f32 to vector<16x1xf32>
    %453 = arith.addf %449, %452 : vector<16x1xf32>
    %454 = math.rsqrt %453 : vector<16x1xf32>
    %455 = vector.broadcast %454 : vector<16x1xf32> to vector<16x32xf32>
    %456 = arith.mulf %451, %455 : vector<16x32xf32>
    %457 = vector.broadcast %436 : vector<1x32xf32> to vector<16x32xf32>
    %458 = arith.mulf %456, %457 : vector<16x32xf32>
    %459 = vector.broadcast %438 : vector<1x32xf32> to vector<16x32xf32>
    %460 = arith.addf %458, %459 : vector<16x32xf32>
    %c1_297 = arith.constant 1 : index
    %c0_298 = arith.constant 0 : index
    %c0_299 = arith.constant 0 : index
    %461 = vector.load %arg12[%c1_297, %c0_298, %c0_299] : memref<2x1x32xf32, #tpu.memory_space<vmem>>, vector<1x1x32xf32>
    %462 = vector.shape_cast %461 : vector<1x1x32xf32> to vector<1x32xf32>
    %c1_300 = arith.constant 1 : index
    %c0_301 = arith.constant 0 : index
    %c0_302 = arith.constant 0 : index
    %c0_303 = arith.constant 0 : index
    %463 = vector.load %arg9[%c1_300, %c0_301, %c0_302, %c0_303] : memref<2x4x32x32xf32, #tpu.memory_space<vmem>>, vector<1x1x32x32xf32>
    %464 = vector.shape_cast %463 : vector<1x1x32x32xf32> to vector<32x32xf32>
    %cst_304 = arith.constant dense<0.000000e+00> : vector<16x32xf32>
    %465 = tpu.matmul %460, %464, %cst_304 {dimension_numbers = #tpu.dot_dimension_numbers<[1], [0], [0], [1], [0, 0, 1, 1], [], []>} : vector<16x32xf32>, vector<32x32xf32>, vector<16x32xf32> -> vector<16x32xf32>
    %c1_305 = arith.constant 1 : index
    %c0_306 = arith.constant 0 : index
    %c0_307 = arith.constant 0 : index
    %c0_308 = arith.constant 0 : index
    %466 = vector.load %arg10[%c1_305, %c0_306, %c0_307, %c0_308] : memref<2x4x1x32xf32, #tpu.memory_space<vmem>>, vector<1x1x1x32xf32>
    %467 = vector.shape_cast %466 : vector<1x1x1x32xf32> to vector<1x32xf32>
    %468 = vector.broadcast %467 : vector<1x32xf32> to vector<16x32xf32>
    %469 = arith.addf %465, %468 : vector<16x32xf32>
    %cst_309 = arith.constant dense<0.000000e+00> : vector<16x32xf32>
    %470 = tpu.matmul %469, %25, %cst_309 {dimension_numbers = #tpu.dot_dimension_numbers<[1], [1], [0], [0], [0, 0, 1, 0], [], []>} : vector<16x32xf32>, vector<32x32xf32>, vector<16x32xf32> -> vector<16x32xf32>
    %471 = arith.addf %470, %28 : vector<16x32xf32>
    %cst_310 = arith.constant dense<0xFF800000> : vector<16xf32>
    %472 = vector.multi_reduction <maximumf>, %471, %cst_310 [1] : vector<16x32xf32> to vector<16xf32>
    %473 = vector.shape_cast %472 : vector<16xf32> to vector<16x1xf32>
    %474 = vector.broadcast %473 : vector<16x1xf32> to vector<16x32xf32>
    %475 = arith.subf %471, %474 : vector<16x32xf32>
    %476 = math.exp %475 : vector<16x32xf32>
    %cst_311 = arith.constant dense<0.000000e+00> : vector<16xf32>
    %477 = vector.multi_reduction <add>, %476, %cst_311 [1] : vector<16x32xf32> to vector<16xf32>
    %478 = vector.shape_cast %477 : vector<16xf32> to vector<16x1xf32>
    %479 = tpu.reciprocal %478 {approx = true} : vector<16x1xf32> -> vector<16x1xf32>
    %480 = vector.broadcast %479 : vector<16x1xf32> to vector<16x32xf32>
    %481 = arith.mulf %476, %480 : vector<16x32xf32>
    %c1_312 = arith.constant 1 : index
    %c0_313 = arith.constant 0 : index
    %c0_314 = arith.constant 0 : index
    %c0_315 = arith.constant 0 : index
    %482 = vector.load %arg11[%c1_312, %c0_313, %c0_314, %c0_315] : memref<2x4x32x32xf32, #tpu.memory_space<vmem>>, vector<1x1x32x32xf32>
    %483 = vector.shape_cast %482 : vector<1x1x32x32xf32> to vector<32x32xf32>
    %cst_316 = arith.constant dense<0.000000e+00> : vector<32x32xf32>
    %484 = tpu.matmul %25, %483, %cst_316 {dimension_numbers = #tpu.dot_dimension_numbers<[1], [0], [0], [1], [0, 0, 1, 1], [], []>} : vector<32x32xf32>, vector<32x32xf32>, vector<32x32xf32> -> vector<32x32xf32>
    %cst_317 = arith.constant dense<0.000000e+00> : vector<16x32xf32>
    %485 = tpu.matmul %481, %484, %cst_317 {dimension_numbers = #tpu.dot_dimension_numbers<[1], [0], [0], [1], [0, 0, 1, 1], [], []>} : vector<16x32xf32>, vector<32x32xf32>, vector<16x32xf32> -> vector<16x32xf32>
    %486 = vector.broadcast %462 : vector<1x32xf32> to vector<16x32xf32>
    %487 = arith.addf %486, %485 : vector<16x32xf32>
    %c1_318 = arith.constant 1 : index
    %c1_319 = arith.constant 1 : index
    %c0_320 = arith.constant 0 : index
    %c0_321 = arith.constant 0 : index
    %488 = vector.load %arg9[%c1_318, %c1_319, %c0_320, %c0_321] : memref<2x4x32x32xf32, #tpu.memory_space<vmem>>, vector<1x1x32x32xf32>
    %489 = vector.shape_cast %488 : vector<1x1x32x32xf32> to vector<32x32xf32>
    %cst_322 = arith.constant dense<0.000000e+00> : vector<16x32xf32>
    %490 = tpu.matmul %460, %489, %cst_322 {dimension_numbers = #tpu.dot_dimension_numbers<[1], [0], [0], [1], [0, 0, 1, 1], [], []>} : vector<16x32xf32>, vector<32x32xf32>, vector<16x32xf32> -> vector<16x32xf32>
    %c1_323 = arith.constant 1 : index
    %c1_324 = arith.constant 1 : index
    %c0_325 = arith.constant 0 : index
    %c0_326 = arith.constant 0 : index
    %491 = vector.load %arg10[%c1_323, %c1_324, %c0_325, %c0_326] : memref<2x4x1x32xf32, #tpu.memory_space<vmem>>, vector<1x1x1x32xf32>
    %492 = vector.shape_cast %491 : vector<1x1x1x32xf32> to vector<1x32xf32>
    %493 = vector.broadcast %492 : vector<1x32xf32> to vector<16x32xf32>
    %494 = arith.addf %490, %493 : vector<16x32xf32>
    %cst_327 = arith.constant dense<0.000000e+00> : vector<16x32xf32>
    %495 = tpu.matmul %494, %25, %cst_327 {dimension_numbers = #tpu.dot_dimension_numbers<[1], [1], [0], [0], [0, 0, 1, 0], [], []>} : vector<16x32xf32>, vector<32x32xf32>, vector<16x32xf32> -> vector<16x32xf32>
    %496 = arith.addf %495, %28 : vector<16x32xf32>
    %cst_328 = arith.constant dense<0xFF800000> : vector<16xf32>
    %497 = vector.multi_reduction <maximumf>, %496, %cst_328 [1] : vector<16x32xf32> to vector<16xf32>
    %498 = vector.shape_cast %497 : vector<16xf32> to vector<16x1xf32>
    %499 = vector.broadcast %498 : vector<16x1xf32> to vector<16x32xf32>
    %500 = arith.subf %496, %499 : vector<16x32xf32>
    %501 = math.exp %500 : vector<16x32xf32>
    %cst_329 = arith.constant dense<0.000000e+00> : vector<16xf32>
    %502 = vector.multi_reduction <add>, %501, %cst_329 [1] : vector<16x32xf32> to vector<16xf32>
    %503 = vector.shape_cast %502 : vector<16xf32> to vector<16x1xf32>
    %504 = tpu.reciprocal %503 {approx = true} : vector<16x1xf32> -> vector<16x1xf32>
    %505 = vector.broadcast %504 : vector<16x1xf32> to vector<16x32xf32>
    %506 = arith.mulf %501, %505 : vector<16x32xf32>
    %c1_330 = arith.constant 1 : index
    %c1_331 = arith.constant 1 : index
    %c0_332 = arith.constant 0 : index
    %c0_333 = arith.constant 0 : index
    %507 = vector.load %arg11[%c1_330, %c1_331, %c0_332, %c0_333] : memref<2x4x32x32xf32, #tpu.memory_space<vmem>>, vector<1x1x32x32xf32>
    %508 = vector.shape_cast %507 : vector<1x1x32x32xf32> to vector<32x32xf32>
    %cst_334 = arith.constant dense<0.000000e+00> : vector<32x32xf32>
    %509 = tpu.matmul %25, %508, %cst_334 {dimension_numbers = #tpu.dot_dimension_numbers<[1], [0], [0], [1], [0, 0, 1, 1], [], []>} : vector<32x32xf32>, vector<32x32xf32>, vector<32x32xf32> -> vector<32x32xf32>
    %cst_335 = arith.constant dense<0.000000e+00> : vector<16x32xf32>
    %510 = tpu.matmul %506, %509, %cst_335 {dimension_numbers = #tpu.dot_dimension_numbers<[1], [0], [0], [1], [0, 0, 1, 1], [], []>} : vector<16x32xf32>, vector<32x32xf32>, vector<16x32xf32> -> vector<16x32xf32>
    %511 = arith.addf %487, %510 : vector<16x32xf32>
    %c1_336 = arith.constant 1 : index
    %c2_337 = arith.constant 2 : index
    %c0_338 = arith.constant 0 : index
    %c0_339 = arith.constant 0 : index
    %512 = vector.load %arg9[%c1_336, %c2_337, %c0_338, %c0_339] : memref<2x4x32x32xf32, #tpu.memory_space<vmem>>, vector<1x1x32x32xf32>
    %513 = vector.shape_cast %512 : vector<1x1x32x32xf32> to vector<32x32xf32>
    %cst_340 = arith.constant dense<0.000000e+00> : vector<16x32xf32>
    %514 = tpu.matmul %460, %513, %cst_340 {dimension_numbers = #tpu.dot_dimension_numbers<[1], [0], [0], [1], [0, 0, 1, 1], [], []>} : vector<16x32xf32>, vector<32x32xf32>, vector<16x32xf32> -> vector<16x32xf32>
    %c1_341 = arith.constant 1 : index
    %c2_342 = arith.constant 2 : index
    %c0_343 = arith.constant 0 : index
    %c0_344 = arith.constant 0 : index
    %515 = vector.load %arg10[%c1_341, %c2_342, %c0_343, %c0_344] : memref<2x4x1x32xf32, #tpu.memory_space<vmem>>, vector<1x1x1x32xf32>
    %516 = vector.shape_cast %515 : vector<1x1x1x32xf32> to vector<1x32xf32>
    %517 = vector.broadcast %516 : vector<1x32xf32> to vector<16x32xf32>
    %518 = arith.addf %514, %517 : vector<16x32xf32>
    %cst_345 = arith.constant dense<0.000000e+00> : vector<16x32xf32>
    %519 = tpu.matmul %518, %25, %cst_345 {dimension_numbers = #tpu.dot_dimension_numbers<[1], [1], [0], [0], [0, 0, 1, 0], [], []>} : vector<16x32xf32>, vector<32x32xf32>, vector<16x32xf32> -> vector<16x32xf32>
    %520 = arith.addf %519, %28 : vector<16x32xf32>
    %cst_346 = arith.constant dense<0xFF800000> : vector<16xf32>
    %521 = vector.multi_reduction <maximumf>, %520, %cst_346 [1] : vector<16x32xf32> to vector<16xf32>
    %522 = vector.shape_cast %521 : vector<16xf32> to vector<16x1xf32>
    %523 = vector.broadcast %522 : vector<16x1xf32> to vector<16x32xf32>
    %524 = arith.subf %520, %523 : vector<16x32xf32>
    %525 = math.exp %524 : vector<16x32xf32>
    %cst_347 = arith.constant dense<0.000000e+00> : vector<16xf32>
    %526 = vector.multi_reduction <add>, %525, %cst_347 [1] : vector<16x32xf32> to vector<16xf32>
    %527 = vector.shape_cast %526 : vector<16xf32> to vector<16x1xf32>
    %528 = tpu.reciprocal %527 {approx = true} : vector<16x1xf32> -> vector<16x1xf32>
    %529 = vector.broadcast %528 : vector<16x1xf32> to vector<16x32xf32>
    %530 = arith.mulf %525, %529 : vector<16x32xf32>
    %c1_348 = arith.constant 1 : index
    %c2_349 = arith.constant 2 : index
    %c0_350 = arith.constant 0 : index
    %c0_351 = arith.constant 0 : index
    %531 = vector.load %arg11[%c1_348, %c2_349, %c0_350, %c0_351] : memref<2x4x32x32xf32, #tpu.memory_space<vmem>>, vector<1x1x32x32xf32>
    %532 = vector.shape_cast %531 : vector<1x1x32x32xf32> to vector<32x32xf32>
    %cst_352 = arith.constant dense<0.000000e+00> : vector<32x32xf32>
    %533 = tpu.matmul %25, %532, %cst_352 {dimension_numbers = #tpu.dot_dimension_numbers<[1], [0], [0], [1], [0, 0, 1, 1], [], []>} : vector<32x32xf32>, vector<32x32xf32>, vector<32x32xf32> -> vector<32x32xf32>
    %cst_353 = arith.constant dense<0.000000e+00> : vector<16x32xf32>
    %534 = tpu.matmul %530, %533, %cst_353 {dimension_numbers = #tpu.dot_dimension_numbers<[1], [0], [0], [1], [0, 0, 1, 1], [], []>} : vector<16x32xf32>, vector<32x32xf32>, vector<16x32xf32> -> vector<16x32xf32>
    %535 = arith.addf %511, %534 : vector<16x32xf32>
    %c1_354 = arith.constant 1 : index
    %c3_355 = arith.constant 3 : index
    %c0_356 = arith.constant 0 : index
    %c0_357 = arith.constant 0 : index
    %536 = vector.load %arg9[%c1_354, %c3_355, %c0_356, %c0_357] : memref<2x4x32x32xf32, #tpu.memory_space<vmem>>, vector<1x1x32x32xf32>
    %537 = vector.shape_cast %536 : vector<1x1x32x32xf32> to vector<32x32xf32>
    %cst_358 = arith.constant dense<0.000000e+00> : vector<16x32xf32>
    %538 = tpu.matmul %460, %537, %cst_358 {dimension_numbers = #tpu.dot_dimension_numbers<[1], [0], [0], [1], [0, 0, 1, 1], [], []>} : vector<16x32xf32>, vector<32x32xf32>, vector<16x32xf32> -> vector<16x32xf32>
    %c1_359 = arith.constant 1 : index
    %c3_360 = arith.constant 3 : index
    %c0_361 = arith.constant 0 : index
    %c0_362 = arith.constant 0 : index
    %539 = vector.load %arg10[%c1_359, %c3_360, %c0_361, %c0_362] : memref<2x4x1x32xf32, #tpu.memory_space<vmem>>, vector<1x1x1x32xf32>
    %540 = vector.shape_cast %539 : vector<1x1x1x32xf32> to vector<1x32xf32>
    %541 = vector.broadcast %540 : vector<1x32xf32> to vector<16x32xf32>
    %542 = arith.addf %538, %541 : vector<16x32xf32>
    %cst_363 = arith.constant dense<0.000000e+00> : vector<16x32xf32>
    %543 = tpu.matmul %542, %25, %cst_363 {dimension_numbers = #tpu.dot_dimension_numbers<[1], [1], [0], [0], [0, 0, 1, 0], [], []>} : vector<16x32xf32>, vector<32x32xf32>, vector<16x32xf32> -> vector<16x32xf32>
    %544 = arith.addf %543, %28 : vector<16x32xf32>
    %cst_364 = arith.constant dense<0xFF800000> : vector<16xf32>
    %545 = vector.multi_reduction <maximumf>, %544, %cst_364 [1] : vector<16x32xf32> to vector<16xf32>
    %546 = vector.shape_cast %545 : vector<16xf32> to vector<16x1xf32>
    %547 = vector.broadcast %546 : vector<16x1xf32> to vector<16x32xf32>
    %548 = arith.subf %544, %547 : vector<16x32xf32>
    %549 = math.exp %548 : vector<16x32xf32>
    %cst_365 = arith.constant dense<0.000000e+00> : vector<16xf32>
    %550 = vector.multi_reduction <add>, %549, %cst_365 [1] : vector<16x32xf32> to vector<16xf32>
    %551 = vector.shape_cast %550 : vector<16xf32> to vector<16x1xf32>
    %552 = tpu.reciprocal %551 {approx = true} : vector<16x1xf32> -> vector<16x1xf32>
    %553 = vector.broadcast %552 : vector<16x1xf32> to vector<16x32xf32>
    %554 = arith.mulf %549, %553 : vector<16x32xf32>
    %c1_366 = arith.constant 1 : index
    %c3_367 = arith.constant 3 : index
    %c0_368 = arith.constant 0 : index
    %c0_369 = arith.constant 0 : index
    %555 = vector.load %arg11[%c1_366, %c3_367, %c0_368, %c0_369] : memref<2x4x32x32xf32, #tpu.memory_space<vmem>>, vector<1x1x32x32xf32>
    %556 = vector.shape_cast %555 : vector<1x1x32x32xf32> to vector<32x32xf32>
    %cst_370 = arith.constant dense<0.000000e+00> : vector<32x32xf32>
    %557 = tpu.matmul %25, %556, %cst_370 {dimension_numbers = #tpu.dot_dimension_numbers<[1], [0], [0], [1], [0, 0, 1, 1], [], []>} : vector<32x32xf32>, vector<32x32xf32>, vector<32x32xf32> -> vector<32x32xf32>
    %cst_371 = arith.constant dense<0.000000e+00> : vector<16x32xf32>
    %558 = tpu.matmul %554, %557, %cst_371 {dimension_numbers = #tpu.dot_dimension_numbers<[1], [0], [0], [1], [0, 0, 1, 1], [], []>} : vector<16x32xf32>, vector<32x32xf32>, vector<16x32xf32> -> vector<16x32xf32>
    %559 = arith.addf %535, %558 : vector<16x32xf32>
    %560 = arith.addf %460, %559 : vector<16x32xf32>
    %c1_372 = arith.constant 1 : index
    %c2_373 = arith.constant 2 : index
    %c0_374 = arith.constant 0 : index
    %561 = vector.load %arg17[%c1_372, %c2_373, %c0_374] : memref<2x6x32xf32, #tpu.memory_space<vmem>>, vector<1x1x32xf32>
    %562 = vector.shape_cast %561 : vector<1x1x32xf32> to vector<1x32xf32>
    %c1_375 = arith.constant 1 : index
    %c3_376 = arith.constant 3 : index
    %c0_377 = arith.constant 0 : index
    %563 = vector.load %arg17[%c1_375, %c3_376, %c0_377] : memref<2x6x32xf32, #tpu.memory_space<vmem>>, vector<1x1x32xf32>
    %564 = vector.shape_cast %563 : vector<1x1x32xf32> to vector<1x32xf32>
    %cst_378 = arith.constant dense<0.000000e+00> : vector<16xf32>
    %565 = vector.multi_reduction <add>, %560, %cst_378 [1] : vector<16x32xf32> to vector<16xf32>
    %566 = vector.shape_cast %565 : vector<16xf32> to vector<16x1xf32>
    %cst_379 = arith.constant 3.200000e+01 : f32
    %567 = vector.broadcast %cst_379 : f32 to vector<16x1xf32>
    %568 = arith.divf %566, %567 : vector<16x1xf32>
    %569 = vector.broadcast %568 : vector<16x1xf32> to vector<16x32xf32>
    %570 = arith.subf %560, %569 : vector<16x32xf32>
    %571 = arith.mulf %570, %570 : vector<16x32xf32>
    %cst_380 = arith.constant dense<0.000000e+00> : vector<16xf32>
    %572 = vector.multi_reduction <add>, %571, %cst_380 [1] : vector<16x32xf32> to vector<16xf32>
    %573 = vector.shape_cast %572 : vector<16xf32> to vector<16x1xf32>
    %cst_381 = arith.constant 3.200000e+01 : f32
    %574 = vector.broadcast %cst_381 : f32 to vector<16x1xf32>
    %575 = arith.divf %573, %574 : vector<16x1xf32>
    %576 = vector.broadcast %568 : vector<16x1xf32> to vector<16x32xf32>
    %577 = arith.subf %560, %576 : vector<16x32xf32>
    %cst_382 = arith.constant 9.99999974E-6 : f32
    %578 = vector.broadcast %cst_382 : f32 to vector<16x1xf32>
    %579 = arith.addf %575, %578 : vector<16x1xf32>
    %580 = math.rsqrt %579 : vector<16x1xf32>
    %581 = vector.broadcast %580 : vector<16x1xf32> to vector<16x32xf32>
    %582 = arith.mulf %577, %581 : vector<16x32xf32>
    %583 = vector.broadcast %562 : vector<1x32xf32> to vector<16x32xf32>
    %584 = arith.mulf %582, %583 : vector<16x32xf32>
    %585 = vector.broadcast %564 : vector<1x32xf32> to vector<16x32xf32>
    %586 = arith.addf %584, %585 : vector<16x32xf32>
    %c1_383 = arith.constant 1 : index
    %c0_384 = arith.constant 0 : index
    %c0_385 = arith.constant 0 : index
    %587 = vector.load %arg13[%c1_383, %c0_384, %c0_385] : memref<2x32x64xf32, #tpu.memory_space<vmem>>, vector<1x32x64xf32>
    %588 = vector.shape_cast %587 : vector<1x32x64xf32> to vector<32x64xf32>
    %cst_386 = arith.constant dense<0.000000e+00> : vector<16x64xf32>
    %589 = tpu.matmul %586, %588, %cst_386 {dimension_numbers = #tpu.dot_dimension_numbers<[1], [0], [0], [1], [0, 0, 1, 1], [], []>} : vector<16x32xf32>, vector<32x64xf32>, vector<16x64xf32> -> vector<16x64xf32>
    %c1_387 = arith.constant 1 : index
    %c0_388 = arith.constant 0 : index
    %c0_389 = arith.constant 0 : index
    %590 = vector.load %arg14[%c1_387, %c0_388, %c0_389] : memref<2x1x64xf32, #tpu.memory_space<vmem>>, vector<1x1x64xf32>
    %591 = vector.shape_cast %590 : vector<1x1x64xf32> to vector<1x64xf32>
    %592 = vector.broadcast %591 : vector<1x64xf32> to vector<16x64xf32>
    %593 = arith.addf %589, %592 : vector<16x64xf32>
    %594 = arith.mulf %593, %593 : vector<16x64xf32>
    %595 = arith.mulf %593, %594 : vector<16x64xf32>
    %cst_390 = arith.constant 4.471500e-02 : f32
    %596 = vector.broadcast %cst_390 : f32 to vector<16x64xf32>
    %597 = arith.mulf %596, %595 : vector<16x64xf32>
    %598 = arith.addf %593, %597 : vector<16x64xf32>
    %cst_391 = arith.constant 0.797884583 : f32
    %599 = vector.broadcast %cst_391 : f32 to vector<16x64xf32>
    %600 = arith.mulf %599, %598 : vector<16x64xf32>
    %601 = math.tanh %600 : vector<16x64xf32>
    %cst_392 = arith.constant 1.000000e+00 : f32
    %602 = vector.broadcast %cst_392 : f32 to vector<16x64xf32>
    %603 = arith.addf %602, %601 : vector<16x64xf32>
    %cst_393 = arith.constant 5.000000e-01 : f32
    %604 = vector.broadcast %cst_393 : f32 to vector<16x64xf32>
    %605 = arith.mulf %604, %603 : vector<16x64xf32>
    %606 = arith.mulf %593, %605 : vector<16x64xf32>
    %c1_394 = arith.constant 1 : index
    %c0_395 = arith.constant 0 : index
    %c0_396 = arith.constant 0 : index
    %607 = vector.load %arg15[%c1_394, %c0_395, %c0_396] : memref<2x64x32xf32, #tpu.memory_space<vmem>>, vector<1x64x32xf32>
    %608 = vector.shape_cast %607 : vector<1x64x32xf32> to vector<64x32xf32>
    %cst_397 = arith.constant dense<0.000000e+00> : vector<16x32xf32>
    %609 = tpu.matmul %606, %608, %cst_397 {dimension_numbers = #tpu.dot_dimension_numbers<[1], [0], [0], [1], [0, 0, 1, 1], [], []>} : vector<16x64xf32>, vector<64x32xf32>, vector<16x32xf32> -> vector<16x32xf32>
    %c1_398 = arith.constant 1 : index
    %c0_399 = arith.constant 0 : index
    %c0_400 = arith.constant 0 : index
    %610 = vector.load %arg16[%c1_398, %c0_399, %c0_400] : memref<2x1x32xf32, #tpu.memory_space<vmem>>, vector<1x1x32xf32>
    %611 = vector.shape_cast %610 : vector<1x1x32xf32> to vector<1x32xf32>
    %612 = vector.broadcast %611 : vector<1x32xf32> to vector<16x32xf32>
    %613 = arith.addf %609, %612 : vector<16x32xf32>
    %614 = arith.addf %586, %613 : vector<16x32xf32>
    %c1_401 = arith.constant 1 : index
    %c4_402 = arith.constant 4 : index
    %c0_403 = arith.constant 0 : index
    %615 = vector.load %arg17[%c1_401, %c4_402, %c0_403] : memref<2x6x32xf32, #tpu.memory_space<vmem>>, vector<1x1x32xf32>
    %616 = vector.shape_cast %615 : vector<1x1x32xf32> to vector<1x32xf32>
    %c1_404 = arith.constant 1 : index
    %c5_405 = arith.constant 5 : index
    %c0_406 = arith.constant 0 : index
    %617 = vector.load %arg17[%c1_404, %c5_405, %c0_406] : memref<2x6x32xf32, #tpu.memory_space<vmem>>, vector<1x1x32xf32>
    %618 = vector.shape_cast %617 : vector<1x1x32xf32> to vector<1x32xf32>
    %cst_407 = arith.constant dense<0.000000e+00> : vector<16xf32>
    %619 = vector.multi_reduction <add>, %614, %cst_407 [1] : vector<16x32xf32> to vector<16xf32>
    %620 = vector.shape_cast %619 : vector<16xf32> to vector<16x1xf32>
    %cst_408 = arith.constant 3.200000e+01 : f32
    %621 = vector.broadcast %cst_408 : f32 to vector<16x1xf32>
    %622 = arith.divf %620, %621 : vector<16x1xf32>
    %623 = vector.broadcast %622 : vector<16x1xf32> to vector<16x32xf32>
    %624 = arith.subf %614, %623 : vector<16x32xf32>
    %625 = arith.mulf %624, %624 : vector<16x32xf32>
    %cst_409 = arith.constant dense<0.000000e+00> : vector<16xf32>
    %626 = vector.multi_reduction <add>, %625, %cst_409 [1] : vector<16x32xf32> to vector<16xf32>
    %627 = vector.shape_cast %626 : vector<16xf32> to vector<16x1xf32>
    %cst_410 = arith.constant 3.200000e+01 : f32
    %628 = vector.broadcast %cst_410 : f32 to vector<16x1xf32>
    %629 = arith.divf %627, %628 : vector<16x1xf32>
    %630 = vector.broadcast %622 : vector<16x1xf32> to vector<16x32xf32>
    %631 = arith.subf %614, %630 : vector<16x32xf32>
    %cst_411 = arith.constant 9.99999974E-6 : f32
    %632 = vector.broadcast %cst_411 : f32 to vector<16x1xf32>
    %633 = arith.addf %629, %632 : vector<16x1xf32>
    %634 = math.rsqrt %633 : vector<16x1xf32>
    %635 = vector.broadcast %634 : vector<16x1xf32> to vector<16x32xf32>
    %636 = arith.mulf %631, %635 : vector<16x32xf32>
    %637 = vector.broadcast %616 : vector<1x32xf32> to vector<16x32xf32>
    %638 = arith.mulf %636, %637 : vector<16x32xf32>
    %639 = vector.broadcast %618 : vector<1x32xf32> to vector<16x32xf32>
    %640 = arith.addf %638, %639 : vector<16x32xf32>
    %c0_412 = arith.constant 0 : index
    %c0_413 = arith.constant 0 : index
    %641 = vector.load %arg18[%c0_412, %c0_413] : memref<16x32xf32, #tpu.memory_space<vmem>>, vector<16x32xf32>
    tpu.vector_store %arg18[%c0_412, %c0_413], %640 {strides = array<i32>} : memref<16x32xf32, #tpu.memory_space<vmem>>, vector<16x32xf32>,
    return
  }
}

</mosaic_0001>

<llo_original>
// kernel: eq.28
$region0: #{eq.28}
  %s0 = inlined_call_operand.vmem [shape: s32[2,16], index: 0, kind: input, shape index: {}]
  %s1 = inlined_call_operand.vmem [shape: s32[32], index: 1, kind: output, shape index: {}]
  $region1: #{eq.28} parent=0
    #allocation0 [shape = 'u8[4096]{0}', space=vmem, size = 0x1000, scoped, tag = 'scoped mem for output reshape']
    #allocation1 [shape = 'u8[4096]{0}', space=vmem, size = 0x1000, scoped, tag = 'scoped mem for input reshape']
    %s3 = sshllo.u32 0, 2
    %v4 = vld [vmem:[%s0] sm:%s3]
    %5 = vst [vmem:[#allocation1] sm:%s3] %v4
    %v6 = vld [vmem:[#allocation1] sm:$0x1]
    %vm7 = vcmask 130048
    %8 = vst.msk [vmem:[#allocation0] sm:$0x1] %vm7, %v6
    %s9 = scalar_lea.vmem [#allocation1], 1
    %v10 = vld [vmem:[%s9] sm:$0x1]
    %11 = vrot.lane.b32.xlu0 %v10, 16
    %v12 = vpop.permute.xlu0 %11
    %vm13 = vcmask 261248
    %14 = vst.msk [vmem:[#allocation0] sm:$0x1] %vm13, %v12
    %s16 = sshllo.u32 0, 1
    %v18 = vld [vmem:[#allocation0] sm:%s16]
    %s19 = sshllo.u32 0, 1
    %20 = vst [vmem:[%s1] sm:%s19] %v18

// kernel: tile.9
$region0: #{tile.9}
  %s0 = inlined_call_operand.vmem [shape: f32[2,8,2,8], index: 0, kind: input, shape index: {}]
  %s1 = inlined_call_operand.vmem [shape: f32[16,16], index: 1, kind: output, shape index: {}]
  $region1: #{tile.9} parent=0
    #allocation0 [shape = 'u8[65536]{0}', space=vmem, size = 0x10000, scoped, tag = 'scoped mem for input reshape']
    %s3 = sshllo.u32 0, 2
    %s4 = smul.addr 2, 15
    %s5 = scalar_lea.vmem %s0, %s4
    %v6 = vld [vmem:[%s5] sm:%s3]
    %s7 = scalar_lea.vmem [#allocation0], 120
    %8 = vst [vmem:[%s7] sm:%s3] %v6
    %s9 = smul.addr 2, 14
    %s10 = scalar_lea.vmem %s0, %s9
    %v11 = vld [vmem:[%s10] sm:%s3]
    %s12 = scalar_lea.vmem [#allocation0], 112
    %13 = vst [vmem:[%s12] sm:%s3] %v11
    %s14 = smul.addr 2, 13
    %s15 = scalar_lea.vmem %s0, %s14
    %v16 = vld [vmem:[%s15] sm:%s3]
    %s17 = scalar_lea.vmem [#allocation0], 104
    %18 = vst [vmem:[%s17] sm:%s3] %v16
    %s19 = smul.addr 2, 12
    %s20 = scalar_lea.vmem %s0, %s19
    %v21 = vld [vmem:[%s20] sm:%s3]
    %s22 = scalar_lea.vmem [#allocation0], 96
    %23 = vst [vmem:[%s22] sm:%s3] %v21
    %s24 = smul.addr 2, 11
    %s25 = scalar_lea.vmem %s0, %s24
    %v26 = vld [vmem:[%s25] sm:%s3]
    %s27 = scalar_lea.vmem [#allocation0], 88
    %28 = vst [vmem:[%s27] sm:%s3] %v26
    %s29 = smul.addr 2, 10
    %s30 = scalar_lea.vmem %s0, %s29
    %v31 = vld [vmem:[%s30] sm:%s3]
    %s32 = scalar_lea.vmem [#allocation0], 80
    %33 = vst [vmem:[%s32] sm:%s3] %v31
    %s34 = smul.addr 2, 9
    %s35 = scalar_lea.vmem %s0, %s34
    %v36 = vld [vmem:[%s35] sm:%s3]
    %s37 = scalar_lea.vmem [#allocation0], 72
    %38 = vst [vmem:[%s37] sm:%s3] %v36
    %s39 = smul.addr 2, 8
    %s40 = scalar_lea.vmem %s0, %s39
    %v41 = vld [vmem:[%s40] sm:%s3]
    %s42 = scalar_lea.vmem [#allocation0], 64
    %43 = vst [vmem:[%s42] sm:%s3] %v41
    %s44 = smul.addr 2, 7
    %s45 = scalar_lea.vmem %s0, %s44
    %v46 = vld [vmem:[%s45] sm:%s3]
    %s47 = scalar_lea.vmem [#allocation0], 56
    %48 = vst [vmem:[%s47] sm:%s3] %v46
    %s49 = smul.addr 2, 6
    %s50 = scalar_lea.vmem %s0, %s49
    %v51 = vld [vmem:[%s50] sm:%s3]
    %s52 = scalar_lea.vmem [#allocation0], 48
    %53 = vst [vmem:[%s52] sm:%s3] %v51
    %s54 = smul.addr 2, 5
    %s55 = scalar_lea.vmem %s0, %s54
    %v56 = vld [vmem:[%s55] sm:%s3]
    %s57 = scalar_lea.vmem [#allocation0], 40
    %58 = vst [vmem:[%s57] sm:%s3] %v56
    %s59 = smul.addr 2, 4
    %s60 = scalar_lea.vmem %s0, %s59
    %v61 = vld [vmem:[%s60] sm:%s3]
    %s62 = scalar_lea.vmem [#allocation0], 32
    %63 = vst [vmem:[%s62] sm:%s3] %v61
    %s64 = smul.addr 2, 3
    %s65 = scalar_lea.vmem %s0, %s64
    %v66 = vld [vmem:[%s65] sm:%s3]
    %s67 = scalar_lea.vmem [#allocation0], 24
    %68 = vst [vmem:[%s67] sm:%s3] %v66
    %s69 = smul.addr 2, 2
    %s70 = scalar_lea.vmem %s0, %s69
    %v71 = vld [vmem:[%s70] sm:%s3]
    %s72 = scalar_lea.vmem [#allocation0], 16
    %73 = vst [vmem:[%s72] sm:%s3] %v71
    %s74 = scalar_lea.vmem %s0, 2
    %v75 = vld [vmem:[%s74] sm:%s3]
    %s76 = scalar_lea.vmem [#allocation0], 8
    %77 = vst [vmem:[%s76] sm:%s3] %v75
    %v78 = vld [vmem:[%s0] sm:%s3]
    %79 = vst [vmem:[#allocation0] sm:%s3] %v78
    %v80 = vld [vmem:[#allocation0] ss:$8 sm:$0xf]
    %v81 = vld [vmem:[#allocation0] ss:$8 sm:$0xf0]
    %vm82 = vcmask 1047556
    %v83 = vsel %vm82, %v81, %v80
    %vm84 = vcmask 64512
    %85 = vst.msk [vmem:[%s1] sm:$0xff] %vm84, %v83
    %s86 = scalar_lea.vmem [#allocation0], 64
    %v87 = vld [vmem:[%s86] ss:$8 sm:$0xf]
    %s88 = scalar_lea.vmem [#allocation0], 64
    %v89 = vld [vmem:[%s88] ss:$8 sm:$0xf0]
    %vm90 = vcmask 1047556
    %v91 = vsel %vm90, %v89, %v87
    %vm92 = vcmask 64512
    %s93 = scalar_lea.vmem %s1, 8
    %94 = vst.msk [vmem:[%s93] sm:$0xff] %vm92, %v91
    %s95 = scalar_lea.vmem [#allocation0], 1
    %v96 = vld [vmem:[%s95] ss:$8 sm:$0xf]
    %s97 = scalar_lea.vmem [#allocation0], 1
    %v98 = vld [vmem:[%s97] ss:$8 sm:$0xf0]
    %vm99 = vcmask 1047556
    %v100 = vsel %vm99, %v98, %v96
    %101 = vrot.lane.b32.xlu0 %v100, 8
    %v102 = vpop.permute.xlu0 %101
    %vm103 = vcmask 130112
    %104 = vst.msk [vmem:[%s1] sm:$0xff] %vm103, %v102
    %s105 = scalar_lea.vmem [#allocation0], 65
    %v106 = vld [vmem:[%s105] ss:$8 sm:$0xf]
    %s107 = scalar_lea.vmem [#allocation0], 65
    %v108 = vld [vmem:[%s107] ss:$8 sm:$0xf0]
    %vm109 = vcmask 1047556
    %v110 = vsel %vm109, %v108, %v106
    %111 = vrot.lane.b32.xlu0 %v110, 8
    %v112 = vpop.permute.xlu0 %111
    %vm113 = vcmask 130112
    %s114 = scalar_lea.vmem %s1, 8
    %115 = vst.msk [vmem:[%s114] sm:$0xff] %vm113, %v112

// kernel: tile.8
$region0: #{tile.8}
  #allocation0 [shape = 's32[1]{0}', space=sflag, size = 0x4, scoped, tag = 'scoped memory for tile.8']
  %s0 = inlined_call_operand.vmem [shape: f32[8,8], index: 0, kind: input, shape index: {}]
  %s1 = inlined_call_operand.vmem [shape: f32[2,8,2,8], index: 1, kind: output, shape index: {}]
  // Predicated region
  $region2: #{tile.8} parent=0 // pred_check
    _
  $region3: #{tile.8} parent=0 // pred_check_branch
    %3 = sbr.rel (0) target = $region5
  $region4: #{tile.8} parent=0 // pred_region
    _
  $region5: #{tile.8} parent=0 // pred_fallthru
    _
  %v4 = vld [vmem:[%s0] ss:$0 sm:$0xff]
  %5 = vst [vmem:[%s1] sm:$0x3] %v4
  %s6 = scalar_lea.vmem %s1, 16
  %7 = vst [vmem:[%s6] sm:$0x3] %v4
  %s8 = scalar_lea.vmem %s0, 1
  %v9 = vld [vmem:[%s8] ss:$0 sm:$0xff]
  %s10 = scalar_lea.vmem %s1, 2
  %11 = vst [vmem:[%s10] sm:$0x3] %v9
  %s12 = scalar_lea.vmem %s1, 18
  %13 = vst [vmem:[%s12] sm:$0x3] %v9
  %s14 = scalar_lea.vmem %s0, 2
  %v15 = vld [vmem:[%s14] ss:$0 sm:$0xff]
  %s16 = scalar_lea.vmem %s1, 4
  %17 = vst [vmem:[%s16] sm:$0x3] %v15
  %s18 = scalar_lea.vmem %s1, 20
  %19 = vst [vmem:[%s18] sm:$0x3] %v15
  %s20 = scalar_lea.vmem %s0, 3
  %v21 = vld [vmem:[%s20] ss:$0 sm:$0xff]
  %s22 = scalar_lea.vmem %s1, 6
  %23 = vst [vmem:[%s22] sm:$0x3] %v21
  %s24 = scalar_lea.vmem %s1, 22
  %25 = vst [vmem:[%s24] sm:$0x3] %v21
  %s26 = scalar_lea.vmem %s0, 4
  %v27 = vld [vmem:[%s26] ss:$0 sm:$0xff]
  %s28 = scalar_lea.vmem %s1, 8
  %29 = vst [vmem:[%s28] sm:$0x3] %v27
  %s30 = scalar_lea.vmem %s1, 24
  %31 = vst [vmem:[%s30] sm:$0x3] %v27
  %s32 = scalar_lea.vmem %s0, 5
  %v33 = vld [vmem:[%s32] ss:$0 sm:$0xff]
  %s34 = scalar_lea.vmem %s1, 10
  %35 = vst [vmem:[%s34] sm:$0x3] %v33
  %s36 = scalar_lea.vmem %s1, 26
  %37 = vst [vmem:[%s36] sm:$0x3] %v33
  %s38 = scalar_lea.vmem %s0, 6
  %v39 = vld [vmem:[%s38] ss:$0 sm:$0xff]
  %s40 = scalar_lea.vmem %s1, 12
  %41 = vst [vmem:[%s40] sm:$0x3] %v39
  %s42 = scalar_lea.vmem %s1, 28
  %43 = vst [vmem:[%s42] sm:$0x3] %v39
  %s44 = scalar_lea.vmem %s0, 7
  %v45 = vld [vmem:[%s44] ss:$0 sm:$0xff]
  %s46 = scalar_lea.vmem %s1, 14
  %47 = vst [vmem:[%s46] sm:$0x3] %v45
  %s48 = scalar_lea.vmem %s1, 30
  %49 = vst [vmem:[%s48] sm:$0x3] %v45

// kernel: bart_decoder_forward.1
$region0: #{bart_decoder_forward.1}
  #allocation0 [shape = 'u32[]', space=smem, size = 0x4, offset = 0x4, fixed_abs, tag = 'smem constant byte address 0x4 - core index']
  #allocation1 [shape = 'u32[144,128]{1,0:T(1,128)}', space=vmem, size = 0x12000, scoped, tag = 'internal scratch']
  %s0 = inlined_call_operand.vmem [shape: f32[16,32], index: 0, kind: input, shape index: {}]
  %s1 = inlined_call_operand.vmem [shape: f32[32,32], index: 1, kind: input, shape index: {}]
  %s2 = inlined_call_operand.vmem [shape: f32[16,16], index: 2, kind: input, shape index: {}]
  %s3 = inlined_call_operand.vmem [shape: f32[16,32], index: 3, kind: input, shape index: {}]
  %s4 = inlined_call_operand.hbm [shape: f32[2,32], index: 4, kind: input, shape index: {}]
  %s5 = inlined_call_operand.vmem [shape: f32[2,4,32,32], index: 5, kind: input, shape index: {}]
  %s6 = inlined_call_operand.hbm [shape: f32[2,4,1,32], index: 6, kind: input, shape index: {}]
  %s7 = inlined_call_operand.vmem [shape: f32[2,4,32,32], index: 7, kind: input, shape index: {}]
  %s8 = inlined_call_operand.hbm [shape: f32[2,1,32], index: 8, kind: input, shape index: {}]
  %s9 = inlined_call_operand.vmem [shape: f32[2,4,32,32], index: 9, kind: input, shape index: {}]
  %s10 = inlined_call_operand.hbm [shape: f32[2,4,1,32], index: 10, kind: input, shape index: {}]
  %s11 = inlined_call_operand.hbm [shape: f32[2,4,32,32], index: 11, kind: input, shape index: {}]
  %s12 = inlined_call_operand.hbm [shape: f32[2,1,32], index: 12, kind: input, shape index: {}]
  %s13 = inlined_call_operand.vmem [shape: f32[2,32,64], index: 13, kind: input, shape index: {}]
  %s14 = inlined_call_operand.hbm [shape: f32[2,1,64], index: 14, kind: input, shape index: {}]
  %s15 = inlined_call_operand.vmem [shape: f32[2,64,32], index: 15, kind: input, shape index: {}]
  %s16 = inlined_call_operand.hbm [shape: f32[2,1,32], index: 16, kind: input, shape index: {}]
  %s17 = inlined_call_operand.vmem [shape: f32[2,6,32], index: 17, kind: input, shape index: {}]
  %s18 = inlined_call_operand.hbm [shape: f32[16,32], index: 18, kind: output, shape index: {}]
  %s19 = sld [smem:[#allocation0]]
  $region114: #{bart_decoder_forward.1} parent=0
    _
  %s21 = ssub.s32 1, %s19
  %s22 = scalar_select 0, %s21, %s19
  $region1: #{bart_decoder_forward.1} parent=0
    #allocation2 [shape = 'u8[1024]{0}', space=vmem, size = 0x400, scoped, tag = 'input window, operand 4, single buffered']
    #allocation3 [shape = 's32[1]{0}', space=sflag, size = 0x4, scoped, tag = 'scoped memory for bart_decoder_forward.1']
    #allocation4 [shape = 's32[1]{0}', space=sflag, size = 0x4, scoped, tag = 'scoped memory for bart_decoder_forward.1']
    #allocation5 [shape = 'u8[4096]{0}', space=vmem, size = 0x1000, scoped, tag = 'input window, operand 6, single buffered']
    #allocation6 [shape = 's32[1]{0}', space=sflag, size = 0x4, scoped, tag = 'scoped memory for bart_decoder_forward.1']
    #allocation7 [shape = 'u8[1024]{0}', space=vmem, size = 0x400, scoped, tag = 'input window, operand 8, single buffered']
    #allocation8 [shape = 'u8[4096]{0}', space=vmem, size = 0x1000, scoped, tag = 'input window, operand 10, single buffered']
    #allocation9 [shape = 's32[1]{0}', space=sflag, size = 0x4, scoped, tag = 'scoped memory for bart_decoder_forward.1']
    #allocation10 [shape = 'u8[131072]{0}', space=vmem, size = 0x20000, scoped, tag = 'input window, operand 11, single buffered']
    #allocation11 [shape = 'u8[1024]{0}', space=vmem, size = 0x400, scoped, tag = 'input window, operand 12, single buffered']
    #allocation12 [shape = 's32[1]{0}', space=sflag, size = 0x4, scoped, tag = 'scoped memory for bart_decoder_forward.1']
    #allocation13 [shape = 'u8[1024]{0}', space=vmem, size = 0x400, scoped, tag = 'input window, operand 14, single buffered']
    #allocation14 [shape = 'u8[1024]{0}', space=vmem, size = 0x400, scoped, tag = 'input window, operand 16, single buffered']
    #allocation15 [shape = 's32[1]{0}', space=sflag, size = 0x4, scoped, tag = 'scoped memory for bart_decoder_forward.1']
    #allocation16 [shape = 'u8[8192]{0}', space=vmem, size = 0x2000, scoped, tag = 'output window, operand 0, single buffered']
    %23 = vsyncpa [#allocation3], 0
    %24 = vsyncpa [#allocation6], 0
    %25 = vsyncpa [#allocation9], 0
    %26 = vsyncpa [#allocation12], 0
    %27 = vsyncpa [#allocation15], 0
    %28 = vsyncpa [#allocation4], 0
    // Predicated region
    $region2: #{bart_decoder_forward.1} parent=1 // pred_check
      _
    $region3: #{bart_decoder_forward.1} parent=1 // pred_check_branch
      %30 = sbr.rel (0) target = $region5
    $region4: #{bart_decoder_forward.1} parent=1 // pred_region
      _
    $region5: #{bart_decoder_forward.1} parent=1 // pred_fallthru
      _
    // Predicated region
    $region6: #{bart_decoder_forward.1} parent=1 // pred_check
      _
    $region7: #{bart_decoder_forward.1} parent=1 // pred_check_branch
      %32 = sbr.rel (0) target = $region9
    $region8: #{bart_decoder_forward.1} parent=1 // pred_region
      _
    $region9: #{bart_decoder_forward.1} parent=1 // pred_fallthru
      _
    // Predicated region
    $region10: #{bart_decoder_forward.1} parent=1 // pred_check
      _
    $region11: #{bart_decoder_forward.1} parent=1 // pred_check_branch
      %34 = sbr.rel (0) target = $region13
    $region12: #{bart_decoder_forward.1} parent=1 // pred_region
      _
    $region13: #{bart_decoder_forward.1} parent=1 // pred_fallthru
      _
    // Predicated region
    $region14: #{bart_decoder_forward.1} parent=1 // pred_check
      _
    $region15: #{bart_decoder_forward.1} parent=1 // pred_check_branch
      %36 = sbr.rel (0) target = $region17
    $region16: #{bart_decoder_forward.1} parent=1 // pred_region
      _
    $region17: #{bart_decoder_forward.1} parent=1 // pred_fallthru
      _
    // Predicated region
    $region18: #{bart_decoder_forward.1} parent=1 // pred_check
      _
    $region19: #{bart_decoder_forward.1} parent=1 // pred_check_branch
      %38 = sbr.rel (0) target = $region21
    $region20: #{bart_decoder_forward.1} parent=1 // pred_region
      %s40 = ssub.s32 32, 32
      %41 = vsyncadd [#allocation3], %s40
      %s43 = sshll.u32 [#allocation2], 4
      %s44 = int_to_ptr.vmem [resolvable:$true] %s43
      %46 = dma.hbm_to_vmem [thread:$0]  %s4, 32, %s44, [#allocation3]
    $region21: #{bart_decoder_forward.1} parent=1 // pred_fallthru
      _
    // Predicated region
    $region22: #{bart_decoder_forward.1} parent=1 // pred_check
      _
    $region23: #{bart_decoder_forward.1} parent=1 // pred_check_branch
      %48 = sbr.rel (0) target = $region25
    $region24: #{bart_decoder_forward.1} parent=1 // pred_region
      _
    $region25: #{bart_decoder_forward.1} parent=1 // pred_fallthru
      _
    // Predicated region
    $region26: #{bart_decoder_forward.1} parent=1 // pred_check
      _
    $region27: #{bart_decoder_forward.1} parent=1 // pred_check_branch
      %50 = sbr.rel (0) target = $region29
    $region28: #{bart_decoder_forward.1} parent=1 // pred_region
      %s52 = ssub.s32 128, 128
      %53 = vsyncadd [#allocation6], %s52
      %s54 = sshll.u32 [#allocation5], 4
      %s55 = int_to_ptr.vmem [resolvable:$true] %s54
      %60 = dma.hbm_to_vmem [thread:$0]  %s6, 128, %s55, [#allocation6], 16, 16, 1
    $region29: #{bart_decoder_forward.1} parent=1 // pred_fallthru
      _
    // Predicated region
    $region30: #{bart_decoder_forward.1} parent=1 // pred_check
      _
    $region31: #{bart_decoder_forward.1} parent=1 // pred_check_branch
      %62 = sbr.rel (0) target = $region33
    $region32: #{bart_decoder_forward.1} parent=1 // pred_region
      _
    $region33: #{bart_decoder_forward.1} parent=1 // pred_fallthru
      _
    // Predicated region
    $region34: #{bart_decoder_forward.1} parent=1 // pred_check
      _
    $region35: #{bart_decoder_forward.1} parent=1 // pred_check_branch
      %64 = sbr.rel (0) target = $region37
    $region36: #{bart_decoder_forward.1} parent=1 // pred_region
      %s66 = ssub.s32 32, 32
      %67 = vsyncadd [#allocation6], %s66
      %s68 = sshll.u32 [#allocation7], 4
      %s69 = int_to_ptr.vmem [resolvable:$true] %s68
      %74 = dma.hbm_to_vmem [thread:$0]  %s8, 32, %s69, [#allocation6], 16, 16, 1
    $region37: #{bart_decoder_forward.1} parent=1 // pred_fallthru
      _
    // Predicated region
    $region38: #{bart_decoder_forward.1} parent=1 // pred_check
      _
    $region39: #{bart_decoder_forward.1} parent=1 // pred_check_branch
      %76 = sbr.rel (0) target = $region41
    $region40: #{bart_decoder_forward.1} parent=1 // pred_region
      _
    $region41: #{bart_decoder_forward.1} parent=1 // pred_fallthru
      _
    // Predicated region
    $region42: #{bart_decoder_forward.1} parent=1 // pred_check
      _
    $region43: #{bart_decoder_forward.1} parent=1 // pred_check_branch
      %78 = sbr.rel (0) target = $region45
    $region44: #{bart_decoder_forward.1} parent=1 // pred_region
      %s80 = ssub.s32 128, 128
      %81 = vsyncadd [#allocation9], %s80
      %s82 = sshll.u32 [#allocation8], 4
      %s83 = int_to_ptr.vmem [resolvable:$true] %s82
      %88 = dma.hbm_to_vmem [thread:$0]  %s10, 128, %s83, [#allocation9], 16, 16, 1
    $region45: #{bart_decoder_forward.1} parent=1 // pred_fallthru
      _
    // Predicated region
    $region46: #{bart_decoder_forward.1} parent=1 // pred_check
      _
    $region47: #{bart_decoder_forward.1} parent=1 // pred_check_branch
      %90 = sbr.rel (0) target = $region49
    $region48: #{bart_decoder_forward.1} parent=1 // pred_region
      %s92 = ssub.s32 4096, 4096
      %93 = vsyncadd [#allocation9], %s92
      %s94 = sshll.u32 [#allocation10], 4
      %s95 = int_to_ptr.vmem [resolvable:$true] %s94
      %100 = dma.hbm_to_vmem [thread:$0]  %s11, 4096, %s95, [#allocation9], 128, 128, 8
    $region49: #{bart_decoder_forward.1} parent=1 // pred_fallthru
      _
    // Predicated region
    $region50: #{bart_decoder_forward.1} parent=1 // pred_check
      _
    $region51: #{bart_decoder_forward.1} parent=1 // pred_check_branch
      %102 = sbr.rel (0) target = $region53
    $region52: #{bart_decoder_forward.1} parent=1 // pred_region
      %s104 = ssub.s32 32, 32
      %105 = vsyncadd [#allocation12], %s104
      %s106 = sshll.u32 [#allocation11], 4
      %s107 = int_to_ptr.vmem [resolvable:$true] %s106
      %112 = dma.hbm_to_vmem [thread:$0]  %s12, 32, %s107, [#allocation12], 16, 16, 1
    $region53: #{bart_decoder_forward.1} parent=1 // pred_fallthru
      _
    // Predicated region
    $region54: #{bart_decoder_forward.1} parent=1 // pred_check
      _
    $region55: #{bart_decoder_forward.1} parent=1 // pred_check_branch
      %114 = sbr.rel (0) target = $region57
    $region56: #{bart_decoder_forward.1} parent=1 // pred_region
      _
    $region57: #{bart_decoder_forward.1} parent=1 // pred_fallthru
      _
    // Predicated region
    $region58: #{bart_decoder_forward.1} parent=1 // pred_check
      _
    $region59: #{bart_decoder_forward.1} parent=1 // pred_check_branch
      %116 = sbr.rel (0) target = $region61
    $region60: #{bart_decoder_forward.1} parent=1 // pred_region
      %s118 = ssub.s32 32, 32
      %119 = vsyncadd [#allocation12], %s118
      %s120 = sshll.u32 [#allocation13], 4
      %s121 = int_to_ptr.vmem [resolvable:$true] %s120
      %126 = dma.hbm_to_vmem [thread:$0]  %s14, 32, %s121, [#allocation12], 16, 16, 1
    $region61: #{bart_decoder_forward.1} parent=1 // pred_fallthru
      _
    // Predicated region
    $region62: #{bart_decoder_forward.1} parent=1 // pred_check
      _
    $region63: #{bart_decoder_forward.1} parent=1 // pred_check_branch
      %128 = sbr.rel (0) target = $region65
    $region64: #{bart_decoder_forward.1} parent=1 // pred_region
      _
    $region65: #{bart_decoder_forward.1} parent=1 // pred_fallthru
      _
    // Predicated region
    $region66: #{bart_decoder_forward.1} parent=1 // pred_check
      _
    $region67: #{bart_decoder_forward.1} parent=1 // pred_check_branch
      %130 = sbr.rel (0) target = $region69
    $region68: #{bart_decoder_forward.1} parent=1 // pred_region
      %s132 = ssub.s32 32, 32
      %133 = vsyncadd [#allocation15], %s132
      %s134 = sshll.u32 [#allocation14], 4
      %s135 = int_to_ptr.vmem [resolvable:$true] %s134
      %140 = dma.hbm_to_vmem [thread:$0]  %s16, 32, %s135, [#allocation15], 16, 16, 1
    $region69: #{bart_decoder_forward.1} parent=1 // pred_fallthru
      _
    // Predicated region
    $region70: #{bart_decoder_forward.1} parent=1 // pred_check
      _
    $region71: #{bart_decoder_forward.1} parent=1 // pred_check_branch
      %142 = sbr.rel (0) target = $region73
    $region72: #{bart_decoder_forward.1} parent=1 // pred_region
      _
    $region73: #{bart_decoder_forward.1} parent=1 // pred_fallthru
      _
    // Predicated region
    $region74: #{bart_decoder_forward.1} parent=1 // pred_check
      _
    $region75: #{bart_decoder_forward.1} parent=1 // pred_check_branch
      %144 = sbr.rel (0) target = $region77
    $region76: #{bart_decoder_forward.1} parent=1 // pred_region
      %145 = dma.done [#allocation3], 32
    $region77: #{bart_decoder_forward.1} parent=1 // pred_fallthru
      _
    // Predicated region
    $region78: #{bart_decoder_forward.1} parent=1 // pred_check
      _
    $region79: #{bart_decoder_forward.1} parent=1 // pred_check_branch
      %147 = sbr.rel (0) target = $region81
    $region80: #{bart_decoder_forward.1} parent=1 // pred_region
      %148 = dma.done [#allocation6], 128
    $region81: #{bart_decoder_forward.1} parent=1 // pred_fallthru
      _
    // Predicated region
    $region82: #{bart_decoder_forward.1} parent=1 // pred_check
      _
    $region83: #{bart_decoder_forward.1} parent=1 // pred_check_branch
      %150 = sbr.rel (0) target = $region85
    $region84: #{bart_decoder_forward.1} parent=1 // pred_region
      %151 = dma.done [#allocation6], 32
    $region85: #{bart_decoder_forward.1} parent=1 // pred_fallthru
      _
    // Predicated region
    $region86: #{bart_decoder_forward.1} parent=1 // pred_check
      _
    $region87: #{bart_decoder_forward.1} parent=1 // pred_check_branch
      %153 = sbr.rel (0) target = $region89
    $region88: #{bart_decoder_forward.1} parent=1 // pred_region
      %154 = dma.done [#allocation9], 128
    $region89: #{bart_decoder_forward.1} parent=1 // pred_fallthru
      _
    // Predicated region
    $region90: #{bart_decoder_forward.1} parent=1 // pred_check
      _
    $region91: #{bart_decoder_forward.1} parent=1 // pred_check_branch
      %156 = sbr.rel (0) target = $region93
    $region92: #{bart_decoder_forward.1} parent=1 // pred_region
      %157 = dma.done [#allocation9], 4096
    $region93: #{bart_decoder_forward.1} parent=1 // pred_fallthru
      _
    // Predicated region
    $region94: #{bart_decoder_forward.1} parent=1 // pred_check
      _
    $region95: #{bart_decoder_forward.1} parent=1 // pred_check_branch
      %159 = sbr.rel (0) target = $region97
    $region96: #{bart_decoder_forward.1} parent=1 // pred_region
      %160 = dma.done [#allocation12], 32
    $region97: #{bart_decoder_forward.1} parent=1 // pred_fallthru
      _
    // Predicated region
    $region98: #{bart_decoder_forward.1} parent=1 // pred_check
      _
    $region99: #{bart_decoder_forward.1} parent=1 // pred_check_branch
      %162 = sbr.rel (0) target = $region101
    $region100: #{bart_decoder_forward.1} parent=1 // pred_region
      %163 = dma.done [#allocation12], 32
    $region101: #{bart_decoder_forward.1} parent=1 // pred_fallthru
      _
    // Predicated region
    $region102: #{bart_decoder_forward.1} parent=1 // pred_check
      _
    $region103: #{bart_decoder_forward.1} parent=1 // pred_check_branch
      %165 = sbr.rel (0) target = $region105
    $region104: #{bart_decoder_forward.1} parent=1 // pred_region
      %166 = dma.done [#allocation15], 32
    $region105: #{bart_decoder_forward.1} parent=1 // pred_fallthru
      _
    %v167 = vld [vmem:[%s0] sm:$0xff]
    %v168 = vld [vmem:[%s0 + $0x8] sm:$0xff]
    %v169 = vld [vmem:[#allocation2] sm:$0x1]
    %v170 = vld [vmem:[#allocation2 + $0x1] sm:$0x1]
    %vm171 = vcmask 261120
    %v172 = vsel %vm171, %v167, 0.0
    %173 = vadd.xlane.f32.xlu0 %v172
    %v174 = vpop.xlane.xlu0 %173
    %v175 = vsel %vm171, %v168, 0.0
    %176 = vadd.xlane.f32.xlu0 %v175
    %v177 = vpop.xlane.xlu0 %176
    %v178 = vrcp.pop 32.0
    %v179 = vmul.f32 %v174, %v178
    %v180 = vmul.f32 %v177, %v178
    %v181 = vsub.f32 %v167, %v179
    %v182 = vsub.f32 %v168, %v180
    %v183 = vmul.f32 %v181, %v181
    %v184 = vmul.f32 %v182, %v182
    %v185 = vsel %vm171, %v183, 0.0
    %186 = vadd.xlane.f32.xlu0 %v185
    %v187 = vpop.xlane.xlu0 %186
    %v188 = vsel %vm171, %v184, 0.0
    %189 = vadd.xlane.f32.xlu0 %v188
    %v190 = vpop.xlane.xlu0 %189
    %v191 = vmul.f32 %v187, %v178
    %v192 = vmul.f32 %v190, %v178
    %v193 = vadd.f32 %v191, 1e-05
    %v194 = vadd.f32 %v192, 1e-05
    %v195 = vrsqrt.pop %v193
    %v196 = vrsqrt.pop %v194
    %v197 = vmul.f32 %v181, %v195
    %v198 = vmul.f32 %v182, %v196
    %v199 = vlaneseq
    %v200 = vshrl.u32 %v199, 7
    %v201 = vsub.s32 0, %v200
    %v202 = vrot.slane %v169, %v201
    %v203 = vmul.f32 %v197, %v202
    %v204 = vmul.f32 %v198, %v202
    %v205 = vlaneseq
    %v206 = vshrl.u32 %v205, 7
    %v207 = vsub.s32 0, %v206
    %v208 = vrot.slane %v170, %v207
    %v209 = vadd.f32 %v203, %v208
    %v210 = vadd.f32 %v204, %v208
    %v211 = vld [vmem:[%s1] sm:$0xff]
    %v212 = vld [vmem:[%s1 + $0x8] sm:$0xff]
    %v213 = vld [vmem:[%s1 + $0x10] sm:$0xff]
    %v214 = vld [vmem:[%s1 + $0x18] sm:$0xff]
    %v215 = vld [vmem:[%s2] sm:$0xff]
    %v216 = vld [vmem:[%s2 + $0x8] sm:$0xff]
    %v217 = vld [vmem:[%s3] sm:$0xff]
    %v218 = vld [vmem:[%s3 + $0x8] sm:$0xff]
    %v219 = vld [vmem:[#allocation7] sm:$0x1]
    %v220 = vld [vmem:[%s5] sm:$0xff]
    %v221 = vld [vmem:[%s5 + $0x8] sm:$0xff]
    %v222 = vld [vmem:[%s5 + $0x10] sm:$0xff]
    %v223 = vld [vmem:[%s5 + $0x18] sm:$0xff]
    %v224 = vld [vmem:[#allocation5] sm:$0x1]
    %v226 = vlaneseq
    %v227 = vshrl.u32 %v226, 7
    %v228 = vsub.s32 0, %v227
    %v229 = vrot.slane %v224, %v228
    %v232 = vsel %vm171, %v209, 0
    %v235 = vsel %vm171, %v210, 0
    %237 = vmatprep.subr.mxu0 0.0
    %238 = vmatpush1.msra.mxu0 %v220
    %239 = vmatprep.subr.mxu0 0.0
    %240 = vmatpush1.msra.mxu0 %v221
    %241 = vmatprep.subr.mxu0 0.0
    %242 = vmatpush1.msra.mxu0 %v222
    %243 = vmatprep.subr.mxu0 0.0
    %244 = vmatpush1.msra.mxu0 %v223
    %245 = vmatprep.subr.mxu0 0.0
    %246 = vmatpush1.msra.mxu0 0.0
    %247 = vmatprep.subr.mxu0 0.0
    %248 = vmatpush1.msra.mxu0 0.0
    %249 = vmatprep.subr.mxu0 0.0
    %250 = vmatpush1.msra.mxu0 0.0
    %251 = vmatprep.subr.mxu0 0.0
    %252 = vmatpush1.msra.mxu0 0.0
    %253 = vmatprep.subr.mxu0 0.0
    %254 = vmatpush1.msra.mxu0 0.0
    %255 = vmatprep.subr.mxu0 0.0
    %256 = vmatpush1.msra.mxu0 0.0
    %257 = vmatprep.subr.mxu0 0.0
    %258 = vmatpush1.msra.mxu0 0.0
    %259 = vmatprep.subr.mxu0 0.0
    %260 = vmatpush1.msra.mxu0 0.0
    %261 = vmatprep.subr.mxu0 0.0
    %262 = vmatpush1.msra.mxu0 0.0
    %263 = vmatprep.subr.mxu0 0.0
    %264 = vmatpush1.msra.mxu0 0.0
    %265 = vmatprep.subr.mxu0 0.0
    %266 = vmatpush1.msra.mxu0 0.0
    %267 = vmatprep.subr.mxu0 0.0
    %268 = vmatpush1.msra.mxu0 0.0
    %269 = vmatprep.subr.mxu0 0.0
    %270 = vmatpush1.msra.mxu0 0.0
    %271 = vmatprep.subr.mxu0 0.0
    %272 = vmatpush1.msra.mxu0 0.0
    %273 = vmatprep.subr.mxu0 0.0
    %274 = vmatpush1.msra.mxu0 0.0
    %275 = vmatprep.subr.mxu0 0.0
    %276 = vmatpush1.msra.mxu0 0.0
    %277 = vmatprep.subr.mxu0 0.0
    %278 = vmatpush1.msra.mxu0 0.0
    %279 = vmatprep.subr.mxu0 0.0
    %280 = vmatpush1.msra.mxu0 0.0
    %281 = vmatprep.subr.mxu0 0.0
    %282 = vmatpush1.msra.mxu0 0.0
    %283 = vmatprep.subr.mxu0 0.0
    %284 = vmatpush1.msra.mxu0 0.0
    %285 = vmatprep.subr.mxu0 0.0
    %286 = vmatpush1.msra.mxu0 0.0
    %287 = vmatprep.subr.mxu0 0.0
    %288 = vmatpush1.msra.mxu0 0.0
    %289 = vmatprep.subr.mxu0 0.0
    %290 = vmatpush1.msra.mxu0 0.0
    %291 = vmatprep.subr.mxu0 0.0
    %292 = vmatpush1.msra.mxu0 0.0
    %293 = vmatprep.subr.mxu0 0.0
    %294 = vmatpush1.msra.mxu0 0.0
    %295 = vmatprep.subr.mxu0 0.0
    %296 = vmatpush1.msra.mxu0 0.0
    %297 = vmatprep.subr.mxu0 0.0
    %298 = vmatpush1.msra.mxu0 0.0
    %299 = vmatprep.subr.mxu0 0.0
    %300 = vmatpush1.msra.mxu0 0.0
    %301 = vmatprep.mubr.f32.mxu0 0.0
    %302 = vmatmul.mubr.f32.gmra.mrb[0].mxu0 %v232
    %v303 = vpop.f32.mrb[0].mxu0
    %v304 = vadd.f32 %v229, %v303
    %v305 = vpop.f32.mrb[0].mxu0
    %306 = vmatprep.mubr.f32.mxu0 0.0
    %307 = vmatmul.mubr.f32.gmra.mrb[0].mxu0 %v235
    %v308 = vpop.f32.mrb[0].mxu0
    %v309 = vadd.f32 %v229, %v308
    %v310 = vpop.f32.mrb[0].mxu0
    %311 = vdwg.mxu0
    %v313 = vsel %vm171, %v304, 0
    %v316 = vsel %vm171, %v309, 0
    %318 = vmatprep.subr.mxu0 0.0
    %319 = vmatpush1.xpose.msra.mxu0 %v232
    %320 = vmatprep.subr.mxu0 0.0
    %321 = vmatpush1.xpose.msra.mxu0 %v235
    %322 = vmatprep.subr.mxu0 0.0
    %323 = vmatpush1.xpose.msra.mxu0 0.0
    %324 = vmatprep.subr.mxu0 0.0
    %325 = vmatpush1.xpose.msra.mxu0 0.0
    %326 = vmatprep.subr.mxu0 0.0
    %327 = vmatpush1.xpose.msra.mxu0 0.0
    %328 = vmatprep.subr.mxu0 0.0
    %329 = vmatpush1.xpose.msra.mxu0 0.0
    %330 = vmatprep.subr.mxu0 0.0
    %331 = vmatpush1.xpose.msra.mxu0 0.0
    %332 = vmatprep.subr.mxu0 0.0
    %333 = vmatpush1.xpose.msra.mxu0 0.0
    %334 = vmatprep.subr.mxu0 0.0
    %335 = vmatpush1.xpose.msra.mxu0 0.0
    %336 = vmatprep.subr.mxu0 0.0
    %337 = vmatpush1.xpose.msra.mxu0 0.0
    %338 = vmatprep.subr.mxu0 0.0
    %339 = vmatpush1.xpose.msra.mxu0 0.0
    %340 = vmatprep.subr.mxu0 0.0
    %341 = vmatpush1.xpose.msra.mxu0 0.0
    %342 = vmatprep.subr.mxu0 0.0
    %343 = vmatpush1.xpose.msra.mxu0 0.0
    %344 = vmatprep.subr.mxu0 0.0
    %345 = vmatpush1.xpose.msra.mxu0 0.0
    %346 = vmatprep.subr.mxu0 0.0
    %347 = vmatpush1.xpose.msra.mxu0 0.0
    %348 = vmatprep.subr.mxu0 0.0
    %349 = vmatpush1.xpose.msra.mxu0 0.0
    %350 = vmatprep.subr.mxu0 0.0
    %351 = vmatpush1.xpose.msra.mxu0 0.0
    %352 = vmatprep.subr.mxu0 0.0
    %353 = vmatpush1.xpose.msra.mxu0 0.0
    %354 = vmatprep.subr.mxu0 0.0
    %355 = vmatpush1.xpose.msra.mxu0 0.0
    %356 = vmatprep.subr.mxu0 0.0
    %357 = vmatpush1.xpose.msra.mxu0 0.0
    %358 = vmatprep.subr.mxu0 0.0
    %359 = vmatpush1.xpose.msra.mxu0 0.0
    %360 = vmatprep.subr.mxu0 0.0
    %361 = vmatpush1.xpose.msra.mxu0 0.0
    %362 = vmatprep.subr.mxu0 0.0
    %363 = vmatpush1.xpose.msra.mxu0 0.0
    %364 = vmatprep.subr.mxu0 0.0
    %365 = vmatpush1.xpose.msra.mxu0 0.0
    %366 = vmatprep.subr.mxu0 0.0
    %367 = vmatpush1.xpose.msra.mxu0 0.0
    %368 = vmatprep.subr.mxu0 0.0
    %369 = vmatpush1.xpose.msra.mxu0 0.0
    %370 = vmatprep.subr.mxu0 0.0
    %371 = vmatpush1.xpose.msra.mxu0 0.0
    %372 = vmatprep.subr.mxu0 0.0
    %373 = vmatpush1.xpose.msra.mxu0 0.0
    %374 = vmatprep.subr.mxu0 0.0
    %375 = vmatpush1.xpose.msra.mxu0 0.0
    %376 = vmatprep.subr.mxu0 0.0
    %377 = vmatpush1.xpose.msra.mxu0 0.0
    %378 = vmatprep.subr.mxu0 0.0
    %379 = vmatpush1.xpose.msra.mxu0 0.0
    %380 = vmatprep.subr.mxu0 0.0
    %381 = vmatpush1.xpose.msra.mxu0 0.0
    %382 = vmatprep.mubr.f32.mxu0 0.0
    %383 = vmatmul.mubr.f32.gmra.mrb[0].mxu0 %v313
    %v384 = vpop.f32.mrb[0].mxu0
    %v385 = vadd.f32 %v215, %v384
    %v386 = vpop.f32.mrb[0].mxu0
    %387 = vmatprep.mubr.f32.mxu0 0.0
    %388 = vmatmul.mubr.f32.gmra.mrb[0].mxu0 %v316
    %v389 = vpop.f32.mrb[0].mxu0
    %v390 = vadd.f32 %v216, %v389
    %v391 = vpop.f32.mrb[0].mxu0
    %392 = vdwg.mxu0
    %vm393 = vcmask 130048
    %v394 = vsel %vm393, %v385, -inf
    %395 = vmax.xlane.f32.xlu0 %v394
    %v396 = vpop.xlane.xlu0 %395
    %v397 = vsel %vm393, %v390, -inf
    %398 = vmax.xlane.f32.xlu0 %v397
    %v399 = vpop.xlane.xlu0 %398
    %v400 = vsub.f32 %v385, %v396
    %v401 = vsub.f32 %v390, %v399
    %v402 = vmul.f32 %v400, 1.442695
    %v403 = vpow.pop %v402
    %v404 = vmul.f32 %v401, 1.442695
    %v405 = vpow.pop %v404
    %v406 = vsel %vm393, %v403, 0.0
    %407 = vadd.xlane.f32.xlu0 %v406
    %v408 = vpop.xlane.xlu0 %407
    %v409 = vsel %vm393, %v405, 0.0
    %410 = vadd.xlane.f32.xlu0 %v409
    %v411 = vpop.xlane.xlu0 %410
    %v412 = vrcp.pop %v408
    %v413 = vrcp.pop %v411
    %v414 = vmul.f32 %v403, %v412
    %v415 = vmul.f32 %v405, %v413
    %v416 = vld [vmem:[%s7] sm:$0xff]
    %v417 = vld [vmem:[%s7 + $0x8] sm:$0xff]
    %v418 = vld [vmem:[%s7 + $0x10] sm:$0xff]
    %v419 = vld [vmem:[%s7 + $0x18] sm:$0xff]
    %420 = vmatprep.subr.mxu0 0.0
    %421 = vmatpush1.msra.mxu0 %v416
    %422 = vmatprep.subr.mxu0 0.0
    %423 = vmatpush1.msra.mxu0 %v417
    %424 = vmatprep.subr.mxu0 0.0
    %425 = vmatpush1.msra.mxu0 %v418
    %426 = vmatprep.subr.mxu0 0.0
    %427 = vmatpush1.msra.mxu0 %v419
    %428 = vmatprep.subr.mxu0 0.0
    %429 = vmatpush1.msra.mxu0 0.0
    %430 = vmatprep.subr.mxu0 0.0
    %431 = vmatpush1.msra.mxu0 0.0
    %432 = vmatprep.subr.mxu0 0.0
    %433 = vmatpush1.msra.mxu0 0.0
    %434 = vmatprep.subr.mxu0 0.0
    %435 = vmatpush1.msra.mxu0 0.0
    %436 = vmatprep.subr.mxu0 0.0
    %437 = vmatpush1.msra.mxu0 0.0
    %438 = vmatprep.subr.mxu0 0.0
    %439 = vmatpush1.msra.mxu0 0.0
    %440 = vmatprep.subr.mxu0 0.0
    %441 = vmatpush1.msra.mxu0 0.0
    %442 = vmatprep.subr.mxu0 0.0
    %443 = vmatpush1.msra.mxu0 0.0
    %444 = vmatprep.subr.mxu0 0.0
    %445 = vmatpush1.msra.mxu0 0.0
    %446 = vmatprep.subr.mxu0 0.0
    %447 = vmatpush1.msra.mxu0 0.0
    %448 = vmatprep.subr.mxu0 0.0
    %449 = vmatpush1.msra.mxu0 0.0
    %450 = vmatprep.subr.mxu0 0.0
    %451 = vmatpush1.msra.mxu0 0.0
    %452 = vmatprep.subr.mxu0 0.0
    %453 = vmatpush1.msra.mxu0 0.0
    %454 = vmatprep.subr.mxu0 0.0
    %455 = vmatpush1.msra.mxu0 0.0
    %456 = vmatprep.subr.mxu0 0.0
    %457 = vmatpush1.msra.mxu0 0.0
    %458 = vmatprep.subr.mxu0 0.0
    %459 = vmatpush1.msra.mxu0 0.0
    %460 = vmatprep.subr.mxu0 0.0
    %461 = vmatpush1.msra.mxu0 0.0
    %462 = vmatprep.subr.mxu0 0.0
    %463 = vmatpush1.msra.mxu0 0.0
    %464 = vmatprep.subr.mxu0 0.0
    %465 = vmatpush1.msra.mxu0 0.0
    %466 = vmatprep.subr.mxu0 0.0
    %467 = vmatpush1.msra.mxu0 0.0
    %468 = vmatprep.subr.mxu0 0.0
    %469 = vmatpush1.msra.mxu0 0.0
    %470 = vmatprep.subr.mxu0 0.0
    %471 = vmatpush1.msra.mxu0 0.0
    %472 = vmatprep.subr.mxu0 0.0
    %473 = vmatpush1.msra.mxu0 0.0
    %474 = vmatprep.subr.mxu0 0.0
    %475 = vmatpush1.msra.mxu0 0.0
    %476 = vmatprep.subr.mxu0 0.0
    %477 = vmatpush1.msra.mxu0 0.0
    %478 = vmatprep.subr.mxu0 0.0
    %479 = vmatpush1.msra.mxu0 0.0
    %480 = vmatprep.subr.mxu0 0.0
    %481 = vmatpush1.msra.mxu0 0.0
    %482 = vmatprep.subr.mxu0 0.0
    %483 = vmatpush1.msra.mxu0 0.0
    %484 = vmatprep.mubr.f32.mxu0 0.0
    %485 = vmatmul.mubr.f32.gmra.mrb[0].mxu0 %v232
    %v486 = vpop.f32.mrb[0].mxu0
    %v487 = vadd.f32 0.0, %v486
    %v488 = vpop.f32.mrb[0].mxu0
    %489 = vmatprep.mubr.f32.mxu0 0.0
    %490 = vmatmul.mubr.f32.gmra.mrb[0].mxu0 %v235
    %v491 = vpop.f32.mrb[0].mxu0
    %v492 = vadd.f32 0.0, %v491
    %v493 = vpop.f32.mrb[0].mxu0
    %494 = vdwg.mxu0
    %v496 = vsel %vm393, %v414, 0
    %v499 = vsel %vm393, %v415, 0
    %501 = vmatprep.subr.mxu0 0.0
    %502 = vmatpush1.msra.mxu0 %v487
    %503 = vmatprep.subr.mxu0 0.0
    %504 = vmatpush1.msra.mxu0 %v492
    %505 = vmatprep.subr.mxu0 0.0
    %506 = vmatpush1.msra.mxu0 0.0
    %507 = vmatprep.subr.mxu0 0.0
    %508 = vmatpush1.msra.mxu0 0.0
    %509 = vmatprep.subr.mxu0 0.0
    %510 = vmatpush1.msra.mxu0 0.0
    %511 = vmatprep.subr.mxu0 0.0
    %512 = vmatpush1.msra.mxu0 0.0
    %513 = vmatprep.subr.mxu0 0.0
    %514 = vmatpush1.msra.mxu0 0.0
    %515 = vmatprep.subr.mxu0 0.0
    %516 = vmatpush1.msra.mxu0 0.0
    %517 = vmatprep.subr.mxu0 0.0
    %518 = vmatpush1.msra.mxu0 0.0
    %519 = vmatprep.subr.mxu0 0.0
    %520 = vmatpush1.msra.mxu0 0.0
    %521 = vmatprep.subr.mxu0 0.0
    %522 = vmatpush1.msra.mxu0 0.0
    %523 = vmatprep.subr.mxu0 0.0
    %524 = vmatpush1.msra.mxu0 0.0
    %525 = vmatprep.subr.mxu0 0.0
    %526 = vmatpush1.msra.mxu0 0.0
    %527 = vmatprep.subr.mxu0 0.0
    %528 = vmatpush1.msra.mxu0 0.0
    %529 = vmatprep.subr.mxu0 0.0
    %530 = vmatpush1.msra.mxu0 0.0
    %531 = vmatprep.subr.mxu0 0.0
    %532 = vmatpush1.msra.mxu0 0.0
    %533 = vmatprep.subr.mxu0 0.0
    %534 = vmatpush1.msra.mxu0 0.0
    %535 = vmatprep.subr.mxu0 0.0
    %536 = vmatpush1.msra.mxu0 0.0
    %537 = vmatprep.subr.mxu0 0.0
    %538 = vmatpush1.msra.mxu0 0.0
    %539 = vmatprep.subr.mxu0 0.0
    %540 = vmatpush1.msra.mxu0 0.0
    %541 = vmatprep.subr.mxu0 0.0
    %542 = vmatpush1.msra.mxu0 0.0
    %543 = vmatprep.subr.mxu0 0.0
    %544 = vmatpush1.msra.mxu0 0.0
    %545 = vmatprep.subr.mxu0 0.0
    %546 = vmatpush1.msra.mxu0 0.0
    %547 = vmatprep.subr.mxu0 0.0
    %548 = vmatpush1.msra.mxu0 0.0
    %549 = vmatprep.subr.mxu0 0.0
    %550 = vmatpush1.msra.mxu0 0.0
    %551 = vmatprep.subr.mxu0 0.0
    %552 = vmatpush1.msra.mxu0 0.0
    %553 = vmatprep.subr.mxu0 0.0
    %554 = vmatpush1.msra.mxu0 0.0
    %555 = vmatprep.subr.mxu0 0.0
    %556 = vmatpush1.msra.mxu0 0.0
    %557 = vmatprep.subr.mxu0 0.0
    %558 = vmatpush1.msra.mxu0 0.0
    %559 = vmatprep.subr.mxu0 0.0
    %560 = vmatpush1.msra.mxu0 0.0
    %561 = vmatprep.subr.mxu0 0.0
    %562 = vmatpush1.msra.mxu0 0.0
    %563 = vmatprep.subr.mxu0 0.0
    %564 = vmatpush1.msra.mxu0 0.0
    %565 = vmatprep.mubr.f32.mxu0 0.0
    %566 = vmatmul.mubr.f32.gmra.mrb[0].mxu0 %v496
    %v567 = vpop.f32.mrb[0].mxu0
    %v568 = vadd.f32 0.0, %v567
    %v569 = vpop.f32.mrb[0].mxu0
    %570 = vmatprep.mubr.f32.mxu0 0.0
    %571 = vmatmul.mubr.f32.gmra.mrb[0].mxu0 %v499
    %v572 = vpop.f32.mrb[0].mxu0
    %v573 = vadd.f32 0.0, %v572
    %v574 = vpop.f32.mrb[0].mxu0
    %575 = vdwg.mxu0
    %v577 = vlaneseq
    %v578 = vshrl.u32 %v577, 7
    %v579 = vsub.s32 0, %v578
    %v580 = vrot.slane %v219, %v579
    %v582 = vadd.f32 %v580, %v568
    %v583 = vadd.f32 %v580, %v573
    %s584 = scalar_lea.vmem %s5, 32
    %v585 = vld [vmem:[%s584] sm:$0xff]
    %v586 = vld [vmem:[%s584 + $0x8] sm:$0xff]
    %v587 = vld [vmem:[%s584 + $0x10] sm:$0xff]
    %v588 = vld [vmem:[%s584 + $0x18] sm:$0xff]
    %s589 = scalar_lea.vmem [#allocation5], 1
    %v590 = vld [vmem:[%s589] sm:$0x1]
    %v592 = vlaneseq
    %v593 = vshrl.u32 %v592, 7
    %v594 = vsub.s32 0, %v593
    %v595 = vrot.slane %v590, %v594
    %597 = vmatprep.subr.mxu0 0.0
    %598 = vmatpush1.msra.mxu0 %v585
    %599 = vmatprep.subr.mxu0 0.0
    %600 = vmatpush1.msra.mxu0 %v586
    %601 = vmatprep.subr.mxu0 0.0
    %602 = vmatpush1.msra.mxu0 %v587
    %603 = vmatprep.subr.mxu0 0.0
    %604 = vmatpush1.msra.mxu0 %v588
    %605 = vmatprep.subr.mxu0 0.0
    %606 = vmatpush1.msra.mxu0 0.0
    %607 = vmatprep.subr.mxu0 0.0
    %608 = vmatpush1.msra.mxu0 0.0
    %609 = vmatprep.subr.mxu0 0.0
    %610 = vmatpush1.msra.mxu0 0.0
    %611 = vmatprep.subr.mxu0 0.0
    %612 = vmatpush1.msra.mxu0 0.0
    %613 = vmatprep.subr.mxu0 0.0
    %614 = vmatpush1.msra.mxu0 0.0
    %615 = vmatprep.subr.mxu0 0.0
    %616 = vmatpush1.msra.mxu0 0.0
    %617 = vmatprep.subr.mxu0 0.0
    %618 = vmatpush1.msra.mxu0 0.0
    %619 = vmatprep.subr.mxu0 0.0
    %620 = vmatpush1.msra.mxu0 0.0
    %621 = vmatprep.subr.mxu0 0.0
    %622 = vmatpush1.msra.mxu0 0.0
    %623 = vmatprep.subr.mxu0 0.0
    %624 = vmatpush1.msra.mxu0 0.0
    %625 = vmatprep.subr.mxu0 0.0
    %626 = vmatpush1.msra.mxu0 0.0
    %627 = vmatprep.subr.mxu0 0.0
    %628 = vmatpush1.msra.mxu0 0.0
    %629 = vmatprep.subr.mxu0 0.0
    %630 = vmatpush1.msra.mxu0 0.0
    %631 = vmatprep.subr.mxu0 0.0
    %632 = vmatpush1.msra.mxu0 0.0
    %633 = vmatprep.subr.mxu0 0.0
    %634 = vmatpush1.msra.mxu0 0.0
    %635 = vmatprep.subr.mxu0 0.0
    %636 = vmatpush1.msra.mxu0 0.0
    %637 = vmatprep.subr.mxu0 0.0
    %638 = vmatpush1.msra.mxu0 0.0
    %639 = vmatprep.subr.mxu0 0.0
    %640 = vmatpush1.msra.mxu0 0.0
    %641 = vmatprep.subr.mxu0 0.0
    %642 = vmatpush1.msra.mxu0 0.0
    %643 = vmatprep.subr.mxu0 0.0
    %644 = vmatpush1.msra.mxu0 0.0
    %645 = vmatprep.subr.mxu0 0.0
    %646 = vmatpush1.msra.mxu0 0.0
    %647 = vmatprep.subr.mxu0 0.0
    %648 = vmatpush1.msra.mxu0 0.0
    %649 = vmatprep.subr.mxu0 0.0
    %650 = vmatpush1.msra.mxu0 0.0
    %651 = vmatprep.subr.mxu0 0.0
    %652 = vmatpush1.msra.mxu0 0.0
    %653 = vmatprep.subr.mxu0 0.0
    %654 = vmatpush1.msra.mxu0 0.0
    %655 = vmatprep.subr.mxu0 0.0
    %656 = vmatpush1.msra.mxu0 0.0
    %657 = vmatprep.subr.mxu0 0.0
    %658 = vmatpush1.msra.mxu0 0.0
    %659 = vmatprep.subr.mxu0 0.0
    %660 = vmatpush1.msra.mxu0 0.0
    %661 = vmatprep.mubr.f32.mxu0 0.0
    %662 = vmatmul.mubr.f32.gmra.mrb[0].mxu0 %v232
    %v663 = vpop.f32.mrb[0].mxu0
    %v664 = vadd.f32 %v595, %v663
    %v665 = vpop.f32.mrb[0].mxu0
    %666 = vmatprep.mubr.f32.mxu0 0.0
    %667 = vmatmul.mubr.f32.gmra.mrb[0].mxu0 %v235
    %v668 = vpop.f32.mrb[0].mxu0
    %v669 = vadd.f32 %v595, %v668
    %v670 = vpop.f32.mrb[0].mxu0
    %671 = vdwg.mxu0
    %v673 = vsel %vm171, %v664, 0
    %v676 = vsel %vm171, %v669, 0
    %678 = vmatprep.subr.mxu0 0.0
    %679 = vmatpush1.xpose.msra.mxu0 %v232
    %680 = vmatprep.subr.mxu0 0.0
    %681 = vmatpush1.xpose.msra.mxu0 %v235
    %682 = vmatprep.subr.mxu0 0.0
    %683 = vmatpush1.xpose.msra.mxu0 0.0
    %684 = vmatprep.subr.mxu0 0.0
    %685 = vmatpush1.xpose.msra.mxu0 0.0
    %686 = vmatprep.subr.mxu0 0.0
    %687 = vmatpush1.xpose.msra.mxu0 0.0
    %688 = vmatprep.subr.mxu0 0.0
    %689 = vmatpush1.xpose.msra.mxu0 0.0
    %690 = vmatprep.subr.mxu0 0.0
    %691 = vmatpush1.xpose.msra.mxu0 0.0
    %692 = vmatprep.subr.mxu0 0.0
    %693 = vmatpush1.xpose.msra.mxu0 0.0
    %694 = vmatprep.subr.mxu0 0.0
    %695 = vmatpush1.xpose.msra.mxu0 0.0
    %696 = vmatprep.subr.mxu0 0.0
    %697 = vmatpush1.xpose.msra.mxu0 0.0
    %698 = vmatprep.subr.mxu0 0.0
    %699 = vmatpush1.xpose.msra.mxu0 0.0
    %700 = vmatprep.subr.mxu0 0.0
    %701 = vmatpush1.xpose.msra.mxu0 0.0
    %702 = vmatprep.subr.mxu0 0.0
    %703 = vmatpush1.xpose.msra.mxu0 0.0
    %704 = vmatprep.subr.mxu0 0.0
    %705 = vmatpush1.xpose.msra.mxu0 0.0
    %706 = vmatprep.subr.mxu0 0.0
    %707 = vmatpush1.xpose.msra.mxu0 0.0
    %708 = vmatprep.subr.mxu0 0.0
    %709 = vmatpush1.xpose.msra.mxu0 0.0
    %710 = vmatprep.subr.mxu0 0.0
    %711 = vmatpush1.xpose.msra.mxu0 0.0
    %712 = vmatprep.subr.mxu0 0.0
    %713 = vmatpush1.xpose.msra.mxu0 0.0
    %714 = vmatprep.subr.mxu0 0.0
    %715 = vmatpush1.xpose.msra.mxu0 0.0
    %716 = vmatprep.subr.mxu0 0.0
    %717 = vmatpush1.xpose.msra.mxu0 0.0
    %718 = vmatprep.subr.mxu0 0.0
    %719 = vmatpush1.xpose.msra.mxu0 0.0
    %720 = vmatprep.subr.mxu0 0.0
    %721 = vmatpush1.xpose.msra.mxu0 0.0
    %722 = vmatprep.subr.mxu0 0.0
    %723 = vmatpush1.xpose.msra.mxu0 0.0
    %724 = vmatprep.subr.mxu0 0.0
    %725 = vmatpush1.xpose.msra.mxu0 0.0
    %726 = vmatprep.subr.mxu0 0.0
    %727 = vmatpush1.xpose.msra.mxu0 0.0
    %728 = vmatprep.subr.mxu0 0.0
    %729 = vmatpush1.xpose.msra.mxu0 0.0
    %730 = vmatprep.subr.mxu0 0.0
    %731 = vmatpush1.xpose.msra.mxu0 0.0
    %732 = vmatprep.subr.mxu0 0.0
    %733 = vmatpush1.xpose.msra.mxu0 0.0
    %734 = vmatprep.subr.mxu0 0.0
    %735 = vmatpush1.xpose.msra.mxu0 0.0
    %736 = vmatprep.subr.mxu0 0.0
    %737 = vmatpush1.xpose.msra.mxu0 0.0
    %738 = vmatprep.subr.mxu0 0.0
    %739 = vmatpush1.xpose.msra.mxu0 0.0
    %740 = vmatprep.subr.mxu0 0.0
    %741 = vmatpush1.xpose.msra.mxu0 0.0
    %742 = vmatprep.mubr.f32.mxu0 0.0
    %743 = vmatmul.mubr.f32.gmra.mrb[0].mxu0 %v673
    %v744 = vpop.f32.mrb[0].mxu0
    %v745 = vadd.f32 %v215, %v744
    %v746 = vpop.f32.mrb[0].mxu0
    %747 = vmatprep.mubr.f32.mxu0 0.0
    %748 = vmatmul.mubr.f32.gmra.mrb[0].mxu0 %v676
    %v749 = vpop.f32.mrb[0].mxu0
    %v750 = vadd.f32 %v216, %v749
    %v751 = vpop.f32.mrb[0].mxu0
    %752 = vdwg.mxu0
    %v753 = vsel %vm393, %v745, -inf
    %754 = vmax.xlane.f32.xlu0 %v753
    %v755 = vpop.xlane.xlu0 %754
    %v756 = vsel %vm393, %v750, -inf
    %757 = vmax.xlane.f32.xlu0 %v756
    %v758 = vpop.xlane.xlu0 %757
    %v759 = vsub.f32 %v745, %v755
    %v760 = vsub.f32 %v750, %v758
    %v761 = vmul.f32 %v759, 1.442695
    %v762 = vpow.pop %v761
    %v763 = vmul.f32 %v760, 1.442695
    %v764 = vpow.pop %v763
    %v765 = vsel %vm393, %v762, 0.0
    %766 = vadd.xlane.f32.xlu0 %v765
    %v767 = vpop.xlane.xlu0 %766
    %v768 = vsel %vm393, %v764, 0.0
    %769 = vadd.xlane.f32.xlu0 %v768
    %v770 = vpop.xlane.xlu0 %769
    %v771 = vrcp.pop %v767
    %v772 = vrcp.pop %v770
    %v773 = vmul.f32 %v762, %v771
    %v774 = vmul.f32 %v764, %v772
    %s775 = scalar_lea.vmem %s7, 32
    %v776 = vld [vmem:[%s775] sm:$0xff]
    %v777 = vld [vmem:[%s775 + $0x8] sm:$0xff]
    %v778 = vld [vmem:[%s775 + $0x10] sm:$0xff]
    %v779 = vld [vmem:[%s775 + $0x18] sm:$0xff]
    %780 = vmatprep.subr.mxu0 0.0
    %781 = vmatpush1.msra.mxu0 %v776
    %782 = vmatprep.subr.mxu0 0.0
    %783 = vmatpush1.msra.mxu0 %v777
    %784 = vmatprep.subr.mxu0 0.0
    %785 = vmatpush1.msra.mxu0 %v778
    %786 = vmatprep.subr.mxu0 0.0
    %787 = vmatpush1.msra.mxu0 %v779
    %788 = vmatprep.subr.mxu0 0.0
    %789 = vmatpush1.msra.mxu0 0.0
    %790 = vmatprep.subr.mxu0 0.0
    %791 = vmatpush1.msra.mxu0 0.0
    %792 = vmatprep.subr.mxu0 0.0
    %793 = vmatpush1.msra.mxu0 0.0
    %794 = vmatprep.subr.mxu0 0.0
    %795 = vmatpush1.msra.mxu0 0.0
    %796 = vmatprep.subr.mxu0 0.0
    %797 = vmatpush1.msra.mxu0 0.0
    %798 = vmatprep.subr.mxu0 0.0
    %799 = vmatpush1.msra.mxu0 0.0
    %800 = vmatprep.subr.mxu0 0.0
    %801 = vmatpush1.msra.mxu0 0.0
    %802 = vmatprep.subr.mxu0 0.0
    %803 = vmatpush1.msra.mxu0 0.0
    %804 = vmatprep.subr.mxu0 0.0
    %805 = vmatpush1.msra.mxu0 0.0
    %806 = vmatprep.subr.mxu0 0.0
    %807 = vmatpush1.msra.mxu0 0.0
    %808 = vmatprep.subr.mxu0 0.0
    %809 = vmatpush1.msra.mxu0 0.0
    %810 = vmatprep.subr.mxu0 0.0
    %811 = vmatpush1.msra.mxu0 0.0
    %812 = vmatprep.subr.mxu0 0.0
    %813 = vmatpush1.msra.mxu0 0.0
    %814 = vmatprep.subr.mxu0 0.0
    %815 = vmatpush1.msra.mxu0 0.0
    %816 = vmatprep.subr.mxu0 0.0
    %817 = vmatpush1.msra.mxu0 0.0
    %818 = vmatprep.subr.mxu0 0.0
    %819 = vmatpush1.msra.mxu0 0.0
    %820 = vmatprep.subr.mxu0 0.0
    %821 = vmatpush1.msra.mxu0 0.0
    %822 = vmatprep.subr.mxu0 0.0
    %823 = vmatpush1.msra.mxu0 0.0
    %824 = vmatprep.subr.mxu0 0.0
    %825 = vmatpush1.msra.mxu0 0.0
    %826 = vmatprep.subr.mxu0 0.0
    %827 = vmatpush1.msra.mxu0 0.0
    %828 = vmatprep.subr.mxu0 0.0
    %829 = vmatpush1.msra.mxu0 0.0
    %830 = vmatprep.subr.mxu0 0.0
    %831 = vmatpush1.msra.mxu0 0.0
    %832 = vmatprep.subr.mxu0 0.0
    %833 = vmatpush1.msra.mxu0 0.0
    %834 = vmatprep.subr.mxu0 0.0
    %835 = vmatpush1.msra.mxu0 0.0
    %836 = vmatprep.subr.mxu0 0.0
    %837 = vmatpush1.msra.mxu0 0.0
    %838 = vmatprep.subr.mxu0 0.0
    %839 = vmatpush1.msra.mxu0 0.0
    %840 = vmatprep.subr.mxu0 0.0
    %841 = vmatpush1.msra.mxu0 0.0
    %842 = vmatprep.subr.mxu0 0.0
    %843 = vmatpush1.msra.mxu0 0.0
    %844 = vmatprep.mubr.f32.mxu0 0.0
    %845 = vmatmul.mubr.f32.gmra.mrb[0].mxu0 %v232
    %v846 = vpop.f32.mrb[0].mxu0
    %v847 = vadd.f32 0.0, %v846
    %v848 = vpop.f32.mrb[0].mxu0
    %849 = vmatprep.mubr.f32.mxu0 0.0
    %850 = vmatmul.mubr.f32.gmra.mrb[0].mxu0 %v235
    %v851 = vpop.f32.mrb[0].mxu0
    %v852 = vadd.f32 0.0, %v851
    %v853 = vpop.f32.mrb[0].mxu0
    %854 = vdwg.mxu0
    %v856 = vsel %vm393, %v773, 0
    %v859 = vsel %vm393, %v774, 0
    %861 = vmatprep.subr.mxu0 0.0
    %862 = vmatpush1.msra.mxu0 %v847
    %863 = vmatprep.subr.mxu0 0.0
    %864 = vmatpush1.msra.mxu0 %v852
    %865 = vmatprep.subr.mxu0 0.0
    %866 = vmatpush1.msra.mxu0 0.0
    %867 = vmatprep.subr.mxu0 0.0
    %868 = vmatpush1.msra.mxu0 0.0
    %869 = vmatprep.subr.mxu0 0.0
    %870 = vmatpush1.msra.mxu0 0.0
    %871 = vmatprep.subr.mxu0 0.0
    %872 = vmatpush1.msra.mxu0 0.0
    %873 = vmatprep.subr.mxu0 0.0
    %874 = vmatpush1.msra.mxu0 0.0
    %875 = vmatprep.subr.mxu0 0.0
    %876 = vmatpush1.msra.mxu0 0.0
    %877 = vmatprep.subr.mxu0 0.0
    %878 = vmatpush1.msra.mxu0 0.0
    %879 = vmatprep.subr.mxu0 0.0
    %880 = vmatpush1.msra.mxu0 0.0
    %881 = vmatprep.subr.mxu0 0.0
    %882 = vmatpush1.msra.mxu0 0.0
    %883 = vmatprep.subr.mxu0 0.0
    %884 = vmatpush1.msra.mxu0 0.0
    %885 = vmatprep.subr.mxu0 0.0
    %886 = vmatpush1.msra.mxu0 0.0
    %887 = vmatprep.subr.mxu0 0.0
    %888 = vmatpush1.msra.mxu0 0.0
    %889 = vmatprep.subr.mxu0 0.0
    %890 = vmatpush1.msra.mxu0 0.0
    %891 = vmatprep.subr.mxu0 0.0
    %892 = vmatpush1.msra.mxu0 0.0
    %893 = vmatprep.subr.mxu0 0.0
    %894 = vmatpush1.msra.mxu0 0.0
    %895 = vmatprep.subr.mxu0 0.0
    %896 = vmatpush1.msra.mxu0 0.0
    %897 = vmatprep.subr.mxu0 0.0
    %898 = vmatpush1.msra.mxu0 0.0
    %899 = vmatprep.subr.mxu0 0.0
    %900 = vmatpush1.msra.mxu0 0.0
    %901 = vmatprep.subr.mxu0 0.0
    %902 = vmatpush1.msra.mxu0 0.0
    %903 = vmatprep.subr.mxu0 0.0
    %904 = vmatpush1.msra.mxu0 0.0
    %905 = vmatprep.subr.mxu0 0.0
    %906 = vmatpush1.msra.mxu0 0.0
    %907 = vmatprep.subr.mxu0 0.0
    %908 = vmatpush1.msra.mxu0 0.0
    %909 = vmatprep.subr.mxu0 0.0
    %910 = vmatpush1.msra.mxu0 0.0
    %911 = vmatprep.subr.mxu0 0.0
    %912 = vmatpush1.msra.mxu0 0.0
    %913 = vmatprep.subr.mxu0 0.0
    %914 = vmatpush1.msra.mxu0 0.0
    %915 = vmatprep.subr.mxu0 0.0
    %916 = vmatpush1.msra.mxu0 0.0
    %917 = vmatprep.subr.mxu0 0.0
    %918 = vmatpush1.msra.mxu0 0.0
    %919 = vmatprep.subr.mxu0 0.0
    %920 = vmatpush1.msra.mxu0 0.0
    %921 = vmatprep.subr.mxu0 0.0
    %922 = vmatpush1.msra.mxu0 0.0
    %923 = vmatprep.subr.mxu0 0.0
    %924 = vmatpush1.msra.mxu0 0.0
    %925 = vmatprep.mubr.f32.mxu0 0.0
    %926 = vmatmul.mubr.f32.gmra.mrb[0].mxu0 %v856
    %v927 = vpop.f32.mrb[0].mxu0
    %v928 = vadd.f32 0.0, %v927
    %v929 = vpop.f32.mrb[0].mxu0
    %930 = vmatprep.mubr.f32.mxu0 0.0
    %931 = vmatmul.mubr.f32.gmra.mrb[0].mxu0 %v859
    %v932 = vpop.f32.mrb[0].mxu0
    %v933 = vadd.f32 0.0, %v932
    %v934 = vpop.f32.mrb[0].mxu0
    %935 = vdwg.mxu0
    %v936 = vadd.f32 %v582, %v928
    %v937 = vadd.f32 %v583, %v933
    %s938 = scalar_lea.vmem %s5, 64
    %v939 = vld [vmem:[%s938] sm:$0xff]
    %v940 = vld [vmem:[%s938 + $0x8] sm:$0xff]
    %v941 = vld [vmem:[%s938 + $0x10] sm:$0xff]
    %v942 = vld [vmem:[%s938 + $0x18] sm:$0xff]
    %s943 = scalar_lea.vmem [#allocation5], 2
    %v944 = vld [vmem:[%s943] sm:$0x1]
    %v946 = vlaneseq
    %v947 = vshrl.u32 %v946, 7
    %v948 = vsub.s32 0, %v947
    %v949 = vrot.slane %v944, %v948
    %951 = vmatprep.subr.mxu0 0.0
    %952 = vmatpush1.msra.mxu0 %v939
    %953 = vmatprep.subr.mxu0 0.0
    %954 = vmatpush1.msra.mxu0 %v940
    %955 = vmatprep.subr.mxu0 0.0
    %956 = vmatpush1.msra.mxu0 %v941
    %957 = vmatprep.subr.mxu0 0.0
    %958 = vmatpush1.msra.mxu0 %v942
    %959 = vmatprep.subr.mxu0 0.0
    %960 = vmatpush1.msra.mxu0 0.0
    %961 = vmatprep.subr.mxu0 0.0
    %962 = vmatpush1.msra.mxu0 0.0
    %963 = vmatprep.subr.mxu0 0.0
    %964 = vmatpush1.msra.mxu0 0.0
    %965 = vmatprep.subr.mxu0 0.0
    %966 = vmatpush1.msra.mxu0 0.0
    %967 = vmatprep.subr.mxu0 0.0
    %968 = vmatpush1.msra.mxu0 0.0
    %969 = vmatprep.subr.mxu0 0.0
    %970 = vmatpush1.msra.mxu0 0.0
    %971 = vmatprep.subr.mxu0 0.0
    %972 = vmatpush1.msra.mxu0 0.0
    %973 = vmatprep.subr.mxu0 0.0
    %974 = vmatpush1.msra.mxu0 0.0
    %975 = vmatprep.subr.mxu0 0.0
    %976 = vmatpush1.msra.mxu0 0.0
    %977 = vmatprep.subr.mxu0 0.0
    %978 = vmatpush1.msra.mxu0 0.0
    %979 = vmatprep.subr.mxu0 0.0
    %980 = vmatpush1.msra.mxu0 0.0
    %981 = vmatprep.subr.mxu0 0.0
    %982 = vmatpush1.msra.mxu0 0.0
    %983 = vmatprep.subr.mxu0 0.0
    %984 = vmatpush1.msra.mxu0 0.0
    %985 = vmatprep.subr.mxu0 0.0
    %986 = vmatpush1.msra.mxu0 0.0
    %987 = vmatprep.subr.mxu0 0.0
    %988 = vmatpush1.msra.mxu0 0.0
    %989 = vmatprep.subr.mxu0 0.0
    %990 = vmatpush1.msra.mxu0 0.0
    %991 = vmatprep.subr.mxu0 0.0
    %992 = vmatpush1.msra.mxu0 0.0
    %993 = vmatprep.subr.mxu0 0.0
    %994 = vmatpush1.msra.mxu0 0.0
    %995 = vmatprep.subr.mxu0 0.0
    %996 = vmatpush1.msra.mxu0 0.0
    %997 = vmatprep.subr.mxu0 0.0
    %998 = vmatpush1.msra.mxu0 0.0
    %999 = vmatprep.subr.mxu0 0.0
    %1000 = vmatpush1.msra.mxu0 0.0
    %1001 = vmatprep.subr.mxu0 0.0
    %1002 = vmatpush1.msra.mxu0 0.0
    %1003 = vmatprep.subr.mxu0 0.0
    %1004 = vmatpush1.msra.mxu0 0.0
    %1005 = vmatprep.subr.mxu0 0.0
    %1006 = vmatpush1.msra.mxu0 0.0
    %1007 = vmatprep.subr.mxu0 0.0
    %1008 = vmatpush1.msra.mxu0 0.0
    %1009 = vmatprep.subr.mxu0 0.0
    %1010 = vmatpush1.msra.mxu0 0.0
    %1011 = vmatprep.subr.mxu0 0.0
    %1012 = vmatpush1.msra.mxu0 0.0
    %1013 = vmatprep.subr.mxu0 0.0
    %1014 = vmatpush1.msra.mxu0 0.0
    %1015 = vmatprep.mubr.f32.mxu0 0.0
    %1016 = vmatmul.mubr.f32.gmra.mrb[0].mxu0 %v232
    %v1017 = vpop.f32.mrb[0].mxu0
    %v1018 = vadd.f32 %v949, %v1017
    %v1019 = vpop.f32.mrb[0].mxu0
    %1020 = vmatprep.mubr.f32.mxu0 0.0
    %1021 = vmatmul.mubr.f32.gmra.mrb[0].mxu0 %v235
    %v1022 = vpop.f32.mrb[0].mxu0
    %v1023 = vadd.f32 %v949, %v1022
    %v1024 = vpop.f32.mrb[0].mxu0
    %1025 = vdwg.mxu0
    %v1027 = vsel %vm171, %v1018, 0
    %v1030 = vsel %vm171, %v1023, 0
    %1032 = vmatprep.subr.mxu0 0.0
    %1033 = vmatpush1.xpose.msra.mxu0 %v232
    %1034 = vmatprep.subr.mxu0 0.0
    %1035 = vmatpush1.xpose.msra.mxu0 %v235
    %1036 = vmatprep.subr.mxu0 0.0
    %1037 = vmatpush1.xpose.msra.mxu0 0.0
    %1038 = vmatprep.subr.mxu0 0.0
    %1039 = vmatpush1.xpose.msra.mxu0 0.0
    %1040 = vmatprep.subr.mxu0 0.0
    %1041 = vmatpush1.xpose.msra.mxu0 0.0
    %1042 = vmatprep.subr.mxu0 0.0
    %1043 = vmatpush1.xpose.msra.mxu0 0.0
    %1044 = vmatprep.subr.mxu0 0.0
    %1045 = vmatpush1.xpose.msra.mxu0 0.0
    %1046 = vmatprep.subr.mxu0 0.0
    %1047 = vmatpush1.xpose.msra.mxu0 0.0
    %1048 = vmatprep.subr.mxu0 0.0
    %1049 = vmatpush1.xpose.msra.mxu0 0.0
    %1050 = vmatprep.subr.mxu0 0.0
    %1051 = vmatpush1.xpose.msra.mxu0 0.0
    %1052 = vmatprep.subr.mxu0 0.0
    %1053 = vmatpush1.xpose.msra.mxu0 0.0
    %1054 = vmatprep.subr.mxu0 0.0
    %1055 = vmatpush1.xpose.msra.mxu0 0.0
    %1056 = vmatprep.subr.mxu0 0.0
    %1057 = vmatpush1.xpose.msra.mxu0 0.0
    %1058 = vmatprep.subr.mxu0 0.0
    %1059 = vmatpush1.xpose.msra.mxu0 0.0
    %1060 = vmatprep.subr.mxu0 0.0
    %1061 = vmatpush1.xpose.msra.mxu0 0.0
    %1062 = vmatprep.subr.mxu0 0.0
    %1063 = vmatpush1.xpose.msra.mxu0 0.0
    %1064 = vmatprep.subr.mxu0 0.0
    %1065 = vmatpush1.xpose.msra.mxu0 0.0
    %1066 = vmatprep.subr.mxu0 0.0
    %1067 = vmatpush1.xpose.msra.mxu0 0.0
    %1068 = vmatprep.subr.mxu0 0.0
    %1069 = vmatpush1.xpose.msra.mxu0 0.0
    %1070 = vmatprep.subr.mxu0 0.0
    %1071 = vmatpush1.xpose.msra.mxu0 0.0
    %1072 = vmatprep.subr.mxu0 0.0
    %1073 = vmatpush1.xpose.msra.mxu0 0.0
    %1074 = vmatprep.subr.mxu0 0.0
    %1075 = vmatpush1.xpose.msra.mxu0 0.0
    %1076 = vmatprep.subr.mxu0 0.0
    %1077 = vmatpush1.xpose.msra.mxu0 0.0
    %1078 = vmatprep.subr.mxu0 0.0
    %1079 = vmatpush1.xpose.msra.mxu0 0.0
    %1080 = vmatprep.subr.mxu0 0.0
    %1081 = vmatpush1.xpose.msra.mxu0 0.0
    %1082 = vmatprep.subr.mxu0 0.0
    %1083 = vmatpush1.xpose.msra.mxu0 0.0
    %1084 = vmatprep.subr.mxu0 0.0
    %1085 = vmatpush1.xpose.msra.mxu0 0.0
    %1086 = vmatprep.subr.mxu0 0.0
    %1087 = vmatpush1.xpose.msra.mxu0 0.0
    %1088 = vmatprep.subr.mxu0 0.0
    %1089 = vmatpush1.xpose.msra.mxu0 0.0
    %1090 = vmatprep.subr.mxu0 0.0
    %1091 = vmatpush1.xpose.msra.mxu0 0.0
    %1092 = vmatprep.subr.mxu0 0.0
    %1093 = vmatpush1.xpose.msra.mxu0 0.0
    %1094 = vmatprep.subr.mxu0 0.0
    %1095 = vmatpush1.xpose.msra.mxu0 0.0
    %1096 = vmatprep.mubr.f32.mxu0 0.0
    %1097 = vmatmul.mubr.f32.gmra.mrb[0].mxu0 %v1027
    %v1098 = vpop.f32.mrb[0].mxu0
    %v1099 = vadd.f32 %v215, %v1098
    %v1100 = vpop.f32.mrb[0].mxu0
    %1101 = vmatprep.mubr.f32.mxu0 0.0
    %1102 = vmatmul.mubr.f32.gmra.mrb[0].mxu0 %v1030
    %v1103 = vpop.f32.mrb[0].mxu0
    %v1104 = vadd.f32 %v216, %v1103
    %v1105 = vpop.f32.mrb[0].mxu0
    %1106 = vdwg.mxu0
    %v1107 = vsel %vm393, %v1099, -inf
    %1108 = vmax.xlane.f32.xlu0 %v1107
    %v1109 = vpop.xlane.xlu0 %1108
    %v1110 = vsel %vm393, %v1104, -inf
    %1111 = vmax.xlane.f32.xlu0 %v1110
    %v1112 = vpop.xlane.xlu0 %1111
    %v1113 = vsub.f32 %v1099, %v1109
    %v1114 = vsub.f32 %v1104, %v1112
    %v1115 = vmul.f32 %v1113, 1.442695
    %v1116 = vpow.pop %v1115
    %v1117 = vmul.f32 %v1114, 1.442695
    %v1118 = vpow.pop %v1117
    %v1119 = vsel %vm393, %v1116, 0.0
    %1120 = vadd.xlane.f32.xlu0 %v1119
    %v1121 = vpop.xlane.xlu0 %1120
    %v1122 = vsel %vm393, %v1118, 0.0
    %1123 = vadd.xlane.f32.xlu0 %v1122
    %v1124 = vpop.xlane.xlu0 %1123
    %v1125 = vrcp.pop %v1121
    %v1126 = vrcp.pop %v1124
    %v1127 = vmul.f32 %v1116, %v1125
    %v1128 = vmul.f32 %v1118, %v1126
    %s1129 = scalar_lea.vmem %s7, 64
    %v1130 = vld [vmem:[%s1129] sm:$0xff]
    %v1131 = vld [vmem:[%s1129 + $0x8] sm:$0xff]
    %v1132 = vld [vmem:[%s1129 + $0x10] sm:$0xff]
    %v1133 = vld [vmem:[%s1129 + $0x18] sm:$0xff]
    %1134 = vmatprep.subr.mxu0 0.0
    %1135 = vmatpush1.msra.mxu0 %v1130
    %1136 = vmatprep.subr.mxu0 0.0
    %1137 = vmatpush1.msra.mxu0 %v1131
    %1138 = vmatprep.subr.mxu0 0.0
    %1139 = vmatpush1.msra.mxu0 %v1132
    %1140 = vmatprep.subr.mxu0 0.0
    %1141 = vmatpush1.msra.mxu0 %v1133
    %1142 = vmatprep.subr.mxu0 0.0
    %1143 = vmatpush1.msra.mxu0 0.0
    %1144 = vmatprep.subr.mxu0 0.0
    %1145 = vmatpush1.msra.mxu0 0.0
    %1146 = vmatprep.subr.mxu0 0.0
    %1147 = vmatpush1.msra.mxu0 0.0
    %1148 = vmatprep.subr.mxu0 0.0
    %1149 = vmatpush1.msra.mxu0 0.0
    %1150 = vmatprep.subr.mxu0 0.0
    %1151 = vmatpush1.msra.mxu0 0.0
    %1152 = vmatprep.subr.mxu0 0.0
    %1153 = vmatpush1.msra.mxu0 0.0
    %1154 = vmatprep.subr.mxu0 0.0
    %1155 = vmatpush1.msra.mxu0 0.0
    %1156 = vmatprep.subr.mxu0 0.0
    %1157 = vmatpush1.msra.mxu0 0.0
    %1158 = vmatprep.subr.mxu0 0.0
    %1159 = vmatpush1.msra.mxu0 0.0
    %1160 = vmatprep.subr.mxu0 0.0
    %1161 = vmatpush1.msra.mxu0 0.0
    %1162 = vmatprep.subr.mxu0 0.0
    %1163 = vmatpush1.msra.mxu0 0.0
    %1164 = vmatprep.subr.mxu0 0.0
    %1165 = vmatpush1.msra.mxu0 0.0
    %1166 = vmatprep.subr.mxu0 0.0
    %1167 = vmatpush1.msra.mxu0 0.0
    %1168 = vmatprep.subr.mxu0 0.0
    %1169 = vmatpush1.msra.mxu0 0.0
    %1170 = vmatprep.subr.mxu0 0.0
    %1171 = vmatpush1.msra.mxu0 0.0
    %1172 = vmatprep.subr.mxu0 0.0
    %1173 = vmatpush1.msra.mxu0 0.0
    %1174 = vmatprep.subr.mxu0 0.0
    %1175 = vmatpush1.msra.mxu0 0.0
    %1176 = vmatprep.subr.mxu0 0.0
    %1177 = vmatpush1.msra.mxu0 0.0
    %1178 = vmatprep.subr.mxu0 0.0
    %1179 = vmatpush1.msra.mxu0 0.0
    %1180 = vmatprep.subr.mxu0 0.0
    %1181 = vmatpush1.msra.mxu0 0.0
    %1182 = vmatprep.subr.mxu0 0.0
    %1183 = vmatpush1.msra.mxu0 0.0
    %1184 = vmatprep.subr.mxu0 0.0
    %1185 = vmatpush1.msra.mxu0 0.0
    %1186 = vmatprep.subr.mxu0 0.0
    %1187 = vmatpush1.msra.mxu0 0.0
    %1188 = vmatprep.subr.mxu0 0.0
    %1189 = vmatpush1.msra.mxu0 0.0
    %1190 = vmatprep.subr.mxu0 0.0
    %1191 = vmatpush1.msra.mxu0 0.0
    %1192 = vmatprep.subr.mxu0 0.0
    %1193 = vmatpush1.msra.mxu0 0.0
    %1194 = vmatprep.subr.mxu0 0.0
    %1195 = vmatpush1.msra.mxu0 0.0
    %1196 = vmatprep.subr.mxu0 0.0
    %1197 = vmatpush1.msra.mxu0 0.0
    %1198 = vmatprep.mubr.f32.mxu0 0.0
    %1199 = vmatmul.mubr.f32.gmra.mrb[0].mxu0 %v232
    %v1200 = vpop.f32.mrb[0].mxu0
    %v1201 = vadd.f32 0.0, %v1200
    %v1202 = vpop.f32.mrb[0].mxu0
    %1203 = vmatprep.mubr.f32.mxu0 0.0
    %1204 = vmatmul.mubr.f32.gmra.mrb[0].mxu0 %v235
    %v1205 = vpop.f32.mrb[0].mxu0
    %v1206 = vadd.f32 0.0, %v1205
    %v1207 = vpop.f32.mrb[0].mxu0
    %1208 = vdwg.mxu0
    %v1210 = vsel %vm393, %v1127, 0
    %v1213 = vsel %vm393, %v1128, 0
    %1215 = vmatprep.subr.mxu0 0.0
    %1216 = vmatpush1.msra.mxu0 %v1201
    %1217 = vmatprep.subr.mxu0 0.0
    %1218 = vmatpush1.msra.mxu0 %v1206
    %1219 = vmatprep.subr.mxu0 0.0
    %1220 = vmatpush1.msra.mxu0 0.0
    %1221 = vmatprep.subr.mxu0 0.0
    %1222 = vmatpush1.msra.mxu0 0.0
    %1223 = vmatprep.subr.mxu0 0.0
    %1224 = vmatpush1.msra.mxu0 0.0
    %1225 = vmatprep.subr.mxu0 0.0
    %1226 = vmatpush1.msra.mxu0 0.0
    %1227 = vmatprep.subr.mxu0 0.0
    %1228 = vmatpush1.msra.mxu0 0.0
    %1229 = vmatprep.subr.mxu0 0.0
    %1230 = vmatpush1.msra.mxu0 0.0
    %1231 = vmatprep.subr.mxu0 0.0
    %1232 = vmatpush1.msra.mxu0 0.0
    %1233 = vmatprep.subr.mxu0 0.0
    %1234 = vmatpush1.msra.mxu0 0.0
    %1235 = vmatprep.subr.mxu0 0.0
    %1236 = vmatpush1.msra.mxu0 0.0
    %1237 = vmatprep.subr.mxu0 0.0
    %1238 = vmatpush1.msra.mxu0 0.0
    %1239 = vmatprep.subr.mxu0 0.0
    %1240 = vmatpush1.msra.mxu0 0.0
    %1241 = vmatprep.subr.mxu0 0.0
    %1242 = vmatpush1.msra.mxu0 0.0
    %1243 = vmatprep.subr.mxu0 0.0
    %1244 = vmatpush1.msra.mxu0 0.0
    %1245 = vmatprep.subr.mxu0 0.0
    %1246 = vmatpush1.msra.mxu0 0.0
    %1247 = vmatprep.subr.mxu0 0.0
    %1248 = vmatpush1.msra.mxu0 0.0
    %1249 = vmatprep.subr.mxu0 0.0
    %1250 = vmatpush1.msra.mxu0 0.0
    %1251 = vmatprep.subr.mxu0 0.0
    %1252 = vmatpush1.msra.mxu0 0.0
    %1253 = vmatprep.subr.mxu0 0.0
    %1254 = vmatpush1.msra.mxu0 0.0
    %1255 = vmatprep.subr.mxu0 0.0
    %1256 = vmatpush1.msra.mxu0 0.0
    %1257 = vmatprep.subr.mxu0 0.0
    %1258 = vmatpush1.msra.mxu0 0.0
    %1259 = vmatprep.subr.mxu0 0.0
    %1260 = vmatpush1.msra.mxu0 0.0
    %1261 = vmatprep.subr.mxu0 0.0
    %1262 = vmatpush1.msra.mxu0 0.0
    %1263 = vmatprep.subr.mxu0 0.0
    %1264 = vmatpush1.msra.mxu0 0.0
    %1265 = vmatprep.subr.mxu0 0.0
    %1266 = vmatpush1.msra.mxu0 0.0
    %1267 = vmatprep.subr.mxu0 0.0
    %1268 = vmatpush1.msra.mxu0 0.0
    %1269 = vmatprep.subr.mxu0 0.0
    %1270 = vmatpush1.msra.mxu0 0.0
    %1271 = vmatprep.subr.mxu0 0.0
    %1272 = vmatpush1.msra.mxu0 0.0
    %1273 = vmatprep.subr.mxu0 0.0
    %1274 = vmatpush1.msra.mxu0 0.0
    %1275 = vmatprep.subr.mxu0 0.0
    %1276 = vmatpush1.msra.mxu0 0.0
    %1277 = vmatprep.subr.mxu0 0.0
    %1278 = vmatpush1.msra.mxu0 0.0
    %1279 = vmatprep.mubr.f32.mxu0 0.0
    %1280 = vmatmul.mubr.f32.gmra.mrb[0].mxu0 %v1210
    %v1281 = vpop.f32.mrb[0].mxu0
    %v1282 = vadd.f32 0.0, %v1281
    %v1283 = vpop.f32.mrb[0].mxu0
    %1284 = vmatprep.mubr.f32.mxu0 0.0
    %1285 = vmatmul.mubr.f32.gmra.mrb[0].mxu0 %v1213
    %v1286 = vpop.f32.mrb[0].mxu0
    %v1287 = vadd.f32 0.0, %v1286
    %v1288 = vpop.f32.mrb[0].mxu0
    %1289 = vdwg.mxu0
    %v1290 = vadd.f32 %v936, %v1282
    %v1291 = vadd.f32 %v937, %v1287
    %s1292 = scalar_lea.vmem %s5, 96
    %v1293 = vld [vmem:[%s1292] sm:$0xff]
    %v1294 = vld [vmem:[%s1292 + $0x8] sm:$0xff]
    %v1295 = vld [vmem:[%s1292 + $0x10] sm:$0xff]
    %v1296 = vld [vmem:[%s1292 + $0x18] sm:$0xff]
    %s1297 = scalar_lea.vmem [#allocation5], 3
    %v1298 = vld [vmem:[%s1297] sm:$0x1]
    %v1300 = vlaneseq
    %v1301 = vshrl.u32 %v1300, 7
    %v1302 = vsub.s32 0, %v1301
    %v1303 = vrot.slane %v1298, %v1302
    %1305 = vmatprep.subr.mxu0 0.0
    %1306 = vmatpush1.msra.mxu0 %v1293
    %1307 = vmatprep.subr.mxu0 0.0
    %1308 = vmatpush1.msra.mxu0 %v1294
    %1309 = vmatprep.subr.mxu0 0.0
    %1310 = vmatpush1.msra.mxu0 %v1295
    %1311 = vmatprep.subr.mxu0 0.0
    %1312 = vmatpush1.msra.mxu0 %v1296
    %1313 = vmatprep.subr.mxu0 0.0
    %1314 = vmatpush1.msra.mxu0 0.0
    %1315 = vmatprep.subr.mxu0 0.0
    %1316 = vmatpush1.msra.mxu0 0.0
    %1317 = vmatprep.subr.mxu0 0.0
    %1318 = vmatpush1.msra.mxu0 0.0
    %1319 = vmatprep.subr.mxu0 0.0
    %1320 = vmatpush1.msra.mxu0 0.0
    %1321 = vmatprep.subr.mxu0 0.0
    %1322 = vmatpush1.msra.mxu0 0.0
    %1323 = vmatprep.subr.mxu0 0.0
    %1324 = vmatpush1.msra.mxu0 0.0
    %1325 = vmatprep.subr.mxu0 0.0
    %1326 = vmatpush1.msra.mxu0 0.0
    %1327 = vmatprep.subr.mxu0 0.0
    %1328 = vmatpush1.msra.mxu0 0.0
    %1329 = vmatprep.subr.mxu0 0.0
    %1330 = vmatpush1.msra.mxu0 0.0
    %1331 = vmatprep.subr.mxu0 0.0
    %1332 = vmatpush1.msra.mxu0 0.0
    %1333 = vmatprep.subr.mxu0 0.0
    %1334 = vmatpush1.msra.mxu0 0.0
    %1335 = vmatprep.subr.mxu0 0.0
    %1336 = vmatpush1.msra.mxu0 0.0
    %1337 = vmatprep.subr.mxu0 0.0
    %1338 = vmatpush1.msra.mxu0 0.0
    %1339 = vmatprep.subr.mxu0 0.0
    %1340 = vmatpush1.msra.mxu0 0.0
    %1341 = vmatprep.subr.mxu0 0.0
    %1342 = vmatpush1.msra.mxu0 0.0
    %1343 = vmatprep.subr.mxu0 0.0
    %1344 = vmatpush1.msra.mxu0 0.0
    %1345 = vmatprep.subr.mxu0 0.0
    %1346 = vmatpush1.msra.mxu0 0.0
    %1347 = vmatprep.subr.mxu0 0.0
    %1348 = vmatpush1.msra.mxu0 0.0
    %1349 = vmatprep.subr.mxu0 0.0
    %1350 = vmatpush1.msra.mxu0 0.0
    %1351 = vmatprep.subr.mxu0 0.0
    %1352 = vmatpush1.msra.mxu0 0.0
    %1353 = vmatprep.subr.mxu0 0.0
    %1354 = vmatpush1.msra.mxu0 0.0
    %1355 = vmatprep.subr.mxu0 0.0
    %1356 = vmatpush1.msra.mxu0 0.0
    %1357 = vmatprep.subr.mxu0 0.0
    %1358 = vmatpush1.msra.mxu0 0.0
    %1359 = vmatprep.subr.mxu0 0.0
    %1360 = vmatpush1.msra.mxu0 0.0
    %1361 = vmatprep.subr.mxu0 0.0
    %1362 = vmatpush1.msra.mxu0 0.0
    %1363 = vmatprep.subr.mxu0 0.0
    %1364 = vmatpush1.msra.mxu0 0.0
    %1365 = vmatprep.subr.mxu0 0.0
    %1366 = vmatpush1.msra.mxu0 0.0
    %1367 = vmatprep.subr.mxu0 0.0
    %1368 = vmatpush1.msra.mxu0 0.0
    %1369 = vmatprep.mubr.f32.mxu0 0.0
    %1370 = vmatmul.mubr.f32.gmra.mrb[0].mxu0 %v232
    %v1371 = vpop.f32.mrb[0].mxu0
    %v1372 = vadd.f32 %v1303, %v1371
    %v1373 = vpop.f32.mrb[0].mxu0
    %1374 = vmatprep.mubr.f32.mxu0 0.0
    %1375 = vmatmul.mubr.f32.gmra.mrb[0].mxu0 %v235
    %v1376 = vpop.f32.mrb[0].mxu0
    %v1377 = vadd.f32 %v1303, %v1376
    %v1378 = vpop.f32.mrb[0].mxu0
    %1379 = vdwg.mxu0
    %v1381 = vsel %vm171, %v1372, 0
    %v1384 = vsel %vm171, %v1377, 0
    %1386 = vmatprep.subr.mxu0 0.0
    %1387 = vmatpush1.xpose.msra.mxu0 %v232
    %1388 = vmatprep.subr.mxu0 0.0
    %1389 = vmatpush1.xpose.msra.mxu0 %v235
    %1390 = vmatprep.subr.mxu0 0.0
    %1391 = vmatpush1.xpose.msra.mxu0 0.0
    %1392 = vmatprep.subr.mxu0 0.0
    %1393 = vmatpush1.xpose.msra.mxu0 0.0
    %1394 = vmatprep.subr.mxu0 0.0
    %1395 = vmatpush1.xpose.msra.mxu0 0.0
    %1396 = vmatprep.subr.mxu0 0.0
    %1397 = vmatpush1.xpose.msra.mxu0 0.0
    %1398 = vmatprep.subr.mxu0 0.0
    %1399 = vmatpush1.xpose.msra.mxu0 0.0
    %1400 = vmatprep.subr.mxu0 0.0
    %1401 = vmatpush1.xpose.msra.mxu0 0.0
    %1402 = vmatprep.subr.mxu0 0.0
    %1403 = vmatpush1.xpose.msra.mxu0 0.0
    %1404 = vmatprep.subr.mxu0 0.0
    %1405 = vmatpush1.xpose.msra.mxu0 0.0
    %1406 = vmatprep.subr.mxu0 0.0
    %1407 = vmatpush1.xpose.msra.mxu0 0.0
    %1408 = vmatprep.subr.mxu0 0.0
    %1409 = vmatpush1.xpose.msra.mxu0 0.0
    %1410 = vmatprep.subr.mxu0 0.0
    %1411 = vmatpush1.xpose.msra.mxu0 0.0
    %1412 = vmatprep.subr.mxu0 0.0
    %1413 = vmatpush1.xpose.msra.mxu0 0.0
    %1414 = vmatprep.subr.mxu0 0.0
    %1415 = vmatpush1.xpose.msra.mxu0 0.0
    %1416 = vmatprep.subr.mxu0 0.0
    %1417 = vmatpush1.xpose.msra.mxu0 0.0
    %1418 = vmatprep.subr.mxu0 0.0
    %1419 = vmatpush1.xpose.msra.mxu0 0.0
    %1420 = vmatprep.subr.mxu0 0.0
    %1421 = vmatpush1.xpose.msra.mxu0 0.0
    %1422 = vmatprep.subr.mxu0 0.0
    %1423 = vmatpush1.xpose.msra.mxu0 0.0
    %1424 = vmatprep.subr.mxu0 0.0
    %1425 = vmatpush1.xpose.msra.mxu0 0.0
    %1426 = vmatprep.subr.mxu0 0.0
    %1427 = vmatpush1.xpose.msra.mxu0 0.0
    %1428 = vmatprep.subr.mxu0 0.0
    %1429 = vmatpush1.xpose.msra.mxu0 0.0
    %1430 = vmatprep.subr.mxu0 0.0
    %1431 = vmatpush1.xpose.msra.mxu0 0.0
    %1432 = vmatprep.subr.mxu0 0.0
    %1433 = vmatpush1.xpose.msra.mxu0 0.0
    %1434 = vmatprep.subr.mxu0 0.0
    %1435 = vmatpush1.xpose.msra.mxu0 0.0
    %1436 = vmatprep.subr.mxu0 0.0
    %1437 = vmatpush1.xpose.msra.mxu0 0.0
    %1438 = vmatprep.subr.mxu0 0.0
    %1439 = vmatpush1.xpose.msra.mxu0 0.0
    %1440 = vmatprep.subr.mxu0 0.0
    %1441 = vmatpush1.xpose.msra.mxu0 0.0
    %1442 = vmatprep.subr.mxu0 0.0
    %1443 = vmatpush1.xpose.msra.mxu0 0.0
    %1444 = vmatprep.subr.mxu0 0.0
    %1445 = vmatpush1.xpose.msra.mxu0 0.0
    %1446 = vmatprep.subr.mxu0 0.0
    %1447 = vmatpush1.xpose.msra.mxu0 0.0
    %1448 = vmatprep.subr.mxu0 0.0
    %1449 = vmatpush1.xpose.msra.mxu0 0.0
    %1450 = vmatprep.mubr.f32.mxu0 0.0
    %1451 = vmatmul.mubr.f32.gmra.mrb[0].mxu0 %v1381
    %v1452 = vpop.f32.mrb[0].mxu0
    %v1453 = vadd.f32 %v215, %v1452
    %v1454 = vpop.f32.mrb[0].mxu0
    %1455 = vmatprep.mubr.f32.mxu0 0.0
    %1456 = vmatmul.mubr.f32.gmra.mrb[0].mxu0 %v1384
    %v1457 = vpop.f32.mrb[0].mxu0
    %v1458 = vadd.f32 %v216, %v1457
    %v1459 = vpop.f32.mrb[0].mxu0
    %1460 = vdwg.mxu0
    %v1461 = vsel %vm393, %v1453, -inf
    %1462 = vmax.xlane.f32.xlu0 %v1461
    %v1463 = vpop.xlane.xlu0 %1462
    %v1464 = vsel %vm393, %v1458, -inf
    %1465 = vmax.xlane.f32.xlu0 %v1464
    %v1466 = vpop.xlane.xlu0 %1465
    %v1467 = vsub.f32 %v1453, %v1463
    %v1468 = vsub.f32 %v1458, %v1466
    %v1469 = vmul.f32 %v1467, 1.442695
    %v1470 = vpow.pop %v1469
    %v1471 = vmul.f32 %v1468, 1.442695
    %v1472 = vpow.pop %v1471
    %v1473 = vsel %vm393, %v1470, 0.0
    %1474 = vadd.xlane.f32.xlu0 %v1473
    %v1475 = vpop.xlane.xlu0 %1474
    %v1476 = vsel %vm393, %v1472, 0.0
    %1477 = vadd.xlane.f32.xlu0 %v1476
    %v1478 = vpop.xlane.xlu0 %1477
    %v1479 = vrcp.pop %v1475
    %v1480 = vrcp.pop %v1478
    %v1481 = vmul.f32 %v1470, %v1479
    %v1482 = vmul.f32 %v1472, %v1480
    %s1483 = scalar_lea.vmem %s7, 96
    %v1484 = vld [vmem:[%s1483] sm:$0xff]
    %v1485 = vld [vmem:[%s1483 + $0x8] sm:$0xff]
    %v1486 = vld [vmem:[%s1483 + $0x10] sm:$0xff]
    %v1487 = vld [vmem:[%s1483 + $0x18] sm:$0xff]
    %1488 = vmatprep.subr.mxu0 0.0
    %1489 = vmatpush1.msra.mxu0 %v1484
    %1490 = vmatprep.subr.mxu0 0.0
    %1491 = vmatpush1.msra.mxu0 %v1485
    %1492 = vmatprep.subr.mxu0 0.0
    %1493 = vmatpush1.msra.mxu0 %v1486
    %1494 = vmatprep.subr.mxu0 0.0
    %1495 = vmatpush1.msra.mxu0 %v1487
    %1496 = vmatprep.subr.mxu0 0.0
    %1497 = vmatpush1.msra.mxu0 0.0
    %1498 = vmatprep.subr.mxu0 0.0
    %1499 = vmatpush1.msra.mxu0 0.0
    %1500 = vmatprep.subr.mxu0 0.0
    %1501 = vmatpush1.msra.mxu0 0.0
    %1502 = vmatprep.subr.mxu0 0.0
    %1503 = vmatpush1.msra.mxu0 0.0
    %1504 = vmatprep.subr.mxu0 0.0
    %1505 = vmatpush1.msra.mxu0 0.0
    %1506 = vmatprep.subr.mxu0 0.0
    %1507 = vmatpush1.msra.mxu0 0.0
    %1508 = vmatprep.subr.mxu0 0.0
    %1509 = vmatpush1.msra.mxu0 0.0
    %1510 = vmatprep.subr.mxu0 0.0
    %1511 = vmatpush1.msra.mxu0 0.0
    %1512 = vmatprep.subr.mxu0 0.0
    %1513 = vmatpush1.msra.mxu0 0.0
    %1514 = vmatprep.subr.mxu0 0.0
    %1515 = vmatpush1.msra.mxu0 0.0
    %1516 = vmatprep.subr.mxu0 0.0
    %1517 = vmatpush1.msra.mxu0 0.0
    %1518 = vmatprep.subr.mxu0 0.0
    %1519 = vmatpush1.msra.mxu0 0.0
    %1520 = vmatprep.subr.mxu0 0.0
    %1521 = vmatpush1.msra.mxu0 0.0
    %1522 = vmatprep.subr.mxu0 0.0
    %1523 = vmatpush1.msra.mxu0 0.0
    %1524 = vmatprep.subr.mxu0 0.0
    %1525 = vmatpush1.msra.mxu0 0.0
    %1526 = vmatprep.subr.mxu0 0.0
    %1527 = vmatpush1.msra.mxu0 0.0
    %1528 = vmatprep.subr.mxu0 0.0
    %1529 = vmatpush1.msra.mxu0 0.0
    %1530 = vmatprep.subr.mxu0 0.0
    %1531 = vmatpush1.msra.mxu0 0.0
    %1532 = vmatprep.subr.mxu0 0.0
    %1533 = vmatpush1.msra.mxu0 0.0
    %1534 = vmatprep.subr.mxu0 0.0
    %1535 = vmatpush1.msra.mxu0 0.0
    %1536 = vmatprep.subr.mxu0 0.0
    %1537 = vmatpush1.msra.mxu0 0.0
    %1538 = vmatprep.subr.mxu0 0.0
    %1539 = vmatpush1.msra.mxu0 0.0
    %1540 = vmatprep.subr.mxu0 0.0
    %1541 = vmatpush1.msra.mxu0 0.0
    %1542 = vmatprep.subr.mxu0 0.0
    %1543 = vmatpush1.msra.mxu0 0.0
    %1544 = vmatprep.subr.mxu0 0.0
    %1545 = vmatpush1.msra.mxu0 0.0
    %1546 = vmatprep.subr.mxu0 0.0
    %1547 = vmatpush1.msra.mxu0 0.0
    %1548 = vmatprep.subr.mxu0 0.0
    %1549 = vmatpush1.msra.mxu0 0.0
    %1550 = vmatprep.subr.mxu0 0.0
    %1551 = vmatpush1.msra.mxu0 0.0
    %1552 = vmatprep.mubr.f32.mxu0 0.0
    %1553 = vmatmul.mubr.f32.gmra.mrb[0].mxu0 %v232
    %v1554 = vpop.f32.mrb[0].mxu0
    %v1555 = vadd.f32 0.0, %v1554
    %v1556 = vpop.f32.mrb[0].mxu0
    %1557 = vmatprep.mubr.f32.mxu0 0.0
    %1558 = vmatmul.mubr.f32.gmra.mrb[0].mxu0 %v235
    %v1559 = vpop.f32.mrb[0].mxu0
    %v1560 = vadd.f32 0.0, %v1559
    %v1561 = vpop.f32.mrb[0].mxu0
    %1562 = vdwg.mxu0
    %v1564 = vsel %vm393, %v1481, 0
    %v1567 = vsel %vm393, %v1482, 0
    %1569 = vmatprep.subr.mxu0 0.0
    %1570 = vmatpush1.msra.mxu0 %v1555
    %1571 = vmatprep.subr.mxu0 0.0
    %1572 = vmatpush1.msra.mxu0 %v1560
    %1573 = vmatprep.subr.mxu0 0.0
    %1574 = vmatpush1.msra.mxu0 0.0
    %1575 = vmatprep.subr.mxu0 0.0
    %1576 = vmatpush1.msra.mxu0 0.0
    %1577 = vmatprep.subr.mxu0 0.0
    %1578 = vmatpush1.msra.mxu0 0.0
    %1579 = vmatprep.subr.mxu0 0.0
    %1580 = vmatpush1.msra.mxu0 0.0
    %1581 = vmatprep.subr.mxu0 0.0
    %1582 = vmatpush1.msra.mxu0 0.0
    %1583 = vmatprep.subr.mxu0 0.0
    %1584 = vmatpush1.msra.mxu0 0.0
    %1585 = vmatprep.subr.mxu0 0.0
    %1586 = vmatpush1.msra.mxu0 0.0
    %1587 = vmatprep.subr.mxu0 0.0
    %1588 = vmatpush1.msra.mxu0 0.0
    %1589 = vmatprep.subr.mxu0 0.0
    %1590 = vmatpush1.msra.mxu0 0.0
    %1591 = vmatprep.subr.mxu0 0.0
    %1592 = vmatpush1.msra.mxu0 0.0
    %1593 = vmatprep.subr.mxu0 0.0
    %1594 = vmatpush1.msra.mxu0 0.0
    %1595 = vmatprep.subr.mxu0 0.0
    %1596 = vmatpush1.msra.mxu0 0.0
    %1597 = vmatprep.subr.mxu0 0.0
    %1598 = vmatpush1.msra.mxu0 0.0
    %1599 = vmatprep.subr.mxu0 0.0
    %1600 = vmatpush1.msra.mxu0 0.0
    %1601 = vmatprep.subr.mxu0 0.0
    %1602 = vmatpush1.msra.mxu0 0.0
    %1603 = vmatprep.subr.mxu0 0.0
    %1604 = vmatpush1.msra.mxu0 0.0
    %1605 = vmatprep.subr.mxu0 0.0
    %1606 = vmatpush1.msra.mxu0 0.0
    %1607 = vmatprep.subr.mxu0 0.0
    %1608 = vmatpush1.msra.mxu0 0.0
    %1609 = vmatprep.subr.mxu0 0.0
    %1610 = vmatpush1.msra.mxu0 0.0
    %1611 = vmatprep.subr.mxu0 0.0
    %1612 = vmatpush1.msra.mxu0 0.0
    %1613 = vmatprep.subr.mxu0 0.0
    %1614 = vmatpush1.msra.mxu0 0.0
    %1615 = vmatprep.subr.mxu0 0.0
    %1616 = vmatpush1.msra.mxu0 0.0
    %1617 = vmatprep.subr.mxu0 0.0
    %1618 = vmatpush1.msra.mxu0 0.0
    %1619 = vmatprep.subr.mxu0 0.0
    %1620 = vmatpush1.msra.mxu0 0.0
    %1621 = vmatprep.subr.mxu0 0.0
    %1622 = vmatpush1.msra.mxu0 0.0
    %1623 = vmatprep.subr.mxu0 0.0
    %1624 = vmatpush1.msra.mxu0 0.0
    %1625 = vmatprep.subr.mxu0 0.0
    %1626 = vmatpush1.msra.mxu0 0.0
    %1627 = vmatprep.subr.mxu0 0.0
    %1628 = vmatpush1.msra.mxu0 0.0
    %1629 = vmatprep.subr.mxu0 0.0
    %1630 = vmatpush1.msra.mxu0 0.0
    %1631 = vmatprep.subr.mxu0 0.0
    %1632 = vmatpush1.msra.mxu0 0.0
    %1633 = vmatprep.mubr.f32.mxu0 0.0
    %1634 = vmatmul.mubr.f32.gmra.mrb[0].mxu0 %v1564
    %v1635 = vpop.f32.mrb[0].mxu0
    %v1636 = vadd.f32 0.0, %v1635
    %v1637 = vpop.f32.mrb[0].mxu0
    %1638 = vmatprep.mubr.f32.mxu0 0.0
    %1639 = vmatmul.mubr.f32.gmra.mrb[0].mxu0 %v1567
    %v1640 = vpop.f32.mrb[0].mxu0
    %v1641 = vadd.f32 0.0, %v1640
    %v1642 = vpop.f32.mrb[0].mxu0
    %1643 = vdwg.mxu0
    %v1644 = vadd.f32 %v1290, %v1636
    %v1645 = vadd.f32 %v1291, %v1641
    %v1646 = vadd.f32 %v209, %v1644
    %v1647 = vadd.f32 %v210, %v1645
    %v1648 = vld [vmem:[%s17] sm:$0x1]
    %v1649 = vld [vmem:[%s17 + $0x1] sm:$0x1]
    %v1650 = vsel %vm171, %v1646, 0.0
    %1651 = vadd.xlane.f32.xlu0 %v1650
    %v1652 = vpop.xlane.xlu0 %1651
    %v1653 = vsel %vm171, %v1647, 0.0
    %1654 = vadd.xlane.f32.xlu0 %v1653
    %v1655 = vpop.xlane.xlu0 %1654
    %v1656 = vmul.f32 %v1652, %v178
    %v1657 = vmul.f32 %v1655, %v178
    %v1658 = vsub.f32 %v1646, %v1656
    %v1659 = vsub.f32 %v1647, %v1657
    %v1660 = vmul.f32 %v1658, %v1658
    %v1661 = vmul.f32 %v1659, %v1659
    %v1662 = vsel %vm171, %v1660, 0.0
    %1663 = vadd.xlane.f32.xlu0 %v1662
    %v1664 = vpop.xlane.xlu0 %1663
    %v1665 = vsel %vm171, %v1661, 0.0
    %1666 = vadd.xlane.f32.xlu0 %v1665
    %v1667 = vpop.xlane.xlu0 %1666
    %v1668 = vmul.f32 %v1664, %v178
    %v1669 = vmul.f32 %v1667, %v178
    %v1670 = vadd.f32 %v1668, 1e-05
    %v1671 = vadd.f32 %v1669, 1e-05
    %v1672 = vrsqrt.pop %v1670
    %v1673 = vrsqrt.pop %v1671
    %v1674 = vmul.f32 %v1658, %v1672
    %v1675 = vmul.f32 %v1659, %v1673
    %v1676 = vlaneseq
    %v1677 = vshrl.u32 %v1676, 7
    %v1678 = vsub.s32 0, %v1677
    %v1679 = vrot.slane %v1648, %v1678
    %v1680 = vmul.f32 %v1674, %v1679
    %v1681 = vmul.f32 %v1675, %v1679
    %v1682 = vlaneseq
    %v1683 = vshrl.u32 %v1682, 7
    %v1684 = vsub.s32 0, %v1683
    %v1685 = vrot.slane %v1649, %v1684
    %v1686 = vadd.f32 %v1680, %v1685
    %v1687 = vadd.f32 %v1681, %v1685
    %v1688 = vld [vmem:[#allocation11] sm:$0x1]
    %v1689 = vld [vmem:[%s9] sm:$0xff]
    %v1690 = vld [vmem:[%s9 + $0x8] sm:$0xff]
    %v1691 = vld [vmem:[%s9 + $0x10] sm:$0xff]
    %v1692 = vld [vmem:[%s9 + $0x18] sm:$0xff]
    %v1693 = vld [vmem:[#allocation8] sm:$0x1]
    %v1695 = vlaneseq
    %v1696 = vshrl.u32 %v1695, 7
    %v1697 = vsub.s32 0, %v1696
    %v1698 = vrot.slane %v1693, %v1697
    %v1701 = vsel %vm171, %v1686, 0
    %v1704 = vsel %vm171, %v1687, 0
    %1706 = vmatprep.subr.mxu0 0.0
    %1707 = vmatpush1.msra.mxu0 %v1689
    %1708 = vmatprep.subr.mxu0 0.0
    %1709 = vmatpush1.msra.mxu0 %v1690
    %1710 = vmatprep.subr.mxu0 0.0
    %1711 = vmatpush1.msra.mxu0 %v1691
    %1712 = vmatprep.subr.mxu0 0.0
    %1713 = vmatpush1.msra.mxu0 %v1692
    %1714 = vmatprep.subr.mxu0 0.0
    %1715 = vmatpush1.msra.mxu0 0.0
    %1716 = vmatprep.subr.mxu0 0.0
    %1717 = vmatpush1.msra.mxu0 0.0
    %1718 = vmatprep.subr.mxu0 0.0
    %1719 = vmatpush1.msra.mxu0 0.0
    %1720 = vmatprep.subr.mxu0 0.0
    %1721 = vmatpush1.msra.mxu0 0.0
    %1722 = vmatprep.subr.mxu0 0.0
    %1723 = vmatpush1.msra.mxu0 0.0
    %1724 = vmatprep.subr.mxu0 0.0
    %1725 = vmatpush1.msra.mxu0 0.0
    %1726 = vmatprep.subr.mxu0 0.0
    %1727 = vmatpush1.msra.mxu0 0.0
    %1728 = vmatprep.subr.mxu0 0.0
    %1729 = vmatpush1.msra.mxu0 0.0
    %1730 = vmatprep.subr.mxu0 0.0
    %1731 = vmatpush1.msra.mxu0 0.0
    %1732 = vmatprep.subr.mxu0 0.0
    %1733 = vmatpush1.msra.mxu0 0.0
    %1734 = vmatprep.subr.mxu0 0.0
    %1735 = vmatpush1.msra.mxu0 0.0
    %1736 = vmatprep.subr.mxu0 0.0
    %1737 = vmatpush1.msra.mxu0 0.0
    %1738 = vmatprep.subr.mxu0 0.0
    %1739 = vmatpush1.msra.mxu0 0.0
    %1740 = vmatprep.subr.mxu0 0.0
    %1741 = vmatpush1.msra.mxu0 0.0
    %1742 = vmatprep.subr.mxu0 0.0
    %1743 = vmatpush1.msra.mxu0 0.0
    %1744 = vmatprep.subr.mxu0 0.0
    %1745 = vmatpush1.msra.mxu0 0.0
    %1746 = vmatprep.subr.mxu0 0.0
    %1747 = vmatpush1.msra.mxu0 0.0
    %1748 = vmatprep.subr.mxu0 0.0
    %1749 = vmatpush1.msra.mxu0 0.0
    %1750 = vmatprep.subr.mxu0 0.0
    %1751 = vmatpush1.msra.mxu0 0.0
    %1752 = vmatprep.subr.mxu0 0.0
    %1753 = vmatpush1.msra.mxu0 0.0
    %1754 = vmatprep.subr.mxu0 0.0
    %1755 = vmatpush1.msra.mxu0 0.0
    %1756 = vmatprep.subr.mxu0 0.0
    %1757 = vmatpush1.msra.mxu0 0.0
    %1758 = vmatprep.subr.mxu0 0.0
    %1759 = vmatpush1.msra.mxu0 0.0
    %1760 = vmatprep.subr.mxu0 0.0
    %1761 = vmatpush1.msra.mxu0 0.0
    %1762 = vmatprep.subr.mxu0 0.0
    %1763 = vmatpush1.msra.mxu0 0.0
    %1764 = vmatprep.subr.mxu0 0.0
    %1765 = vmatpush1.msra.mxu0 0.0
    %1766 = vmatprep.subr.mxu0 0.0
    %1767 = vmatpush1.msra.mxu0 0.0
    %1768 = vmatprep.subr.mxu0 0.0
    %1769 = vmatpush1.msra.mxu0 0.0
    %1770 = vmatprep.mubr.f32.mxu0 0.0
    %1771 = vmatmul.mubr.f32.gmra.mrb[0].mxu0 %v1701
    %v1772 = vpop.f32.mrb[0].mxu0
    %v1773 = vadd.f32 %v1698, %v1772
    %v1774 = vpop.f32.mrb[0].mxu0
    %1775 = vmatprep.mubr.f32.mxu0 0.0
    %1776 = vmatmul.mubr.f32.gmra.mrb[0].mxu0 %v1704
    %v1777 = vpop.f32.mrb[0].mxu0
    %v1778 = vadd.f32 %v1698, %v1777
    %v1779 = vpop.f32.mrb[0].mxu0
    %1780 = vdwg.mxu0
    %v1782 = vsel %vm171, %v1773, 0
    %v1785 = vsel %vm171, %v1778, 0
    %v1788 = vsel %vm171, %v211, 0
    %v1791 = vsel %vm171, %v212, 0
    %v1794 = vsel %vm171, %v213, 0
    %v1797 = vsel %vm171, %v214, 0
    %1799 = vmatprep.subr.mxu0 0.0
    %1800 = vmatpush1.xpose.msra.mxu0 %v1788
    %1801 = vmatprep.subr.mxu0 0.0
    %1802 = vmatpush1.xpose.msra.mxu0 %v1791
    %1803 = vmatprep.subr.mxu0 0.0
    %1804 = vmatpush1.xpose.msra.mxu0 %v1794
    %1805 = vmatprep.subr.mxu0 0.0
    %1806 = vmatpush1.xpose.msra.mxu0 %v1797
    %1807 = vmatprep.subr.mxu0 0.0
    %1808 = vmatpush1.xpose.msra.mxu0 0.0
    %1809 = vmatprep.subr.mxu0 0.0
    %1810 = vmatpush1.xpose.msra.mxu0 0.0
    %1811 = vmatprep.subr.mxu0 0.0
    %1812 = vmatpush1.xpose.msra.mxu0 0.0
    %1813 = vmatprep.subr.mxu0 0.0
    %1814 = vmatpush1.xpose.msra.mxu0 0.0
    %1815 = vmatprep.subr.mxu0 0.0
    %1816 = vmatpush1.xpose.msra.mxu0 0.0
    %1817 = vmatprep.subr.mxu0 0.0
    %1818 = vmatpush1.xpose.msra.mxu0 0.0
    %1819 = vmatprep.subr.mxu0 0.0
    %1820 = vmatpush1.xpose.msra.mxu0 0.0
    %1821 = vmatprep.subr.mxu0 0.0
    %1822 = vmatpush1.xpose.msra.mxu0 0.0
    %1823 = vmatprep.subr.mxu0 0.0
    %1824 = vmatpush1.xpose.msra.mxu0 0.0
    %1825 = vmatprep.subr.mxu0 0.0
    %1826 = vmatpush1.xpose.msra.mxu0 0.0
    %1827 = vmatprep.subr.mxu0 0.0
    %1828 = vmatpush1.xpose.msra.mxu0 0.0
    %1829 = vmatprep.subr.mxu0 0.0
    %1830 = vmatpush1.xpose.msra.mxu0 0.0
    %1831 = vmatprep.subr.mxu0 0.0
    %1832 = vmatpush1.xpose.msra.mxu0 0.0
    %1833 = vmatprep.subr.mxu0 0.0
    %1834 = vmatpush1.xpose.msra.mxu0 0.0
    %1835 = vmatprep.subr.mxu0 0.0
    %1836 = vmatpush1.xpose.msra.mxu0 0.0
    %1837 = vmatprep.subr.mxu0 0.0
    %1838 = vmatpush1.xpose.msra.mxu0 0.0
    %1839 = vmatprep.subr.mxu0 0.0
    %1840 = vmatpush1.xpose.msra.mxu0 0.0
    %1841 = vmatprep.subr.mxu0 0.0
    %1842 = vmatpush1.xpose.msra.mxu0 0.0
    %1843 = vmatprep.subr.mxu0 0.0
    %1844 = vmatpush1.xpose.msra.mxu0 0.0
    %1845 = vmatprep.subr.mxu0 0.0
    %1846 = vmatpush1.xpose.msra.mxu0 0.0
    %1847 = vmatprep.subr.mxu0 0.0
    %1848 = vmatpush1.xpose.msra.mxu0 0.0
    %1849 = vmatprep.subr.mxu0 0.0
    %1850 = vmatpush1.xpose.msra.mxu0 0.0
    %1851 = vmatprep.subr.mxu0 0.0
    %1852 = vmatpush1.xpose.msra.mxu0 0.0
    %1853 = vmatprep.subr.mxu0 0.0
    %1854 = vmatpush1.xpose.msra.mxu0 0.0
    %1855 = vmatprep.subr.mxu0 0.0
    %1856 = vmatpush1.xpose.msra.mxu0 0.0
    %1857 = vmatprep.subr.mxu0 0.0
    %1858 = vmatpush1.xpose.msra.mxu0 0.0
    %1859 = vmatprep.subr.mxu0 0.0
    %1860 = vmatpush1.xpose.msra.mxu0 0.0
    %1861 = vmatprep.subr.mxu0 0.0
    %1862 = vmatpush1.xpose.msra.mxu0 0.0
    %1863 = vmatprep.mubr.f32.mxu0 0.0
    %1864 = vmatmul.mubr.f32.gmra.mrb[0].mxu0 %v1782
    %v1865 = vpop.f32.mrb[0].mxu0
    %v1866 = vadd.f32 %v217, %v1865
    %v1867 = vpop.f32.mrb[0].mxu0
    %1868 = vmatprep.mubr.f32.mxu0 0.0
    %1869 = vmatmul.mubr.f32.gmra.mrb[0].mxu0 %v1785
    %v1870 = vpop.f32.mrb[0].mxu0
    %v1871 = vadd.f32 %v218, %v1870
    %v1872 = vpop.f32.mrb[0].mxu0
    %1873 = vdwg.mxu0
    %v1874 = vsel %vm171, %v1866, -inf
    %1875 = vmax.xlane.f32.xlu0 %v1874
    %v1876 = vpop.xlane.xlu0 %1875
    %v1877 = vsel %vm171, %v1871, -inf
    %1878 = vmax.xlane.f32.xlu0 %v1877
    %v1879 = vpop.xlane.xlu0 %1878
    %v1880 = vsub.f32 %v1866, %v1876
    %v1881 = vsub.f32 %v1871, %v1879
    %v1882 = vmul.f32 %v1880, 1.442695
    %v1883 = vpow.pop %v1882
    %v1884 = vmul.f32 %v1881, 1.442695
    %v1885 = vpow.pop %v1884
    %v1886 = vsel %vm171, %v1883, 0.0
    %1887 = vadd.xlane.f32.xlu0 %v1886
    %v1888 = vpop.xlane.xlu0 %1887
    %v1889 = vsel %vm171, %v1885, 0.0
    %1890 = vadd.xlane.f32.xlu0 %v1889
    %v1891 = vpop.xlane.xlu0 %1890
    %v1892 = vrcp.pop %v1888
    %v1893 = vrcp.pop %v1891
    %v1894 = vmul.f32 %v1883, %v1892
    %v1895 = vmul.f32 %v1885, %v1893
    %v1896 = vld [vmem:[#allocation10] sm:$0xff]
    %v1897 = vld [vmem:[#allocation10 + $0x8] sm:$0xff]
    %v1898 = vld [vmem:[#allocation10 + $0x10] sm:$0xff]
    %v1899 = vld [vmem:[#allocation10 + $0x18] sm:$0xff]
    %1900 = vmatprep.subr.mxu0 0.0
    %1901 = vmatpush1.msra.mxu0 %v1896
    %1902 = vmatprep.subr.mxu0 0.0
    %1903 = vmatpush1.msra.mxu0 %v1897
    %1904 = vmatprep.subr.mxu0 0.0
    %1905 = vmatpush1.msra.mxu0 %v1898
    %1906 = vmatprep.subr.mxu0 0.0
    %1907 = vmatpush1.msra.mxu0 %v1899
    %1908 = vmatprep.subr.mxu0 0.0
    %1909 = vmatpush1.msra.mxu0 0.0
    %1910 = vmatprep.subr.mxu0 0.0
    %1911 = vmatpush1.msra.mxu0 0.0
    %1912 = vmatprep.subr.mxu0 0.0
    %1913 = vmatpush1.msra.mxu0 0.0
    %1914 = vmatprep.subr.mxu0 0.0
    %1915 = vmatpush1.msra.mxu0 0.0
    %1916 = vmatprep.subr.mxu0 0.0
    %1917 = vmatpush1.msra.mxu0 0.0
    %1918 = vmatprep.subr.mxu0 0.0
    %1919 = vmatpush1.msra.mxu0 0.0
    %1920 = vmatprep.subr.mxu0 0.0
    %1921 = vmatpush1.msra.mxu0 0.0
    %1922 = vmatprep.subr.mxu0 0.0
    %1923 = vmatpush1.msra.mxu0 0.0
    %1924 = vmatprep.subr.mxu0 0.0
    %1925 = vmatpush1.msra.mxu0 0.0
    %1926 = vmatprep.subr.mxu0 0.0
    %1927 = vmatpush1.msra.mxu0 0.0
    %1928 = vmatprep.subr.mxu0 0.0
    %1929 = vmatpush1.msra.mxu0 0.0
    %1930 = vmatprep.subr.mxu0 0.0
    %1931 = vmatpush1.msra.mxu0 0.0
    %1932 = vmatprep.subr.mxu0 0.0
    %1933 = vmatpush1.msra.mxu0 0.0
    %1934 = vmatprep.subr.mxu0 0.0
    %1935 = vmatpush1.msra.mxu0 0.0
    %1936 = vmatprep.subr.mxu0 0.0
    %1937 = vmatpush1.msra.mxu0 0.0
    %1938 = vmatprep.subr.mxu0 0.0
    %1939 = vmatpush1.msra.mxu0 0.0
    %1940 = vmatprep.subr.mxu0 0.0
    %1941 = vmatpush1.msra.mxu0 0.0
    %1942 = vmatprep.subr.mxu0 0.0
    %1943 = vmatpush1.msra.mxu0 0.0
    %1944 = vmatprep.subr.mxu0 0.0
    %1945 = vmatpush1.msra.mxu0 0.0
    %1946 = vmatprep.subr.mxu0 0.0
    %1947 = vmatpush1.msra.mxu0 0.0
    %1948 = vmatprep.subr.mxu0 0.0
    %1949 = vmatpush1.msra.mxu0 0.0
    %1950 = vmatprep.subr.mxu0 0.0
    %1951 = vmatpush1.msra.mxu0 0.0
    %1952 = vmatprep.subr.mxu0 0.0
    %1953 = vmatpush1.msra.mxu0 0.0
    %1954 = vmatprep.subr.mxu0 0.0
    %1955 = vmatpush1.msra.mxu0 0.0
    %1956 = vmatprep.subr.mxu0 0.0
    %1957 = vmatpush1.msra.mxu0 0.0
    %1958 = vmatprep.subr.mxu0 0.0
    %1959 = vmatpush1.msra.mxu0 0.0
    %1960 = vmatprep.subr.mxu0 0.0
    %1961 = vmatpush1.msra.mxu0 0.0
    %1962 = vmatprep.subr.mxu0 0.0
    %1963 = vmatpush1.msra.mxu0 0.0
    %1964 = vmatprep.mubr.f32.mxu0 0.0
    %1965 = vmatmul.mubr.f32.gmra.mrb[0].mxu0 %v1788
    %v1966 = vpop.f32.mrb[0].mxu0
    %v1967 = vadd.f32 0.0, %v1966
    %v1968 = vpop.f32.mrb[0].mxu0
    %1969 = vmatprep.mubr.f32.mxu0 0.0
    %1970 = vmatmul.mubr.f32.gmra.mrb[0].mxu0 %v1791
    %v1971 = vpop.f32.mrb[0].mxu0
    %v1972 = vadd.f32 0.0, %v1971
    %v1973 = vpop.f32.mrb[0].mxu0
    %1974 = vmatprep.mubr.f32.mxu0 0.0
    %1975 = vmatmul.mubr.f32.gmra.mrb[0].mxu0 %v1794
    %v1976 = vpop.f32.mrb[0].mxu0
    %v1977 = vadd.f32 0.0, %v1976
    %v1978 = vpop.f32.mrb[0].mxu0
    %1979 = vmatprep.mubr.f32.mxu0 0.0
    %1980 = vmatmul.mubr.f32.gmra.mrb[0].mxu0 %v1797
    %v1981 = vpop.f32.mrb[0].mxu0
    %v1982 = vadd.f32 0.0, %v1981
    %v1983 = vpop.f32.mrb[0].mxu0
    %1984 = vdwg.mxu0
    %v1986 = vsel %vm171, %v1894, 0
    %v1989 = vsel %vm171, %v1895, 0
    %1991 = vmatprep.subr.mxu0 0.0
    %1992 = vmatpush1.msra.mxu0 %v1967
    %1993 = vmatprep.subr.mxu0 0.0
    %1994 = vmatpush1.msra.mxu0 %v1972
    %1995 = vmatprep.subr.mxu0 0.0
    %1996 = vmatpush1.msra.mxu0 %v1977
    %1997 = vmatprep.subr.mxu0 0.0
    %1998 = vmatpush1.msra.mxu0 %v1982
    %1999 = vmatprep.subr.mxu0 0.0
    %2000 = vmatpush1.msra.mxu0 0.0
    %2001 = vmatprep.subr.mxu0 0.0
    %2002 = vmatpush1.msra.mxu0 0.0
    %2003 = vmatprep.subr.mxu0 0.0
    %2004 = vmatpush1.msra.mxu0 0.0
    %2005 = vmatprep.subr.mxu0 0.0
    %2006 = vmatpush1.msra.mxu0 0.0
    %2007 = vmatprep.subr.mxu0 0.0
    %2008 = vmatpush1.msra.mxu0 0.0
    %2009 = vmatprep.subr.mxu0 0.0
    %2010 = vmatpush1.msra.mxu0 0.0
    %2011 = vmatprep.subr.mxu0 0.0
    %2012 = vmatpush1.msra.mxu0 0.0
    %2013 = vmatprep.subr.mxu0 0.0
    %2014 = vmatpush1.msra.mxu0 0.0
    %2015 = vmatprep.subr.mxu0 0.0
    %2016 = vmatpush1.msra.mxu0 0.0
    %2017 = vmatprep.subr.mxu0 0.0
    %2018 = vmatpush1.msra.mxu0 0.0
    %2019 = vmatprep.subr.mxu0 0.0
    %2020 = vmatpush1.msra.mxu0 0.0
    %2021 = vmatprep.subr.mxu0 0.0
    %2022 = vmatpush1.msra.mxu0 0.0
    %2023 = vmatprep.subr.mxu0 0.0
    %2024 = vmatpush1.msra.mxu0 0.0
    %2025 = vmatprep.subr.mxu0 0.0
    %2026 = vmatpush1.msra.mxu0 0.0
    %2027 = vmatprep.subr.mxu0 0.0
    %2028 = vmatpush1.msra.mxu0 0.0
    %2029 = vmatprep.subr.mxu0 0.0
    %2030 = vmatpush1.msra.mxu0 0.0
    %2031 = vmatprep.subr.mxu0 0.0
    %2032 = vmatpush1.msra.mxu0 0.0
    %2033 = vmatprep.subr.mxu0 0.0
    %2034 = vmatpush1.msra.mxu0 0.0
    %2035 = vmatprep.subr.mxu0 0.0
    %2036 = vmatpush1.msra.mxu0 0.0
    %2037 = vmatprep.subr.mxu0 0.0
    %2038 = vmatpush1.msra.mxu0 0.0
    %2039 = vmatprep.subr.mxu0 0.0
    %2040 = vmatpush1.msra.mxu0 0.0
    %2041 = vmatprep.subr.mxu0 0.0
    %2042 = vmatpush1.msra.mxu0 0.0
    %2043 = vmatprep.subr.mxu0 0.0
    %2044 = vmatpush1.msra.mxu0 0.0
    %2045 = vmatprep.subr.mxu0 0.0
    %2046 = vmatpush1.msra.mxu0 0.0
    %2047 = vmatprep.subr.mxu0 0.0
    %2048 = vmatpush1.msra.mxu0 0.0
    %2049 = vmatprep.subr.mxu0 0.0
    %2050 = vmatpush1.msra.mxu0 0.0
    %2051 = vmatprep.subr.mxu0 0.0
    %2052 = vmatpush1.msra.mxu0 0.0
    %2053 = vmatprep.subr.mxu0 0.0
    %2054 = vmatpush1.msra.mxu0 0.0
    %2055 = vmatprep.mubr.f32.mxu0 0.0
    %2056 = vmatmul.mubr.f32.gmra.mrb[0].mxu0 %v1986
    %v2057 = vpop.f32.mrb[0].mxu0
    %v2058 = vadd.f32 0.0, %v2057
    %v2059 = vpop.f32.mrb[0].mxu0
    %2060 = vmatprep.mubr.f32.mxu0 0.0
    %2061 = vmatmul.mubr.f32.gmra.mrb[0].mxu0 %v1989
    %v2062 = vpop.f32.mrb[0].mxu0
    %v2063 = vadd.f32 0.0, %v2062
    %v2064 = vpop.f32.mrb[0].mxu0
    %2065 = vdwg.mxu0
    %v2067 = vlaneseq
    %v2068 = vshrl.u32 %v2067, 7
    %v2069 = vsub.s32 0, %v2068
    %v2070 = vrot.slane %v1688, %v2069
    %v2072 = vadd.f32 %v2070, %v2058
    %v2073 = vadd.f32 %v2070, %v2063
    %s2074 = scalar_lea.vmem %s9, 32
    %v2075 = vld [vmem:[%s2074] sm:$0xff]
    %v2076 = vld [vmem:[%s2074 + $0x8] sm:$0xff]
    %v2077 = vld [vmem:[%s2074 + $0x10] sm:$0xff]
    %v2078 = vld [vmem:[%s2074 + $0x18] sm:$0xff]
    %s2079 = scalar_lea.vmem [#allocation8], 1
    %v2080 = vld [vmem:[%s2079] sm:$0x1]
    %v2082 = vlaneseq
    %v2083 = vshrl.u32 %v2082, 7
    %v2084 = vsub.s32 0, %v2083
    %v2085 = vrot.slane %v2080, %v2084
    %2087 = vmatprep.subr.mxu0 0.0
    %2088 = vmatpush1.msra.mxu0 %v2075
    %2089 = vmatprep.subr.mxu0 0.0
    %2090 = vmatpush1.msra.mxu0 %v2076
    %2091 = vmatprep.subr.mxu0 0.0
    %2092 = vmatpush1.msra.mxu0 %v2077
    %2093 = vmatprep.subr.mxu0 0.0
    %2094 = vmatpush1.msra.mxu0 %v2078
    %2095 = vmatprep.subr.mxu0 0.0
    %2096 = vmatpush1.msra.mxu0 0.0
    %2097 = vmatprep.subr.mxu0 0.0
    %2098 = vmatpush1.msra.mxu0 0.0
    %2099 = vmatprep.subr.mxu0 0.0
    %2100 = vmatpush1.msra.mxu0 0.0
    %2101 = vmatprep.subr.mxu0 0.0
    %2102 = vmatpush1.msra.mxu0 0.0
    %2103 = vmatprep.subr.mxu0 0.0
    %2104 = vmatpush1.msra.mxu0 0.0
    %2105 = vmatprep.subr.mxu0 0.0
    %2106 = vmatpush1.msra.mxu0 0.0
    %2107 = vmatprep.subr.mxu0 0.0
    %2108 = vmatpush1.msra.mxu0 0.0
    %2109 = vmatprep.subr.mxu0 0.0
    %2110 = vmatpush1.msra.mxu0 0.0
    %2111 = vmatprep.subr.mxu0 0.0
    %2112 = vmatpush1.msra.mxu0 0.0
    %2113 = vmatprep.subr.mxu0 0.0
    %2114 = vmatpush1.msra.mxu0 0.0
    %2115 = vmatprep.subr.mxu0 0.0
    %2116 = vmatpush1.msra.mxu0 0.0
    %2117 = vmatprep.subr.mxu0 0.0
    %2118 = vmatpush1.msra.mxu0 0.0
    %2119 = vmatprep.subr.mxu0 0.0
    %2120 = vmatpush1.msra.mxu0 0.0
    %2121 = vmatprep.subr.mxu0 0.0
    %2122 = vmatpush1.msra.mxu0 0.0
    %2123 = vmatprep.subr.mxu0 0.0
    %2124 = vmatpush1.msra.mxu0 0.0
    %2125 = vmatprep.subr.mxu0 0.0
    %2126 = vmatpush1.msra.mxu0 0.0
    %2127 = vmatprep.subr.mxu0 0.0
    %2128 = vmatpush1.msra.mxu0 0.0
    %2129 = vmatprep.subr.mxu0 0.0
    %2130 = vmatpush1.msra.mxu0 0.0
    %2131 = vmatprep.subr.mxu0 0.0
    %2132 = vmatpush1.msra.mxu0 0.0
    %2133 = vmatprep.subr.mxu0 0.0
    %2134 = vmatpush1.msra.mxu0 0.0
    %2135 = vmatprep.subr.mxu0 0.0
    %2136 = vmatpush1.msra.mxu0 0.0
    %2137 = vmatprep.subr.mxu0 0.0
    %2138 = vmatpush1.msra.mxu0 0.0
    %2139 = vmatprep.subr.mxu0 0.0
    %2140 = vmatpush1.msra.mxu0 0.0
    %2141 = vmatprep.subr.mxu0 0.0
    %2142 = vmatpush1.msra.mxu0 0.0
    %2143 = vmatprep.subr.mxu0 0.0
    %2144 = vmatpush1.msra.mxu0 0.0
    %2145 = vmatprep.subr.mxu0 0.0
    %2146 = vmatpush1.msra.mxu0 0.0
    %2147 = vmatprep.subr.mxu0 0.0
    %2148 = vmatpush1.msra.mxu0 0.0
    %2149 = vmatprep.subr.mxu0 0.0
    %2150 = vmatpush1.msra.mxu0 0.0
    %2151 = vmatprep.mubr.f32.mxu0 0.0
    %2152 = vmatmul.mubr.f32.gmra.mrb[0].mxu0 %v1701
    %v2153 = vpop.f32.mrb[0].mxu0
    %v2154 = vadd.f32 %v2085, %v2153
    %v2155 = vpop.f32.mrb[0].mxu0
    %2156 = vmatprep.mubr.f32.mxu0 0.0
    %2157 = vmatmul.mubr.f32.gmra.mrb[0].mxu0 %v1704
    %v2158 = vpop.f32.mrb[0].mxu0
    %v2159 = vadd.f32 %v2085, %v2158
    %v2160 = vpop.f32.mrb[0].mxu0
    %2161 = vdwg.mxu0
    %v2163 = vsel %vm171, %v2154, 0
    %v2166 = vsel %vm171, %v2159, 0
    %2168 = vmatprep.subr.mxu0 0.0
    %2169 = vmatpush1.xpose.msra.mxu0 %v1788
    %2170 = vmatprep.subr.mxu0 0.0
    %2171 = vmatpush1.xpose.msra.mxu0 %v1791
    %2172 = vmatprep.subr.mxu0 0.0
    %2173 = vmatpush1.xpose.msra.mxu0 %v1794
    %2174 = vmatprep.subr.mxu0 0.0
    %2175 = vmatpush1.xpose.msra.mxu0 %v1797
    %2176 = vmatprep.subr.mxu0 0.0
    %2177 = vmatpush1.xpose.msra.mxu0 0.0
    %2178 = vmatprep.subr.mxu0 0.0
    %2179 = vmatpush1.xpose.msra.mxu0 0.0
    %2180 = vmatprep.subr.mxu0 0.0
    %2181 = vmatpush1.xpose.msra.mxu0 0.0
    %2182 = vmatprep.subr.mxu0 0.0
    %2183 = vmatpush1.xpose.msra.mxu0 0.0
    %2184 = vmatprep.subr.mxu0 0.0
    %2185 = vmatpush1.xpose.msra.mxu0 0.0
    %2186 = vmatprep.subr.mxu0 0.0
    %2187 = vmatpush1.xpose.msra.mxu0 0.0
    %2188 = vmatprep.subr.mxu0 0.0
    %2189 = vmatpush1.xpose.msra.mxu0 0.0
    %2190 = vmatprep.subr.mxu0 0.0
    %2191 = vmatpush1.xpose.msra.mxu0 0.0
    %2192 = vmatprep.subr.mxu0 0.0
    %2193 = vmatpush1.xpose.msra.mxu0 0.0
    %2194 = vmatprep.subr.mxu0 0.0
    %2195 = vmatpush1.xpose.msra.mxu0 0.0
    %2196 = vmatprep.subr.mxu0 0.0
    %2197 = vmatpush1.xpose.msra.mxu0 0.0
    %2198 = vmatprep.subr.mxu0 0.0
    %2199 = vmatpush1.xpose.msra.mxu0 0.0
    %2200 = vmatprep.subr.mxu0 0.0
    %2201 = vmatpush1.xpose.msra.mxu0 0.0
    %2202 = vmatprep.subr.mxu0 0.0
    %2203 = vmatpush1.xpose.msra.mxu0 0.0
    %2204 = vmatprep.subr.mxu0 0.0
    %2205 = vmatpush1.xpose.msra.mxu0 0.0
    %2206 = vmatprep.subr.mxu0 0.0
    %2207 = vmatpush1.xpose.msra.mxu0 0.0
    %2208 = vmatprep.subr.mxu0 0.0
    %2209 = vmatpush1.xpose.msra.mxu0 0.0
    %2210 = vmatprep.subr.mxu0 0.0
    %2211 = vmatpush1.xpose.msra.mxu0 0.0
    %2212 = vmatprep.subr.mxu0 0.0
    %2213 = vmatpush1.xpose.msra.mxu0 0.0
    %2214 = vmatprep.subr.mxu0 0.0
    %2215 = vmatpush1.xpose.msra.mxu0 0.0
    %2216 = vmatprep.subr.mxu0 0.0
    %2217 = vmatpush1.xpose.msra.mxu0 0.0
    %2218 = vmatprep.subr.mxu0 0.0
    %2219 = vmatpush1.xpose.msra.mxu0 0.0
    %2220 = vmatprep.subr.mxu0 0.0
    %2221 = vmatpush1.xpose.msra.mxu0 0.0
    %2222 = vmatprep.subr.mxu0 0.0
    %2223 = vmatpush1.xpose.msra.mxu0 0.0
    %2224 = vmatprep.subr.mxu0 0.0
    %2225 = vmatpush1.xpose.msra.mxu0 0.0
    %2226 = vmatprep.subr.mxu0 0.0
    %2227 = vmatpush1.xpose.msra.mxu0 0.0
    %2228 = vmatprep.subr.mxu0 0.0
    %2229 = vmatpush1.xpose.msra.mxu0 0.0
    %2230 = vmatprep.subr.mxu0 0.0
    %2231 = vmatpush1.xpose.msra.mxu0 0.0
    %2232 = vmatprep.mubr.f32.mxu0 0.0
    %2233 = vmatmul.mubr.f32.gmra.mrb[0].mxu0 %v2163
    %v2234 = vpop.f32.mrb[0].mxu0
    %v2235 = vadd.f32 %v217, %v2234
    %v2236 = vpop.f32.mrb[0].mxu0
    %2237 = vmatprep.mubr.f32.mxu0 0.0
    %2238 = vmatmul.mubr.f32.gmra.mrb[0].mxu0 %v2166
    %v2239 = vpop.f32.mrb[0].mxu0
    %v2240 = vadd.f32 %v218, %v2239
    %v2241 = vpop.f32.mrb[0].mxu0
    %2242 = vdwg.mxu0
    %v2243 = vsel %vm171, %v2235, -inf
    %2244 = vmax.xlane.f32.xlu0 %v2243
    %v2245 = vpop.xlane.xlu0 %2244
    %v2246 = vsel %vm171, %v2240, -inf
    %2247 = vmax.xlane.f32.xlu0 %v2246
    %v2248 = vpop.xlane.xlu0 %2247
    %v2249 = vsub.f32 %v2235, %v2245
    %v2250 = vsub.f32 %v2240, %v2248
    %v2251 = vmul.f32 %v2249, 1.442695
    %v2252 = vpow.pop %v2251
    %v2253 = vmul.f32 %v2250, 1.442695
    %v2254 = vpow.pop %v2253
    %v2255 = vsel %vm171, %v2252, 0.0
    %2256 = vadd.xlane.f32.xlu0 %v2255
    %v2257 = vpop.xlane.xlu0 %2256
    %v2258 = vsel %vm171, %v2254, 0.0
    %2259 = vadd.xlane.f32.xlu0 %v2258
    %v2260 = vpop.xlane.xlu0 %2259
    %v2261 = vrcp.pop %v2257
    %v2262 = vrcp.pop %v2260
    %v2263 = vmul.f32 %v2252, %v2261
    %v2264 = vmul.f32 %v2254, %v2262
    %s2265 = scalar_lea.vmem [#allocation10], 32
    %v2266 = vld [vmem:[%s2265] sm:$0xff]
    %v2267 = vld [vmem:[%s2265 + $0x8] sm:$0xff]
    %v2268 = vld [vmem:[%s2265 + $0x10] sm:$0xff]
    %v2269 = vld [vmem:[%s2265 + $0x18] sm:$0xff]
    %2270 = vmatprep.subr.mxu0 0.0
    %2271 = vmatpush1.msra.mxu0 %v2266
    %2272 = vmatprep.subr.mxu0 0.0
    %2273 = vmatpush1.msra.mxu0 %v2267
    %2274 = vmatprep.subr.mxu0 0.0
    %2275 = vmatpush1.msra.mxu0 %v2268
    %2276 = vmatprep.subr.mxu0 0.0
    %2277 = vmatpush1.msra.mxu0 %v2269
    %2278 = vmatprep.subr.mxu0 0.0
    %2279 = vmatpush1.msra.mxu0 0.0
    %2280 = vmatprep.subr.mxu0 0.0
    %2281 = vmatpush1.msra.mxu0 0.0
    %2282 = vmatprep.subr.mxu0 0.0
    %2283 = vmatpush1.msra.mxu0 0.0
    %2284 = vmatprep.subr.mxu0 0.0
    %2285 = vmatpush1.msra.mxu0 0.0
    %2286 = vmatprep.subr.mxu0 0.0
    %2287 = vmatpush1.msra.mxu0 0.0
    %2288 = vmatprep.subr.mxu0 0.0
    %2289 = vmatpush1.msra.mxu0 0.0
    %2290 = vmatprep.subr.mxu0 0.0
    %2291 = vmatpush1.msra.mxu0 0.0
    %2292 = vmatprep.subr.mxu0 0.0
    %2293 = vmatpush1.msra.mxu0 0.0
    %2294 = vmatprep.subr.mxu0 0.0
    %2295 = vmatpush1.msra.mxu0 0.0
    %2296 = vmatprep.subr.mxu0 0.0
    %2297 = vmatpush1.msra.mxu0 0.0
    %2298 = vmatprep.subr.mxu0 0.0
    %2299 = vmatpush1.msra.mxu0 0.0
    %2300 = vmatprep.subr.mxu0 0.0
    %2301 = vmatpush1.msra.mxu0 0.0
    %2302 = vmatprep.subr.mxu0 0.0
    %2303 = vmatpush1.msra.mxu0 0.0
    %2304 = vmatprep.subr.mxu0 0.0
    %2305 = vmatpush1.msra.mxu0 0.0
    %2306 = vmatprep.subr.mxu0 0.0
    %2307 = vmatpush1.msra.mxu0 0.0
    %2308 = vmatprep.subr.mxu0 0.0
    %2309 = vmatpush1.msra.mxu0 0.0
    %2310 = vmatprep.subr.mxu0 0.0
    %2311 = vmatpush1.msra.mxu0 0.0
    %2312 = vmatprep.subr.mxu0 0.0
    %2313 = vmatpush1.msra.mxu0 0.0
    %2314 = vmatprep.subr.mxu0 0.0
    %2315 = vmatpush1.msra.mxu0 0.0
    %2316 = vmatprep.subr.mxu0 0.0
    %2317 = vmatpush1.msra.mxu0 0.0
    %2318 = vmatprep.subr.mxu0 0.0
    %2319 = vmatpush1.msra.mxu0 0.0
    %2320 = vmatprep.subr.mxu0 0.0
    %2321 = vmatpush1.msra.mxu0 0.0
    %2322 = vmatprep.subr.mxu0 0.0
    %2323 = vmatpush1.msra.mxu0 0.0
    %2324 = vmatprep.subr.mxu0 0.0
    %2325 = vmatpush1.msra.mxu0 0.0
    %2326 = vmatprep.subr.mxu0 0.0
    %2327 = vmatpush1.msra.mxu0 0.0
    %2328 = vmatprep.subr.mxu0 0.0
    %2329 = vmatpush1.msra.mxu0 0.0
    %2330 = vmatprep.subr.mxu0 0.0
    %2331 = vmatpush1.msra.mxu0 0.0
    %2332 = vmatprep.subr.mxu0 0.0
    %2333 = vmatpush1.msra.mxu0 0.0
    %2334 = vmatprep.mubr.f32.mxu0 0.0
    %2335 = vmatmul.mubr.f32.gmra.mrb[0].mxu0 %v1788
    %v2336 = vpop.f32.mrb[0].mxu0
    %v2337 = vadd.f32 0.0, %v2336
    %v2338 = vpop.f32.mrb[0].mxu0
    %2339 = vmatprep.mubr.f32.mxu0 0.0
    %2340 = vmatmul.mubr.f32.gmra.mrb[0].mxu0 %v1791
    %v2341 = vpop.f32.mrb[0].mxu0
    %v2342 = vadd.f32 0.0, %v2341
    %v2343 = vpop.f32.mrb[0].mxu0
    %2344 = vmatprep.mubr.f32.mxu0 0.0
    %2345 = vmatmul.mubr.f32.gmra.mrb[0].mxu0 %v1794
    %v2346 = vpop.f32.mrb[0].mxu0
    %v2347 = vadd.f32 0.0, %v2346
    %v2348 = vpop.f32.mrb[0].mxu0
    %2349 = vmatprep.mubr.f32.mxu0 0.0
    %2350 = vmatmul.mubr.f32.gmra.mrb[0].mxu0 %v1797
    %v2351 = vpop.f32.mrb[0].mxu0
    %v2352 = vadd.f32 0.0, %v2351
    %v2353 = vpop.f32.mrb[0].mxu0
    %2354 = vdwg.mxu0
    %v2356 = vsel %vm171, %v2263, 0
    %v2359 = vsel %vm171, %v2264, 0
    %2361 = vmatprep.subr.mxu0 0.0
    %2362 = vmatpush1.msra.mxu0 %v2337
    %2363 = vmatprep.subr.mxu0 0.0
    %2364 = vmatpush1.msra.mxu0 %v2342
    %2365 = vmatprep.subr.mxu0 0.0
    %2366 = vmatpush1.msra.mxu0 %v2347
    %2367 = vmatprep.subr.mxu0 0.0
    %2368 = vmatpush1.msra.mxu0 %v2352
    %2369 = vmatprep.subr.mxu0 0.0
    %2370 = vmatpush1.msra.mxu0 0.0
    %2371 = vmatprep.subr.mxu0 0.0
    %2372 = vmatpush1.msra.mxu0 0.0
    %2373 = vmatprep.subr.mxu0 0.0
    %2374 = vmatpush1.msra.mxu0 0.0
    %2375 = vmatprep.subr.mxu0 0.0
    %2376 = vmatpush1.msra.mxu0 0.0
    %2377 = vmatprep.subr.mxu0 0.0
    %2378 = vmatpush1.msra.mxu0 0.0
    %2379 = vmatprep.subr.mxu0 0.0
    %2380 = vmatpush1.msra.mxu0 0.0
    %2381 = vmatprep.subr.mxu0 0.0
    %2382 = vmatpush1.msra.mxu0 0.0
    %2383 = vmatprep.subr.mxu0 0.0
    %2384 = vmatpush1.msra.mxu0 0.0
    %2385 = vmatprep.subr.mxu0 0.0
    %2386 = vmatpush1.msra.mxu0 0.0
    %2387 = vmatprep.subr.mxu0 0.0
    %2388 = vmatpush1.msra.mxu0 0.0
    %2389 = vmatprep.subr.mxu0 0.0
    %2390 = vmatpush1.msra.mxu0 0.0
    %2391 = vmatprep.subr.mxu0 0.0
    %2392 = vmatpush1.msra.mxu0 0.0
    %2393 = vmatprep.subr.mxu0 0.0
    %2394 = vmatpush1.msra.mxu0 0.0
    %2395 = vmatprep.subr.mxu0 0.0
    %2396 = vmatpush1.msra.mxu0 0.0
    %2397 = vmatprep.subr.mxu0 0.0
    %2398 = vmatpush1.msra.mxu0 0.0
    %2399 = vmatprep.subr.mxu0 0.0
    %2400 = vmatpush1.msra.mxu0 0.0
    %2401 = vmatprep.subr.mxu0 0.0
    %2402 = vmatpush1.msra.mxu0 0.0
    %2403 = vmatprep.subr.mxu0 0.0
    %2404 = vmatpush1.msra.mxu0 0.0
    %2405 = vmatprep.subr.mxu0 0.0
    %2406 = vmatpush1.msra.mxu0 0.0
    %2407 = vmatprep.subr.mxu0 0.0
    %2408 = vmatpush1.msra.mxu0 0.0
    %2409 = vmatprep.subr.mxu0 0.0
    %2410 = vmatpush1.msra.mxu0 0.0
    %2411 = vmatprep.subr.mxu0 0.0
    %2412 = vmatpush1.msra.mxu0 0.0
    %2413 = vmatprep.subr.mxu0 0.0
    %2414 = vmatpush1.msra.mxu0 0.0
    %2415 = vmatprep.subr.mxu0 0.0
    %2416 = vmatpush1.msra.mxu0 0.0
    %2417 = vmatprep.subr.mxu0 0.0
    %2418 = vmatpush1.msra.mxu0 0.0
    %2419 = vmatprep.subr.mxu0 0.0
    %2420 = vmatpush1.msra.mxu0 0.0
    %2421 = vmatprep.subr.mxu0 0.0
    %2422 = vmatpush1.msra.mxu0 0.0
    %2423 = vmatprep.subr.mxu0 0.0
    %2424 = vmatpush1.msra.mxu0 0.0
    %2425 = vmatprep.mubr.f32.mxu0 0.0
    %2426 = vmatmul.mubr.f32.gmra.mrb[0].mxu0 %v2356
    %v2427 = vpop.f32.mrb[0].mxu0
    %v2428 = vadd.f32 0.0, %v2427
    %v2429 = vpop.f32.mrb[0].mxu0
    %2430 = vmatprep.mubr.f32.mxu0 0.0
    %2431 = vmatmul.mubr.f32.gmra.mrb[0].mxu0 %v2359
    %v2432 = vpop.f32.mrb[0].mxu0
    %v2433 = vadd.f32 0.0, %v2432
    %v2434 = vpop.f32.mrb[0].mxu0
    %2435 = vdwg.mxu0
    %v2436 = vadd.f32 %v2072, %v2428
    %v2437 = vadd.f32 %v2073, %v2433
    %s2438 = scalar_lea.vmem %s9, 64
    %v2439 = vld [vmem:[%s2438] sm:$0xff]
    %v2440 = vld [vmem:[%s2438 + $0x8] sm:$0xff]
    %v2441 = vld [vmem:[%s2438 + $0x10] sm:$0xff]
    %v2442 = vld [vmem:[%s2438 + $0x18] sm:$0xff]
    %s2443 = scalar_lea.vmem [#allocation8], 2
    %v2444 = vld [vmem:[%s2443] sm:$0x1]
    %v2446 = vlaneseq
    %v2447 = vshrl.u32 %v2446, 7
    %v2448 = vsub.s32 0, %v2447
    %v2449 = vrot.slane %v2444, %v2448
    %2451 = vmatprep.subr.mxu0 0.0
    %2452 = vmatpush1.msra.mxu0 %v2439
    %2453 = vmatprep.subr.mxu0 0.0
    %2454 = vmatpush1.msra.mxu0 %v2440
    %2455 = vmatprep.subr.mxu0 0.0
    %2456 = vmatpush1.msra.mxu0 %v2441
    %2457 = vmatprep.subr.mxu0 0.0
    %2458 = vmatpush1.msra.mxu0 %v2442
    %2459 = vmatprep.subr.mxu0 0.0
    %2460 = vmatpush1.msra.mxu0 0.0
    %2461 = vmatprep.subr.mxu0 0.0
    %2462 = vmatpush1.msra.mxu0 0.0
    %2463 = vmatprep.subr.mxu0 0.0
    %2464 = vmatpush1.msra.mxu0 0.0
    %2465 = vmatprep.subr.mxu0 0.0
    %2466 = vmatpush1.msra.mxu0 0.0
    %2467 = vmatprep.subr.mxu0 0.0
    %2468 = vmatpush1.msra.mxu0 0.0
    %2469 = vmatprep.subr.mxu0 0.0
    %2470 = vmatpush1.msra.mxu0 0.0
    %2471 = vmatprep.subr.mxu0 0.0
    %2472 = vmatpush1.msra.mxu0 0.0
    %2473 = vmatprep.subr.mxu0 0.0
    %2474 = vmatpush1.msra.mxu0 0.0
    %2475 = vmatprep.subr.mxu0 0.0
    %2476 = vmatpush1.msra.mxu0 0.0
    %2477 = vmatprep.subr.mxu0 0.0
    %2478 = vmatpush1.msra.mxu0 0.0
    %2479 = vmatprep.subr.mxu0 0.0
    %2480 = vmatpush1.msra.mxu0 0.0
    %2481 = vmatprep.subr.mxu0 0.0
    %2482 = vmatpush1.msra.mxu0 0.0
    %2483 = vmatprep.subr.mxu0 0.0
    %2484 = vmatpush1.msra.mxu0 0.0
    %2485 = vmatprep.subr.mxu0 0.0
    %2486 = vmatpush1.msra.mxu0 0.0
    %2487 = vmatprep.subr.mxu0 0.0
    %2488 = vmatpush1.msra.mxu0 0.0
    %2489 = vmatprep.subr.mxu0 0.0
    %2490 = vmatpush1.msra.mxu0 0.0
    %2491 = vmatprep.subr.mxu0 0.0
    %2492 = vmatpush1.msra.mxu0 0.0
    %2493 = vmatprep.subr.mxu0 0.0
    %2494 = vmatpush1.msra.mxu0 0.0
    %2495 = vmatprep.subr.mxu0 0.0
    %2496 = vmatpush1.msra.mxu0 0.0
    %2497 = vmatprep.subr.mxu0 0.0
    %2498 = vmatpush1.msra.mxu0 0.0
    %2499 = vmatprep.subr.mxu0 0.0
    %2500 = vmatpush1.msra.mxu0 0.0
    %2501 = vmatprep.subr.mxu0 0.0
    %2502 = vmatpush1.msra.mxu0 0.0
    %2503 = vmatprep.subr.mxu0 0.0
    %2504 = vmatpush1.msra.mxu0 0.0
    %2505 = vmatprep.subr.mxu0 0.0
    %2506 = vmatpush1.msra.mxu0 0.0
    %2507 = vmatprep.subr.mxu0 0.0
    %2508 = vmatpush1.msra.mxu0 0.0
    %2509 = vmatprep.subr.mxu0 0.0
    %2510 = vmatpush1.msra.mxu0 0.0
    %2511 = vmatprep.subr.mxu0 0.0
    %2512 = vmatpush1.msra.mxu0 0.0
    %2513 = vmatprep.subr.mxu0 0.0
    %2514 = vmatpush1.msra.mxu0 0.0
    %2515 = vmatprep.mubr.f32.mxu0 0.0
    %2516 = vmatmul.mubr.f32.gmra.mrb[0].mxu0 %v1701
    %v2517 = vpop.f32.mrb[0].mxu0
    %v2518 = vadd.f32 %v2449, %v2517
    %v2519 = vpop.f32.mrb[0].mxu0
    %2520 = vmatprep.mubr.f32.mxu0 0.0
    %2521 = vmatmul.mubr.f32.gmra.mrb[0].mxu0 %v1704
    %v2522 = vpop.f32.mrb[0].mxu0
    %v2523 = vadd.f32 %v2449, %v2522
    %v2524 = vpop.f32.mrb[0].mxu0
    %2525 = vdwg.mxu0
    %v2527 = vsel %vm171, %v2518, 0
    %v2530 = vsel %vm171, %v2523, 0
    %2532 = vmatprep.subr.mxu0 0.0
    %2533 = vmatpush1.xpose.msra.mxu0 %v1788
    %2534 = vmatprep.subr.mxu0 0.0
    %2535 = vmatpush1.xpose.msra.mxu0 %v1791
    %2536 = vmatprep.subr.mxu0 0.0
    %2537 = vmatpush1.xpose.msra.mxu0 %v1794
    %2538 = vmatprep.subr.mxu0 0.0
    %2539 = vmatpush1.xpose.msra.mxu0 %v1797
    %2540 = vmatprep.subr.mxu0 0.0
    %2541 = vmatpush1.xpose.msra.mxu0 0.0
    %2542 = vmatprep.subr.mxu0 0.0
    %2543 = vmatpush1.xpose.msra.mxu0 0.0
    %2544 = vmatprep.subr.mxu0 0.0
    %2545 = vmatpush1.xpose.msra.mxu0 0.0
    %2546 = vmatprep.subr.mxu0 0.0
    %2547 = vmatpush1.xpose.msra.mxu0 0.0
    %2548 = vmatprep.subr.mxu0 0.0
    %2549 = vmatpush1.xpose.msra.mxu0 0.0
    %2550 = vmatprep.subr.mxu0 0.0
    %2551 = vmatpush1.xpose.msra.mxu0 0.0
    %2552 = vmatprep.subr.mxu0 0.0
    %2553 = vmatpush1.xpose.msra.mxu0 0.0
    %2554 = vmatprep.subr.mxu0 0.0
    %2555 = vmatpush1.xpose.msra.mxu0 0.0
    %2556 = vmatprep.subr.mxu0 0.0
    %2557 = vmatpush1.xpose.msra.mxu0 0.0
    %2558 = vmatprep.subr.mxu0 0.0
    %2559 = vmatpush1.xpose.msra.mxu0 0.0
    %2560 = vmatprep.subr.mxu0 0.0
    %2561 = vmatpush1.xpose.msra.mxu0 0.0
    %2562 = vmatprep.subr.mxu0 0.0
    %2563 = vmatpush1.xpose.msra.mxu0 0.0
    %2564 = vmatprep.subr.mxu0 0.0
    %2565 = vmatpush1.xpose.msra.mxu0 0.0
    %2566 = vmatprep.subr.mxu0 0.0
    %2567 = vmatpush1.xpose.msra.mxu0 0.0
    %2568 = vmatprep.subr.mxu0 0.0
    %2569 = vmatpush1.xpose.msra.mxu0 0.0
    %2570 = vmatprep.subr.mxu0 0.0
    %2571 = vmatpush1.xpose.msra.mxu0 0.0
    %2572 = vmatprep.subr.mxu0 0.0
    %2573 = vmatpush1.xpose.msra.mxu0 0.0
    %2574 = vmatprep.subr.mxu0 0.0
    %2575 = vmatpush1.xpose.msra.mxu0 0.0
    %2576 = vmatprep.subr.mxu0 0.0
    %2577 = vmatpush1.xpose.msra.mxu0 0.0
    %2578 = vmatprep.subr.mxu0 0.0
    %2579 = vmatpush1.xpose.msra.mxu0 0.0
    %2580 = vmatprep.subr.mxu0 0.0
    %2581 = vmatpush1.xpose.msra.mxu0 0.0
    %2582 = vmatprep.subr.mxu0 0.0
    %2583 = vmatpush1.xpose.msra.mxu0 0.0
    %2584 = vmatprep.subr.mxu0 0.0
    %2585 = vmatpush1.xpose.msra.mxu0 0.0
    %2586 = vmatprep.subr.mxu0 0.0
    %2587 = vmatpush1.xpose.msra.mxu0 0.0
    %2588 = vmatprep.subr.mxu0 0.0
    %2589 = vmatpush1.xpose.msra.mxu0 0.0
    %2590 = vmatprep.subr.mxu0 0.0
    %2591 = vmatpush1.xpose.msra.mxu0 0.0
    %2592 = vmatprep.subr.mxu0 0.0
    %2593 = vmatpush1.xpose.msra.mxu0 0.0
    %2594 = vmatprep.subr.mxu0 0.0
    %2595 = vmatpush1.xpose.msra.mxu0 0.0
    %2596 = vmatprep.mubr.f32.mxu0 0.0
    %2597 = vmatmul.mubr.f32.gmra.mrb[0].mxu0 %v2527
    %v2598 = vpop.f32.mrb[0].mxu0
    %v2599 = vadd.f32 %v217, %v2598
    %v2600 = vpop.f32.mrb[0].mxu0
    %2601 = vmatprep.mubr.f32.mxu0 0.0
    %2602 = vmatmul.mubr.f32.gmra.mrb[0].mxu0 %v2530
    %v2603 = vpop.f32.mrb[0].mxu0
    %v2604 = vadd.f32 %v218, %v2603
    %v2605 = vpop.f32.mrb[0].mxu0
    %2606 = vdwg.mxu0
    %v2607 = vsel %vm171, %v2599, -inf
    %2608 = vmax.xlane.f32.xlu0 %v2607
    %v2609 = vpop.xlane.xlu0 %2608
    %v2610 = vsel %vm171, %v2604, -inf
    %2611 = vmax.xlane.f32.xlu0 %v2610
    %v2612 = vpop.xlane.xlu0 %2611
    %v2613 = vsub.f32 %v2599, %v2609
    %v2614 = vsub.f32 %v2604, %v2612
    %v2615 = vmul.f32 %v2613, 1.442695
    %v2616 = vpow.pop %v2615
    %v2617 = vmul.f32 %v2614, 1.442695
    %v2618 = vpow.pop %v2617
    %v2619 = vsel %vm171, %v2616, 0.0
    %2620 = vadd.xlane.f32.xlu0 %v2619
    %v2621 = vpop.xlane.xlu0 %2620
    %v2622 = vsel %vm171, %v2618, 0.0
    %2623 = vadd.xlane.f32.xlu0 %v2622
    %v2624 = vpop.xlane.xlu0 %2623
    %v2625 = vrcp.pop %v2621
    %v2626 = vrcp.pop %v2624
    %v2627 = vmul.f32 %v2616, %v2625
    %v2628 = vmul.f32 %v2618, %v2626
    %s2629 = scalar_lea.vmem [#allocation10], 64
    %v2630 = vld [vmem:[%s2629] sm:$0xff]
    %v2631 = vld [vmem:[%s2629 + $0x8] sm:$0xff]
    %v2632 = vld [vmem:[%s2629 + $0x10] sm:$0xff]
    %v2633 = vld [vmem:[%s2629 + $0x18] sm:$0xff]
    %2634 = vmatprep.subr.mxu0 0.0
    %2635 = vmatpush1.msra.mxu0 %v2630
    %2636 = vmatprep.subr.mxu0 0.0
    %2637 = vmatpush1.msra.mxu0 %v2631
    %2638 = vmatprep.subr.mxu0 0.0
    %2639 = vmatpush1.msra.mxu0 %v2632
    %2640 = vmatprep.subr.mxu0 0.0
    %2641 = vmatpush1.msra.mxu0 %v2633
    %2642 = vmatprep.subr.mxu0 0.0
    %2643 = vmatpush1.msra.mxu0 0.0
    %2644 = vmatprep.subr.mxu0 0.0
    %2645 = vmatpush1.msra.mxu0 0.0
    %2646 = vmatprep.subr.mxu0 0.0
    %2647 = vmatpush1.msra.mxu0 0.0
    %2648 = vmatprep.subr.mxu0 0.0
    %2649 = vmatpush1.msra.mxu0 0.0
    %2650 = vmatprep.subr.mxu0 0.0
    %2651 = vmatpush1.msra.mxu0 0.0
    %2652 = vmatprep.subr.mxu0 0.0
    %2653 = vmatpush1.msra.mxu0 0.0
    %2654 = vmatprep.subr.mxu0 0.0
    %2655 = vmatpush1.msra.mxu0 0.0
    %2656 = vmatprep.subr.mxu0 0.0
    %2657 = vmatpush1.msra.mxu0 0.0
    %2658 = vmatprep.subr.mxu0 0.0
    %2659 = vmatpush1.msra.mxu0 0.0
    %2660 = vmatprep.subr.mxu0 0.0
    %2661 = vmatpush1.msra.mxu0 0.0
    %2662 = vmatprep.subr.mxu0 0.0
    %2663 = vmatpush1.msra.mxu0 0.0
    %2664 = vmatprep.subr.mxu0 0.0
    %2665 = vmatpush1.msra.mxu0 0.0
    %2666 = vmatprep.subr.mxu0 0.0
    %2667 = vmatpush1.msra.mxu0 0.0
    %2668 = vmatprep.subr.mxu0 0.0
    %2669 = vmatpush1.msra.mxu0 0.0
    %2670 = vmatprep.subr.mxu0 0.0
    %2671 = vmatpush1.msra.mxu0 0.0
    %2672 = vmatprep.subr.mxu0 0.0
    %2673 = vmatpush1.msra.mxu0 0.0
    %2674 = vmatprep.subr.mxu0 0.0
    %2675 = vmatpush1.msra.mxu0 0.0
    %2676 = vmatprep.subr.mxu0 0.0
    %2677 = vmatpush1.msra.mxu0 0.0
    %2678 = vmatprep.subr.mxu0 0.0
    %2679 = vmatpush1.msra.mxu0 0.0
    %2680 = vmatprep.subr.mxu0 0.0
    %2681 = vmatpush1.msra.mxu0 0.0
    %2682 = vmatprep.subr.mxu0 0.0
    %2683 = vmatpush1.msra.mxu0 0.0
    %2684 = vmatprep.subr.mxu0 0.0
    %2685 = vmatpush1.msra.mxu0 0.0
    %2686 = vmatprep.subr.mxu0 0.0
    %2687 = vmatpush1.msra.mxu0 0.0
    %2688 = vmatprep.subr.mxu0 0.0
    %2689 = vmatpush1.msra.mxu0 0.0
    %2690 = vmatprep.subr.mxu0 0.0
    %2691 = vmatpush1.msra.mxu0 0.0
    %2692 = vmatprep.subr.mxu0 0.0
    %2693 = vmatpush1.msra.mxu0 0.0
    %2694 = vmatprep.subr.mxu0 0.0
    %2695 = vmatpush1.msra.mxu0 0.0
    %2696 = vmatprep.subr.mxu0 0.0
    %2697 = vmatpush1.msra.mxu0 0.0
    %2698 = vmatprep.mubr.f32.mxu0 0.0
    %2699 = vmatmul.mubr.f32.gmra.mrb[0].mxu0 %v1788
    %v2700 = vpop.f32.mrb[0].mxu0
    %v2701 = vadd.f32 0.0, %v2700
    %v2702 = vpop.f32.mrb[0].mxu0
    %2703 = vmatprep.mubr.f32.mxu0 0.0
    %2704 = vmatmul.mubr.f32.gmra.mrb[0].mxu0 %v1791
    %v2705 = vpop.f32.mrb[0].mxu0
    %v2706 = vadd.f32 0.0, %v2705
    %v2707 = vpop.f32.mrb[0].mxu0
    %2708 = vmatprep.mubr.f32.mxu0 0.0
    %2709 = vmatmul.mubr.f32.gmra.mrb[0].mxu0 %v1794
    %v2710 = vpop.f32.mrb[0].mxu0
    %v2711 = vadd.f32 0.0, %v2710
    %v2712 = vpop.f32.mrb[0].mxu0
    %2713 = vmatprep.mubr.f32.mxu0 0.0
    %2714 = vmatmul.mubr.f32.gmra.mrb[0].mxu0 %v1797
    %v2715 = vpop.f32.mrb[0].mxu0
    %v2716 = vadd.f32 0.0, %v2715
    %v2717 = vpop.f32.mrb[0].mxu0
    %2718 = vdwg.mxu0
    %v2720 = vsel %vm171, %v2627, 0
    %v2723 = vsel %vm171, %v2628, 0
    %2725 = vmatprep.subr.mxu0 0.0
    %2726 = vmatpush1.msra.mxu0 %v2701
    %2727 = vmatprep.subr.mxu0 0.0
    %2728 = vmatpush1.msra.mxu0 %v2706
    %2729 = vmatprep.subr.mxu0 0.0
    %2730 = vmatpush1.msra.mxu0 %v2711
    %2731 = vmatprep.subr.mxu0 0.0
    %2732 = vmatpush1.msra.mxu0 %v2716
    %2733 = vmatprep.subr.mxu0 0.0
    %2734 = vmatpush1.msra.mxu0 0.0
    %2735 = vmatprep.subr.mxu0 0.0
    %2736 = vmatpush1.msra.mxu0 0.0
    %2737 = vmatprep.subr.mxu0 0.0
    %2738 = vmatpush1.msra.mxu0 0.0
    %2739 = vmatprep.subr.mxu0 0.0
    %2740 = vmatpush1.msra.mxu0 0.0
    %2741 = vmatprep.subr.mxu0 0.0
    %2742 = vmatpush1.msra.mxu0 0.0
    %2743 = vmatprep.subr.mxu0 0.0
    %2744 = vmatpush1.msra.mxu0 0.0
    %2745 = vmatprep.subr.mxu0 0.0
    %2746 = vmatpush1.msra.mxu0 0.0
    %2747 = vmatprep.subr.mxu0 0.0
    %2748 = vmatpush1.msra.mxu0 0.0
    %2749 = vmatprep.subr.mxu0 0.0
    %2750 = vmatpush1.msra.mxu0 0.0
    %2751 = vmatprep.subr.mxu0 0.0
    %2752 = vmatpush1.msra.mxu0 0.0
    %2753 = vmatprep.subr.mxu0 0.0
    %2754 = vmatpush1.msra.mxu0 0.0
    %2755 = vmatprep.subr.mxu0 0.0
    %2756 = vmatpush1.msra.mxu0 0.0
    %2757 = vmatprep.subr.mxu0 0.0
    %2758 = vmatpush1.msra.mxu0 0.0
    %2759 = vmatprep.subr.mxu0 0.0
    %2760 = vmatpush1.msra.mxu0 0.0
    %2761 = vmatprep.subr.mxu0 0.0
    %2762 = vmatpush1.msra.mxu0 0.0
    %2763 = vmatprep.subr.mxu0 0.0
    %2764 = vmatpush1.msra.mxu0 0.0
    %2765 = vmatprep.subr.mxu0 0.0
    %2766 = vmatpush1.msra.mxu0 0.0
    %2767 = vmatprep.subr.mxu0 0.0
    %2768 = vmatpush1.msra.mxu0 0.0
    %2769 = vmatprep.subr.mxu0 0.0
    %2770 = vmatpush1.msra.mxu0 0.0
    %2771 = vmatprep.subr.mxu0 0.0
    %2772 = vmatpush1.msra.mxu0 0.0
    %2773 = vmatprep.subr.mxu0 0.0
    %2774 = vmatpush1.msra.mxu0 0.0
    %2775 = vmatprep.subr.mxu0 0.0
    %2776 = vmatpush1.msra.mxu0 0.0
    %2777 = vmatprep.subr.mxu0 0.0
    %2778 = vmatpush1.msra.mxu0 0.0
    %2779 = vmatprep.subr.mxu0 0.0
    %2780 = vmatpush1.msra.mxu0 0.0
    %2781 = vmatprep.subr.mxu0 0.0
    %2782 = vmatpush1.msra.mxu0 0.0
    %2783 = vmatprep.subr.mxu0 0.0
    %2784 = vmatpush1.msra.mxu0 0.0
    %2785 = vmatprep.subr.mxu0 0.0
    %2786 = vmatpush1.msra.mxu0 0.0
    %2787 = vmatprep.subr.mxu0 0.0
    %2788 = vmatpush1.msra.mxu0 0.0
    %2789 = vmatprep.mubr.f32.mxu0 0.0
    %2790 = vmatmul.mubr.f32.gmra.mrb[0].mxu0 %v2720
    %v2791 = vpop.f32.mrb[0].mxu0
    %v2792 = vadd.f32 0.0, %v2791
    %v2793 = vpop.f32.mrb[0].mxu0
    %2794 = vmatprep.mubr.f32.mxu0 0.0
    %2795 = vmatmul.mubr.f32.gmra.mrb[0].mxu0 %v2723
    %v2796 = vpop.f32.mrb[0].mxu0
    %v2797 = vadd.f32 0.0, %v2796
    %v2798 = vpop.f32.mrb[0].mxu0
    %2799 = vdwg.mxu0
    %v2800 = vadd.f32 %v2436, %v2792
    %v2801 = vadd.f32 %v2437, %v2797
    %s2802 = scalar_lea.vmem %s9, 96
    %v2803 = vld [vmem:[%s2802] sm:$0xff]
    %v2804 = vld [vmem:[%s2802 + $0x8] sm:$0xff]
    %v2805 = vld [vmem:[%s2802 + $0x10] sm:$0xff]
    %v2806 = vld [vmem:[%s2802 + $0x18] sm:$0xff]
    %s2807 = scalar_lea.vmem [#allocation8], 3
    %v2808 = vld [vmem:[%s2807] sm:$0x1]
    %v2810 = vlaneseq
    %v2811 = vshrl.u32 %v2810, 7
    %v2812 = vsub.s32 0, %v2811
    %v2813 = vrot.slane %v2808, %v2812
    %2815 = vmatprep.subr.mxu0 0.0
    %2816 = vmatpush1.msra.mxu0 %v2803
    %2817 = vmatprep.subr.mxu0 0.0
    %2818 = vmatpush1.msra.mxu0 %v2804
    %2819 = vmatprep.subr.mxu0 0.0
    %2820 = vmatpush1.msra.mxu0 %v2805
    %2821 = vmatprep.subr.mxu0 0.0
    %2822 = vmatpush1.msra.mxu0 %v2806
    %2823 = vmatprep.subr.mxu0 0.0
    %2824 = vmatpush1.msra.mxu0 0.0
    %2825 = vmatprep.subr.mxu0 0.0
    %2826 = vmatpush1.msra.mxu0 0.0
    %2827 = vmatprep.subr.mxu0 0.0
    %2828 = vmatpush1.msra.mxu0 0.0
    %2829 = vmatprep.subr.mxu0 0.0
    %2830 = vmatpush1.msra.mxu0 0.0
    %2831 = vmatprep.subr.mxu0 0.0
    %2832 = vmatpush1.msra.mxu0 0.0
    %2833 = vmatprep.subr.mxu0 0.0
    %2834 = vmatpush1.msra.mxu0 0.0
    %2835 = vmatprep.subr.mxu0 0.0
    %2836 = vmatpush1.msra.mxu0 0.0
    %2837 = vmatprep.subr.mxu0 0.0
    %2838 = vmatpush1.msra.mxu0 0.0
    %2839 = vmatprep.subr.mxu0 0.0
    %2840 = vmatpush1.msra.mxu0 0.0
    %2841 = vmatprep.subr.mxu0 0.0
    %2842 = vmatpush1.msra.mxu0 0.0
    %2843 = vmatprep.subr.mxu0 0.0
    %2844 = vmatpush1.msra.mxu0 0.0
    %2845 = vmatprep.subr.mxu0 0.0
    %2846 = vmatpush1.msra.mxu0 0.0
    %2847 = vmatprep.subr.mxu0 0.0
    %2848 = vmatpush1.msra.mxu0 0.0
    %2849 = vmatprep.subr.mxu0 0.0
    %2850 = vmatpush1.msra.mxu0 0.0
    %2851 = vmatprep.subr.mxu0 0.0
    %2852 = vmatpush1.msra.mxu0 0.0
    %2853 = vmatprep.subr.mxu0 0.0
    %2854 = vmatpush1.msra.mxu0 0.0
    %2855 = vmatprep.subr.mxu0 0.0
    %2856 = vmatpush1.msra.mxu0 0.0
    %2857 = vmatprep.subr.mxu0 0.0
    %2858 = vmatpush1.msra.mxu0 0.0
    %2859 = vmatprep.subr.mxu0 0.0
    %2860 = vmatpush1.msra.mxu0 0.0
    %2861 = vmatprep.subr.mxu0 0.0
    %2862 = vmatpush1.msra.mxu0 0.0
    %2863 = vmatprep.subr.mxu0 0.0
    %2864 = vmatpush1.msra.mxu0 0.0
    %2865 = vmatprep.subr.mxu0 0.0
    %2866 = vmatpush1.msra.mxu0 0.0
    %2867 = vmatprep.subr.mxu0 0.0
    %2868 = vmatpush1.msra.mxu0 0.0
    %2869 = vmatprep.subr.mxu0 0.0
    %2870 = vmatpush1.msra.mxu0 0.0
    %2871 = vmatprep.subr.mxu0 0.0
    %2872 = vmatpush1.msra.mxu0 0.0
    %2873 = vmatprep.subr.mxu0 0.0
    %2874 = vmatpush1.msra.mxu0 0.0
    %2875 = vmatprep.subr.mxu0 0.0
    %2876 = vmatpush1.msra.mxu0 0.0
    %2877 = vmatprep.subr.mxu0 0.0
    %2878 = vmatpush1.msra.mxu0 0.0
    %2879 = vmatprep.mubr.f32.mxu0 0.0
    %2880 = vmatmul.mubr.f32.gmra.mrb[0].mxu0 %v1701
    %v2881 = vpop.f32.mrb[0].mxu0
    %v2882 = vadd.f32 %v2813, %v2881
    %v2883 = vpop.f32.mrb[0].mxu0
    %2884 = vmatprep.mubr.f32.mxu0 0.0
    %2885 = vmatmul.mubr.f32.gmra.mrb[0].mxu0 %v1704
    %v2886 = vpop.f32.mrb[0].mxu0
    %v2887 = vadd.f32 %v2813, %v2886
    %v2888 = vpop.f32.mrb[0].mxu0
    %2889 = vdwg.mxu0
    %v2891 = vsel %vm171, %v2882, 0
    %v2894 = vsel %vm171, %v2887, 0
    %2896 = vmatprep.subr.mxu0 0.0
    %2897 = vmatpush1.xpose.msra.mxu0 %v1788
    %2898 = vmatprep.subr.mxu0 0.0
    %2899 = vmatpush1.xpose.msra.mxu0 %v1791
    %2900 = vmatprep.subr.mxu0 0.0
    %2901 = vmatpush1.xpose.msra.mxu0 %v1794
    %2902 = vmatprep.subr.mxu0 0.0
    %2903 = vmatpush1.xpose.msra.mxu0 %v1797
    %2904 = vmatprep.subr.mxu0 0.0
    %2905 = vmatpush1.xpose.msra.mxu0 0.0
    %2906 = vmatprep.subr.mxu0 0.0
    %2907 = vmatpush1.xpose.msra.mxu0 0.0
    %2908 = vmatprep.subr.mxu0 0.0
    %2909 = vmatpush1.xpose.msra.mxu0 0.0
    %2910 = vmatprep.subr.mxu0 0.0
    %2911 = vmatpush1.xpose.msra.mxu0 0.0
    %2912 = vmatprep.subr.mxu0 0.0
    %2913 = vmatpush1.xpose.msra.mxu0 0.0
    %2914 = vmatprep.subr.mxu0 0.0
    %2915 = vmatpush1.xpose.msra.mxu0 0.0
    %2916 = vmatprep.subr.mxu0 0.0
    %2917 = vmatpush1.xpose.msra.mxu0 0.0
    %2918 = vmatprep.subr.mxu0 0.0
    %2919 = vmatpush1.xpose.msra.mxu0 0.0
    %2920 = vmatprep.subr.mxu0 0.0
    %2921 = vmatpush1.xpose.msra.mxu0 0.0
    %2922 = vmatprep.subr.mxu0 0.0
    %2923 = vmatpush1.xpose.msra.mxu0 0.0
    %2924 = vmatprep.subr.mxu0 0.0
    %2925 = vmatpush1.xpose.msra.mxu0 0.0
    %2926 = vmatprep.subr.mxu0 0.0
    %2927 = vmatpush1.xpose.msra.mxu0 0.0
    %2928 = vmatprep.subr.mxu0 0.0
    %2929 = vmatpush1.xpose.msra.mxu0 0.0
    %2930 = vmatprep.subr.mxu0 0.0
    %2931 = vmatpush1.xpose.msra.mxu0 0.0
    %2932 = vmatprep.subr.mxu0 0.0
    %2933 = vmatpush1.xpose.msra.mxu0 0.0
    %2934 = vmatprep.subr.mxu0 0.0
    %2935 = vmatpush1.xpose.msra.mxu0 0.0
    %2936 = vmatprep.subr.mxu0 0.0
    %2937 = vmatpush1.xpose.msra.mxu0 0.0
    %2938 = vmatprep.subr.mxu0 0.0
    %2939 = vmatpush1.xpose.msra.mxu0 0.0
    %2940 = vmatprep.subr.mxu0 0.0
    %2941 = vmatpush1.xpose.msra.mxu0 0.0
    %2942 = vmatprep.subr.mxu0 0.0
    %2943 = vmatpush1.xpose.msra.mxu0 0.0
    %2944 = vmatprep.subr.mxu0 0.0
    %2945 = vmatpush1.xpose.msra.mxu0 0.0
    %2946 = vmatprep.subr.mxu0 0.0
    %2947 = vmatpush1.xpose.msra.mxu0 0.0
    %2948 = vmatprep.subr.mxu0 0.0
    %2949 = vmatpush1.xpose.msra.mxu0 0.0
    %2950 = vmatprep.subr.mxu0 0.0
    %2951 = vmatpush1.xpose.msra.mxu0 0.0
    %2952 = vmatprep.subr.mxu0 0.0
    %2953 = vmatpush1.xpose.msra.mxu0 0.0
    %2954 = vmatprep.subr.mxu0 0.0
    %2955 = vmatpush1.xpose.msra.mxu0 0.0
    %2956 = vmatprep.subr.mxu0 0.0
    %2957 = vmatpush1.xpose.msra.mxu0 0.0
    %2958 = vmatprep.subr.mxu0 0.0
    %2959 = vmatpush1.xpose.msra.mxu0 0.0
    %2960 = vmatprep.mubr.f32.mxu0 0.0
    %2961 = vmatmul.mubr.f32.gmra.mrb[0].mxu0 %v2891
    %v2962 = vpop.f32.mrb[0].mxu0
    %v2963 = vadd.f32 %v217, %v2962
    %v2964 = vpop.f32.mrb[0].mxu0
    %2965 = vmatprep.mubr.f32.mxu0 0.0
    %2966 = vmatmul.mubr.f32.gmra.mrb[0].mxu0 %v2894
    %v2967 = vpop.f32.mrb[0].mxu0
    %v2968 = vadd.f32 %v218, %v2967
    %v2969 = vpop.f32.mrb[0].mxu0
    %2970 = vdwg.mxu0
    %v2971 = vsel %vm171, %v2963, -inf
    %2972 = vmax.xlane.f32.xlu0 %v2971
    %v2973 = vpop.xlane.xlu0 %2972
    %v2974 = vsel %vm171, %v2968, -inf
    %2975 = vmax.xlane.f32.xlu0 %v2974
    %v2976 = vpop.xlane.xlu0 %2975
    %v2977 = vsub.f32 %v2963, %v2973
    %v2978 = vsub.f32 %v2968, %v2976
    %v2979 = vmul.f32 %v2977, 1.442695
    %v2980 = vpow.pop %v2979
    %v2981 = vmul.f32 %v2978, 1.442695
    %v2982 = vpow.pop %v2981
    %v2983 = vsel %vm171, %v2980, 0.0
    %2984 = vadd.xlane.f32.xlu0 %v2983
    %v2985 = vpop.xlane.xlu0 %2984
    %v2986 = vsel %vm171, %v2982, 0.0
    %2987 = vadd.xlane.f32.xlu0 %v2986
    %v2988 = vpop.xlane.xlu0 %2987
    %v2989 = vrcp.pop %v2985
    %v2990 = vrcp.pop %v2988
    %v2991 = vmul.f32 %v2980, %v2989
    %v2992 = vmul.f32 %v2982, %v2990
    %s2993 = scalar_lea.vmem [#allocation10], 96
    %v2994 = vld [vmem:[%s2993] sm:$0xff]
    %v2995 = vld [vmem:[%s2993 + $0x8] sm:$0xff]
    %v2996 = vld [vmem:[%s2993 + $0x10] sm:$0xff]
    %v2997 = vld [vmem:[%s2993 + $0x18] sm:$0xff]
    %2998 = vmatprep.subr.mxu0 0.0
    %2999 = vmatpush1.msra.mxu0 %v2994
    %3000 = vmatprep.subr.mxu0 0.0
    %3001 = vmatpush1.msra.mxu0 %v2995
    %3002 = vmatprep.subr.mxu0 0.0
    %3003 = vmatpush1.msra.mxu0 %v2996
    %3004 = vmatprep.subr.mxu0 0.0
    %3005 = vmatpush1.msra.mxu0 %v2997
    %3006 = vmatprep.subr.mxu0 0.0
    %3007 = vmatpush1.msra.mxu0 0.0
    %3008 = vmatprep.subr.mxu0 0.0
    %3009 = vmatpush1.msra.mxu0 0.0
    %3010 = vmatprep.subr.mxu0 0.0
    %3011 = vmatpush1.msra.mxu0 0.0
    %3012 = vmatprep.subr.mxu0 0.0
    %3013 = vmatpush1.msra.mxu0 0.0
    %3014 = vmatprep.subr.mxu0 0.0
    %3015 = vmatpush1.msra.mxu0 0.0
    %3016 = vmatprep.subr.mxu0 0.0
    %3017 = vmatpush1.msra.mxu0 0.0
    %3018 = vmatprep.subr.mxu0 0.0
    %3019 = vmatpush1.msra.mxu0 0.0
    %3020 = vmatprep.subr.mxu0 0.0
    %3021 = vmatpush1.msra.mxu0 0.0
    %3022 = vmatprep.subr.mxu0 0.0
    %3023 = vmatpush1.msra.mxu0 0.0
    %3024 = vmatprep.subr.mxu0 0.0
    %3025 = vmatpush1.msra.mxu0 0.0
    %3026 = vmatprep.subr.mxu0 0.0
    %3027 = vmatpush1.msra.mxu0 0.0
    %3028 = vmatprep.subr.mxu0 0.0
    %3029 = vmatpush1.msra.mxu0 0.0
    %3030 = vmatprep.subr.mxu0 0.0
    %3031 = vmatpush1.msra.mxu0 0.0
    %3032 = vmatprep.subr.mxu0 0.0
    %3033 = vmatpush1.msra.mxu0 0.0
    %3034 = vmatprep.subr.mxu0 0.0
    %3035 = vmatpush1.msra.mxu0 0.0
    %3036 = vmatprep.subr.mxu0 0.0
    %3037 = vmatpush1.msra.mxu0 0.0
    %3038 = vmatprep.subr.mxu0 0.0
    %3039 = vmatpush1.msra.mxu0 0.0
    %3040 = vmatprep.subr.mxu0 0.0
    %3041 = vmatpush1.msra.mxu0 0.0
    %3042 = vmatprep.subr.mxu0 0.0
    %3043 = vmatpush1.msra.mxu0 0.0
    %3044 = vmatprep.subr.mxu0 0.0
    %3045 = vmatpush1.msra.mxu0 0.0
    %3046 = vmatprep.subr.mxu0 0.0
    %3047 = vmatpush1.msra.mxu0 0.0
    %3048 = vmatprep.subr.mxu0 0.0
    %3049 = vmatpush1.msra.mxu0 0.0
    %3050 = vmatprep.subr.mxu0 0.0
    %3051 = vmatpush1.msra.mxu0 0.0
    %3052 = vmatprep.subr.mxu0 0.0
    %3053 = vmatpush1.msra.mxu0 0.0
    %3054 = vmatprep.subr.mxu0 0.0
    %3055 = vmatpush1.msra.mxu0 0.0
    %3056 = vmatprep.subr.mxu0 0.0
    %3057 = vmatpush1.msra.mxu0 0.0
    %3058 = vmatprep.subr.mxu0 0.0
    %3059 = vmatpush1.msra.mxu0 0.0
    %3060 = vmatprep.subr.mxu0 0.0
    %3061 = vmatpush1.msra.mxu0 0.0
    %3062 = vmatprep.mubr.f32.mxu0 0.0
    %3063 = vmatmul.mubr.f32.gmra.mrb[0].mxu0 %v1788
    %v3064 = vpop.f32.mrb[0].mxu0
    %v3065 = vadd.f32 0.0, %v3064
    %v3066 = vpop.f32.mrb[0].mxu0
    %3067 = vmatprep.mubr.f32.mxu0 0.0
    %3068 = vmatmul.mubr.f32.gmra.mrb[0].mxu0 %v1791
    %v3069 = vpop.f32.mrb[0].mxu0
    %v3070 = vadd.f32 0.0, %v3069
    %v3071 = vpop.f32.mrb[0].mxu0
    %3072 = vmatprep.mubr.f32.mxu0 0.0
    %3073 = vmatmul.mubr.f32.gmra.mrb[0].mxu0 %v1794
    %v3074 = vpop.f32.mrb[0].mxu0
    %v3075 = vadd.f32 0.0, %v3074
    %v3076 = vpop.f32.mrb[0].mxu0
    %3077 = vmatprep.mubr.f32.mxu0 0.0
    %3078 = vmatmul.mubr.f32.gmra.mrb[0].mxu0 %v1797
    %v3079 = vpop.f32.mrb[0].mxu0
    %v3080 = vadd.f32 0.0, %v3079
    %v3081 = vpop.f32.mrb[0].mxu0
    %3082 = vdwg.mxu0
    %v3084 = vsel %vm171, %v2991, 0
    %v3087 = vsel %vm171, %v2992, 0
    %3089 = vmatprep.subr.mxu0 0.0
    %3090 = vmatpush1.msra.mxu0 %v3065
    %3091 = vmatprep.subr.mxu0 0.0
    %3092 = vmatpush1.msra.mxu0 %v3070
    %3093 = vmatprep.subr.mxu0 0.0
    %3094 = vmatpush1.msra.mxu0 %v3075
    %3095 = vmatprep.subr.mxu0 0.0
    %3096 = vmatpush1.msra.mxu0 %v3080
    %3097 = vmatprep.subr.mxu0 0.0
    %3098 = vmatpush1.msra.mxu0 0.0
    %3099 = vmatprep.subr.mxu0 0.0
    %3100 = vmatpush1.msra.mxu0 0.0
    %3101 = vmatprep.subr.mxu0 0.0
    %3102 = vmatpush1.msra.mxu0 0.0
    %3103 = vmatprep.subr.mxu0 0.0
    %3104 = vmatpush1.msra.mxu0 0.0
    %3105 = vmatprep.subr.mxu0 0.0
    %3106 = vmatpush1.msra.mxu0 0.0
    %3107 = vmatprep.subr.mxu0 0.0
    %3108 = vmatpush1.msra.mxu0 0.0
    %3109 = vmatprep.subr.mxu0 0.0
    %3110 = vmatpush1.msra.mxu0 0.0
    %3111 = vmatprep.subr.mxu0 0.0
    %3112 = vmatpush1.msra.mxu0 0.0
    %3113 = vmatprep.subr.mxu0 0.0
    %3114 = vmatpush1.msra.mxu0 0.0
    %3115 = vmatprep.subr.mxu0 0.0
    %3116 = vmatpush1.msra.mxu0 0.0
    %3117 = vmatprep.subr.mxu0 0.0
    %3118 = vmatpush1.msra.mxu0 0.0
    %3119 = vmatprep.subr.mxu0 0.0
    %3120 = vmatpush1.msra.mxu0 0.0
    %3121 = vmatprep.subr.mxu0 0.0
    %3122 = vmatpush1.msra.mxu0 0.0
    %3123 = vmatprep.subr.mxu0 0.0
    %3124 = vmatpush1.msra.mxu0 0.0
    %3125 = vmatprep.subr.mxu0 0.0
    %3126 = vmatpush1.msra.mxu0 0.0
    %3127 = vmatprep.subr.mxu0 0.0
    %3128 = vmatpush1.msra.mxu0 0.0
    %3129 = vmatprep.subr.mxu0 0.0
    %3130 = vmatpush1.msra.mxu0 0.0
    %3131 = vmatprep.subr.mxu0 0.0
    %3132 = vmatpush1.msra.mxu0 0.0
    %3133 = vmatprep.subr.mxu0 0.0
    %3134 = vmatpush1.msra.mxu0 0.0
    %3135 = vmatprep.subr.mxu0 0.0
    %3136 = vmatpush1.msra.mxu0 0.0
    %3137 = vmatprep.subr.mxu0 0.0
    %3138 = vmatpush1.msra.mxu0 0.0
    %3139 = vmatprep.subr.mxu0 0.0
    %3140 = vmatpush1.msra.mxu0 0.0
    %3141 = vmatprep.subr.mxu0 0.0
    %3142 = vmatpush1.msra.mxu0 0.0
    %3143 = vmatprep.subr.mxu0 0.0
    %3144 = vmatpush1.msra.mxu0 0.0
    %3145 = vmatprep.subr.mxu0 0.0
    %3146 = vmatpush1.msra.mxu0 0.0
    %3147 = vmatprep.subr.mxu0 0.0
    %3148 = vmatpush1.msra.mxu0 0.0
    %3149 = vmatprep.subr.mxu0 0.0
    %3150 = vmatpush1.msra.mxu0 0.0
    %3151 = vmatprep.subr.mxu0 0.0
    %3152 = vmatpush1.msra.mxu0 0.0
    %3153 = vmatprep.mubr.f32.mxu0 0.0
    %3154 = vmatmul.mubr.f32.gmra.mrb[0].mxu0 %v3084
    %v3155 = vpop.f32.mrb[0].mxu0
    %v3156 = vadd.f32 0.0, %v3155
    %v3157 = vpop.f32.mrb[0].mxu0
    %3158 = vmatprep.mubr.f32.mxu0 0.0
    %3159 = vmatmul.mubr.f32.gmra.mrb[0].mxu0 %v3087
    %v3160 = vpop.f32.mrb[0].mxu0
    %v3161 = vadd.f32 0.0, %v3160
    %v3162 = vpop.f32.mrb[0].mxu0
    %3163 = vdwg.mxu0
    %v3164 = vadd.f32 %v2800, %v3156
    %v3165 = vadd.f32 %v2801, %v3161
    %v3166 = vadd.f32 %v1686, %v3164
    %v3167 = vadd.f32 %v1687, %v3165
    %v3168 = vld [vmem:[%s17 + $0x2] sm:$0x1]
    %v3169 = vld [vmem:[%s17 + $0x3] sm:$0x1]
    %v3170 = vsel %vm171, %v3166, 0.0
    %3171 = vadd.xlane.f32.xlu0 %v3170
    %v3172 = vpop.xlane.xlu0 %3171
    %v3173 = vsel %vm171, %v3167, 0.0
    %3174 = vadd.xlane.f32.xlu0 %v3173
    %v3175 = vpop.xlane.xlu0 %3174
    %v3176 = vmul.f32 %v3172, %v178
    %v3177 = vmul.f32 %v3175, %v178
    %v3178 = vsub.f32 %v3166, %v3176
    %v3179 = vsub.f32 %v3167, %v3177
    %v3180 = vmul.f32 %v3178, %v3178
    %v3181 = vmul.f32 %v3179, %v3179
    %v3182 = vsel %vm171, %v3180, 0.0
    %3183 = vadd.xlane.f32.xlu0 %v3182
    %v3184 = vpop.xlane.xlu0 %3183
    %v3185 = vsel %vm171, %v3181, 0.0
    %3186 = vadd.xlane.f32.xlu0 %v3185
    %v3187 = vpop.xlane.xlu0 %3186
    %v3188 = vmul.f32 %v3184, %v178
    %v3189 = vmul.f32 %v3187, %v178
    %v3190 = vadd.f32 %v3188, 1e-05
    %v3191 = vadd.f32 %v3189, 1e-05
    %v3192 = vrsqrt.pop %v3190
    %v3193 = vrsqrt.pop %v3191
    %v3194 = vmul.f32 %v3178, %v3192
    %v3195 = vmul.f32 %v3179, %v3193
    %v3196 = vlaneseq
    %v3197 = vshrl.u32 %v3196, 7
    %v3198 = vsub.s32 0, %v3197
    %v3199 = vrot.slane %v3168, %v3198
    %v3200 = vmul.f32 %v3194, %v3199
    %v3201 = vmul.f32 %v3195, %v3199
    %v3202 = vlaneseq
    %v3203 = vshrl.u32 %v3202, 7
    %v3204 = vsub.s32 0, %v3203
    %v3205 = vrot.slane %v3169, %v3204
    %v3206 = vadd.f32 %v3200, %v3205
    %v3207 = vadd.f32 %v3201, %v3205
    %v3208 = vld [vmem:[%s13] sm:$0xff]
    %v3209 = vld [vmem:[%s13 + $0x8] sm:$0xff]
    %v3210 = vld [vmem:[%s13 + $0x10] sm:$0xff]
    %v3211 = vld [vmem:[%s13 + $0x18] sm:$0xff]
    %v3212 = vld [vmem:[#allocation13] sm:$0x1]
    %v3214 = vlaneseq
    %v3215 = vshrl.u32 %v3214, 7
    %v3216 = vsub.s32 0, %v3215
    %v3217 = vrot.slane %v3212, %v3216
    %v3220 = vsel %vm171, %v3206, 0
    %v3223 = vsel %vm171, %v3207, 0
    %3225 = vmatprep.subr.mxu0 0.0
    %3226 = vmatpush1.msra.mxu0 %v3208
    %3227 = vmatprep.subr.mxu0 0.0
    %3228 = vmatpush1.msra.mxu0 %v3209
    %3229 = vmatprep.subr.mxu0 0.0
    %3230 = vmatpush1.msra.mxu0 %v3210
    %3231 = vmatprep.subr.mxu0 0.0
    %3232 = vmatpush1.msra.mxu0 %v3211
    %3233 = vmatprep.subr.mxu0 0.0
    %3234 = vmatpush1.msra.mxu0 0.0
    %3235 = vmatprep.subr.mxu0 0.0
    %3236 = vmatpush1.msra.mxu0 0.0
    %3237 = vmatprep.subr.mxu0 0.0
    %3238 = vmatpush1.msra.mxu0 0.0
    %3239 = vmatprep.subr.mxu0 0.0
    %3240 = vmatpush1.msra.mxu0 0.0
    %3241 = vmatprep.subr.mxu0 0.0
    %3242 = vmatpush1.msra.mxu0 0.0
    %3243 = vmatprep.subr.mxu0 0.0
    %3244 = vmatpush1.msra.mxu0 0.0
    %3245 = vmatprep.subr.mxu0 0.0
    %3246 = vmatpush1.msra.mxu0 0.0
    %3247 = vmatprep.subr.mxu0 0.0
    %3248 = vmatpush1.msra.mxu0 0.0
    %3249 = vmatprep.subr.mxu0 0.0
    %3250 = vmatpush1.msra.mxu0 0.0
    %3251 = vmatprep.subr.mxu0 0.0
    %3252 = vmatpush1.msra.mxu0 0.0
    %3253 = vmatprep.subr.mxu0 0.0
    %3254 = vmatpush1.msra.mxu0 0.0
    %3255 = vmatprep.subr.mxu0 0.0
    %3256 = vmatpush1.msra.mxu0 0.0
    %3257 = vmatprep.subr.mxu0 0.0
    %3258 = vmatpush1.msra.mxu0 0.0
    %3259 = vmatprep.subr.mxu0 0.0
    %3260 = vmatpush1.msra.mxu0 0.0
    %3261 = vmatprep.subr.mxu0 0.0
    %3262 = vmatpush1.msra.mxu0 0.0
    %3263 = vmatprep.subr.mxu0 0.0
    %3264 = vmatpush1.msra.mxu0 0.0
    %3265 = vmatprep.subr.mxu0 0.0
    %3266 = vmatpush1.msra.mxu0 0.0
    %3267 = vmatprep.subr.mxu0 0.0
    %3268 = vmatpush1.msra.mxu0 0.0
    %3269 = vmatprep.subr.mxu0 0.0
    %3270 = vmatpush1.msra.mxu0 0.0
    %3271 = vmatprep.subr.mxu0 0.0
    %3272 = vmatpush1.msra.mxu0 0.0
    %3273 = vmatprep.subr.mxu0 0.0
    %3274 = vmatpush1.msra.mxu0 0.0
    %3275 = vmatprep.subr.mxu0 0.0
    %3276 = vmatpush1.msra.mxu0 0.0
    %3277 = vmatprep.subr.mxu0 0.0
    %3278 = vmatpush1.msra.mxu0 0.0
    %3279 = vmatprep.subr.mxu0 0.0
    %3280 = vmatpush1.msra.mxu0 0.0
    %3281 = vmatprep.subr.mxu0 0.0
    %3282 = vmatpush1.msra.mxu0 0.0
    %3283 = vmatprep.subr.mxu0 0.0
    %3284 = vmatpush1.msra.mxu0 0.0
    %3285 = vmatprep.subr.mxu0 0.0
    %3286 = vmatpush1.msra.mxu0 0.0
    %3287 = vmatprep.subr.mxu0 0.0
    %3288 = vmatpush1.msra.mxu0 0.0
    %3289 = vmatprep.mubr.f32.mxu0 0.0
    %3290 = vmatmul.mubr.f32.gmra.mrb[0].mxu0 %v3220
    %v3291 = vpop.f32.mrb[0].mxu0
    %v3292 = vadd.f32 %v3217, %v3291
    %v3293 = vpop.f32.mrb[0].mxu0
    %3294 = vmatprep.mubr.f32.mxu0 0.0
    %3295 = vmatmul.mubr.f32.gmra.mrb[0].mxu0 %v3223
    %v3296 = vpop.f32.mrb[0].mxu0
    %v3297 = vadd.f32 %v3217, %v3296
    %v3298 = vpop.f32.mrb[0].mxu0
    %3299 = vdwg.mxu0
    %v3300 = vmul.f32 %v3292, %v3292
    %v3301 = vmul.f32 %v3297, %v3297
    %v3302 = vmul.f32 %v3292, %v3300
    %v3303 = vmul.f32 %v3297, %v3301
    %v3304 = vmul.f32 %v3302, 0.044715
    %v3305 = vmul.f32 %v3303, 0.044715
    %v3306 = vadd.f32 %v3292, %v3304
    %v3307 = vadd.f32 %v3297, %v3305
    %v3308 = vmul.f32 %v3306, 0.7978846
    %v3309 = vmul.f32 %v3307, 0.7978846
    %v3310 = vtanh.pop %v3308
    %v3311 = vtanh.pop %v3309
    %v3312 = vadd.f32 %v3310, 1.0
    %v3313 = vadd.f32 %v3311, 1.0
    %v3314 = vmul.f32 %v3312, 0.5
    %v3315 = vmul.f32 %v3313, 0.5
    %v3316 = vmul.f32 %v3292, %v3314
    %v3317 = vmul.f32 %v3297, %v3315
    %v3318 = vld [vmem:[%s15] sm:$0xff]
    %v3319 = vld [vmem:[%s15 + $0x8] sm:$0xff]
    %v3320 = vld [vmem:[%s15 + $0x10] sm:$0xff]
    %v3321 = vld [vmem:[%s15 + $0x18] sm:$0xff]
    %v3322 = vld [vmem:[%s15 + $0x20] sm:$0xff]
    %v3323 = vld [vmem:[%s15 + $0x28] sm:$0xff]
    %v3324 = vld [vmem:[%s15 + $0x30] sm:$0xff]
    %v3325 = vld [vmem:[%s15 + $0x38] sm:$0xff]
    %v3326 = vld [vmem:[#allocation14] sm:$0x1]
    %v3328 = vlaneseq
    %v3329 = vshrl.u32 %v3328, 7
    %v3330 = vsub.s32 0, %v3329
    %v3331 = vrot.slane %v3326, %v3330
    %vm3333 = vcmask 523264
    %v3335 = vsel %vm3333, %v3316, 0
    %v3338 = vsel %vm3333, %v3317, 0
    %3340 = vmatprep.subr.mxu0 0.0
    %3341 = vmatpush1.msra.mxu0 %v3318
    %3342 = vmatprep.subr.mxu0 0.0
    %3343 = vmatpush1.msra.mxu0 %v3319
    %3344 = vmatprep.subr.mxu0 0.0
    %3345 = vmatpush1.msra.mxu0 %v3320
    %3346 = vmatprep.subr.mxu0 0.0
    %3347 = vmatpush1.msra.mxu0 %v3321
    %3348 = vmatprep.subr.mxu0 0.0
    %3349 = vmatpush1.msra.mxu0 %v3322
    %3350 = vmatprep.subr.mxu0 0.0
    %3351 = vmatpush1.msra.mxu0 %v3323
    %3352 = vmatprep.subr.mxu0 0.0
    %3353 = vmatpush1.msra.mxu0 %v3324
    %3354 = vmatprep.subr.mxu0 0.0
    %3355 = vmatpush1.msra.mxu0 %v3325
    %3356 = vmatprep.subr.mxu0 0.0
    %3357 = vmatpush1.msra.mxu0 0.0
    %3358 = vmatprep.subr.mxu0 0.0
    %3359 = vmatpush1.msra.mxu0 0.0
    %3360 = vmatprep.subr.mxu0 0.0
    %3361 = vmatpush1.msra.mxu0 0.0
    %3362 = vmatprep.subr.mxu0 0.0
    %3363 = vmatpush1.msra.mxu0 0.0
    %3364 = vmatprep.subr.mxu0 0.0
    %3365 = vmatpush1.msra.mxu0 0.0
    %3366 = vmatprep.subr.mxu0 0.0
    %3367 = vmatpush1.msra.mxu0 0.0
    %3368 = vmatprep.subr.mxu0 0.0
    %3369 = vmatpush1.msra.mxu0 0.0
    %3370 = vmatprep.subr.mxu0 0.0
    %3371 = vmatpush1.msra.mxu0 0.0
    %3372 = vmatprep.subr.mxu0 0.0
    %3373 = vmatpush1.msra.mxu0 0.0
    %3374 = vmatprep.subr.mxu0 0.0
    %3375 = vmatpush1.msra.mxu0 0.0
    %3376 = vmatprep.subr.mxu0 0.0
    %3377 = vmatpush1.msra.mxu0 0.0
    %3378 = vmatprep.subr.mxu0 0.0
    %3379 = vmatpush1.msra.mxu0 0.0
    %3380 = vmatprep.subr.mxu0 0.0
    %3381 = vmatpush1.msra.mxu0 0.0
    %3382 = vmatprep.subr.mxu0 0.0
    %3383 = vmatpush1.msra.mxu0 0.0
    %3384 = vmatprep.subr.mxu0 0.0
    %3385 = vmatpush1.msra.mxu0 0.0
    %3386 = vmatprep.subr.mxu0 0.0
    %3387 = vmatpush1.msra.mxu0 0.0
    %3388 = vmatprep.subr.mxu0 0.0
    %3389 = vmatpush1.msra.mxu0 0.0
    %3390 = vmatprep.subr.mxu0 0.0
    %3391 = vmatpush1.msra.mxu0 0.0
    %3392 = vmatprep.subr.mxu0 0.0
    %3393 = vmatpush1.msra.mxu0 0.0
    %3394 = vmatprep.subr.mxu0 0.0
    %3395 = vmatpush1.msra.mxu0 0.0
    %3396 = vmatprep.subr.mxu0 0.0
    %3397 = vmatpush1.msra.mxu0 0.0
    %3398 = vmatprep.subr.mxu0 0.0
    %3399 = vmatpush1.msra.mxu0 0.0
    %3400 = vmatprep.subr.mxu0 0.0
    %3401 = vmatpush1.msra.mxu0 0.0
    %3402 = vmatprep.subr.mxu0 0.0
    %3403 = vmatpush1.msra.mxu0 0.0
    %3404 = vmatprep.mubr.f32.mxu0 0.0
    %3405 = vmatmul.mubr.f32.gmra.mrb[0].mxu0 %v3335
    %v3406 = vpop.f32.mrb[0].mxu0
    %v3407 = vadd.f32 %v3331, %v3406
    %v3408 = vpop.f32.mrb[0].mxu0
    %3409 = vmatprep.mubr.f32.mxu0 0.0
    %3410 = vmatmul.mubr.f32.gmra.mrb[0].mxu0 %v3338
    %v3411 = vpop.f32.mrb[0].mxu0
    %v3412 = vadd.f32 %v3331, %v3411
    %v3413 = vpop.f32.mrb[0].mxu0
    %3414 = vdwg.mxu0
    %v3415 = vadd.f32 %v3206, %v3407
    %v3416 = vadd.f32 %v3207, %v3412
    %v3417 = vld [vmem:[%s17 + $0x4] sm:$0x1]
    %v3418 = vld [vmem:[%s17 + $0x5] sm:$0x1]
    %v3419 = vsel %vm171, %v3415, 0.0
    %3420 = vadd.xlane.f32.xlu0 %v3419
    %v3421 = vpop.xlane.xlu0 %3420
    %v3422 = vsel %vm171, %v3416, 0.0
    %3423 = vadd.xlane.f32.xlu0 %v3422
    %v3424 = vpop.xlane.xlu0 %3423
    %v3425 = vmul.f32 %v3421, %v178
    %v3426 = vmul.f32 %v3424, %v178
    %v3427 = vsub.f32 %v3415, %v3425
    %v3428 = vsub.f32 %v3416, %v3426
    %v3429 = vmul.f32 %v3427, %v3427
    %v3430 = vmul.f32 %v3428, %v3428
    %v3431 = vsel %vm171, %v3429, 0.0
    %3432 = vadd.xlane.f32.xlu0 %v3431
    %v3433 = vpop.xlane.xlu0 %3432
    %v3434 = vsel %vm171, %v3430, 0.0
    %3435 = vadd.xlane.f32.xlu0 %v3434
    %v3436 = vpop.xlane.xlu0 %3435
    %v3437 = vmul.f32 %v3433, %v178
    %v3438 = vmul.f32 %v3436, %v178
    %v3439 = vadd.f32 %v3437, 1e-05
    %v3440 = vadd.f32 %v3438, 1e-05
    %v3441 = vrsqrt.pop %v3439
    %v3442 = vrsqrt.pop %v3440
    %v3443 = vmul.f32 %v3427, %v3441
    %v3444 = vmul.f32 %v3428, %v3442
    %v3445 = vlaneseq
    %v3446 = vshrl.u32 %v3445, 7
    %v3447 = vsub.s32 0, %v3446
    %v3448 = vrot.slane %v3417, %v3447
    %v3449 = vmul.f32 %v3443, %v3448
    %v3450 = vmul.f32 %v3444, %v3448
    %v3451 = vlaneseq
    %v3452 = vshrl.u32 %v3451, 7
    %v3453 = vsub.s32 0, %v3452
    %v3454 = vrot.slane %v3418, %v3453
    %v3455 = vadd.f32 %v3449, %v3454
    %v3456 = vadd.f32 %v3450, %v3454
    %s3457 = scalar_lea.vmem [#allocation7], 1
    %v3458 = vld [vmem:[%s3457] sm:$0x1]
    %s3459 = scalar_lea.vmem %s5, 128
    %v3460 = vld [vmem:[%s3459] sm:$0xff]
    %v3461 = vld [vmem:[%s3459 + $0x8] sm:$0xff]
    %v3462 = vld [vmem:[%s3459 + $0x10] sm:$0xff]
    %v3463 = vld [vmem:[%s3459 + $0x18] sm:$0xff]
    %s3464 = scalar_lea.vmem [#allocation5], 4
    %v3465 = vld [vmem:[%s3464] sm:$0x1]
    %v3467 = vlaneseq
    %v3468 = vshrl.u32 %v3467, 7
    %v3469 = vsub.s32 0, %v3468
    %v3470 = vrot.slane %v3465, %v3469
    %v3473 = vsel %vm171, %v3455, 0
    %v3476 = vsel %vm171, %v3456, 0
    %3478 = vmatprep.subr.mxu0 0.0
    %3479 = vmatpush1.msra.mxu0 %v3460
    %3480 = vmatprep.subr.mxu0 0.0
    %3481 = vmatpush1.msra.mxu0 %v3461
    %3482 = vmatprep.subr.mxu0 0.0
    %3483 = vmatpush1.msra.mxu0 %v3462
    %3484 = vmatprep.subr.mxu0 0.0
    %3485 = vmatpush1.msra.mxu0 %v3463
    %3486 = vmatprep.subr.mxu0 0.0
    %3487 = vmatpush1.msra.mxu0 0.0
    %3488 = vmatprep.subr.mxu0 0.0
    %3489 = vmatpush1.msra.mxu0 0.0
    %3490 = vmatprep.subr.mxu0 0.0
    %3491 = vmatpush1.msra.mxu0 0.0
    %3492 = vmatprep.subr.mxu0 0.0
    %3493 = vmatpush1.msra.mxu0 0.0
    %3494 = vmatprep.subr.mxu0 0.0
    %3495 = vmatpush1.msra.mxu0 0.0
    %3496 = vmatprep.subr.mxu0 0.0
    %3497 = vmatpush1.msra.mxu0 0.0
    %3498 = vmatprep.subr.mxu0 0.0
    %3499 = vmatpush1.msra.mxu0 0.0
    %3500 = vmatprep.subr.mxu0 0.0
    %3501 = vmatpush1.msra.mxu0 0.0
    %3502 = vmatprep.subr.mxu0 0.0
    %3503 = vmatpush1.msra.mxu0 0.0
    %3504 = vmatprep.subr.mxu0 0.0
    %3505 = vmatpush1.msra.mxu0 0.0
    %3506 = vmatprep.subr.mxu0 0.0
    %3507 = vmatpush1.msra.mxu0 0.0
    %3508 = vmatprep.subr.mxu0 0.0
    %3509 = vmatpush1.msra.mxu0 0.0
    %3510 = vmatprep.subr.mxu0 0.0
    %3511 = vmatpush1.msra.mxu0 0.0
    %3512 = vmatprep.subr.mxu0 0.0
    %3513 = vmatpush1.msra.mxu0 0.0
    %3514 = vmatprep.subr.mxu0 0.0
    %3515 = vmatpush1.msra.mxu0 0.0
    %3516 = vmatprep.subr.mxu0 0.0
    %3517 = vmatpush1.msra.mxu0 0.0
    %3518 = vmatprep.subr.mxu0 0.0
    %3519 = vmatpush1.msra.mxu0 0.0
    %3520 = vmatprep.subr.mxu0 0.0
    %3521 = vmatpush1.msra.mxu0 0.0
    %3522 = vmatprep.subr.mxu0 0.0
    %3523 = vmatpush1.msra.mxu0 0.0
    %3524 = vmatprep.subr.mxu0 0.0
    %3525 = vmatpush1.msra.mxu0 0.0
    %3526 = vmatprep.subr.mxu0 0.0
    %3527 = vmatpush1.msra.mxu0 0.0
    %3528 = vmatprep.subr.mxu0 0.0
    %3529 = vmatpush1.msra.mxu0 0.0
    %3530 = vmatprep.subr.mxu0 0.0
    %3531 = vmatpush1.msra.mxu0 0.0
    %3532 = vmatprep.subr.mxu0 0.0
    %3533 = vmatpush1.msra.mxu0 0.0
    %3534 = vmatprep.subr.mxu0 0.0
    %3535 = vmatpush1.msra.mxu0 0.0
    %3536 = vmatprep.subr.mxu0 0.0
    %3537 = vmatpush1.msra.mxu0 0.0
    %3538 = vmatprep.subr.mxu0 0.0
    %3539 = vmatpush1.msra.mxu0 0.0
    %3540 = vmatprep.subr.mxu0 0.0
    %3541 = vmatpush1.msra.mxu0 0.0
    %3542 = vmatprep.mubr.f32.mxu0 0.0
    %3543 = vmatmul.mubr.f32.gmra.mrb[0].mxu0 %v3473
    %v3544 = vpop.f32.mrb[0].mxu0
    %v3545 = vadd.f32 %v3470, %v3544
    %v3546 = vpop.f32.mrb[0].mxu0
    %3547 = vmatprep.mubr.f32.mxu0 0.0
    %3548 = vmatmul.mubr.f32.gmra.mrb[0].mxu0 %v3476
    %v3549 = vpop.f32.mrb[0].mxu0
    %v3550 = vadd.f32 %v3470, %v3549
    %v3551 = vpop.f32.mrb[0].mxu0
    %3552 = vdwg.mxu0
    %v3554 = vsel %vm171, %v3545, 0
    %v3557 = vsel %vm171, %v3550, 0
    %3559 = vmatprep.subr.mxu0 0.0
    %3560 = vmatpush1.xpose.msra.mxu0 %v3473
    %3561 = vmatprep.subr.mxu0 0.0
    %3562 = vmatpush1.xpose.msra.mxu0 %v3476
    %3563 = vmatprep.subr.mxu0 0.0
    %3564 = vmatpush1.xpose.msra.mxu0 0.0
    %3565 = vmatprep.subr.mxu0 0.0
    %3566 = vmatpush1.xpose.msra.mxu0 0.0
    %3567 = vmatprep.subr.mxu0 0.0
    %3568 = vmatpush1.xpose.msra.mxu0 0.0
    %3569 = vmatprep.subr.mxu0 0.0
    %3570 = vmatpush1.xpose.msra.mxu0 0.0
    %3571 = vmatprep.subr.mxu0 0.0
    %3572 = vmatpush1.xpose.msra.mxu0 0.0
    %3573 = vmatprep.subr.mxu0 0.0
    %3574 = vmatpush1.xpose.msra.mxu0 0.0
    %3575 = vmatprep.subr.mxu0 0.0
    %3576 = vmatpush1.xpose.msra.mxu0 0.0
    %3577 = vmatprep.subr.mxu0 0.0
    %3578 = vmatpush1.xpose.msra.mxu0 0.0
    %3579 = vmatprep.subr.mxu0 0.0
    %3580 = vmatpush1.xpose.msra.mxu0 0.0
    %3581 = vmatprep.subr.mxu0 0.0
    %3582 = vmatpush1.xpose.msra.mxu0 0.0
    %3583 = vmatprep.subr.mxu0 0.0
    %3584 = vmatpush1.xpose.msra.mxu0 0.0
    %3585 = vmatprep.subr.mxu0 0.0
    %3586 = vmatpush1.xpose.msra.mxu0 0.0
    %3587 = vmatprep.subr.mxu0 0.0
    %3588 = vmatpush1.xpose.msra.mxu0 0.0
    %3589 = vmatprep.subr.mxu0 0.0
    %3590 = vmatpush1.xpose.msra.mxu0 0.0
    %3591 = vmatprep.subr.mxu0 0.0
    %3592 = vmatpush1.xpose.msra.mxu0 0.0
    %3593 = vmatprep.subr.mxu0 0.0
    %3594 = vmatpush1.xpose.msra.mxu0 0.0
    %3595 = vmatprep.subr.mxu0 0.0
    %3596 = vmatpush1.xpose.msra.mxu0 0.0
    %3597 = vmatprep.subr.mxu0 0.0
    %3598 = vmatpush1.xpose.msra.mxu0 0.0
    %3599 = vmatprep.subr.mxu0 0.0
    %3600 = vmatpush1.xpose.msra.mxu0 0.0
    %3601 = vmatprep.subr.mxu0 0.0
    %3602 = vmatpush1.xpose.msra.mxu0 0.0
    %3603 = vmatprep.subr.mxu0 0.0
    %3604 = vmatpush1.xpose.msra.mxu0 0.0
    %3605 = vmatprep.subr.mxu0 0.0
    %3606 = vmatpush1.xpose.msra.mxu0 0.0
    %3607 = vmatprep.subr.mxu0 0.0
    %3608 = vmatpush1.xpose.msra.mxu0 0.0
    %3609 = vmatprep.subr.mxu0 0.0
    %3610 = vmatpush1.xpose.msra.mxu0 0.0
    %3611 = vmatprep.subr.mxu0 0.0
    %3612 = vmatpush1.xpose.msra.mxu0 0.0
    %3613 = vmatprep.subr.mxu0 0.0
    %3614 = vmatpush1.xpose.msra.mxu0 0.0
    %3615 = vmatprep.subr.mxu0 0.0
    %3616 = vmatpush1.xpose.msra.mxu0 0.0
    %3617 = vmatprep.subr.mxu0 0.0
    %3618 = vmatpush1.xpose.msra.mxu0 0.0
    %3619 = vmatprep.subr.mxu0 0.0
    %3620 = vmatpush1.xpose.msra.mxu0 0.0
    %3621 = vmatprep.subr.mxu0 0.0
    %3622 = vmatpush1.xpose.msra.mxu0 0.0
    %3623 = vmatprep.mubr.f32.mxu0 0.0
    %3624 = vmatmul.mubr.f32.gmra.mrb[0].mxu0 %v3554
    %v3625 = vpop.f32.mrb[0].mxu0
    %v3626 = vadd.f32 %v215, %v3625
    %v3627 = vpop.f32.mrb[0].mxu0
    %3628 = vmatprep.mubr.f32.mxu0 0.0
    %3629 = vmatmul.mubr.f32.gmra.mrb[0].mxu0 %v3557
    %v3630 = vpop.f32.mrb[0].mxu0
    %v3631 = vadd.f32 %v216, %v3630
    %v3632 = vpop.f32.mrb[0].mxu0
    %3633 = vdwg.mxu0
    %v3634 = vsel %vm393, %v3626, -inf
    %3635 = vmax.xlane.f32.xlu0 %v3634
    %v3636 = vpop.xlane.xlu0 %3635
    %v3637 = vsel %vm393, %v3631, -inf
    %3638 = vmax.xlane.f32.xlu0 %v3637
    %v3639 = vpop.xlane.xlu0 %3638
    %v3640 = vsub.f32 %v3626, %v3636
    %v3641 = vsub.f32 %v3631, %v3639
    %v3642 = vmul.f32 %v3640, 1.442695
    %v3643 = vpow.pop %v3642
    %v3644 = vmul.f32 %v3641, 1.442695
    %v3645 = vpow.pop %v3644
    %v3646 = vsel %vm393, %v3643, 0.0
    %3647 = vadd.xlane.f32.xlu0 %v3646
    %v3648 = vpop.xlane.xlu0 %3647
    %v3649 = vsel %vm393, %v3645, 0.0
    %3650 = vadd.xlane.f32.xlu0 %v3649
    %v3651 = vpop.xlane.xlu0 %3650
    %v3652 = vrcp.pop %v3648
    %v3653 = vrcp.pop %v3651
    %v3654 = vmul.f32 %v3643, %v3652
    %v3655 = vmul.f32 %v3645, %v3653
    %s3656 = scalar_lea.vmem %s7, 128
    %v3657 = vld [vmem:[%s3656] sm:$0xff]
    %v3658 = vld [vmem:[%s3656 + $0x8] sm:$0xff]
    %v3659 = vld [vmem:[%s3656 + $0x10] sm:$0xff]
    %v3660 = vld [vmem:[%s3656 + $0x18] sm:$0xff]
    %3661 = vmatprep.subr.mxu0 0.0
    %3662 = vmatpush1.msra.mxu0 %v3657
    %3663 = vmatprep.subr.mxu0 0.0
    %3664 = vmatpush1.msra.mxu0 %v3658
    %3665 = vmatprep.subr.mxu0 0.0
    %3666 = vmatpush1.msra.mxu0 %v3659
    %3667 = vmatprep.subr.mxu0 0.0
    %3668 = vmatpush1.msra.mxu0 %v3660
    %3669 = vmatprep.subr.mxu0 0.0
    %3670 = vmatpush1.msra.mxu0 0.0
    %3671 = vmatprep.subr.mxu0 0.0
    %3672 = vmatpush1.msra.mxu0 0.0
    %3673 = vmatprep.subr.mxu0 0.0
    %3674 = vmatpush1.msra.mxu0 0.0
    %3675 = vmatprep.subr.mxu0 0.0
    %3676 = vmatpush1.msra.mxu0 0.0
    %3677 = vmatprep.subr.mxu0 0.0
    %3678 = vmatpush1.msra.mxu0 0.0
    %3679 = vmatprep.subr.mxu0 0.0
    %3680 = vmatpush1.msra.mxu0 0.0
    %3681 = vmatprep.subr.mxu0 0.0
    %3682 = vmatpush1.msra.mxu0 0.0
    %3683 = vmatprep.subr.mxu0 0.0
    %3684 = vmatpush1.msra.mxu0 0.0
    %3685 = vmatprep.subr.mxu0 0.0
    %3686 = vmatpush1.msra.mxu0 0.0
    %3687 = vmatprep.subr.mxu0 0.0
    %3688 = vmatpush1.msra.mxu0 0.0
    %3689 = vmatprep.subr.mxu0 0.0
    %3690 = vmatpush1.msra.mxu0 0.0
    %3691 = vmatprep.subr.mxu0 0.0
    %3692 = vmatpush1.msra.mxu0 0.0
    %3693 = vmatprep.subr.mxu0 0.0
    %3694 = vmatpush1.msra.mxu0 0.0
    %3695 = vmatprep.subr.mxu0 0.0
    %3696 = vmatpush1.msra.mxu0 0.0
    %3697 = vmatprep.subr.mxu0 0.0
    %3698 = vmatpush1.msra.mxu0 0.0
    %3699 = vmatprep.subr.mxu0 0.0
    %3700 = vmatpush1.msra.mxu0 0.0
    %3701 = vmatprep.subr.mxu0 0.0
    %3702 = vmatpush1.msra.mxu0 0.0
    %3703 = vmatprep.subr.mxu0 0.0
    %3704 = vmatpush1.msra.mxu0 0.0
    %3705 = vmatprep.subr.mxu0 0.0
    %3706 = vmatpush1.msra.mxu0 0.0
    %3707 = vmatprep.subr.mxu0 0.0
    %3708 = vmatpush1.msra.mxu0 0.0
    %3709 = vmatprep.subr.mxu0 0.0
    %3710 = vmatpush1.msra.mxu0 0.0
    %3711 = vmatprep.subr.mxu0 0.0
    %3712 = vmatpush1.msra.mxu0 0.0
    %3713 = vmatprep.subr.mxu0 0.0
    %3714 = vmatpush1.msra.mxu0 0.0
    %3715 = vmatprep.subr.mxu0 0.0
    %3716 = vmatpush1.msra.mxu0 0.0
    %3717 = vmatprep.subr.mxu0 0.0
    %3718 = vmatpush1.msra.mxu0 0.0
    %3719 = vmatprep.subr.mxu0 0.0
    %3720 = vmatpush1.msra.mxu0 0.0
    %3721 = vmatprep.subr.mxu0 0.0
    %3722 = vmatpush1.msra.mxu0 0.0
    %3723 = vmatprep.subr.mxu0 0.0
    %3724 = vmatpush1.msra.mxu0 0.0
    %3725 = vmatprep.mubr.f32.mxu0 0.0
    %3726 = vmatmul.mubr.f32.gmra.mrb[0].mxu0 %v3473
    %v3727 = vpop.f32.mrb[0].mxu0
    %v3728 = vadd.f32 0.0, %v3727
    %v3729 = vpop.f32.mrb[0].mxu0
    %3730 = vmatprep.mubr.f32.mxu0 0.0
    %3731 = vmatmul.mubr.f32.gmra.mrb[0].mxu0 %v3476
    %v3732 = vpop.f32.mrb[0].mxu0
    %v3733 = vadd.f32 0.0, %v3732
    %v3734 = vpop.f32.mrb[0].mxu0
    %3735 = vdwg.mxu0
    %v3737 = vsel %vm393, %v3654, 0
    %v3740 = vsel %vm393, %v3655, 0
    %3742 = vmatprep.subr.mxu0 0.0
    %3743 = vmatpush1.msra.mxu0 %v3728
    %3744 = vmatprep.subr.mxu0 0.0
    %3745 = vmatpush1.msra.mxu0 %v3733
    %3746 = vmatprep.subr.mxu0 0.0
    %3747 = vmatpush1.msra.mxu0 0.0
    %3748 = vmatprep.subr.mxu0 0.0
    %3749 = vmatpush1.msra.mxu0 0.0
    %3750 = vmatprep.subr.mxu0 0.0
    %3751 = vmatpush1.msra.mxu0 0.0
    %3752 = vmatprep.subr.mxu0 0.0
    %3753 = vmatpush1.msra.mxu0 0.0
    %3754 = vmatprep.subr.mxu0 0.0
    %3755 = vmatpush1.msra.mxu0 0.0
    %3756 = vmatprep.subr.mxu0 0.0
    %3757 = vmatpush1.msra.mxu0 0.0
    %3758 = vmatprep.subr.mxu0 0.0
    %3759 = vmatpush1.msra.mxu0 0.0
    %3760 = vmatprep.subr.mxu0 0.0
    %3761 = vmatpush1.msra.mxu0 0.0
    %3762 = vmatprep.subr.mxu0 0.0
    %3763 = vmatpush1.msra.mxu0 0.0
    %3764 = vmatprep.subr.mxu0 0.0
    %3765 = vmatpush1.msra.mxu0 0.0
    %3766 = vmatprep.subr.mxu0 0.0
    %3767 = vmatpush1.msra.mxu0 0.0
    %3768 = vmatprep.subr.mxu0 0.0
    %3769 = vmatpush1.msra.mxu0 0.0
    %3770 = vmatprep.subr.mxu0 0.0
    %3771 = vmatpush1.msra.mxu0 0.0
    %3772 = vmatprep.subr.mxu0 0.0
    %3773 = vmatpush1.msra.mxu0 0.0
    %3774 = vmatprep.subr.mxu0 0.0
    %3775 = vmatpush1.msra.mxu0 0.0
    %3776 = vmatprep.subr.mxu0 0.0
    %3777 = vmatpush1.msra.mxu0 0.0
    %3778 = vmatprep.subr.mxu0 0.0
    %3779 = vmatpush1.msra.mxu0 0.0
    %3780 = vmatprep.subr.mxu0 0.0
    %3781 = vmatpush1.msra.mxu0 0.0
    %3782 = vmatprep.subr.mxu0 0.0
    %3783 = vmatpush1.msra.mxu0 0.0
    %3784 = vmatprep.subr.mxu0 0.0
    %3785 = vmatpush1.msra.mxu0 0.0
    %3786 = vmatprep.subr.mxu0 0.0
    %3787 = vmatpush1.msra.mxu0 0.0
    %3788 = vmatprep.subr.mxu0 0.0
    %3789 = vmatpush1.msra.mxu0 0.0
    %3790 = vmatprep.subr.mxu0 0.0
    %3791 = vmatpush1.msra.mxu0 0.0
    %3792 = vmatprep.subr.mxu0 0.0
    %3793 = vmatpush1.msra.mxu0 0.0
    %3794 = vmatprep.subr.mxu0 0.0
    %3795 = vmatpush1.msra.mxu0 0.0
    %3796 = vmatprep.subr.mxu0 0.0
    %3797 = vmatpush1.msra.mxu0 0.0
    %3798 = vmatprep.subr.mxu0 0.0
    %3799 = vmatpush1.msra.mxu0 0.0
    %3800 = vmatprep.subr.mxu0 0.0
    %3801 = vmatpush1.msra.mxu0 0.0
    %3802 = vmatprep.subr.mxu0 0.0
    %3803 = vmatpush1.msra.mxu0 0.0
    %3804 = vmatprep.subr.mxu0 0.0
    %3805 = vmatpush1.msra.mxu0 0.0
    %3806 = vmatprep.mubr.f32.mxu0 0.0
    %3807 = vmatmul.mubr.f32.gmra.mrb[0].mxu0 %v3737
    %v3808 = vpop.f32.mrb[0].mxu0
    %v3809 = vadd.f32 0.0, %v3808
    %v3810 = vpop.f32.mrb[0].mxu0
    %3811 = vmatprep.mubr.f32.mxu0 0.0
    %3812 = vmatmul.mubr.f32.gmra.mrb[0].mxu0 %v3740
    %v3813 = vpop.f32.mrb[0].mxu0
    %v3814 = vadd.f32 0.0, %v3813
    %v3815 = vpop.f32.mrb[0].mxu0
    %3816 = vdwg.mxu0
    %v3818 = vlaneseq
    %v3819 = vshrl.u32 %v3818, 7
    %v3820 = vsub.s32 0, %v3819
    %v3821 = vrot.slane %v3458, %v3820
    %v3823 = vadd.f32 %v3821, %v3809
    %v3824 = vadd.f32 %v3821, %v3814
    %s3825 = scalar_lea.vmem %s5, 160
    %v3826 = vld [vmem:[%s3825] sm:$0xff]
    %v3827 = vld [vmem:[%s3825 + $0x8] sm:$0xff]
    %v3828 = vld [vmem:[%s3825 + $0x10] sm:$0xff]
    %v3829 = vld [vmem:[%s3825 + $0x18] sm:$0xff]
    %s3830 = scalar_lea.vmem [#allocation5], 5
    %v3831 = vld [vmem:[%s3830] sm:$0x1]
    %v3833 = vlaneseq
    %v3834 = vshrl.u32 %v3833, 7
    %v3835 = vsub.s32 0, %v3834
    %v3836 = vrot.slane %v3831, %v3835
    %3838 = vmatprep.subr.mxu0 0.0
    %3839 = vmatpush1.msra.mxu0 %v3826
    %3840 = vmatprep.subr.mxu0 0.0
    %3841 = vmatpush1.msra.mxu0 %v3827
    %3842 = vmatprep.subr.mxu0 0.0
    %3843 = vmatpush1.msra.mxu0 %v3828
    %3844 = vmatprep.subr.mxu0 0.0
    %3845 = vmatpush1.msra.mxu0 %v3829
    %3846 = vmatprep.subr.mxu0 0.0
    %3847 = vmatpush1.msra.mxu0 0.0
    %3848 = vmatprep.subr.mxu0 0.0
    %3849 = vmatpush1.msra.mxu0 0.0
    %3850 = vmatprep.subr.mxu0 0.0
    %3851 = vmatpush1.msra.mxu0 0.0
    %3852 = vmatprep.subr.mxu0 0.0
    %3853 = vmatpush1.msra.mxu0 0.0
    %3854 = vmatprep.subr.mxu0 0.0
    %3855 = vmatpush1.msra.mxu0 0.0
    %3856 = vmatprep.subr.mxu0 0.0
    %3857 = vmatpush1.msra.mxu0 0.0
    %3858 = vmatprep.subr.mxu0 0.0
    %3859 = vmatpush1.msra.mxu0 0.0
    %3860 = vmatprep.subr.mxu0 0.0
    %3861 = vmatpush1.msra.mxu0 0.0
    %3862 = vmatprep.subr.mxu0 0.0
    %3863 = vmatpush1.msra.mxu0 0.0
    %3864 = vmatprep.subr.mxu0 0.0
    %3865 = vmatpush1.msra.mxu0 0.0
    %3866 = vmatprep.subr.mxu0 0.0
    %3867 = vmatpush1.msra.mxu0 0.0
    %3868 = vmatprep.subr.mxu0 0.0
    %3869 = vmatpush1.msra.mxu0 0.0
    %3870 = vmatprep.subr.mxu0 0.0
    %3871 = vmatpush1.msra.mxu0 0.0
    %3872 = vmatprep.subr.mxu0 0.0
    %3873 = vmatpush1.msra.mxu0 0.0
    %3874 = vmatprep.subr.mxu0 0.0
    %3875 = vmatpush1.msra.mxu0 0.0
    %3876 = vmatprep.subr.mxu0 0.0
    %3877 = vmatpush1.msra.mxu0 0.0
    %3878 = vmatprep.subr.mxu0 0.0
    %3879 = vmatpush1.msra.mxu0 0.0
    %3880 = vmatprep.subr.mxu0 0.0
    %3881 = vmatpush1.msra.mxu0 0.0
    %3882 = vmatprep.subr.mxu0 0.0
    %3883 = vmatpush1.msra.mxu0 0.0
    %3884 = vmatprep.subr.mxu0 0.0
    %3885 = vmatpush1.msra.mxu0 0.0
    %3886 = vmatprep.subr.mxu0 0.0
    %3887 = vmatpush1.msra.mxu0 0.0
    %3888 = vmatprep.subr.mxu0 0.0
    %3889 = vmatpush1.msra.mxu0 0.0
    %3890 = vmatprep.subr.mxu0 0.0
    %3891 = vmatpush1.msra.mxu0 0.0
    %3892 = vmatprep.subr.mxu0 0.0
    %3893 = vmatpush1.msra.mxu0 0.0
    %3894 = vmatprep.subr.mxu0 0.0
    %3895 = vmatpush1.msra.mxu0 0.0
    %3896 = vmatprep.subr.mxu0 0.0
    %3897 = vmatpush1.msra.mxu0 0.0
    %3898 = vmatprep.subr.mxu0 0.0
    %3899 = vmatpush1.msra.mxu0 0.0
    %3900 = vmatprep.subr.mxu0 0.0
    %3901 = vmatpush1.msra.mxu0 0.0
    %3902 = vmatprep.mubr.f32.mxu0 0.0
    %3903 = vmatmul.mubr.f32.gmra.mrb[0].mxu0 %v3473
    %v3904 = vpop.f32.mrb[0].mxu0
    %v3905 = vadd.f32 %v3836, %v3904
    %v3906 = vpop.f32.mrb[0].mxu0
    %3907 = vmatprep.mubr.f32.mxu0 0.0
    %3908 = vmatmul.mubr.f32.gmra.mrb[0].mxu0 %v3476
    %v3909 = vpop.f32.mrb[0].mxu0
    %v3910 = vadd.f32 %v3836, %v3909
    %v3911 = vpop.f32.mrb[0].mxu0
    %3912 = vdwg.mxu0
    %v3914 = vsel %vm171, %v3905, 0
    %v3917 = vsel %vm171, %v3910, 0
    %3919 = vmatprep.subr.mxu0 0.0
    %3920 = vmatpush1.xpose.msra.mxu0 %v3473
    %3921 = vmatprep.subr.mxu0 0.0
    %3922 = vmatpush1.xpose.msra.mxu0 %v3476
    %3923 = vmatprep.subr.mxu0 0.0
    %3924 = vmatpush1.xpose.msra.mxu0 0.0
    %3925 = vmatprep.subr.mxu0 0.0
    %3926 = vmatpush1.xpose.msra.mxu0 0.0
    %3927 = vmatprep.subr.mxu0 0.0
    %3928 = vmatpush1.xpose.msra.mxu0 0.0
    %3929 = vmatprep.subr.mxu0 0.0
    %3930 = vmatpush1.xpose.msra.mxu0 0.0
    %3931 = vmatprep.subr.mxu0 0.0
    %3932 = vmatpush1.xpose.msra.mxu0 0.0
    %3933 = vmatprep.subr.mxu0 0.0
    %3934 = vmatpush1.xpose.msra.mxu0 0.0
    %3935 = vmatprep.subr.mxu0 0.0
    %3936 = vmatpush1.xpose.msra.mxu0 0.0
    %3937 = vmatprep.subr.mxu0 0.0
    %3938 = vmatpush1.xpose.msra.mxu0 0.0
    %3939 = vmatprep.subr.mxu0 0.0
    %3940 = vmatpush1.xpose.msra.mxu0 0.0
    %3941 = vmatprep.subr.mxu0 0.0
    %3942 = vmatpush1.xpose.msra.mxu0 0.0
    %3943 = vmatprep.subr.mxu0 0.0
    %3944 = vmatpush1.xpose.msra.mxu0 0.0
    %3945 = vmatprep.subr.mxu0 0.0
    %3946 = vmatpush1.xpose.msra.mxu0 0.0
    %3947 = vmatprep.subr.mxu0 0.0
    %3948 = vmatpush1.xpose.msra.mxu0 0.0
    %3949 = vmatprep.subr.mxu0 0.0
    %3950 = vmatpush1.xpose.msra.mxu0 0.0
    %3951 = vmatprep.subr.mxu0 0.0
    %3952 = vmatpush1.xpose.msra.mxu0 0.0
    %3953 = vmatprep.subr.mxu0 0.0
    %3954 = vmatpush1.xpose.msra.mxu0 0.0
    %3955 = vmatprep.subr.mxu0 0.0
    %3956 = vmatpush1.xpose.msra.mxu0 0.0
    %3957 = vmatprep.subr.mxu0 0.0
    %3958 = vmatpush1.xpose.msra.mxu0 0.0
    %3959 = vmatprep.subr.mxu0 0.0
    %3960 = vmatpush1.xpose.msra.mxu0 0.0
    %3961 = vmatprep.subr.mxu0 0.0
    %3962 = vmatpush1.xpose.msra.mxu0 0.0
    %3963 = vmatprep.subr.mxu0 0.0
    %3964 = vmatpush1.xpose.msra.mxu0 0.0
    %3965 = vmatprep.subr.mxu0 0.0
    %3966 = vmatpush1.xpose.msra.mxu0 0.0
    %3967 = vmatprep.subr.mxu0 0.0
    %3968 = vmatpush1.xpose.msra.mxu0 0.0
    %3969 = vmatprep.subr.mxu0 0.0
    %3970 = vmatpush1.xpose.msra.mxu0 0.0
    %3971 = vmatprep.subr.mxu0 0.0
    %3972 = vmatpush1.xpose.msra.mxu0 0.0
    %3973 = vmatprep.subr.mxu0 0.0
    %3974 = vmatpush1.xpose.msra.mxu0 0.0
    %3975 = vmatprep.subr.mxu0 0.0
    %3976 = vmatpush1.xpose.msra.mxu0 0.0
    %3977 = vmatprep.subr.mxu0 0.0
    %3978 = vmatpush1.xpose.msra.mxu0 0.0
    %3979 = vmatprep.subr.mxu0 0.0
    %3980 = vmatpush1.xpose.msra.mxu0 0.0
    %3981 = vmatprep.subr.mxu0 0.0
    %3982 = vmatpush1.xpose.msra.mxu0 0.0
    %3983 = vmatprep.mubr.f32.mxu0 0.0
    %3984 = vmatmul.mubr.f32.gmra.mrb[0].mxu0 %v3914
    %v3985 = vpop.f32.mrb[0].mxu0
    %v3986 = vadd.f32 %v215, %v3985
    %v3987 = vpop.f32.mrb[0].mxu0
    %3988 = vmatprep.mubr.f32.mxu0 0.0
    %3989 = vmatmul.mubr.f32.gmra.mrb[0].mxu0 %v3917
    %v3990 = vpop.f32.mrb[0].mxu0
    %v3991 = vadd.f32 %v216, %v3990
    %v3992 = vpop.f32.mrb[0].mxu0
    %3993 = vdwg.mxu0
    %v3994 = vsel %vm393, %v3986, -inf
    %3995 = vmax.xlane.f32.xlu0 %v3994
    %v3996 = vpop.xlane.xlu0 %3995
    %v3997 = vsel %vm393, %v3991, -inf
    %3998 = vmax.xlane.f32.xlu0 %v3997
    %v3999 = vpop.xlane.xlu0 %3998
    %v4000 = vsub.f32 %v3986, %v3996
    %v4001 = vsub.f32 %v3991, %v3999
    %v4002 = vmul.f32 %v4000, 1.442695
    %v4003 = vpow.pop %v4002
    %v4004 = vmul.f32 %v4001, 1.442695
    %v4005 = vpow.pop %v4004
    %v4006 = vsel %vm393, %v4003, 0.0
    %4007 = vadd.xlane.f32.xlu0 %v4006
    %v4008 = vpop.xlane.xlu0 %4007
    %v4009 = vsel %vm393, %v4005, 0.0
    %4010 = vadd.xlane.f32.xlu0 %v4009
    %v4011 = vpop.xlane.xlu0 %4010
    %v4012 = vrcp.pop %v4008
    %v4013 = vrcp.pop %v4011
    %v4014 = vmul.f32 %v4003, %v4012
    %v4015 = vmul.f32 %v4005, %v4013
    %s4016 = scalar_lea.vmem %s7, 160
    %v4017 = vld [vmem:[%s4016] sm:$0xff]
    %v4018 = vld [vmem:[%s4016 + $0x8] sm:$0xff]
    %v4019 = vld [vmem:[%s4016 + $0x10] sm:$0xff]
    %v4020 = vld [vmem:[%s4016 + $0x18] sm:$0xff]
    %4021 = vmatprep.subr.mxu0 0.0
    %4022 = vmatpush1.msra.mxu0 %v4017
    %4023 = vmatprep.subr.mxu0 0.0
    %4024 = vmatpush1.msra.mxu0 %v4018
    %4025 = vmatprep.subr.mxu0 0.0
    %4026 = vmatpush1.msra.mxu0 %v4019
    %4027 = vmatprep.subr.mxu0 0.0
    %4028 = vmatpush1.msra.mxu0 %v4020
    %4029 = vmatprep.subr.mxu0 0.0
    %4030 = vmatpush1.msra.mxu0 0.0
    %4031 = vmatprep.subr.mxu0 0.0
    %4032 = vmatpush1.msra.mxu0 0.0
    %4033 = vmatprep.subr.mxu0 0.0
    %4034 = vmatpush1.msra.mxu0 0.0
    %4035 = vmatprep.subr.mxu0 0.0
    %4036 = vmatpush1.msra.mxu0 0.0
    %4037 = vmatprep.subr.mxu0 0.0
    %4038 = vmatpush1.msra.mxu0 0.0
    %4039 = vmatprep.subr.mxu0 0.0
    %4040 = vmatpush1.msra.mxu0 0.0
    %4041 = vmatprep.subr.mxu0 0.0
    %4042 = vmatpush1.msra.mxu0 0.0
    %4043 = vmatprep.subr.mxu0 0.0
    %4044 = vmatpush1.msra.mxu0 0.0
    %4045 = vmatprep.subr.mxu0 0.0
    %4046 = vmatpush1.msra.mxu0 0.0
    %4047 = vmatprep.subr.mxu0 0.0
    %4048 = vmatpush1.msra.mxu0 0.0
    %4049 = vmatprep.subr.mxu0 0.0
    %4050 = vmatpush1.msra.mxu0 0.0
    %4051 = vmatprep.subr.mxu0 0.0
    %4052 = vmatpush1.msra.mxu0 0.0
    %4053 = vmatprep.subr.mxu0 0.0
    %4054 = vmatpush1.msra.mxu0 0.0
    %4055 = vmatprep.subr.mxu0 0.0
    %4056 = vmatpush1.msra.mxu0 0.0
    %4057 = vmatprep.subr.mxu0 0.0
    %4058 = vmatpush1.msra.mxu0 0.0
    %4059 = vmatprep.subr.mxu0 0.0
    %4060 = vmatpush1.msra.mxu0 0.0
    %4061 = vmatprep.subr.mxu0 0.0
    %4062 = vmatpush1.msra.mxu0 0.0
    %4063 = vmatprep.subr.mxu0 0.0
    %4064 = vmatpush1.msra.mxu0 0.0
    %4065 = vmatprep.subr.mxu0 0.0
    %4066 = vmatpush1.msra.mxu0 0.0
    %4067 = vmatprep.subr.mxu0 0.0
    %4068 = vmatpush1.msra.mxu0 0.0
    %4069 = vmatprep.subr.mxu0 0.0
    %4070 = vmatpush1.msra.mxu0 0.0
    %4071 = vmatprep.subr.mxu0 0.0
    %4072 = vmatpush1.msra.mxu0 0.0
    %4073 = vmatprep.subr.mxu0 0.0
    %4074 = vmatpush1.msra.mxu0 0.0
    %4075 = vmatprep.subr.mxu0 0.0
    %4076 = vmatpush1.msra.mxu0 0.0
    %4077 = vmatprep.subr.mxu0 0.0
    %4078 = vmatpush1.msra.mxu0 0.0
    %4079 = vmatprep.subr.mxu0 0.0
    %4080 = vmatpush1.msra.mxu0 0.0
    %4081 = vmatprep.subr.mxu0 0.0
    %4082 = vmatpush1.msra.mxu0 0.0
    %4083 = vmatprep.subr.mxu0 0.0
    %4084 = vmatpush1.msra.mxu0 0.0
    %4085 = vmatprep.mubr.f32.mxu0 0.0
    %4086 = vmatmul.mubr.f32.gmra.mrb[0].mxu0 %v3473
    %v4087 = vpop.f32.mrb[0].mxu0
    %v4088 = vadd.f32 0.0, %v4087
    %v4089 = vpop.f32.mrb[0].mxu0
    %4090 = vmatprep.mubr.f32.mxu0 0.0
    %4091 = vmatmul.mubr.f32.gmra.mrb[0].mxu0 %v3476
    %v4092 = vpop.f32.mrb[0].mxu0
    %v4093 = vadd.f32 0.0, %v4092
    %v4094 = vpop.f32.mrb[0].mxu0
    %4095 = vdwg.mxu0
    %v4097 = vsel %vm393, %v4014, 0
    %v4100 = vsel %vm393, %v4015, 0
    %4102 = vmatprep.subr.mxu0 0.0
    %4103 = vmatpush1.msra.mxu0 %v4088
    %4104 = vmatprep.subr.mxu0 0.0
    %4105 = vmatpush1.msra.mxu0 %v4093
    %4106 = vmatprep.subr.mxu0 0.0
    %4107 = vmatpush1.msra.mxu0 0.0
    %4108 = vmatprep.subr.mxu0 0.0
    %4109 = vmatpush1.msra.mxu0 0.0
    %4110 = vmatprep.subr.mxu0 0.0
    %4111 = vmatpush1.msra.mxu0 0.0
    %4112 = vmatprep.subr.mxu0 0.0
    %4113 = vmatpush1.msra.mxu0 0.0
    %4114 = vmatprep.subr.mxu0 0.0
    %4115 = vmatpush1.msra.mxu0 0.0
    %4116 = vmatprep.subr.mxu0 0.0
    %4117 = vmatpush1.msra.mxu0 0.0
    %4118 = vmatprep.subr.mxu0 0.0
    %4119 = vmatpush1.msra.mxu0 0.0
    %4120 = vmatprep.subr.mxu0 0.0
    %4121 = vmatpush1.msra.mxu0 0.0
    %4122 = vmatprep.subr.mxu0 0.0
    %4123 = vmatpush1.msra.mxu0 0.0
    %4124 = vmatprep.subr.mxu0 0.0
    %4125 = vmatpush1.msra.mxu0 0.0
    %4126 = vmatprep.subr.mxu0 0.0
    %4127 = vmatpush1.msra.mxu0 0.0
    %4128 = vmatprep.subr.mxu0 0.0
    %4129 = vmatpush1.msra.mxu0 0.0
    %4130 = vmatprep.subr.mxu0 0.0
    %4131 = vmatpush1.msra.mxu0 0.0
    %4132 = vmatprep.subr.mxu0 0.0
    %4133 = vmatpush1.msra.mxu0 0.0
    %4134 = vmatprep.subr.mxu0 0.0
    %4135 = vmatpush1.msra.mxu0 0.0
    %4136 = vmatprep.subr.mxu0 0.0
    %4137 = vmatpush1.msra.mxu0 0.0
    %4138 = vmatprep.subr.mxu0 0.0
    %4139 = vmatpush1.msra.mxu0 0.0
    %4140 = vmatprep.subr.mxu0 0.0
    %4141 = vmatpush1.msra.mxu0 0.0
    %4142 = vmatprep.subr.mxu0 0.0
    %4143 = vmatpush1.msra.mxu0 0.0
    %4144 = vmatprep.subr.mxu0 0.0
    %4145 = vmatpush1.msra.mxu0 0.0
    %4146 = vmatprep.subr.mxu0 0.0
    %4147 = vmatpush1.msra.mxu0 0.0
    %4148 = vmatprep.subr.mxu0 0.0
    %4149 = vmatpush1.msra.mxu0 0.0
    %4150 = vmatprep.subr.mxu0 0.0
    %4151 = vmatpush1.msra.mxu0 0.0
    %4152 = vmatprep.subr.mxu0 0.0
    %4153 = vmatpush1.msra.mxu0 0.0
    %4154 = vmatprep.subr.mxu0 0.0
    %4155 = vmatpush1.msra.mxu0 0.0
    %4156 = vmatprep.subr.mxu0 0.0
    %4157 = vmatpush1.msra.mxu0 0.0
    %4158 = vmatprep.subr.mxu0 0.0
    %4159 = vmatpush1.msra.mxu0 0.0
    %4160 = vmatprep.subr.mxu0 0.0
    %4161 = vmatpush1.msra.mxu0 0.0
    %4162 = vmatprep.subr.mxu0 0.0
    %4163 = vmatpush1.msra.mxu0 0.0
    %4164 = vmatprep.subr.mxu0 0.0
    %4165 = vmatpush1.msra.mxu0 0.0
    %4166 = vmatprep.mubr.f32.mxu0 0.0
    %4167 = vmatmul.mubr.f32.gmra.mrb[0].mxu0 %v4097
    %v4168 = vpop.f32.mrb[0].mxu0
    %v4169 = vadd.f32 0.0, %v4168
    %v4170 = vpop.f32.mrb[0].mxu0
    %4171 = vmatprep.mubr.f32.mxu0 0.0
    %4172 = vmatmul.mubr.f32.gmra.mrb[0].mxu0 %v4100
    %v4173 = vpop.f32.mrb[0].mxu0
    %v4174 = vadd.f32 0.0, %v4173
    %v4175 = vpop.f32.mrb[0].mxu0
    %4176 = vdwg.mxu0
    %v4177 = vadd.f32 %v3823, %v4169
    %v4178 = vadd.f32 %v3824, %v4174
    %s4179 = scalar_lea.vmem %s5, 192
    %v4180 = vld [vmem:[%s4179] sm:$0xff]
    %v4181 = vld [vmem:[%s4179 + $0x8] sm:$0xff]
    %v4182 = vld [vmem:[%s4179 + $0x10] sm:$0xff]
    %v4183 = vld [vmem:[%s4179 + $0x18] sm:$0xff]
    %s4184 = scalar_lea.vmem [#allocation5], 6
    %v4185 = vld [vmem:[%s4184] sm:$0x1]
    %v4187 = vlaneseq
    %v4188 = vshrl.u32 %v4187, 7
    %v4189 = vsub.s32 0, %v4188
    %v4190 = vrot.slane %v4185, %v4189
    %4192 = vmatprep.subr.mxu0 0.0
    %4193 = vmatpush1.msra.mxu0 %v4180
    %4194 = vmatprep.subr.mxu0 0.0
    %4195 = vmatpush1.msra.mxu0 %v4181
    %4196 = vmatprep.subr.mxu0 0.0
    %4197 = vmatpush1.msra.mxu0 %v4182
    %4198 = vmatprep.subr.mxu0 0.0
    %4199 = vmatpush1.msra.mxu0 %v4183
    %4200 = vmatprep.subr.mxu0 0.0
    %4201 = vmatpush1.msra.mxu0 0.0
    %4202 = vmatprep.subr.mxu0 0.0
    %4203 = vmatpush1.msra.mxu0 0.0
    %4204 = vmatprep.subr.mxu0 0.0
    %4205 = vmatpush1.msra.mxu0 0.0
    %4206 = vmatprep.subr.mxu0 0.0
    %4207 = vmatpush1.msra.mxu0 0.0
    %4208 = vmatprep.subr.mxu0 0.0
    %4209 = vmatpush1.msra.mxu0 0.0
    %4210 = vmatprep.subr.mxu0 0.0
    %4211 = vmatpush1.msra.mxu0 0.0
    %4212 = vmatprep.subr.mxu0 0.0
    %4213 = vmatpush1.msra.mxu0 0.0
    %4214 = vmatprep.subr.mxu0 0.0
    %4215 = vmatpush1.msra.mxu0 0.0
    %4216 = vmatprep.subr.mxu0 0.0
    %4217 = vmatpush1.msra.mxu0 0.0
    %4218 = vmatprep.subr.mxu0 0.0
    %4219 = vmatpush1.msra.mxu0 0.0
    %4220 = vmatprep.subr.mxu0 0.0
    %4221 = vmatpush1.msra.mxu0 0.0
    %4222 = vmatprep.subr.mxu0 0.0
    %4223 = vmatpush1.msra.mxu0 0.0
    %4224 = vmatprep.subr.mxu0 0.0
    %4225 = vmatpush1.msra.mxu0 0.0
    %4226 = vmatprep.subr.mxu0 0.0
    %4227 = vmatpush1.msra.mxu0 0.0
    %4228 = vmatprep.subr.mxu0 0.0
    %4229 = vmatpush1.msra.mxu0 0.0
    %4230 = vmatprep.subr.mxu0 0.0
    %4231 = vmatpush1.msra.mxu0 0.0
    %4232 = vmatprep.subr.mxu0 0.0
    %4233 = vmatpush1.msra.mxu0 0.0
    %4234 = vmatprep.subr.mxu0 0.0
    %4235 = vmatpush1.msra.mxu0 0.0
    %4236 = vmatprep.subr.mxu0 0.0
    %4237 = vmatpush1.msra.mxu0 0.0
    %4238 = vmatprep.subr.mxu0 0.0
    %4239 = vmatpush1.msra.mxu0 0.0
    %4240 = vmatprep.subr.mxu0 0.0
    %4241 = vmatpush1.msra.mxu0 0.0
    %4242 = vmatprep.subr.mxu0 0.0
    %4243 = vmatpush1.msra.mxu0 0.0
    %4244 = vmatprep.subr.mxu0 0.0
    %4245 = vmatpush1.msra.mxu0 0.0
    %4246 = vmatprep.subr.mxu0 0.0
    %4247 = vmatpush1.msra.mxu0 0.0
    %4248 = vmatprep.subr.mxu0 0.0
    %4249 = vmatpush1.msra.mxu0 0.0
    %4250 = vmatprep.subr.mxu0 0.0
    %4251 = vmatpush1.msra.mxu0 0.0
    %4252 = vmatprep.subr.mxu0 0.0
    %4253 = vmatpush1.msra.mxu0 0.0
    %4254 = vmatprep.subr.mxu0 0.0
    %4255 = vmatpush1.msra.mxu0 0.0
    %4256 = vmatprep.mubr.f32.mxu0 0.0
    %4257 = vmatmul.mubr.f32.gmra.mrb[0].mxu0 %v3473
    %v4258 = vpop.f32.mrb[0].mxu0
    %v4259 = vadd.f32 %v4190, %v4258
    %v4260 = vpop.f32.mrb[0].mxu0
    %4261 = vmatprep.mubr.f32.mxu0 0.0
    %4262 = vmatmul.mubr.f32.gmra.mrb[0].mxu0 %v3476
    %v4263 = vpop.f32.mrb[0].mxu0
    %v4264 = vadd.f32 %v4190, %v4263
    %v4265 = vpop.f32.mrb[0].mxu0
    %4266 = vdwg.mxu0
    %v4268 = vsel %vm171, %v4259, 0
    %v4271 = vsel %vm171, %v4264, 0
    %4273 = vmatprep.subr.mxu0 0.0
    %4274 = vmatpush1.xpose.msra.mxu0 %v3473
    %4275 = vmatprep.subr.mxu0 0.0
    %4276 = vmatpush1.xpose.msra.mxu0 %v3476
    %4277 = vmatprep.subr.mxu0 0.0
    %4278 = vmatpush1.xpose.msra.mxu0 0.0
    %4279 = vmatprep.subr.mxu0 0.0
    %4280 = vmatpush1.xpose.msra.mxu0 0.0
    %4281 = vmatprep.subr.mxu0 0.0
    %4282 = vmatpush1.xpose.msra.mxu0 0.0
    %4283 = vmatprep.subr.mxu0 0.0
    %4284 = vmatpush1.xpose.msra.mxu0 0.0
    %4285 = vmatprep.subr.mxu0 0.0
    %4286 = vmatpush1.xpose.msra.mxu0 0.0
    %4287 = vmatprep.subr.mxu0 0.0
    %4288 = vmatpush1.xpose.msra.mxu0 0.0
    %4289 = vmatprep.subr.mxu0 0.0
    %4290 = vmatpush1.xpose.msra.mxu0 0.0
    %4291 = vmatprep.subr.mxu0 0.0
    %4292 = vmatpush1.xpose.msra.mxu0 0.0
    %4293 = vmatprep.subr.mxu0 0.0
    %4294 = vmatpush1.xpose.msra.mxu0 0.0
    %4295 = vmatprep.subr.mxu0 0.0
    %4296 = vmatpush1.xpose.msra.mxu0 0.0
    %4297 = vmatprep.subr.mxu0 0.0
    %4298 = vmatpush1.xpose.msra.mxu0 0.0
    %4299 = vmatprep.subr.mxu0 0.0
    %4300 = vmatpush1.xpose.msra.mxu0 0.0
    %4301 = vmatprep.subr.mxu0 0.0
    %4302 = vmatpush1.xpose.msra.mxu0 0.0
    %4303 = vmatprep.subr.mxu0 0.0
    %4304 = vmatpush1.xpose.msra.mxu0 0.0
    %4305 = vmatprep.subr.mxu0 0.0
    %4306 = vmatpush1.xpose.msra.mxu0 0.0
    %4307 = vmatprep.subr.mxu0 0.0
    %4308 = vmatpush1.xpose.msra.mxu0 0.0
    %4309 = vmatprep.subr.mxu0 0.0
    %4310 = vmatpush1.xpose.msra.mxu0 0.0
    %4311 = vmatprep.subr.mxu0 0.0
    %4312 = vmatpush1.xpose.msra.mxu0 0.0
    %4313 = vmatprep.subr.mxu0 0.0
    %4314 = vmatpush1.xpose.msra.mxu0 0.0
    %4315 = vmatprep.subr.mxu0 0.0
    %4316 = vmatpush1.xpose.msra.mxu0 0.0
    %4317 = vmatprep.subr.mxu0 0.0
    %4318 = vmatpush1.xpose.msra.mxu0 0.0
    %4319 = vmatprep.subr.mxu0 0.0
    %4320 = vmatpush1.xpose.msra.mxu0 0.0
    %4321 = vmatprep.subr.mxu0 0.0
    %4322 = vmatpush1.xpose.msra.mxu0 0.0
    %4323 = vmatprep.subr.mxu0 0.0
    %4324 = vmatpush1.xpose.msra.mxu0 0.0
    %4325 = vmatprep.subr.mxu0 0.0
    %4326 = vmatpush1.xpose.msra.mxu0 0.0
    %4327 = vmatprep.subr.mxu0 0.0
    %4328 = vmatpush1.xpose.msra.mxu0 0.0
    %4329 = vmatprep.subr.mxu0 0.0
    %4330 = vmatpush1.xpose.msra.mxu0 0.0
    %4331 = vmatprep.subr.mxu0 0.0
    %4332 = vmatpush1.xpose.msra.mxu0 0.0
    %4333 = vmatprep.subr.mxu0 0.0
    %4334 = vmatpush1.xpose.msra.mxu0 0.0
    %4335 = vmatprep.subr.mxu0 0.0
    %4336 = vmatpush1.xpose.msra.mxu0 0.0
    %4337 = vmatprep.mubr.f32.mxu0 0.0
    %4338 = vmatmul.mubr.f32.gmra.mrb[0].mxu0 %v4268
    %v4339 = vpop.f32.mrb[0].mxu0
    %v4340 = vadd.f32 %v215, %v4339
    %v4341 = vpop.f32.mrb[0].mxu0
    %4342 = vmatprep.mubr.f32.mxu0 0.0
    %4343 = vmatmul.mubr.f32.gmra.mrb[0].mxu0 %v4271
    %v4344 = vpop.f32.mrb[0].mxu0
    %v4345 = vadd.f32 %v216, %v4344
    %v4346 = vpop.f32.mrb[0].mxu0
    %4347 = vdwg.mxu0
    %v4348 = vsel %vm393, %v4340, -inf
    %4349 = vmax.xlane.f32.xlu0 %v4348
    %v4350 = vpop.xlane.xlu0 %4349
    %v4351 = vsel %vm393, %v4345, -inf
    %4352 = vmax.xlane.f32.xlu0 %v4351
    %v4353 = vpop.xlane.xlu0 %4352
    %v4354 = vsub.f32 %v4340, %v4350
    %v4355 = vsub.f32 %v4345, %v4353
    %v4356 = vmul.f32 %v4354, 1.442695
    %v4357 = vpow.pop %v4356
    %v4358 = vmul.f32 %v4355, 1.442695
    %v4359 = vpow.pop %v4358
    %v4360 = vsel %vm393, %v4357, 0.0
    %4361 = vadd.xlane.f32.xlu0 %v4360
    %v4362 = vpop.xlane.xlu0 %4361
    %v4363 = vsel %vm393, %v4359, 0.0
    %4364 = vadd.xlane.f32.xlu0 %v4363
    %v4365 = vpop.xlane.xlu0 %4364
    %v4366 = vrcp.pop %v4362
    %v4367 = vrcp.pop %v4365
    %v4368 = vmul.f32 %v4357, %v4366
    %v4369 = vmul.f32 %v4359, %v4367
    %s4370 = scalar_lea.vmem %s7, 192
    %v4371 = vld [vmem:[%s4370] sm:$0xff]
    %v4372 = vld [vmem:[%s4370 + $0x8] sm:$0xff]
    %v4373 = vld [vmem:[%s4370 + $0x10] sm:$0xff]
    %v4374 = vld [vmem:[%s4370 + $0x18] sm:$0xff]
    %4375 = vmatprep.subr.mxu0 0.0
    %4376 = vmatpush1.msra.mxu0 %v4371
    %4377 = vmatprep.subr.mxu0 0.0
    %4378 = vmatpush1.msra.mxu0 %v4372
    %4379 = vmatprep.subr.mxu0 0.0
    %4380 = vmatpush1.msra.mxu0 %v4373
    %4381 = vmatprep.subr.mxu0 0.0
    %4382 = vmatpush1.msra.mxu0 %v4374
    %4383 = vmatprep.subr.mxu0 0.0
    %4384 = vmatpush1.msra.mxu0 0.0
    %4385 = vmatprep.subr.mxu0 0.0
    %4386 = vmatpush1.msra.mxu0 0.0
    %4387 = vmatprep.subr.mxu0 0.0
    %4388 = vmatpush1.msra.mxu0 0.0
    %4389 = vmatprep.subr.mxu0 0.0
    %4390 = vmatpush1.msra.mxu0 0.0
    %4391 = vmatprep.subr.mxu0 0.0
    %4392 = vmatpush1.msra.mxu0 0.0
    %4393 = vmatprep.subr.mxu0 0.0
    %4394 = vmatpush1.msra.mxu0 0.0
    %4395 = vmatprep.subr.mxu0 0.0
    %4396 = vmatpush1.msra.mxu0 0.0
    %4397 = vmatprep.subr.mxu0 0.0
    %4398 = vmatpush1.msra.mxu0 0.0
    %4399 = vmatprep.subr.mxu0 0.0
    %4400 = vmatpush1.msra.mxu0 0.0
    %4401 = vmatprep.subr.mxu0 0.0
    %4402 = vmatpush1.msra.mxu0 0.0
    %4403 = vmatprep.subr.mxu0 0.0
    %4404 = vmatpush1.msra.mxu0 0.0
    %4405 = vmatprep.subr.mxu0 0.0
    %4406 = vmatpush1.msra.mxu0 0.0
    %4407 = vmatprep.subr.mxu0 0.0
    %4408 = vmatpush1.msra.mxu0 0.0
    %4409 = vmatprep.subr.mxu0 0.0
    %4410 = vmatpush1.msra.mxu0 0.0
    %4411 = vmatprep.subr.mxu0 0.0
    %4412 = vmatpush1.msra.mxu0 0.0
    %4413 = vmatprep.subr.mxu0 0.0
    %4414 = vmatpush1.msra.mxu0 0.0
    %4415 = vmatprep.subr.mxu0 0.0
    %4416 = vmatpush1.msra.mxu0 0.0
    %4417 = vmatprep.subr.mxu0 0.0
    %4418 = vmatpush1.msra.mxu0 0.0
    %4419 = vmatprep.subr.mxu0 0.0
    %4420 = vmatpush1.msra.mxu0 0.0
    %4421 = vmatprep.subr.mxu0 0.0
    %4422 = vmatpush1.msra.mxu0 0.0
    %4423 = vmatprep.subr.mxu0 0.0
    %4424 = vmatpush1.msra.mxu0 0.0
    %4425 = vmatprep.subr.mxu0 0.0
    %4426 = vmatpush1.msra.mxu0 0.0
    %4427 = vmatprep.subr.mxu0 0.0
    %4428 = vmatpush1.msra.mxu0 0.0
    %4429 = vmatprep.subr.mxu0 0.0
    %4430 = vmatpush1.msra.mxu0 0.0
    %4431 = vmatprep.subr.mxu0 0.0
    %4432 = vmatpush1.msra.mxu0 0.0
    %4433 = vmatprep.subr.mxu0 0.0
    %4434 = vmatpush1.msra.mxu0 0.0
    %4435 = vmatprep.subr.mxu0 0.0
    %4436 = vmatpush1.msra.mxu0 0.0
    %4437 = vmatprep.subr.mxu0 0.0
    %4438 = vmatpush1.msra.mxu0 0.0
    %4439 = vmatprep.mubr.f32.mxu0 0.0
    %4440 = vmatmul.mubr.f32.gmra.mrb[0].mxu0 %v3473
    %v4441 = vpop.f32.mrb[0].mxu0
    %v4442 = vadd.f32 0.0, %v4441
    %v4443 = vpop.f32.mrb[0].mxu0
    %4444 = vmatprep.mubr.f32.mxu0 0.0
    %4445 = vmatmul.mubr.f32.gmra.mrb[0].mxu0 %v3476
    %v4446 = vpop.f32.mrb[0].mxu0
    %v4447 = vadd.f32 0.0, %v4446
    %v4448 = vpop.f32.mrb[0].mxu0
    %4449 = vdwg.mxu0
    %v4451 = vsel %vm393, %v4368, 0
    %v4454 = vsel %vm393, %v4369, 0
    %4456 = vmatprep.subr.mxu0 0.0
    %4457 = vmatpush1.msra.mxu0 %v4442
    %4458 = vmatprep.subr.mxu0 0.0
    %4459 = vmatpush1.msra.mxu0 %v4447
    %4460 = vmatprep.subr.mxu0 0.0
    %4461 = vmatpush1.msra.mxu0 0.0
    %4462 = vmatprep.subr.mxu0 0.0
    %4463 = vmatpush1.msra.mxu0 0.0
    %4464 = vmatprep.subr.mxu0 0.0
    %4465 = vmatpush1.msra.mxu0 0.0
    %4466 = vmatprep.subr.mxu0 0.0
    %4467 = vmatpush1.msra.mxu0 0.0
    %4468 = vmatprep.subr.mxu0 0.0
    %4469 = vmatpush1.msra.mxu0 0.0
    %4470 = vmatprep.subr.mxu0 0.0
    %4471 = vmatpush1.msra.mxu0 0.0
    %4472 = vmatprep.subr.mxu0 0.0
    %4473 = vmatpush1.msra.mxu0 0.0
    %4474 = vmatprep.subr.mxu0 0.0
    %4475 = vmatpush1.msra.mxu0 0.0
    %4476 = vmatprep.subr.mxu0 0.0
    %4477 = vmatpush1.msra.mxu0 0.0
    %4478 = vmatprep.subr.mxu0 0.0
    %4479 = vmatpush1.msra.mxu0 0.0
    %4480 = vmatprep.subr.mxu0 0.0
    %4481 = vmatpush1.msra.mxu0 0.0
    %4482 = vmatprep.subr.mxu0 0.0
    %4483 = vmatpush1.msra.mxu0 0.0
    %4484 = vmatprep.subr.mxu0 0.0
    %4485 = vmatpush1.msra.mxu0 0.0
    %4486 = vmatprep.subr.mxu0 0.0
    %4487 = vmatpush1.msra.mxu0 0.0
    %4488 = vmatprep.subr.mxu0 0.0
    %4489 = vmatpush1.msra.mxu0 0.0
    %4490 = vmatprep.subr.mxu0 0.0
    %4491 = vmatpush1.msra.mxu0 0.0
    %4492 = vmatprep.subr.mxu0 0.0
    %4493 = vmatpush1.msra.mxu0 0.0
    %4494 = vmatprep.subr.mxu0 0.0
    %4495 = vmatpush1.msra.mxu0 0.0
    %4496 = vmatprep.subr.mxu0 0.0
    %4497 = vmatpush1.msra.mxu0 0.0
    %4498 = vmatprep.subr.mxu0 0.0
    %4499 = vmatpush1.msra.mxu0 0.0
    %4500 = vmatprep.subr.mxu0 0.0
    %4501 = vmatpush1.msra.mxu0 0.0
    %4502 = vmatprep.subr.mxu0 0.0
    %4503 = vmatpush1.msra.mxu0 0.0
    %4504 = vmatprep.subr.mxu0 0.0
    %4505 = vmatpush1.msra.mxu0 0.0
    %4506 = vmatprep.subr.mxu0 0.0
    %4507 = vmatpush1.msra.mxu0 0.0
    %4508 = vmatprep.subr.mxu0 0.0
    %4509 = vmatpush1.msra.mxu0 0.0
    %4510 = vmatprep.subr.mxu0 0.0
    %4511 = vmatpush1.msra.mxu0 0.0
    %4512 = vmatprep.subr.mxu0 0.0
    %4513 = vmatpush1.msra.mxu0 0.0
    %4514 = vmatprep.subr.mxu0 0.0
    %4515 = vmatpush1.msra.mxu0 0.0
    %4516 = vmatprep.subr.mxu0 0.0
    %4517 = vmatpush1.msra.mxu0 0.0
    %4518 = vmatprep.subr.mxu0 0.0
    %4519 = vmatpush1.msra.mxu0 0.0
    %4520 = vmatprep.mubr.f32.mxu0 0.0
    %4521 = vmatmul.mubr.f32.gmra.mrb[0].mxu0 %v4451
    %v4522 = vpop.f32.mrb[0].mxu0
    %v4523 = vadd.f32 0.0, %v4522
    %v4524 = vpop.f32.mrb[0].mxu0
    %4525 = vmatprep.mubr.f32.mxu0 0.0
    %4526 = vmatmul.mubr.f32.gmra.mrb[0].mxu0 %v4454
    %v4527 = vpop.f32.mrb[0].mxu0
    %v4528 = vadd.f32 0.0, %v4527
    %v4529 = vpop.f32.mrb[0].mxu0
    %4530 = vdwg.mxu0
    %v4531 = vadd.f32 %v4177, %v4523
    %v4532 = vadd.f32 %v4178, %v4528
    %s4533 = scalar_lea.vmem %s5, 224
    %v4534 = vld [vmem:[%s4533] sm:$0xff]
    %v4535 = vld [vmem:[%s4533 + $0x8] sm:$0xff]
    %v4536 = vld [vmem:[%s4533 + $0x10] sm:$0xff]
    %v4537 = vld [vmem:[%s4533 + $0x18] sm:$0xff]
    %s4538 = scalar_lea.vmem [#allocation5], 7
    %v4539 = vld [vmem:[%s4538] sm:$0x1]
    %v4541 = vlaneseq
    %v4542 = vshrl.u32 %v4541, 7
    %v4543 = vsub.s32 0, %v4542
    %v4544 = vrot.slane %v4539, %v4543
    %4546 = vmatprep.subr.mxu0 0.0
    %4547 = vmatpush1.msra.mxu0 %v4534
    %4548 = vmatprep.subr.mxu0 0.0
    %4549 = vmatpush1.msra.mxu0 %v4535
    %4550 = vmatprep.subr.mxu0 0.0
    %4551 = vmatpush1.msra.mxu0 %v4536
    %4552 = vmatprep.subr.mxu0 0.0
    %4553 = vmatpush1.msra.mxu0 %v4537
    %4554 = vmatprep.subr.mxu0 0.0
    %4555 = vmatpush1.msra.mxu0 0.0
    %4556 = vmatprep.subr.mxu0 0.0
    %4557 = vmatpush1.msra.mxu0 0.0
    %4558 = vmatprep.subr.mxu0 0.0
    %4559 = vmatpush1.msra.mxu0 0.0
    %4560 = vmatprep.subr.mxu0 0.0
    %4561 = vmatpush1.msra.mxu0 0.0
    %4562 = vmatprep.subr.mxu0 0.0
    %4563 = vmatpush1.msra.mxu0 0.0
    %4564 = vmatprep.subr.mxu0 0.0
    %4565 = vmatpush1.msra.mxu0 0.0
    %4566 = vmatprep.subr.mxu0 0.0
    %4567 = vmatpush1.msra.mxu0 0.0
    %4568 = vmatprep.subr.mxu0 0.0
    %4569 = vmatpush1.msra.mxu0 0.0
    %4570 = vmatprep.subr.mxu0 0.0
    %4571 = vmatpush1.msra.mxu0 0.0
    %4572 = vmatprep.subr.mxu0 0.0
    %4573 = vmatpush1.msra.mxu0 0.0
    %4574 = vmatprep.subr.mxu0 0.0
    %4575 = vmatpush1.msra.mxu0 0.0
    %4576 = vmatprep.subr.mxu0 0.0
    %4577 = vmatpush1.msra.mxu0 0.0
    %4578 = vmatprep.subr.mxu0 0.0
    %4579 = vmatpush1.msra.mxu0 0.0
    %4580 = vmatprep.subr.mxu0 0.0
    %4581 = vmatpush1.msra.mxu0 0.0
    %4582 = vmatprep.subr.mxu0 0.0
    %4583 = vmatpush1.msra.mxu0 0.0
    %4584 = vmatprep.subr.mxu0 0.0
    %4585 = vmatpush1.msra.mxu0 0.0
    %4586 = vmatprep.subr.mxu0 0.0
    %4587 = vmatpush1.msra.mxu0 0.0
    %4588 = vmatprep.subr.mxu0 0.0
    %4589 = vmatpush1.msra.mxu0 0.0
    %4590 = vmatprep.subr.mxu0 0.0
    %4591 = vmatpush1.msra.mxu0 0.0
    %4592 = vmatprep.subr.mxu0 0.0
    %4593 = vmatpush1.msra.mxu0 0.0
    %4594 = vmatprep.subr.mxu0 0.0
    %4595 = vmatpush1.msra.mxu0 0.0
    %4596 = vmatprep.subr.mxu0 0.0
    %4597 = vmatpush1.msra.mxu0 0.0
    %4598 = vmatprep.subr.mxu0 0.0
    %4599 = vmatpush1.msra.mxu0 0.0
    %4600 = vmatprep.subr.mxu0 0.0
    %4601 = vmatpush1.msra.mxu0 0.0
    %4602 = vmatprep.subr.mxu0 0.0
    %4603 = vmatpush1.msra.mxu0 0.0
    %4604 = vmatprep.subr.mxu0 0.0
    %4605 = vmatpush1.msra.mxu0 0.0
    %4606 = vmatprep.subr.mxu0 0.0
    %4607 = vmatpush1.msra.mxu0 0.0
    %4608 = vmatprep.subr.mxu0 0.0
    %4609 = vmatpush1.msra.mxu0 0.0
    %4610 = vmatprep.mubr.f32.mxu0 0.0
    %4611 = vmatmul.mubr.f32.gmra.mrb[0].mxu0 %v3473
    %v4612 = vpop.f32.mrb[0].mxu0
    %v4613 = vadd.f32 %v4544, %v4612
    %v4614 = vpop.f32.mrb[0].mxu0
    %4615 = vmatprep.mubr.f32.mxu0 0.0
    %4616 = vmatmul.mubr.f32.gmra.mrb[0].mxu0 %v3476
    %v4617 = vpop.f32.mrb[0].mxu0
    %v4618 = vadd.f32 %v4544, %v4617
    %v4619 = vpop.f32.mrb[0].mxu0
    %4620 = vdwg.mxu0
    %v4622 = vsel %vm171, %v4613, 0
    %v4625 = vsel %vm171, %v4618, 0
    %4627 = vmatprep.subr.mxu0 0.0
    %4628 = vmatpush1.xpose.msra.mxu0 %v3473
    %4629 = vmatprep.subr.mxu0 0.0
    %4630 = vmatpush1.xpose.msra.mxu0 %v3476
    %4631 = vmatprep.subr.mxu0 0.0
    %4632 = vmatpush1.xpose.msra.mxu0 0.0
    %4633 = vmatprep.subr.mxu0 0.0
    %4634 = vmatpush1.xpose.msra.mxu0 0.0
    %4635 = vmatprep.subr.mxu0 0.0
    %4636 = vmatpush1.xpose.msra.mxu0 0.0
    %4637 = vmatprep.subr.mxu0 0.0
    %4638 = vmatpush1.xpose.msra.mxu0 0.0
    %4639 = vmatprep.subr.mxu0 0.0
    %4640 = vmatpush1.xpose.msra.mxu0 0.0
    %4641 = vmatprep.subr.mxu0 0.0
    %4642 = vmatpush1.xpose.msra.mxu0 0.0
    %4643 = vmatprep.subr.mxu0 0.0
    %4644 = vmatpush1.xpose.msra.mxu0 0.0
    %4645 = vmatprep.subr.mxu0 0.0
    %4646 = vmatpush1.xpose.msra.mxu0 0.0
    %4647 = vmatprep.subr.mxu0 0.0
    %4648 = vmatpush1.xpose.msra.mxu0 0.0
    %4649 = vmatprep.subr.mxu0 0.0
    %4650 = vmatpush1.xpose.msra.mxu0 0.0
    %4651 = vmatprep.subr.mxu0 0.0
    %4652 = vmatpush1.xpose.msra.mxu0 0.0
    %4653 = vmatprep.subr.mxu0 0.0
    %4654 = vmatpush1.xpose.msra.mxu0 0.0
    %4655 = vmatprep.subr.mxu0 0.0
    %4656 = vmatpush1.xpose.msra.mxu0 0.0
    %4657 = vmatprep.subr.mxu0 0.0
    %4658 = vmatpush1.xpose.msra.mxu0 0.0
    %4659 = vmatprep.subr.mxu0 0.0
    %4660 = vmatpush1.xpose.msra.mxu0 0.0
    %4661 = vmatprep.subr.mxu0 0.0
    %4662 = vmatpush1.xpose.msra.mxu0 0.0
    %4663 = vmatprep.subr.mxu0 0.0
    %4664 = vmatpush1.xpose.msra.mxu0 0.0
    %4665 = vmatprep.subr.mxu0 0.0
    %4666 = vmatpush1.xpose.msra.mxu0 0.0
    %4667 = vmatprep.subr.mxu0 0.0
    %4668 = vmatpush1.xpose.msra.mxu0 0.0
    %4669 = vmatprep.subr.mxu0 0.0
    %4670 = vmatpush1.xpose.msra.mxu0 0.0
    %4671 = vmatprep.subr.mxu0 0.0
    %4672 = vmatpush1.xpose.msra.mxu0 0.0
    %4673 = vmatprep.subr.mxu0 0.0
    %4674 = vmatpush1.xpose.msra.mxu0 0.0
    %4675 = vmatprep.subr.mxu0 0.0
    %4676 = vmatpush1.xpose.msra.mxu0 0.0
    %4677 = vmatprep.subr.mxu0 0.0
    %4678 = vmatpush1.xpose.msra.mxu0 0.0
    %4679 = vmatprep.subr.mxu0 0.0
    %4680 = vmatpush1.xpose.msra.mxu0 0.0
    %4681 = vmatprep.subr.mxu0 0.0
    %4682 = vmatpush1.xpose.msra.mxu0 0.0
    %4683 = vmatprep.subr.mxu0 0.0
    %4684 = vmatpush1.xpose.msra.mxu0 0.0
    %4685 = vmatprep.subr.mxu0 0.0
    %4686 = vmatpush1.xpose.msra.mxu0 0.0
    %4687 = vmatprep.subr.mxu0 0.0
    %4688 = vmatpush1.xpose.msra.mxu0 0.0
    %4689 = vmatprep.subr.mxu0 0.0
    %4690 = vmatpush1.xpose.msra.mxu0 0.0
    %4691 = vmatprep.mubr.f32.mxu0 0.0
    %4692 = vmatmul.mubr.f32.gmra.mrb[0].mxu0 %v4622
    %v4693 = vpop.f32.mrb[0].mxu0
    %v4694 = vadd.f32 %v215, %v4693
    %v4695 = vpop.f32.mrb[0].mxu0
    %4696 = vmatprep.mubr.f32.mxu0 0.0
    %4697 = vmatmul.mubr.f32.gmra.mrb[0].mxu0 %v4625
    %v4698 = vpop.f32.mrb[0].mxu0
    %v4699 = vadd.f32 %v216, %v4698
    %v4700 = vpop.f32.mrb[0].mxu0
    %4701 = vdwg.mxu0
    %v4702 = vsel %vm393, %v4694, -inf
    %4703 = vmax.xlane.f32.xlu0 %v4702
    %v4704 = vpop.xlane.xlu0 %4703
    %v4705 = vsel %vm393, %v4699, -inf
    %4706 = vmax.xlane.f32.xlu0 %v4705
    %v4707 = vpop.xlane.xlu0 %4706
    %v4708 = vsub.f32 %v4694, %v4704
    %v4709 = vsub.f32 %v4699, %v4707
    %v4710 = vmul.f32 %v4708, 1.442695
    %v4711 = vpow.pop %v4710
    %v4712 = vmul.f32 %v4709, 1.442695
    %v4713 = vpow.pop %v4712
    %v4714 = vsel %vm393, %v4711, 0.0
    %4715 = vadd.xlane.f32.xlu0 %v4714
    %v4716 = vpop.xlane.xlu0 %4715
    %v4717 = vsel %vm393, %v4713, 0.0
    %4718 = vadd.xlane.f32.xlu0 %v4717
    %v4719 = vpop.xlane.xlu0 %4718
    %v4720 = vrcp.pop %v4716
    %v4721 = vrcp.pop %v4719
    %v4722 = vmul.f32 %v4711, %v4720
    %v4723 = vmul.f32 %v4713, %v4721
    %s4724 = scalar_lea.vmem %s7, 224
    %v4725 = vld [vmem:[%s4724] sm:$0xff]
    %v4726 = vld [vmem:[%s4724 + $0x8] sm:$0xff]
    %v4727 = vld [vmem:[%s4724 + $0x10] sm:$0xff]
    %v4728 = vld [vmem:[%s4724 + $0x18] sm:$0xff]
    %4729 = vmatprep.subr.mxu0 0.0
    %4730 = vmatpush1.msra.mxu0 %v4725
    %4731 = vmatprep.subr.mxu0 0.0
    %4732 = vmatpush1.msra.mxu0 %v4726
    %4733 = vmatprep.subr.mxu0 0.0
    %4734 = vmatpush1.msra.mxu0 %v4727
    %4735 = vmatprep.subr.mxu0 0.0
    %4736 = vmatpush1.msra.mxu0 %v4728
    %4737 = vmatprep.subr.mxu0 0.0
    %4738 = vmatpush1.msra.mxu0 0.0
    %4739 = vmatprep.subr.mxu0 0.0
    %4740 = vmatpush1.msra.mxu0 0.0
    %4741 = vmatprep.subr.mxu0 0.0
    %4742 = vmatpush1.msra.mxu0 0.0
    %4743 = vmatprep.subr.mxu0 0.0
    %4744 = vmatpush1.msra.mxu0 0.0
    %4745 = vmatprep.subr.mxu0 0.0
    %4746 = vmatpush1.msra.mxu0 0.0
    %4747 = vmatprep.subr.mxu0 0.0
    %4748 = vmatpush1.msra.mxu0 0.0
    %4749 = vmatprep.subr.mxu0 0.0
    %4750 = vmatpush1.msra.mxu0 0.0
    %4751 = vmatprep.subr.mxu0 0.0
    %4752 = vmatpush1.msra.mxu0 0.0
    %4753 = vmatprep.subr.mxu0 0.0
    %4754 = vmatpush1.msra.mxu0 0.0
    %4755 = vmatprep.subr.mxu0 0.0
    %4756 = vmatpush1.msra.mxu0 0.0
    %4757 = vmatprep.subr.mxu0 0.0
    %4758 = vmatpush1.msra.mxu0 0.0
    %4759 = vmatprep.subr.mxu0 0.0
    %4760 = vmatpush1.msra.mxu0 0.0
    %4761 = vmatprep.subr.mxu0 0.0
    %4762 = vmatpush1.msra.mxu0 0.0
    %4763 = vmatprep.subr.mxu0 0.0
    %4764 = vmatpush1.msra.mxu0 0.0
    %4765 = vmatprep.subr.mxu0 0.0
    %4766 = vmatpush1.msra.mxu0 0.0
    %4767 = vmatprep.subr.mxu0 0.0
    %4768 = vmatpush1.msra.mxu0 0.0
    %4769 = vmatprep.subr.mxu0 0.0
    %4770 = vmatpush1.msra.mxu0 0.0
    %4771 = vmatprep.subr.mxu0 0.0
    %4772 = vmatpush1.msra.mxu0 0.0
    %4773 = vmatprep.subr.mxu0 0.0
    %4774 = vmatpush1.msra.mxu0 0.0
    %4775 = vmatprep.subr.mxu0 0.0
    %4776 = vmatpush1.msra.mxu0 0.0
    %4777 = vmatprep.subr.mxu0 0.0
    %4778 = vmatpush1.msra.mxu0 0.0
    %4779 = vmatprep.subr.mxu0 0.0
    %4780 = vmatpush1.msra.mxu0 0.0
    %4781 = vmatprep.subr.mxu0 0.0
    %4782 = vmatpush1.msra.mxu0 0.0
    %4783 = vmatprep.subr.mxu0 0.0
    %4784 = vmatpush1.msra.mxu0 0.0
    %4785 = vmatprep.subr.mxu0 0.0
    %4786 = vmatpush1.msra.mxu0 0.0
    %4787 = vmatprep.subr.mxu0 0.0
    %4788 = vmatpush1.msra.mxu0 0.0
    %4789 = vmatprep.subr.mxu0 0.0
    %4790 = vmatpush1.msra.mxu0 0.0
    %4791 = vmatprep.subr.mxu0 0.0
    %4792 = vmatpush1.msra.mxu0 0.0
    %4793 = vmatprep.mubr.f32.mxu0 0.0
    %4794 = vmatmul.mubr.f32.gmra.mrb[0].mxu0 %v3473
    %v4795 = vpop.f32.mrb[0].mxu0
    %v4796 = vadd.f32 0.0, %v4795
    %v4797 = vpop.f32.mrb[0].mxu0
    %4798 = vmatprep.mubr.f32.mxu0 0.0
    %4799 = vmatmul.mubr.f32.gmra.mrb[0].mxu0 %v3476
    %v4800 = vpop.f32.mrb[0].mxu0
    %v4801 = vadd.f32 0.0, %v4800
    %v4802 = vpop.f32.mrb[0].mxu0
    %4803 = vdwg.mxu0
    %v4805 = vsel %vm393, %v4722, 0
    %v4808 = vsel %vm393, %v4723, 0
    %4810 = vmatprep.subr.mxu0 0.0
    %4811 = vmatpush1.msra.mxu0 %v4796
    %4812 = vmatprep.subr.mxu0 0.0
    %4813 = vmatpush1.msra.mxu0 %v4801
    %4814 = vmatprep.subr.mxu0 0.0
    %4815 = vmatpush1.msra.mxu0 0.0
    %4816 = vmatprep.subr.mxu0 0.0
    %4817 = vmatpush1.msra.mxu0 0.0
    %4818 = vmatprep.subr.mxu0 0.0
    %4819 = vmatpush1.msra.mxu0 0.0
    %4820 = vmatprep.subr.mxu0 0.0
    %4821 = vmatpush1.msra.mxu0 0.0
    %4822 = vmatprep.subr.mxu0 0.0
    %4823 = vmatpush1.msra.mxu0 0.0
    %4824 = vmatprep.subr.mxu0 0.0
    %4825 = vmatpush1.msra.mxu0 0.0
    %4826 = vmatprep.subr.mxu0 0.0
    %4827 = vmatpush1.msra.mxu0 0.0
    %4828 = vmatprep.subr.mxu0 0.0
    %4829 = vmatpush1.msra.mxu0 0.0
    %4830 = vmatprep.subr.mxu0 0.0
    %4831 = vmatpush1.msra.mxu0 0.0
    %4832 = vmatprep.subr.mxu0 0.0
    %4833 = vmatpush1.msra.mxu0 0.0
    %4834 = vmatprep.subr.mxu0 0.0
    %4835 = vmatpush1.msra.mxu0 0.0
    %4836 = vmatprep.subr.mxu0 0.0
    %4837 = vmatpush1.msra.mxu0 0.0
    %4838 = vmatprep.subr.mxu0 0.0
    %4839 = vmatpush1.msra.mxu0 0.0
    %4840 = vmatprep.subr.mxu0 0.0
    %4841 = vmatpush1.msra.mxu0 0.0
    %4842 = vmatprep.subr.mxu0 0.0
    %4843 = vmatpush1.msra.mxu0 0.0
    %4844 = vmatprep.subr.mxu0 0.0
    %4845 = vmatpush1.msra.mxu0 0.0
    %4846 = vmatprep.subr.mxu0 0.0
    %4847 = vmatpush1.msra.mxu0 0.0
    %4848 = vmatprep.subr.mxu0 0.0
    %4849 = vmatpush1.msra.mxu0 0.0
    %4850 = vmatprep.subr.mxu0 0.0
    %4851 = vmatpush1.msra.mxu0 0.0
    %4852 = vmatprep.subr.mxu0 0.0
    %4853 = vmatpush1.msra.mxu0 0.0
    %4854 = vmatprep.subr.mxu0 0.0
    %4855 = vmatpush1.msra.mxu0 0.0
    %4856 = vmatprep.subr.mxu0 0.0
    %4857 = vmatpush1.msra.mxu0 0.0
    %4858 = vmatprep.subr.mxu0 0.0
    %4859 = vmatpush1.msra.mxu0 0.0
    %4860 = vmatprep.subr.mxu0 0.0
    %4861 = vmatpush1.msra.mxu0 0.0
    %4862 = vmatprep.subr.mxu0 0.0
    %4863 = vmatpush1.msra.mxu0 0.0
    %4864 = vmatprep.subr.mxu0 0.0
    %4865 = vmatpush1.msra.mxu0 0.0
    %4866 = vmatprep.subr.mxu0 0.0
    %4867 = vmatpush1.msra.mxu0 0.0
    %4868 = vmatprep.subr.mxu0 0.0
    %4869 = vmatpush1.msra.mxu0 0.0
    %4870 = vmatprep.subr.mxu0 0.0
    %4871 = vmatpush1.msra.mxu0 0.0
    %4872 = vmatprep.subr.mxu0 0.0
    %4873 = vmatpush1.msra.mxu0 0.0
    %4874 = vmatprep.mubr.f32.mxu0 0.0
    %4875 = vmatmul.mubr.f32.gmra.mrb[0].mxu0 %v4805
    %v4876 = vpop.f32.mrb[0].mxu0
    %v4877 = vadd.f32 0.0, %v4876
    %v4878 = vpop.f32.mrb[0].mxu0
    %4879 = vmatprep.mubr.f32.mxu0 0.0
    %4880 = vmatmul.mubr.f32.gmra.mrb[0].mxu0 %v4808
    %v4881 = vpop.f32.mrb[0].mxu0
    %v4882 = vadd.f32 0.0, %v4881
    %v4883 = vpop.f32.mrb[0].mxu0
    %4884 = vdwg.mxu0
    %v4885 = vadd.f32 %v4531, %v4877
    %v4886 = vadd.f32 %v4532, %v4882
    %v4887 = vadd.f32 %v3455, %v4885
    %v4888 = vadd.f32 %v3456, %v4886
    %s4889 = scalar_lea.vmem %s17, 8
    %v4890 = vld [vmem:[%s4889] sm:$0x1]
    %v4891 = vld [vmem:[%s4889 + $0x1] sm:$0x1]
    %v4892 = vsel %vm171, %v4887, 0.0
    %4893 = vadd.xlane.f32.xlu0 %v4892
    %v4894 = vpop.xlane.xlu0 %4893
    %v4895 = vsel %vm171, %v4888, 0.0
    %4896 = vadd.xlane.f32.xlu0 %v4895
    %v4897 = vpop.xlane.xlu0 %4896
    %v4898 = vmul.f32 %v4894, %v178
    %v4899 = vmul.f32 %v4897, %v178
    %v4900 = vsub.f32 %v4887, %v4898
    %v4901 = vsub.f32 %v4888, %v4899
    %v4902 = vmul.f32 %v4900, %v4900
    %v4903 = vmul.f32 %v4901, %v4901
    %v4904 = vsel %vm171, %v4902, 0.0
    %4905 = vadd.xlane.f32.xlu0 %v4904
    %v4906 = vpop.xlane.xlu0 %4905
    %v4907 = vsel %vm171, %v4903, 0.0
    %4908 = vadd.xlane.f32.xlu0 %v4907
    %v4909 = vpop.xlane.xlu0 %4908
    %v4910 = vmul.f32 %v4906, %v178
    %v4911 = vmul.f32 %v4909, %v178
    %v4912 = vadd.f32 %v4910, 1e-05
    %v4913 = vadd.f32 %v4911, 1e-05
    %v4914 = vrsqrt.pop %v4912
    %v4915 = vrsqrt.pop %v4913
    %v4916 = vmul.f32 %v4900, %v4914
    %v4917 = vmul.f32 %v4901, %v4915
    %v4918 = vlaneseq
    %v4919 = vshrl.u32 %v4918, 7
    %v4920 = vsub.s32 0, %v4919
    %v4921 = vrot.slane %v4890, %v4920
    %v4922 = vmul.f32 %v4916, %v4921
    %v4923 = vmul.f32 %v4917, %v4921
    %v4924 = vlaneseq
    %v4925 = vshrl.u32 %v4924, 7
    %v4926 = vsub.s32 0, %v4925
    %v4927 = vrot.slane %v4891, %v4926
    %v4928 = vadd.f32 %v4922, %v4927
    %v4929 = vadd.f32 %v4923, %v4927
    %s4930 = scalar_lea.vmem [#allocation11], 1
    %v4931 = vld [vmem:[%s4930] sm:$0x1]
    %s4932 = scalar_lea.vmem %s9, 128
    %v4933 = vld [vmem:[%s4932] sm:$0xff]
    %v4934 = vld [vmem:[%s4932 + $0x8] sm:$0xff]
    %v4935 = vld [vmem:[%s4932 + $0x10] sm:$0xff]
    %v4936 = vld [vmem:[%s4932 + $0x18] sm:$0xff]
    %s4937 = scalar_lea.vmem [#allocation8], 4
    %v4938 = vld [vmem:[%s4937] sm:$0x1]
    %v4940 = vlaneseq
    %v4941 = vshrl.u32 %v4940, 7
    %v4942 = vsub.s32 0, %v4941
    %v4943 = vrot.slane %v4938, %v4942
    %v4946 = vsel %vm171, %v4928, 0
    %v4949 = vsel %vm171, %v4929, 0
    %4951 = vmatprep.subr.mxu0 0.0
    %4952 = vmatpush1.msra.mxu0 %v4933
    %4953 = vmatprep.subr.mxu0 0.0
    %4954 = vmatpush1.msra.mxu0 %v4934
    %4955 = vmatprep.subr.mxu0 0.0
    %4956 = vmatpush1.msra.mxu0 %v4935
    %4957 = vmatprep.subr.mxu0 0.0
    %4958 = vmatpush1.msra.mxu0 %v4936
    %4959 = vmatprep.subr.mxu0 0.0
    %4960 = vmatpush1.msra.mxu0 0.0
    %4961 = vmatprep.subr.mxu0 0.0
    %4962 = vmatpush1.msra.mxu0 0.0
    %4963 = vmatprep.subr.mxu0 0.0
    %4964 = vmatpush1.msra.mxu0 0.0
    %4965 = vmatprep.subr.mxu0 0.0
    %4966 = vmatpush1.msra.mxu0 0.0
    %4967 = vmatprep.subr.mxu0 0.0
    %4968 = vmatpush1.msra.mxu0 0.0
    %4969 = vmatprep.subr.mxu0 0.0
    %4970 = vmatpush1.msra.mxu0 0.0
    %4971 = vmatprep.subr.mxu0 0.0
    %4972 = vmatpush1.msra.mxu0 0.0
    %4973 = vmatprep.subr.mxu0 0.0
    %4974 = vmatpush1.msra.mxu0 0.0
    %4975 = vmatprep.subr.mxu0 0.0
    %4976 = vmatpush1.msra.mxu0 0.0
    %4977 = vmatprep.subr.mxu0 0.0
    %4978 = vmatpush1.msra.mxu0 0.0
    %4979 = vmatprep.subr.mxu0 0.0
    %4980 = vmatpush1.msra.mxu0 0.0
    %4981 = vmatprep.subr.mxu0 0.0
    %4982 = vmatpush1.msra.mxu0 0.0
    %4983 = vmatprep.subr.mxu0 0.0
    %4984 = vmatpush1.msra.mxu0 0.0
    %4985 = vmatprep.subr.mxu0 0.0
    %4986 = vmatpush1.msra.mxu0 0.0
    %4987 = vmatprep.subr.mxu0 0.0
    %4988 = vmatpush1.msra.mxu0 0.0
    %4989 = vmatprep.subr.mxu0 0.0
    %4990 = vmatpush1.msra.mxu0 0.0
    %4991 = vmatprep.subr.mxu0 0.0
    %4992 = vmatpush1.msra.mxu0 0.0
    %4993 = vmatprep.subr.mxu0 0.0
    %4994 = vmatpush1.msra.mxu0 0.0
    %4995 = vmatprep.subr.mxu0 0.0
    %4996 = vmatpush1.msra.mxu0 0.0
    %4997 = vmatprep.subr.mxu0 0.0
    %4998 = vmatpush1.msra.mxu0 0.0
    %4999 = vmatprep.subr.mxu0 0.0
    %5000 = vmatpush1.msra.mxu0 0.0
    %5001 = vmatprep.subr.mxu0 0.0
    %5002 = vmatpush1.msra.mxu0 0.0
    %5003 = vmatprep.subr.mxu0 0.0
    %5004 = vmatpush1.msra.mxu0 0.0
    %5005 = vmatprep.subr.mxu0 0.0
    %5006 = vmatpush1.msra.mxu0 0.0
    %5007 = vmatprep.subr.mxu0 0.0
    %5008 = vmatpush1.msra.mxu0 0.0
    %5009 = vmatprep.subr.mxu0 0.0
    %5010 = vmatpush1.msra.mxu0 0.0
    %5011 = vmatprep.subr.mxu0 0.0
    %5012 = vmatpush1.msra.mxu0 0.0
    %5013 = vmatprep.subr.mxu0 0.0
    %5014 = vmatpush1.msra.mxu0 0.0
    %5015 = vmatprep.mubr.f32.mxu0 0.0
    %5016 = vmatmul.mubr.f32.gmra.mrb[0].mxu0 %v4946
    %v5017 = vpop.f32.mrb[0].mxu0
    %v5018 = vadd.f32 %v4943, %v5017
    %v5019 = vpop.f32.mrb[0].mxu0
    %5020 = vmatprep.mubr.f32.mxu0 0.0
    %5021 = vmatmul.mubr.f32.gmra.mrb[0].mxu0 %v4949
    %v5022 = vpop.f32.mrb[0].mxu0
    %v5023 = vadd.f32 %v4943, %v5022
    %v5024 = vpop.f32.mrb[0].mxu0
    %5025 = vdwg.mxu0
    %v5027 = vsel %vm171, %v5018, 0
    %v5030 = vsel %vm171, %v5023, 0
    %5032 = vmatprep.subr.mxu0 0.0
    %5033 = vmatpush1.xpose.msra.mxu0 %v1788
    %5034 = vmatprep.subr.mxu0 0.0
    %5035 = vmatpush1.xpose.msra.mxu0 %v1791
    %5036 = vmatprep.subr.mxu0 0.0
    %5037 = vmatpush1.xpose.msra.mxu0 %v1794
    %5038 = vmatprep.subr.mxu0 0.0
    %5039 = vmatpush1.xpose.msra.mxu0 %v1797
    %5040 = vmatprep.subr.mxu0 0.0
    %5041 = vmatpush1.xpose.msra.mxu0 0.0
    %5042 = vmatprep.subr.mxu0 0.0
    %5043 = vmatpush1.xpose.msra.mxu0 0.0
    %5044 = vmatprep.subr.mxu0 0.0
    %5045 = vmatpush1.xpose.msra.mxu0 0.0
    %5046 = vmatprep.subr.mxu0 0.0
    %5047 = vmatpush1.xpose.msra.mxu0 0.0
    %5048 = vmatprep.subr.mxu0 0.0
    %5049 = vmatpush1.xpose.msra.mxu0 0.0
    %5050 = vmatprep.subr.mxu0 0.0
    %5051 = vmatpush1.xpose.msra.mxu0 0.0
    %5052 = vmatprep.subr.mxu0 0.0
    %5053 = vmatpush1.xpose.msra.mxu0 0.0
    %5054 = vmatprep.subr.mxu0 0.0
    %5055 = vmatpush1.xpose.msra.mxu0 0.0
    %5056 = vmatprep.subr.mxu0 0.0
    %5057 = vmatpush1.xpose.msra.mxu0 0.0
    %5058 = vmatprep.subr.mxu0 0.0
    %5059 = vmatpush1.xpose.msra.mxu0 0.0
    %5060 = vmatprep.subr.mxu0 0.0
    %5061 = vmatpush1.xpose.msra.mxu0 0.0
    %5062 = vmatprep.subr.mxu0 0.0
    %5063 = vmatpush1.xpose.msra.mxu0 0.0
    %5064 = vmatprep.subr.mxu0 0.0
    %5065 = vmatpush1.xpose.msra.mxu0 0.0
    %5066 = vmatprep.subr.mxu0 0.0
    %5067 = vmatpush1.xpose.msra.mxu0 0.0
    %5068 = vmatprep.subr.mxu0 0.0
    %5069 = vmatpush1.xpose.msra.mxu0 0.0
    %5070 = vmatprep.subr.mxu0 0.0
    %5071 = vmatpush1.xpose.msra.mxu0 0.0
    %5072 = vmatprep.subr.mxu0 0.0
    %5073 = vmatpush1.xpose.msra.mxu0 0.0
    %5074 = vmatprep.subr.mxu0 0.0
    %5075 = vmatpush1.xpose.msra.mxu0 0.0
    %5076 = vmatprep.subr.mxu0 0.0
    %5077 = vmatpush1.xpose.msra.mxu0 0.0
    %5078 = vmatprep.subr.mxu0 0.0
    %5079 = vmatpush1.xpose.msra.mxu0 0.0
    %5080 = vmatprep.subr.mxu0 0.0
    %5081 = vmatpush1.xpose.msra.mxu0 0.0
    %5082 = vmatprep.subr.mxu0 0.0
    %5083 = vmatpush1.xpose.msra.mxu0 0.0
    %5084 = vmatprep.subr.mxu0 0.0
    %5085 = vmatpush1.xpose.msra.mxu0 0.0
    %5086 = vmatprep.subr.mxu0 0.0
    %5087 = vmatpush1.xpose.msra.mxu0 0.0
    %5088 = vmatprep.subr.mxu0 0.0
    %5089 = vmatpush1.xpose.msra.mxu0 0.0
    %5090 = vmatprep.subr.mxu0 0.0
    %5091 = vmatpush1.xpose.msra.mxu0 0.0
    %5092 = vmatprep.subr.mxu0 0.0
    %5093 = vmatpush1.xpose.msra.mxu0 0.0
    %5094 = vmatprep.subr.mxu0 0.0
    %5095 = vmatpush1.xpose.msra.mxu0 0.0
    %5096 = vmatprep.mubr.f32.mxu0 0.0
    %5097 = vmatmul.mubr.f32.gmra.mrb[0].mxu0 %v5027
    %v5098 = vpop.f32.mrb[0].mxu0
    %v5099 = vadd.f32 %v217, %v5098
    %v5100 = vpop.f32.mrb[0].mxu0
    %5101 = vmatprep.mubr.f32.mxu0 0.0
    %5102 = vmatmul.mubr.f32.gmra.mrb[0].mxu0 %v5030
    %v5103 = vpop.f32.mrb[0].mxu0
    %v5104 = vadd.f32 %v218, %v5103
    %v5105 = vpop.f32.mrb[0].mxu0
    %5106 = vdwg.mxu0
    %v5107 = vsel %vm171, %v5099, -inf
    %5108 = vmax.xlane.f32.xlu0 %v5107
    %v5109 = vpop.xlane.xlu0 %5108
    %v5110 = vsel %vm171, %v5104, -inf
    %5111 = vmax.xlane.f32.xlu0 %v5110
    %v5112 = vpop.xlane.xlu0 %5111
    %v5113 = vsub.f32 %v5099, %v5109
    %v5114 = vsub.f32 %v5104, %v5112
    %v5115 = vmul.f32 %v5113, 1.442695
    %v5116 = vpow.pop %v5115
    %v5117 = vmul.f32 %v5114, 1.442695
    %v5118 = vpow.pop %v5117
    %v5119 = vsel %vm171, %v5116, 0.0
    %5120 = vadd.xlane.f32.xlu0 %v5119
    %v5121 = vpop.xlane.xlu0 %5120
    %v5122 = vsel %vm171, %v5118, 0.0
    %5123 = vadd.xlane.f32.xlu0 %v5122
    %v5124 = vpop.xlane.xlu0 %5123
    %v5125 = vrcp.pop %v5121
    %v5126 = vrcp.pop %v5124
    %v5127 = vmul.f32 %v5116, %v5125
    %v5128 = vmul.f32 %v5118, %v5126
    %s5129 = scalar_lea.vmem [#allocation10], 128
    %v5130 = vld [vmem:[%s5129] sm:$0xff]
    %v5131 = vld [vmem:[%s5129 + $0x8] sm:$0xff]
    %v5132 = vld [vmem:[%s5129 + $0x10] sm:$0xff]
    %v5133 = vld [vmem:[%s5129 + $0x18] sm:$0xff]
    %5134 = vmatprep.subr.mxu0 0.0
    %5135 = vmatpush1.msra.mxu0 %v5130
    %5136 = vmatprep.subr.mxu0 0.0
    %5137 = vmatpush1.msra.mxu0 %v5131
    %5138 = vmatprep.subr.mxu0 0.0
    %5139 = vmatpush1.msra.mxu0 %v5132
    %5140 = vmatprep.subr.mxu0 0.0
    %5141 = vmatpush1.msra.mxu0 %v5133
    %5142 = vmatprep.subr.mxu0 0.0
    %5143 = vmatpush1.msra.mxu0 0.0
    %5144 = vmatprep.subr.mxu0 0.0
    %5145 = vmatpush1.msra.mxu0 0.0
    %5146 = vmatprep.subr.mxu0 0.0
    %5147 = vmatpush1.msra.mxu0 0.0
    %5148 = vmatprep.subr.mxu0 0.0
    %5149 = vmatpush1.msra.mxu0 0.0
    %5150 = vmatprep.subr.mxu0 0.0
    %5151 = vmatpush1.msra.mxu0 0.0
    %5152 = vmatprep.subr.mxu0 0.0
    %5153 = vmatpush1.msra.mxu0 0.0
    %5154 = vmatprep.subr.mxu0 0.0
    %5155 = vmatpush1.msra.mxu0 0.0
    %5156 = vmatprep.subr.mxu0 0.0
    %5157 = vmatpush1.msra.mxu0 0.0
    %5158 = vmatprep.subr.mxu0 0.0
    %5159 = vmatpush1.msra.mxu0 0.0
    %5160 = vmatprep.subr.mxu0 0.0
    %5161 = vmatpush1.msra.mxu0 0.0
    %5162 = vmatprep.subr.mxu0 0.0
    %5163 = vmatpush1.msra.mxu0 0.0
    %5164 = vmatprep.subr.mxu0 0.0
    %5165 = vmatpush1.msra.mxu0 0.0
    %5166 = vmatprep.subr.mxu0 0.0
    %5167 = vmatpush1.msra.mxu0 0.0
    %5168 = vmatprep.subr.mxu0 0.0
    %5169 = vmatpush1.msra.mxu0 0.0
    %5170 = vmatprep.subr.mxu0 0.0
    %5171 = vmatpush1.msra.mxu0 0.0
    %5172 = vmatprep.subr.mxu0 0.0
    %5173 = vmatpush1.msra.mxu0 0.0
    %5174 = vmatprep.subr.mxu0 0.0
    %5175 = vmatpush1.msra.mxu0 0.0
    %5176 = vmatprep.subr.mxu0 0.0
    %5177 = vmatpush1.msra.mxu0 0.0
    %5178 = vmatprep.subr.mxu0 0.0
    %5179 = vmatpush1.msra.mxu0 0.0
    %5180 = vmatprep.subr.mxu0 0.0
    %5181 = vmatpush1.msra.mxu0 0.0
    %5182 = vmatprep.subr.mxu0 0.0
    %5183 = vmatpush1.msra.mxu0 0.0
    %5184 = vmatprep.subr.mxu0 0.0
    %5185 = vmatpush1.msra.mxu0 0.0
    %5186 = vmatprep.subr.mxu0 0.0
    %5187 = vmatpush1.msra.mxu0 0.0
    %5188 = vmatprep.subr.mxu0 0.0
    %5189 = vmatpush1.msra.mxu0 0.0
    %5190 = vmatprep.subr.mxu0 0.0
    %5191 = vmatpush1.msra.mxu0 0.0
    %5192 = vmatprep.subr.mxu0 0.0
    %5193 = vmatpush1.msra.mxu0 0.0
    %5194 = vmatprep.subr.mxu0 0.0
    %5195 = vmatpush1.msra.mxu0 0.0
    %5196 = vmatprep.subr.mxu0 0.0
    %5197 = vmatpush1.msra.mxu0 0.0
    %5198 = vmatprep.mubr.f32.mxu0 0.0
    %5199 = vmatmul.mubr.f32.gmra.mrb[0].mxu0 %v1788
    %v5200 = vpop.f32.mrb[0].mxu0
    %v5201 = vadd.f32 0.0, %v5200
    %v5202 = vpop.f32.mrb[0].mxu0
    %5203 = vmatprep.mubr.f32.mxu0 0.0
    %5204 = vmatmul.mubr.f32.gmra.mrb[0].mxu0 %v1791
    %v5205 = vpop.f32.mrb[0].mxu0
    %v5206 = vadd.f32 0.0, %v5205
    %v5207 = vpop.f32.mrb[0].mxu0
    %5208 = vmatprep.mubr.f32.mxu0 0.0
    %5209 = vmatmul.mubr.f32.gmra.mrb[0].mxu0 %v1794
    %v5210 = vpop.f32.mrb[0].mxu0
    %v5211 = vadd.f32 0.0, %v5210
    %v5212 = vpop.f32.mrb[0].mxu0
    %5213 = vmatprep.mubr.f32.mxu0 0.0
    %5214 = vmatmul.mubr.f32.gmra.mrb[0].mxu0 %v1797
    %v5215 = vpop.f32.mrb[0].mxu0
    %v5216 = vadd.f32 0.0, %v5215
    %v5217 = vpop.f32.mrb[0].mxu0
    %5218 = vdwg.mxu0
    %v5220 = vsel %vm171, %v5127, 0
    %v5223 = vsel %vm171, %v5128, 0
    %5225 = vmatprep.subr.mxu0 0.0
    %5226 = vmatpush1.msra.mxu0 %v5201
    %5227 = vmatprep.subr.mxu0 0.0
    %5228 = vmatpush1.msra.mxu0 %v5206
    %5229 = vmatprep.subr.mxu0 0.0
    %5230 = vmatpush1.msra.mxu0 %v5211
    %5231 = vmatprep.subr.mxu0 0.0
    %5232 = vmatpush1.msra.mxu0 %v5216
    %5233 = vmatprep.subr.mxu0 0.0
    %5234 = vmatpush1.msra.mxu0 0.0
    %5235 = vmatprep.subr.mxu0 0.0
    %5236 = vmatpush1.msra.mxu0 0.0
    %5237 = vmatprep.subr.mxu0 0.0
    %5238 = vmatpush1.msra.mxu0 0.0
    %5239 = vmatprep.subr.mxu0 0.0
    %5240 = vmatpush1.msra.mxu0 0.0
    %5241 = vmatprep.subr.mxu0 0.0
    %5242 = vmatpush1.msra.mxu0 0.0
    %5243 = vmatprep.subr.mxu0 0.0
    %5244 = vmatpush1.msra.mxu0 0.0
    %5245 = vmatprep.subr.mxu0 0.0
    %5246 = vmatpush1.msra.mxu0 0.0
    %5247 = vmatprep.subr.mxu0 0.0
    %5248 = vmatpush1.msra.mxu0 0.0
    %5249 = vmatprep.subr.mxu0 0.0
    %5250 = vmatpush1.msra.mxu0 0.0
    %5251 = vmatprep.subr.mxu0 0.0
    %5252 = vmatpush1.msra.mxu0 0.0
    %5253 = vmatprep.subr.mxu0 0.0
    %5254 = vmatpush1.msra.mxu0 0.0
    %5255 = vmatprep.subr.mxu0 0.0
    %5256 = vmatpush1.msra.mxu0 0.0
    %5257 = vmatprep.subr.mxu0 0.0
    %5258 = vmatpush1.msra.mxu0 0.0
    %5259 = vmatprep.subr.mxu0 0.0
    %5260 = vmatpush1.msra.mxu0 0.0
    %5261 = vmatprep.subr.mxu0 0.0
    %5262 = vmatpush1.msra.mxu0 0.0
    %5263 = vmatprep.subr.mxu0 0.0
    %5264 = vmatpush1.msra.mxu0 0.0
    %5265 = vmatprep.subr.mxu0 0.0
    %5266 = vmatpush1.msra.mxu0 0.0
    %5267 = vmatprep.subr.mxu0 0.0
    %5268 = vmatpush1.msra.mxu0 0.0
    %5269 = vmatprep.subr.mxu0 0.0
    %5270 = vmatpush1.msra.mxu0 0.0
    %5271 = vmatprep.subr.mxu0 0.0
    %5272 = vmatpush1.msra.mxu0 0.0
    %5273 = vmatprep.subr.mxu0 0.0
    %5274 = vmatpush1.msra.mxu0 0.0
    %5275 = vmatprep.subr.mxu0 0.0
    %5276 = vmatpush1.msra.mxu0 0.0
    %5277 = vmatprep.subr.mxu0 0.0
    %5278 = vmatpush1.msra.mxu0 0.0
    %5279 = vmatprep.subr.mxu0 0.0
    %5280 = vmatpush1.msra.mxu0 0.0
    %5281 = vmatprep.subr.mxu0 0.0
    %5282 = vmatpush1.msra.mxu0 0.0
    %5283 = vmatprep.subr.mxu0 0.0
    %5284 = vmatpush1.msra.mxu0 0.0
    %5285 = vmatprep.subr.mxu0 0.0
    %5286 = vmatpush1.msra.mxu0 0.0
    %5287 = vmatprep.subr.mxu0 0.0
    %5288 = vmatpush1.msra.mxu0 0.0
    %5289 = vmatprep.mubr.f32.mxu0 0.0
    %5290 = vmatmul.mubr.f32.gmra.mrb[0].mxu0 %v5220
    %v5291 = vpop.f32.mrb[0].mxu0
    %v5292 = vadd.f32 0.0, %v5291
    %v5293 = vpop.f32.mrb[0].mxu0
    %5294 = vmatprep.mubr.f32.mxu0 0.0
    %5295 = vmatmul.mubr.f32.gmra.mrb[0].mxu0 %v5223
    %v5296 = vpop.f32.mrb[0].mxu0
    %v5297 = vadd.f32 0.0, %v5296
    %v5298 = vpop.f32.mrb[0].mxu0
    %5299 = vdwg.mxu0
    %v5301 = vlaneseq
    %v5302 = vshrl.u32 %v5301, 7
    %v5303 = vsub.s32 0, %v5302
    %v5304 = vrot.slane %v4931, %v5303
    %v5306 = vadd.f32 %v5304, %v5292
    %v5307 = vadd.f32 %v5304, %v5297
    %s5308 = scalar_lea.vmem %s9, 160
    %v5309 = vld [vmem:[%s5308] sm:$0xff]
    %v5310 = vld [vmem:[%s5308 + $0x8] sm:$0xff]
    %v5311 = vld [vmem:[%s5308 + $0x10] sm:$0xff]
    %v5312 = vld [vmem:[%s5308 + $0x18] sm:$0xff]
    %s5313 = scalar_lea.vmem [#allocation8], 5
    %v5314 = vld [vmem:[%s5313] sm:$0x1]
    %v5316 = vlaneseq
    %v5317 = vshrl.u32 %v5316, 7
    %v5318 = vsub.s32 0, %v5317
    %v5319 = vrot.slane %v5314, %v5318
    %5321 = vmatprep.subr.mxu0 0.0
    %5322 = vmatpush1.msra.mxu0 %v5309
    %5323 = vmatprep.subr.mxu0 0.0
    %5324 = vmatpush1.msra.mxu0 %v5310
    %5325 = vmatprep.subr.mxu0 0.0
    %5326 = vmatpush1.msra.mxu0 %v5311
    %5327 = vmatprep.subr.mxu0 0.0
    %5328 = vmatpush1.msra.mxu0 %v5312
    %5329 = vmatprep.subr.mxu0 0.0
    %5330 = vmatpush1.msra.mxu0 0.0
    %5331 = vmatprep.subr.mxu0 0.0
    %5332 = vmatpush1.msra.mxu0 0.0
    %5333 = vmatprep.subr.mxu0 0.0
    %5334 = vmatpush1.msra.mxu0 0.0
    %5335 = vmatprep.subr.mxu0 0.0
    %5336 = vmatpush1.msra.mxu0 0.0
    %5337 = vmatprep.subr.mxu0 0.0
    %5338 = vmatpush1.msra.mxu0 0.0
    %5339 = vmatprep.subr.mxu0 0.0
    %5340 = vmatpush1.msra.mxu0 0.0
    %5341 = vmatprep.subr.mxu0 0.0
    %5342 = vmatpush1.msra.mxu0 0.0
    %5343 = vmatprep.subr.mxu0 0.0
    %5344 = vmatpush1.msra.mxu0 0.0
    %5345 = vmatprep.subr.mxu0 0.0
    %5346 = vmatpush1.msra.mxu0 0.0
    %5347 = vmatprep.subr.mxu0 0.0
    %5348 = vmatpush1.msra.mxu0 0.0
    %5349 = vmatprep.subr.mxu0 0.0
    %5350 = vmatpush1.msra.mxu0 0.0
    %5351 = vmatprep.subr.mxu0 0.0
    %5352 = vmatpush1.msra.mxu0 0.0
    %5353 = vmatprep.subr.mxu0 0.0
    %5354 = vmatpush1.msra.mxu0 0.0
    %5355 = vmatprep.subr.mxu0 0.0
    %5356 = vmatpush1.msra.mxu0 0.0
    %5357 = vmatprep.subr.mxu0 0.0
    %5358 = vmatpush1.msra.mxu0 0.0
    %5359 = vmatprep.subr.mxu0 0.0
    %5360 = vmatpush1.msra.mxu0 0.0
    %5361 = vmatprep.subr.mxu0 0.0
    %5362 = vmatpush1.msra.mxu0 0.0
    %5363 = vmatprep.subr.mxu0 0.0
    %5364 = vmatpush1.msra.mxu0 0.0
    %5365 = vmatprep.subr.mxu0 0.0
    %5366 = vmatpush1.msra.mxu0 0.0
    %5367 = vmatprep.subr.mxu0 0.0
    %5368 = vmatpush1.msra.mxu0 0.0
    %5369 = vmatprep.subr.mxu0 0.0
    %5370 = vmatpush1.msra.mxu0 0.0
    %5371 = vmatprep.subr.mxu0 0.0
    %5372 = vmatpush1.msra.mxu0 0.0
    %5373 = vmatprep.subr.mxu0 0.0
    %5374 = vmatpush1.msra.mxu0 0.0
    %5375 = vmatprep.subr.mxu0 0.0
    %5376 = vmatpush1.msra.mxu0 0.0
    %5377 = vmatprep.subr.mxu0 0.0
    %5378 = vmatpush1.msra.mxu0 0.0
    %5379 = vmatprep.subr.mxu0 0.0
    %5380 = vmatpush1.msra.mxu0 0.0
    %5381 = vmatprep.subr.mxu0 0.0
    %5382 = vmatpush1.msra.mxu0 0.0
    %5383 = vmatprep.subr.mxu0 0.0
    %5384 = vmatpush1.msra.mxu0 0.0
    %5385 = vmatprep.mubr.f32.mxu0 0.0
    %5386 = vmatmul.mubr.f32.gmra.mrb[0].mxu0 %v4946
    %v5387 = vpop.f32.mrb[0].mxu0
    %v5388 = vadd.f32 %v5319, %v5387
    %v5389 = vpop.f32.mrb[0].mxu0
    %5390 = vmatprep.mubr.f32.mxu0 0.0
    %5391 = vmatmul.mubr.f32.gmra.mrb[0].mxu0 %v4949
    %v5392 = vpop.f32.mrb[0].mxu0
    %v5393 = vadd.f32 %v5319, %v5392
    %v5394 = vpop.f32.mrb[0].mxu0
    %5395 = vdwg.mxu0
    %v5397 = vsel %vm171, %v5388, 0
    %v5400 = vsel %vm171, %v5393, 0
    %5402 = vmatprep.subr.mxu0 0.0
    %5403 = vmatpush1.xpose.msra.mxu0 %v1788
    %5404 = vmatprep.subr.mxu0 0.0
    %5405 = vmatpush1.xpose.msra.mxu0 %v1791
    %5406 = vmatprep.subr.mxu0 0.0
    %5407 = vmatpush1.xpose.msra.mxu0 %v1794
    %5408 = vmatprep.subr.mxu0 0.0
    %5409 = vmatpush1.xpose.msra.mxu0 %v1797
    %5410 = vmatprep.subr.mxu0 0.0
    %5411 = vmatpush1.xpose.msra.mxu0 0.0
    %5412 = vmatprep.subr.mxu0 0.0
    %5413 = vmatpush1.xpose.msra.mxu0 0.0
    %5414 = vmatprep.subr.mxu0 0.0
    %5415 = vmatpush1.xpose.msra.mxu0 0.0
    %5416 = vmatprep.subr.mxu0 0.0
    %5417 = vmatpush1.xpose.msra.mxu0 0.0
    %5418 = vmatprep.subr.mxu0 0.0
    %5419 = vmatpush1.xpose.msra.mxu0 0.0
    %5420 = vmatprep.subr.mxu0 0.0
    %5421 = vmatpush1.xpose.msra.mxu0 0.0
    %5422 = vmatprep.subr.mxu0 0.0
    %5423 = vmatpush1.xpose.msra.mxu0 0.0
    %5424 = vmatprep.subr.mxu0 0.0
    %5425 = vmatpush1.xpose.msra.mxu0 0.0
    %5426 = vmatprep.subr.mxu0 0.0
    %5427 = vmatpush1.xpose.msra.mxu0 0.0
    %5428 = vmatprep.subr.mxu0 0.0
    %5429 = vmatpush1.xpose.msra.mxu0 0.0
    %5430 = vmatprep.subr.mxu0 0.0
    %5431 = vmatpush1.xpose.msra.mxu0 0.0
    %5432 = vmatprep.subr.mxu0 0.0
    %5433 = vmatpush1.xpose.msra.mxu0 0.0
    %5434 = vmatprep.subr.mxu0 0.0
    %5435 = vmatpush1.xpose.msra.mxu0 0.0
    %5436 = vmatprep.subr.mxu0 0.0
    %5437 = vmatpush1.xpose.msra.mxu0 0.0
    %5438 = vmatprep.subr.mxu0 0.0
    %5439 = vmatpush1.xpose.msra.mxu0 0.0
    %5440 = vmatprep.subr.mxu0 0.0
    %5441 = vmatpush1.xpose.msra.mxu0 0.0
    %5442 = vmatprep.subr.mxu0 0.0
    %5443 = vmatpush1.xpose.msra.mxu0 0.0
    %5444 = vmatprep.subr.mxu0 0.0
    %5445 = vmatpush1.xpose.msra.mxu0 0.0
    %5446 = vmatprep.subr.mxu0 0.0
    %5447 = vmatpush1.xpose.msra.mxu0 0.0
    %5448 = vmatprep.subr.mxu0 0.0
    %5449 = vmatpush1.xpose.msra.mxu0 0.0
    %5450 = vmatprep.subr.mxu0 0.0
    %5451 = vmatpush1.xpose.msra.mxu0 0.0
    %5452 = vmatprep.subr.mxu0 0.0
    %5453 = vmatpush1.xpose.msra.mxu0 0.0
    %5454 = vmatprep.subr.mxu0 0.0
    %5455 = vmatpush1.xpose.msra.mxu0 0.0
    %5456 = vmatprep.subr.mxu0 0.0
    %5457 = vmatpush1.xpose.msra.mxu0 0.0
    %5458 = vmatprep.subr.mxu0 0.0
    %5459 = vmatpush1.xpose.msra.mxu0 0.0
    %5460 = vmatprep.subr.mxu0 0.0
    %5461 = vmatpush1.xpose.msra.mxu0 0.0
    %5462 = vmatprep.subr.mxu0 0.0
    %5463 = vmatpush1.xpose.msra.mxu0 0.0
    %5464 = vmatprep.subr.mxu0 0.0
    %5465 = vmatpush1.xpose.msra.mxu0 0.0
    %5466 = vmatprep.mubr.f32.mxu0 0.0
    %5467 = vmatmul.mubr.f32.gmra.mrb[0].mxu0 %v5397
    %v5468 = vpop.f32.mrb[0].mxu0
    %v5469 = vadd.f32 %v217, %v5468
    %v5470 = vpop.f32.mrb[0].mxu0
    %5471 = vmatprep.mubr.f32.mxu0 0.0
    %5472 = vmatmul.mubr.f32.gmra.mrb[0].mxu0 %v5400
    %v5473 = vpop.f32.mrb[0].mxu0
    %v5474 = vadd.f32 %v218, %v5473
    %v5475 = vpop.f32.mrb[0].mxu0
    %5476 = vdwg.mxu0
    %v5477 = vsel %vm171, %v5469, -inf
    %5478 = vmax.xlane.f32.xlu0 %v5477
    %v5479 = vpop.xlane.xlu0 %5478
    %v5480 = vsel %vm171, %v5474, -inf
    %5481 = vmax.xlane.f32.xlu0 %v5480
    %v5482 = vpop.xlane.xlu0 %5481
    %v5483 = vsub.f32 %v5469, %v5479
    %v5484 = vsub.f32 %v5474, %v5482
    %v5485 = vmul.f32 %v5483, 1.442695
    %v5486 = vpow.pop %v5485
    %v5487 = vmul.f32 %v5484, 1.442695
    %v5488 = vpow.pop %v5487
    %v5489 = vsel %vm171, %v5486, 0.0
    %5490 = vadd.xlane.f32.xlu0 %v5489
    %v5491 = vpop.xlane.xlu0 %5490
    %v5492 = vsel %vm171, %v5488, 0.0
    %5493 = vadd.xlane.f32.xlu0 %v5492
    %v5494 = vpop.xlane.xlu0 %5493
    %v5495 = vrcp.pop %v5491
    %v5496 = vrcp.pop %v5494
    %v5497 = vmul.f32 %v5486, %v5495
    %v5498 = vmul.f32 %v5488, %v5496
    %s5499 = scalar_lea.vmem [#allocation10], 160
    %v5500 = vld [vmem:[%s5499] sm:$0xff]
    %v5501 = vld [vmem:[%s5499 + $0x8] sm:$0xff]
    %v5502 = vld [vmem:[%s5499 + $0x10] sm:$0xff]
    %v5503 = vld [vmem:[%s5499 + $0x18] sm:$0xff]
    %5504 = vmatprep.subr.mxu0 0.0
    %5505 = vmatpush1.msra.mxu0 %v5500
    %5506 = vmatprep.subr.mxu0 0.0
    %5507 = vmatpush1.msra.mxu0 %v5501
    %5508 = vmatprep.subr.mxu0 0.0
    %5509 = vmatpush1.msra.mxu0 %v5502
    %5510 = vmatprep.subr.mxu0 0.0
    %5511 = vmatpush1.msra.mxu0 %v5503
    %5512 = vmatprep.subr.mxu0 0.0
    %5513 = vmatpush1.msra.mxu0 0.0
    %5514 = vmatprep.subr.mxu0 0.0
    %5515 = vmatpush1.msra.mxu0 0.0
    %5516 = vmatprep.subr.mxu0 0.0
    %5517 = vmatpush1.msra.mxu0 0.0
    %5518 = vmatprep.subr.mxu0 0.0
    %5519 = vmatpush1.msra.mxu0 0.0
    %5520 = vmatprep.subr.mxu0 0.0
    %5521 = vmatpush1.msra.mxu0 0.0
    %5522 = vmatprep.subr.mxu0 0.0
    %5523 = vmatpush1.msra.mxu0 0.0
    %5524 = vmatprep.subr.mxu0 0.0
    %5525 = vmatpush1.msra.mxu0 0.0
    %5526 = vmatprep.subr.mxu0 0.0
    %5527 = vmatpush1.msra.mxu0 0.0
    %5528 = vmatprep.subr.mxu0 0.0
    %5529 = vmatpush1.msra.mxu0 0.0
    %5530 = vmatprep.subr.mxu0 0.0
    %5531 = vmatpush1.msra.mxu0 0.0
    %5532 = vmatprep.subr.mxu0 0.0
    %5533 = vmatpush1.msra.mxu0 0.0
    %5534 = vmatprep.subr.mxu0 0.0
    %5535 = vmatpush1.msra.mxu0 0.0
    %5536 = vmatprep.subr.mxu0 0.0
    %5537 = vmatpush1.msra.mxu0 0.0
    %5538 = vmatprep.subr.mxu0 0.0
    %5539 = vmatpush1.msra.mxu0 0.0
    %5540 = vmatprep.subr.mxu0 0.0
    %5541 = vmatpush1.msra.mxu0 0.0
    %5542 = vmatprep.subr.mxu0 0.0
    %5543 = vmatpush1.msra.mxu0 0.0
    %5544 = vmatprep.subr.mxu0 0.0
    %5545 = vmatpush1.msra.mxu0 0.0
    %5546 = vmatprep.subr.mxu0 0.0
    %5547 = vmatpush1.msra.mxu0 0.0
    %5548 = vmatprep.subr.mxu0 0.0
    %5549 = vmatpush1.msra.mxu0 0.0
    %5550 = vmatprep.subr.mxu0 0.0
    %5551 = vmatpush1.msra.mxu0 0.0
    %5552 = vmatprep.subr.mxu0 0.0
    %5553 = vmatpush1.msra.mxu0 0.0
    %5554 = vmatprep.subr.mxu0 0.0
    %5555 = vmatpush1.msra.mxu0 0.0
    %5556 = vmatprep.subr.mxu0 0.0
    %5557 = vmatpush1.msra.mxu0 0.0
    %5558 = vmatprep.subr.mxu0 0.0
    %5559 = vmatpush1.msra.mxu0 0.0
    %5560 = vmatprep.subr.mxu0 0.0
    %5561 = vmatpush1.msra.mxu0 0.0
    %5562 = vmatprep.subr.mxu0 0.0
    %5563 = vmatpush1.msra.mxu0 0.0
    %5564 = vmatprep.subr.mxu0 0.0
    %5565 = vmatpush1.msra.mxu0 0.0
    %5566 = vmatprep.subr.mxu0 0.0
    %5567 = vmatpush1.msra.mxu0 0.0
    %5568 = vmatprep.mubr.f32.mxu0 0.0
    %5569 = vmatmul.mubr.f32.gmra.mrb[0].mxu0 %v1788
    %v5570 = vpop.f32.mrb[0].mxu0
    %v5571 = vadd.f32 0.0, %v5570
    %v5572 = vpop.f32.mrb[0].mxu0
    %5573 = vmatprep.mubr.f32.mxu0 0.0
    %5574 = vmatmul.mubr.f32.gmra.mrb[0].mxu0 %v1791
    %v5575 = vpop.f32.mrb[0].mxu0
    %v5576 = vadd.f32 0.0, %v5575
    %v5577 = vpop.f32.mrb[0].mxu0
    %5578 = vmatprep.mubr.f32.mxu0 0.0
    %5579 = vmatmul.mubr.f32.gmra.mrb[0].mxu0 %v1794
    %v5580 = vpop.f32.mrb[0].mxu0
    %v5581 = vadd.f32 0.0, %v5580
    %v5582 = vpop.f32.mrb[0].mxu0
    %5583 = vmatprep.mubr.f32.mxu0 0.0
    %5584 = vmatmul.mubr.f32.gmra.mrb[0].mxu0 %v1797
    %v5585 = vpop.f32.mrb[0].mxu0
    %v5586 = vadd.f32 0.0, %v5585
    %v5587 = vpop.f32.mrb[0].mxu0
    %5588 = vdwg.mxu0
    %v5590 = vsel %vm171, %v5497, 0
    %v5593 = vsel %vm171, %v5498, 0
    %5595 = vmatprep.subr.mxu0 0.0
    %5596 = vmatpush1.msra.mxu0 %v5571
    %5597 = vmatprep.subr.mxu0 0.0
    %5598 = vmatpush1.msra.mxu0 %v5576
    %5599 = vmatprep.subr.mxu0 0.0
    %5600 = vmatpush1.msra.mxu0 %v5581
    %5601 = vmatprep.subr.mxu0 0.0
    %5602 = vmatpush1.msra.mxu0 %v5586
    %5603 = vmatprep.subr.mxu0 0.0
    %5604 = vmatpush1.msra.mxu0 0.0
    %5605 = vmatprep.subr.mxu0 0.0
    %5606 = vmatpush1.msra.mxu0 0.0
    %5607 = vmatprep.subr.mxu0 0.0
    %5608 = vmatpush1.msra.mxu0 0.0
    %5609 = vmatprep.subr.mxu0 0.0
    %5610 = vmatpush1.msra.mxu0 0.0
    %5611 = vmatprep.subr.mxu0 0.0
    %5612 = vmatpush1.msra.mxu0 0.0
    %5613 = vmatprep.subr.mxu0 0.0
    %5614 = vmatpush1.msra.mxu0 0.0
    %5615 = vmatprep.subr.mxu0 0.0
    %5616 = vmatpush1.msra.mxu0 0.0
    %5617 = vmatprep.subr.mxu0 0.0
    %5618 = vmatpush1.msra.mxu0 0.0
    %5619 = vmatprep.subr.mxu0 0.0
    %5620 = vmatpush1.msra.mxu0 0.0
    %5621 = vmatprep.subr.mxu0 0.0
    %5622 = vmatpush1.msra.mxu0 0.0
    %5623 = vmatprep.subr.mxu0 0.0
    %5624 = vmatpush1.msra.mxu0 0.0
    %5625 = vmatprep.subr.mxu0 0.0
    %5626 = vmatpush1.msra.mxu0 0.0
    %5627 = vmatprep.subr.mxu0 0.0
    %5628 = vmatpush1.msra.mxu0 0.0
    %5629 = vmatprep.subr.mxu0 0.0
    %5630 = vmatpush1.msra.mxu0 0.0
    %5631 = vmatprep.subr.mxu0 0.0
    %5632 = vmatpush1.msra.mxu0 0.0
    %5633 = vmatprep.subr.mxu0 0.0
    %5634 = vmatpush1.msra.mxu0 0.0
    %5635 = vmatprep.subr.mxu0 0.0
    %5636 = vmatpush1.msra.mxu0 0.0
    %5637 = vmatprep.subr.mxu0 0.0
    %5638 = vmatpush1.msra.mxu0 0.0
    %5639 = vmatprep.subr.mxu0 0.0
    %5640 = vmatpush1.msra.mxu0 0.0
    %5641 = vmatprep.subr.mxu0 0.0
    %5642 = vmatpush1.msra.mxu0 0.0
    %5643 = vmatprep.subr.mxu0 0.0
    %5644 = vmatpush1.msra.mxu0 0.0
    %5645 = vmatprep.subr.mxu0 0.0
    %5646 = vmatpush1.msra.mxu0 0.0
    %5647 = vmatprep.subr.mxu0 0.0
    %5648 = vmatpush1.msra.mxu0 0.0
    %5649 = vmatprep.subr.mxu0 0.0
    %5650 = vmatpush1.msra.mxu0 0.0
    %5651 = vmatprep.subr.mxu0 0.0
    %5652 = vmatpush1.msra.mxu0 0.0
    %5653 = vmatprep.subr.mxu0 0.0
    %5654 = vmatpush1.msra.mxu0 0.0
    %5655 = vmatprep.subr.mxu0 0.0
    %5656 = vmatpush1.msra.mxu0 0.0
    %5657 = vmatprep.subr.mxu0 0.0
    %5658 = vmatpush1.msra.mxu0 0.0
    %5659 = vmatprep.mubr.f32.mxu0 0.0
    %5660 = vmatmul.mubr.f32.gmra.mrb[0].mxu0 %v5590
    %v5661 = vpop.f32.mrb[0].mxu0
    %v5662 = vadd.f32 0.0, %v5661
    %v5663 = vpop.f32.mrb[0].mxu0
    %5664 = vmatprep.mubr.f32.mxu0 0.0
    %5665 = vmatmul.mubr.f32.gmra.mrb[0].mxu0 %v5593
    %v5666 = vpop.f32.mrb[0].mxu0
    %v5667 = vadd.f32 0.0, %v5666
    %v5668 = vpop.f32.mrb[0].mxu0
    %5669 = vdwg.mxu0
    %v5670 = vadd.f32 %v5306, %v5662
    %v5671 = vadd.f32 %v5307, %v5667
    %s5672 = scalar_lea.vmem %s9, 192
    %v5673 = vld [vmem:[%s5672] sm:$0xff]
    %v5674 = vld [vmem:[%s5672 + $0x8] sm:$0xff]
    %v5675 = vld [vmem:[%s5672 + $0x10] sm:$0xff]
    %v5676 = vld [vmem:[%s5672 + $0x18] sm:$0xff]
    %s5677 = scalar_lea.vmem [#allocation8], 6
    %v5678 = vld [vmem:[%s5677] sm:$0x1]
    %v5680 = vlaneseq
    %v5681 = vshrl.u32 %v5680, 7
    %v5682 = vsub.s32 0, %v5681
    %v5683 = vrot.slane %v5678, %v5682
    %5685 = vmatprep.subr.mxu0 0.0
    %5686 = vmatpush1.msra.mxu0 %v5673
    %5687 = vmatprep.subr.mxu0 0.0
    %5688 = vmatpush1.msra.mxu0 %v5674
    %5689 = vmatprep.subr.mxu0 0.0
    %5690 = vmatpush1.msra.mxu0 %v5675
    %5691 = vmatprep.subr.mxu0 0.0
    %5692 = vmatpush1.msra.mxu0 %v5676
    %5693 = vmatprep.subr.mxu0 0.0
    %5694 = vmatpush1.msra.mxu0 0.0
    %5695 = vmatprep.subr.mxu0 0.0
    %5696 = vmatpush1.msra.mxu0 0.0
    %5697 = vmatprep.subr.mxu0 0.0
    %5698 = vmatpush1.msra.mxu0 0.0
    %5699 = vmatprep.subr.mxu0 0.0
    %5700 = vmatpush1.msra.mxu0 0.0
    %5701 = vmatprep.subr.mxu0 0.0
    %5702 = vmatpush1.msra.mxu0 0.0
    %5703 = vmatprep.subr.mxu0 0.0
    %5704 = vmatpush1.msra.mxu0 0.0
    %5705 = vmatprep.subr.mxu0 0.0
    %5706 = vmatpush1.msra.mxu0 0.0
    %5707 = vmatprep.subr.mxu0 0.0
    %5708 = vmatpush1.msra.mxu0 0.0
    %5709 = vmatprep.subr.mxu0 0.0
    %5710 = vmatpush1.msra.mxu0 0.0
    %5711 = vmatprep.subr.mxu0 0.0
    %5712 = vmatpush1.msra.mxu0 0.0
    %5713 = vmatprep.subr.mxu0 0.0
    %5714 = vmatpush1.msra.mxu0 0.0
    %5715 = vmatprep.subr.mxu0 0.0
    %5716 = vmatpush1.msra.mxu0 0.0
    %5717 = vmatprep.subr.mxu0 0.0
    %5718 = vmatpush1.msra.mxu0 0.0
    %5719 = vmatprep.subr.mxu0 0.0
    %5720 = vmatpush1.msra.mxu0 0.0
    %5721 = vmatprep.subr.mxu0 0.0
    %5722 = vmatpush1.msra.mxu0 0.0
    %5723 = vmatprep.subr.mxu0 0.0
    %5724 = vmatpush1.msra.mxu0 0.0
    %5725 = vmatprep.subr.mxu0 0.0
    %5726 = vmatpush1.msra.mxu0 0.0
    %5727 = vmatprep.subr.mxu0 0.0
    %5728 = vmatpush1.msra.mxu0 0.0
    %5729 = vmatprep.subr.mxu0 0.0
    %5730 = vmatpush1.msra.mxu0 0.0
    %5731 = vmatprep.subr.mxu0 0.0
    %5732 = vmatpush1.msra.mxu0 0.0
    %5733 = vmatprep.subr.mxu0 0.0
    %5734 = vmatpush1.msra.mxu0 0.0
    %5735 = vmatprep.subr.mxu0 0.0
    %5736 = vmatpush1.msra.mxu0 0.0
    %5737 = vmatprep.subr.mxu0 0.0
    %5738 = vmatpush1.msra.mxu0 0.0
    %5739 = vmatprep.subr.mxu0 0.0
    %5740 = vmatpush1.msra.mxu0 0.0
    %5741 = vmatprep.subr.mxu0 0.0
    %5742 = vmatpush1.msra.mxu0 0.0
    %5743 = vmatprep.subr.mxu0 0.0
    %5744 = vmatpush1.msra.mxu0 0.0
    %5745 = vmatprep.subr.mxu0 0.0
    %5746 = vmatpush1.msra.mxu0 0.0
    %5747 = vmatprep.subr.mxu0 0.0
    %5748 = vmatpush1.msra.mxu0 0.0
    %5749 = vmatprep.mubr.f32.mxu0 0.0
    %5750 = vmatmul.mubr.f32.gmra.mrb[0].mxu0 %v4946
    %v5751 = vpop.f32.mrb[0].mxu0
    %v5752 = vadd.f32 %v5683, %v5751
    %v5753 = vpop.f32.mrb[0].mxu0
    %5754 = vmatprep.mubr.f32.mxu0 0.0
    %5755 = vmatmul.mubr.f32.gmra.mrb[0].mxu0 %v4949
    %v5756 = vpop.f32.mrb[0].mxu0
    %v5757 = vadd.f32 %v5683, %v5756
    %v5758 = vpop.f32.mrb[0].mxu0
    %5759 = vdwg.mxu0
    %v5761 = vsel %vm171, %v5752, 0
    %v5764 = vsel %vm171, %v5757, 0
    %5766 = vmatprep.subr.mxu0 0.0
    %5767 = vmatpush1.xpose.msra.mxu0 %v1788
    %5768 = vmatprep.subr.mxu0 0.0
    %5769 = vmatpush1.xpose.msra.mxu0 %v1791
    %5770 = vmatprep.subr.mxu0 0.0
    %5771 = vmatpush1.xpose.msra.mxu0 %v1794
    %5772 = vmatprep.subr.mxu0 0.0
    %5773 = vmatpush1.xpose.msra.mxu0 %v1797
    %5774 = vmatprep.subr.mxu0 0.0
    %5775 = vmatpush1.xpose.msra.mxu0 0.0
    %5776 = vmatprep.subr.mxu0 0.0
    %5777 = vmatpush1.xpose.msra.mxu0 0.0
    %5778 = vmatprep.subr.mxu0 0.0
    %5779 = vmatpush1.xpose.msra.mxu0 0.0
    %5780 = vmatprep.subr.mxu0 0.0
    %5781 = vmatpush1.xpose.msra.mxu0 0.0
    %5782 = vmatprep.subr.mxu0 0.0
    %5783 = vmatpush1.xpose.msra.mxu0 0.0
    %5784 = vmatprep.subr.mxu0 0.0
    %5785 = vmatpush1.xpose.msra.mxu0 0.0
    %5786 = vmatprep.subr.mxu0 0.0
    %5787 = vmatpush1.xpose.msra.mxu0 0.0
    %5788 = vmatprep.subr.mxu0 0.0
    %5789 = vmatpush1.xpose.msra.mxu0 0.0
    %5790 = vmatprep.subr.mxu0 0.0
    %5791 = vmatpush1.xpose.msra.mxu0 0.0
    %5792 = vmatprep.subr.mxu0 0.0
    %5793 = vmatpush1.xpose.msra.mxu0 0.0
    %5794 = vmatprep.subr.mxu0 0.0
    %5795 = vmatpush1.xpose.msra.mxu0 0.0
    %5796 = vmatprep.subr.mxu0 0.0
    %5797 = vmatpush1.xpose.msra.mxu0 0.0
    %5798 = vmatprep.subr.mxu0 0.0
    %5799 = vmatpush1.xpose.msra.mxu0 0.0
    %5800 = vmatprep.subr.mxu0 0.0
    %5801 = vmatpush1.xpose.msra.mxu0 0.0
    %5802 = vmatprep.subr.mxu0 0.0
    %5803 = vmatpush1.xpose.msra.mxu0 0.0
    %5804 = vmatprep.subr.mxu0 0.0
    %5805 = vmatpush1.xpose.msra.mxu0 0.0
    %5806 = vmatprep.subr.mxu0 0.0
    %5807 = vmatpush1.xpose.msra.mxu0 0.0
    %5808 = vmatprep.subr.mxu0 0.0
    %5809 = vmatpush1.xpose.msra.mxu0 0.0
    %5810 = vmatprep.subr.mxu0 0.0
    %5811 = vmatpush1.xpose.msra.mxu0 0.0
    %5812 = vmatprep.subr.mxu0 0.0
    %5813 = vmatpush1.xpose.msra.mxu0 0.0
    %5814 = vmatprep.subr.mxu0 0.0
    %5815 = vmatpush1.xpose.msra.mxu0 0.0
    %5816 = vmatprep.subr.mxu0 0.0
    %5817 = vmatpush1.xpose.msra.mxu0 0.0
    %5818 = vmatprep.subr.mxu0 0.0
    %5819 = vmatpush1.xpose.msra.mxu0 0.0
    %5820 = vmatprep.subr.mxu0 0.0
    %5821 = vmatpush1.xpose.msra.mxu0 0.0
    %5822 = vmatprep.subr.mxu0 0.0
    %5823 = vmatpush1.xpose.msra.mxu0 0.0
    %5824 = vmatprep.subr.mxu0 0.0
    %5825 = vmatpush1.xpose.msra.mxu0 0.0
    %5826 = vmatprep.subr.mxu0 0.0
    %5827 = vmatpush1.xpose.msra.mxu0 0.0
    %5828 = vmatprep.subr.mxu0 0.0
    %5829 = vmatpush1.xpose.msra.mxu0 0.0
    %5830 = vmatprep.mubr.f32.mxu0 0.0
    %5831 = vmatmul.mubr.f32.gmra.mrb[0].mxu0 %v5761
    %v5832 = vpop.f32.mrb[0].mxu0
    %v5833 = vadd.f32 %v217, %v5832
    %v5834 = vpop.f32.mrb[0].mxu0
    %5835 = vmatprep.mubr.f32.mxu0 0.0
    %5836 = vmatmul.mubr.f32.gmra.mrb[0].mxu0 %v5764
    %v5837 = vpop.f32.mrb[0].mxu0
    %v5838 = vadd.f32 %v218, %v5837
    %v5839 = vpop.f32.mrb[0].mxu0
    %5840 = vdwg.mxu0
    %v5841 = vsel %vm171, %v5833, -inf
    %5842 = vmax.xlane.f32.xlu0 %v5841
    %v5843 = vpop.xlane.xlu0 %5842
    %v5844 = vsel %vm171, %v5838, -inf
    %5845 = vmax.xlane.f32.xlu0 %v5844
    %v5846 = vpop.xlane.xlu0 %5845
    %v5847 = vsub.f32 %v5833, %v5843
    %v5848 = vsub.f32 %v5838, %v5846
    %v5849 = vmul.f32 %v5847, 1.442695
    %v5850 = vpow.pop %v5849
    %v5851 = vmul.f32 %v5848, 1.442695
    %v5852 = vpow.pop %v5851
    %v5853 = vsel %vm171, %v5850, 0.0
    %5854 = vadd.xlane.f32.xlu0 %v5853
    %v5855 = vpop.xlane.xlu0 %5854
    %v5856 = vsel %vm171, %v5852, 0.0
    %5857 = vadd.xlane.f32.xlu0 %v5856
    %v5858 = vpop.xlane.xlu0 %5857
    %v5859 = vrcp.pop %v5855
    %v5860 = vrcp.pop %v5858
    %v5861 = vmul.f32 %v5850, %v5859
    %v5862 = vmul.f32 %v5852, %v5860
    %s5863 = scalar_lea.vmem [#allocation10], 192
    %v5864 = vld [vmem:[%s5863] sm:$0xff]
    %v5865 = vld [vmem:[%s5863 + $0x8] sm:$0xff]
    %v5866 = vld [vmem:[%s5863 + $0x10] sm:$0xff]
    %v5867 = vld [vmem:[%s5863 + $0x18] sm:$0xff]
    %5868 = vmatprep.subr.mxu0 0.0
    %5869 = vmatpush1.msra.mxu0 %v5864
    %5870 = vmatprep.subr.mxu0 0.0
    %5871 = vmatpush1.msra.mxu0 %v5865
    %5872 = vmatprep.subr.mxu0 0.0
    %5873 = vmatpush1.msra.mxu0 %v5866
    %5874 = vmatprep.subr.mxu0 0.0
    %5875 = vmatpush1.msra.mxu0 %v5867
    %5876 = vmatprep.subr.mxu0 0.0
    %5877 = vmatpush1.msra.mxu0 0.0
    %5878 = vmatprep.subr.mxu0 0.0
    %5879 = vmatpush1.msra.mxu0 0.0
    %5880 = vmatprep.subr.mxu0 0.0
    %5881 = vmatpush1.msra.mxu0 0.0
    %5882 = vmatprep.subr.mxu0 0.0
    %5883 = vmatpush1.msra.mxu0 0.0
    %5884 = vmatprep.subr.mxu0 0.0
    %5885 = vmatpush1.msra.mxu0 0.0
    %5886 = vmatprep.subr.mxu0 0.0
    %5887 = vmatpush1.msra.mxu0 0.0
    %5888 = vmatprep.subr.mxu0 0.0
    %5889 = vmatpush1.msra.mxu0 0.0
    %5890 = vmatprep.subr.mxu0 0.0
    %5891 = vmatpush1.msra.mxu0 0.0
    %5892 = vmatprep.subr.mxu0 0.0
    %5893 = vmatpush1.msra.mxu0 0.0
    %5894 = vmatprep.subr.mxu0 0.0
    %5895 = vmatpush1.msra.mxu0 0.0
    %5896 = vmatprep.subr.mxu0 0.0
    %5897 = vmatpush1.msra.mxu0 0.0
    %5898 = vmatprep.subr.mxu0 0.0
    %5899 = vmatpush1.msra.mxu0 0.0
    %5900 = vmatprep.subr.mxu0 0.0
    %5901 = vmatpush1.msra.mxu0 0.0
    %5902 = vmatprep.subr.mxu0 0.0
    %5903 = vmatpush1.msra.mxu0 0.0
    %5904 = vmatprep.subr.mxu0 0.0
    %5905 = vmatpush1.msra.mxu0 0.0
    %5906 = vmatprep.subr.mxu0 0.0
    %5907 = vmatpush1.msra.mxu0 0.0
    %5908 = vmatprep.subr.mxu0 0.0
    %5909 = vmatpush1.msra.mxu0 0.0
    %5910 = vmatprep.subr.mxu0 0.0
    %5911 = vmatpush1.msra.mxu0 0.0
    %5912 = vmatprep.subr.mxu0 0.0
    %5913 = vmatpush1.msra.mxu0 0.0
    %5914 = vmatprep.subr.mxu0 0.0
    %5915 = vmatpush1.msra.mxu0 0.0
    %5916 = vmatprep.subr.mxu0 0.0
    %5917 = vmatpush1.msra.mxu0 0.0
    %5918 = vmatprep.subr.mxu0 0.0
    %5919 = vmatpush1.msra.mxu0 0.0
    %5920 = vmatprep.subr.mxu0 0.0
    %5921 = vmatpush1.msra.mxu0 0.0
    %5922 = vmatprep.subr.mxu0 0.0
    %5923 = vmatpush1.msra.mxu0 0.0
    %5924 = vmatprep.subr.mxu0 0.0
    %5925 = vmatpush1.msra.mxu0 0.0
    %5926 = vmatprep.subr.mxu0 0.0
    %5927 = vmatpush1.msra.mxu0 0.0
    %5928 = vmatprep.subr.mxu0 0.0
    %5929 = vmatpush1.msra.mxu0 0.0
    %5930 = vmatprep.subr.mxu0 0.0
    %5931 = vmatpush1.msra.mxu0 0.0
    %5932 = vmatprep.mubr.f32.mxu0 0.0
    %5933 = vmatmul.mubr.f32.gmra.mrb[0].mxu0 %v1788
    %v5934 = vpop.f32.mrb[0].mxu0
    %v5935 = vadd.f32 0.0, %v5934
    %v5936 = vpop.f32.mrb[0].mxu0
    %5937 = vmatprep.mubr.f32.mxu0 0.0
    %5938 = vmatmul.mubr.f32.gmra.mrb[0].mxu0 %v1791
    %v5939 = vpop.f32.mrb[0].mxu0
    %v5940 = vadd.f32 0.0, %v5939
    %v5941 = vpop.f32.mrb[0].mxu0
    %5942 = vmatprep.mubr.f32.mxu0 0.0
    %5943 = vmatmul.mubr.f32.gmra.mrb[0].mxu0 %v1794
    %v5944 = vpop.f32.mrb[0].mxu0
    %v5945 = vadd.f32 0.0, %v5944
    %v5946 = vpop.f32.mrb[0].mxu0
    %5947 = vmatprep.mubr.f32.mxu0 0.0
    %5948 = vmatmul.mubr.f32.gmra.mrb[0].mxu0 %v1797
    %v5949 = vpop.f32.mrb[0].mxu0
    %v5950 = vadd.f32 0.0, %v5949
    %v5951 = vpop.f32.mrb[0].mxu0
    %5952 = vdwg.mxu0
    %v5954 = vsel %vm171, %v5861, 0
    %v5957 = vsel %vm171, %v5862, 0
    %5959 = vmatprep.subr.mxu0 0.0
    %5960 = vmatpush1.msra.mxu0 %v5935
    %5961 = vmatprep.subr.mxu0 0.0
    %5962 = vmatpush1.msra.mxu0 %v5940
    %5963 = vmatprep.subr.mxu0 0.0
    %5964 = vmatpush1.msra.mxu0 %v5945
    %5965 = vmatprep.subr.mxu0 0.0
    %5966 = vmatpush1.msra.mxu0 %v5950
    %5967 = vmatprep.subr.mxu0 0.0
    %5968 = vmatpush1.msra.mxu0 0.0
    %5969 = vmatprep.subr.mxu0 0.0
    %5970 = vmatpush1.msra.mxu0 0.0
    %5971 = vmatprep.subr.mxu0 0.0
    %5972 = vmatpush1.msra.mxu0 0.0
    %5973 = vmatprep.subr.mxu0 0.0
    %5974 = vmatpush1.msra.mxu0 0.0
    %5975 = vmatprep.subr.mxu0 0.0
    %5976 = vmatpush1.msra.mxu0 0.0
    %5977 = vmatprep.subr.mxu0 0.0
    %5978 = vmatpush1.msra.mxu0 0.0
    %5979 = vmatprep.subr.mxu0 0.0
    %5980 = vmatpush1.msra.mxu0 0.0
    %5981 = vmatprep.subr.mxu0 0.0
    %5982 = vmatpush1.msra.mxu0 0.0
    %5983 = vmatprep.subr.mxu0 0.0
    %5984 = vmatpush1.msra.mxu0 0.0
    %5985 = vmatprep.subr.mxu0 0.0
    %5986 = vmatpush1.msra.mxu0 0.0
    %5987 = vmatprep.subr.mxu0 0.0
    %5988 = vmatpush1.msra.mxu0 0.0
    %5989 = vmatprep.subr.mxu0 0.0
    %5990 = vmatpush1.msra.mxu0 0.0
    %5991 = vmatprep.subr.mxu0 0.0
    %5992 = vmatpush1.msra.mxu0 0.0
    %5993 = vmatprep.subr.mxu0 0.0
    %5994 = vmatpush1.msra.mxu0 0.0
    %5995 = vmatprep.subr.mxu0 0.0
    %5996 = vmatpush1.msra.mxu0 0.0
    %5997 = vmatprep.subr.mxu0 0.0
    %5998 = vmatpush1.msra.mxu0 0.0
    %5999 = vmatprep.subr.mxu0 0.0
    %6000 = vmatpush1.msra.mxu0 0.0
    %6001 = vmatprep.subr.mxu0 0.0
    %6002 = vmatpush1.msra.mxu0 0.0
    %6003 = vmatprep.subr.mxu0 0.0
    %6004 = vmatpush1.msra.mxu0 0.0
    %6005 = vmatprep.subr.mxu0 0.0
    %6006 = vmatpush1.msra.mxu0 0.0
    %6007 = vmatprep.subr.mxu0 0.0
    %6008 = vmatpush1.msra.mxu0 0.0
    %6009 = vmatprep.subr.mxu0 0.0
    %6010 = vmatpush1.msra.mxu0 0.0
    %6011 = vmatprep.subr.mxu0 0.0
    %6012 = vmatpush1.msra.mxu0 0.0
    %6013 = vmatprep.subr.mxu0 0.0
    %6014 = vmatpush1.msra.mxu0 0.0
    %6015 = vmatprep.subr.mxu0 0.0
    %6016 = vmatpush1.msra.mxu0 0.0
    %6017 = vmatprep.subr.mxu0 0.0
    %6018 = vmatpush1.msra.mxu0 0.0
    %6019 = vmatprep.subr.mxu0 0.0
    %6020 = vmatpush1.msra.mxu0 0.0
    %6021 = vmatprep.subr.mxu0 0.0
    %6022 = vmatpush1.msra.mxu0 0.0
    %6023 = vmatprep.mubr.f32.mxu0 0.0
    %6024 = vmatmul.mubr.f32.gmra.mrb[0].mxu0 %v5954
    %v6025 = vpop.f32.mrb[0].mxu0
    %v6026 = vadd.f32 0.0, %v6025
    %v6027 = vpop.f32.mrb[0].mxu0
    %6028 = vmatprep.mubr.f32.mxu0 0.0
    %6029 = vmatmul.mubr.f32.gmra.mrb[0].mxu0 %v5957
    %v6030 = vpop.f32.mrb[0].mxu0
    %v6031 = vadd.f32 0.0, %v6030
    %v6032 = vpop.f32.mrb[0].mxu0
    %6033 = vdwg.mxu0
    %v6034 = vadd.f32 %v5670, %v6026
    %v6035 = vadd.f32 %v5671, %v6031
    %s6036 = scalar_lea.vmem %s9, 224
    %v6037 = vld [vmem:[%s6036] sm:$0xff]
    %v6038 = vld [vmem:[%s6036 + $0x8] sm:$0xff]
    %v6039 = vld [vmem:[%s6036 + $0x10] sm:$0xff]
    %v6040 = vld [vmem:[%s6036 + $0x18] sm:$0xff]
    %s6041 = scalar_lea.vmem [#allocation8], 7
    %v6042 = vld [vmem:[%s6041] sm:$0x1]
    %v6044 = vlaneseq
    %v6045 = vshrl.u32 %v6044, 7
    %v6046 = vsub.s32 0, %v6045
    %v6047 = vrot.slane %v6042, %v6046
    %6049 = vmatprep.subr.mxu0 0.0
    %6050 = vmatpush1.msra.mxu0 %v6037
    %6051 = vmatprep.subr.mxu0 0.0
    %6052 = vmatpush1.msra.mxu0 %v6038
    %6053 = vmatprep.subr.mxu0 0.0
    %6054 = vmatpush1.msra.mxu0 %v6039
    %6055 = vmatprep.subr.mxu0 0.0
    %6056 = vmatpush1.msra.mxu0 %v6040
    %6057 = vmatprep.subr.mxu0 0.0
    %6058 = vmatpush1.msra.mxu0 0.0
    %6059 = vmatprep.subr.mxu0 0.0
    %6060 = vmatpush1.msra.mxu0 0.0
    %6061 = vmatprep.subr.mxu0 0.0
    %6062 = vmatpush1.msra.mxu0 0.0
    %6063 = vmatprep.subr.mxu0 0.0
    %6064 = vmatpush1.msra.mxu0 0.0
    %6065 = vmatprep.subr.mxu0 0.0
    %6066 = vmatpush1.msra.mxu0 0.0
    %6067 = vmatprep.subr.mxu0 0.0
    %6068 = vmatpush1.msra.mxu0 0.0
    %6069 = vmatprep.subr.mxu0 0.0
    %6070 = vmatpush1.msra.mxu0 0.0
    %6071 = vmatprep.subr.mxu0 0.0
    %6072 = vmatpush1.msra.mxu0 0.0
    %6073 = vmatprep.subr.mxu0 0.0
    %6074 = vmatpush1.msra.mxu0 0.0
    %6075 = vmatprep.subr.mxu0 0.0
    %6076 = vmatpush1.msra.mxu0 0.0
    %6077 = vmatprep.subr.mxu0 0.0
    %6078 = vmatpush1.msra.mxu0 0.0
    %6079 = vmatprep.subr.mxu0 0.0
    %6080 = vmatpush1.msra.mxu0 0.0
    %6081 = vmatprep.subr.mxu0 0.0
    %6082 = vmatpush1.msra.mxu0 0.0
    %6083 = vmatprep.subr.mxu0 0.0
    %6084 = vmatpush1.msra.mxu0 0.0
    %6085 = vmatprep.subr.mxu0 0.0
    %6086 = vmatpush1.msra.mxu0 0.0
    %6087 = vmatprep.subr.mxu0 0.0
    %6088 = vmatpush1.msra.mxu0 0.0
    %6089 = vmatprep.subr.mxu0 0.0
    %6090 = vmatpush1.msra.mxu0 0.0
    %6091 = vmatprep.subr.mxu0 0.0
    %6092 = vmatpush1.msra.mxu0 0.0
    %6093 = vmatprep.subr.mxu0 0.0
    %6094 = vmatpush1.msra.mxu0 0.0
    %6095 = vmatprep.subr.mxu0 0.0
    %6096 = vmatpush1.msra.mxu0 0.0
    %6097 = vmatprep.subr.mxu0 0.0
    %6098 = vmatpush1.msra.mxu0 0.0
    %6099 = vmatprep.subr.mxu0 0.0
    %6100 = vmatpush1.msra.mxu0 0.0
    %6101 = vmatprep.subr.mxu0 0.0
    %6102 = vmatpush1.msra.mxu0 0.0
    %6103 = vmatprep.subr.mxu0 0.0
    %6104 = vmatpush1.msra.mxu0 0.0
    %6105 = vmatprep.subr.mxu0 0.0
    %6106 = vmatpush1.msra.mxu0 0.0
    %6107 = vmatprep.subr.mxu0 0.0
    %6108 = vmatpush1.msra.mxu0 0.0
    %6109 = vmatprep.subr.mxu0 0.0
    %6110 = vmatpush1.msra.mxu0 0.0
    %6111 = vmatprep.subr.mxu0 0.0
    %6112 = vmatpush1.msra.mxu0 0.0
    %6113 = vmatprep.mubr.f32.mxu0 0.0
    %6114 = vmatmul.mubr.f32.gmra.mrb[0].mxu0 %v4946
    %v6115 = vpop.f32.mrb[0].mxu0
    %v6116 = vadd.f32 %v6047, %v6115
    %v6117 = vpop.f32.mrb[0].mxu0
    %6118 = vmatprep.mubr.f32.mxu0 0.0
    %6119 = vmatmul.mubr.f32.gmra.mrb[0].mxu0 %v4949
    %v6120 = vpop.f32.mrb[0].mxu0
    %v6121 = vadd.f32 %v6047, %v6120
    %v6122 = vpop.f32.mrb[0].mxu0
    %6123 = vdwg.mxu0
    %v6125 = vsel %vm171, %v6116, 0
    %v6128 = vsel %vm171, %v6121, 0
    %6130 = vmatprep.subr.mxu0 0.0
    %6131 = vmatpush1.xpose.msra.mxu0 %v1788
    %6132 = vmatprep.subr.mxu0 0.0
    %6133 = vmatpush1.xpose.msra.mxu0 %v1791
    %6134 = vmatprep.subr.mxu0 0.0
    %6135 = vmatpush1.xpose.msra.mxu0 %v1794
    %6136 = vmatprep.subr.mxu0 0.0
    %6137 = vmatpush1.xpose.msra.mxu0 %v1797
    %6138 = vmatprep.subr.mxu0 0.0
    %6139 = vmatpush1.xpose.msra.mxu0 0.0
    %6140 = vmatprep.subr.mxu0 0.0
    %6141 = vmatpush1.xpose.msra.mxu0 0.0
    %6142 = vmatprep.subr.mxu0 0.0
    %6143 = vmatpush1.xpose.msra.mxu0 0.0
    %6144 = vmatprep.subr.mxu0 0.0
    %6145 = vmatpush1.xpose.msra.mxu0 0.0
    %6146 = vmatprep.subr.mxu0 0.0
    %6147 = vmatpush1.xpose.msra.mxu0 0.0
    %6148 = vmatprep.subr.mxu0 0.0
    %6149 = vmatpush1.xpose.msra.mxu0 0.0
    %6150 = vmatprep.subr.mxu0 0.0
    %6151 = vmatpush1.xpose.msra.mxu0 0.0
    %6152 = vmatprep.subr.mxu0 0.0
    %6153 = vmatpush1.xpose.msra.mxu0 0.0
    %6154 = vmatprep.subr.mxu0 0.0
    %6155 = vmatpush1.xpose.msra.mxu0 0.0
    %6156 = vmatprep.subr.mxu0 0.0
    %6157 = vmatpush1.xpose.msra.mxu0 0.0
    %6158 = vmatprep.subr.mxu0 0.0
    %6159 = vmatpush1.xpose.msra.mxu0 0.0
    %6160 = vmatprep.subr.mxu0 0.0
    %6161 = vmatpush1.xpose.msra.mxu0 0.0
    %6162 = vmatprep.subr.mxu0 0.0
    %6163 = vmatpush1.xpose.msra.mxu0 0.0
    %6164 = vmatprep.subr.mxu0 0.0
    %6165 = vmatpush1.xpose.msra.mxu0 0.0
    %6166 = vmatprep.subr.mxu0 0.0
    %6167 = vmatpush1.xpose.msra.mxu0 0.0
    %6168 = vmatprep.subr.mxu0 0.0
    %6169 = vmatpush1.xpose.msra.mxu0 0.0
    %6170 = vmatprep.subr.mxu0 0.0
    %6171 = vmatpush1.xpose.msra.mxu0 0.0
    %6172 = vmatprep.subr.mxu0 0.0
    %6173 = vmatpush1.xpose.msra.mxu0 0.0
    %6174 = vmatprep.subr.mxu0 0.0
    %6175 = vmatpush1.xpose.msra.mxu0 0.0
    %6176 = vmatprep.subr.mxu0 0.0
    %6177 = vmatpush1.xpose.msra.mxu0 0.0
    %6178 = vmatprep.subr.mxu0 0.0
    %6179 = vmatpush1.xpose.msra.mxu0 0.0
    %6180 = vmatprep.subr.mxu0 0.0
    %6181 = vmatpush1.xpose.msra.mxu0 0.0
    %6182 = vmatprep.subr.mxu0 0.0
    %6183 = vmatpush1.xpose.msra.mxu0 0.0
    %6184 = vmatprep.subr.mxu0 0.0
    %6185 = vmatpush1.xpose.msra.mxu0 0.0
    %6186 = vmatprep.subr.mxu0 0.0
    %6187 = vmatpush1.xpose.msra.mxu0 0.0
    %6188 = vmatprep.subr.mxu0 0.0
    %6189 = vmatpush1.xpose.msra.mxu0 0.0
    %6190 = vmatprep.subr.mxu0 0.0
    %6191 = vmatpush1.xpose.msra.mxu0 0.0
    %6192 = vmatprep.subr.mxu0 0.0
    %6193 = vmatpush1.xpose.msra.mxu0 0.0
    %6194 = vmatprep.mubr.f32.mxu0 0.0
    %6195 = vmatmul.mubr.f32.gmra.mrb[0].mxu0 %v6125
    %v6196 = vpop.f32.mrb[0].mxu0
    %v6197 = vadd.f32 %v217, %v6196
    %v6198 = vpop.f32.mrb[0].mxu0
    %6199 = vmatprep.mubr.f32.mxu0 0.0
    %6200 = vmatmul.mubr.f32.gmra.mrb[0].mxu0 %v6128
    %v6201 = vpop.f32.mrb[0].mxu0
    %v6202 = vadd.f32 %v218, %v6201
    %v6203 = vpop.f32.mrb[0].mxu0
    %6204 = vdwg.mxu0
    %v6205 = vsel %vm171, %v6197, -inf
    %6206 = vmax.xlane.f32.xlu0 %v6205
    %v6207 = vpop.xlane.xlu0 %6206
    %v6208 = vsel %vm171, %v6202, -inf
    %6209 = vmax.xlane.f32.xlu0 %v6208
    %v6210 = vpop.xlane.xlu0 %6209
    %v6211 = vsub.f32 %v6197, %v6207
    %v6212 = vsub.f32 %v6202, %v6210
    %v6213 = vmul.f32 %v6211, 1.442695
    %v6214 = vpow.pop %v6213
    %v6215 = vmul.f32 %v6212, 1.442695
    %v6216 = vpow.pop %v6215
    %v6217 = vsel %vm171, %v6214, 0.0
    %6218 = vadd.xlane.f32.xlu0 %v6217
    %v6219 = vpop.xlane.xlu0 %6218
    %v6220 = vsel %vm171, %v6216, 0.0
    %6221 = vadd.xlane.f32.xlu0 %v6220
    %v6222 = vpop.xlane.xlu0 %6221
    %v6223 = vrcp.pop %v6219
    %v6224 = vrcp.pop %v6222
    %v6225 = vmul.f32 %v6214, %v6223
    %v6226 = vmul.f32 %v6216, %v6224
    %s6227 = scalar_lea.vmem [#allocation10], 224
    %v6228 = vld [vmem:[%s6227] sm:$0xff]
    %v6229 = vld [vmem:[%s6227 + $0x8] sm:$0xff]
    %v6230 = vld [vmem:[%s6227 + $0x10] sm:$0xff]
    %v6231 = vld [vmem:[%s6227 + $0x18] sm:$0xff]
    %6232 = vmatprep.subr.mxu0 0.0
    %6233 = vmatpush1.msra.mxu0 %v6228
    %6234 = vmatprep.subr.mxu0 0.0
    %6235 = vmatpush1.msra.mxu0 %v6229
    %6236 = vmatprep.subr.mxu0 0.0
    %6237 = vmatpush1.msra.mxu0 %v6230
    %6238 = vmatprep.subr.mxu0 0.0
    %6239 = vmatpush1.msra.mxu0 %v6231
    %6240 = vmatprep.subr.mxu0 0.0
    %6241 = vmatpush1.msra.mxu0 0.0
    %6242 = vmatprep.subr.mxu0 0.0
    %6243 = vmatpush1.msra.mxu0 0.0
    %6244 = vmatprep.subr.mxu0 0.0
    %6245 = vmatpush1.msra.mxu0 0.0
    %6246 = vmatprep.subr.mxu0 0.0
    %6247 = vmatpush1.msra.mxu0 0.0
    %6248 = vmatprep.subr.mxu0 0.0
    %6249 = vmatpush1.msra.mxu0 0.0
    %6250 = vmatprep.subr.mxu0 0.0
    %6251 = vmatpush1.msra.mxu0 0.0
    %6252 = vmatprep.subr.mxu0 0.0
    %6253 = vmatpush1.msra.mxu0 0.0
    %6254 = vmatprep.subr.mxu0 0.0
    %6255 = vmatpush1.msra.mxu0 0.0
    %6256 = vmatprep.subr.mxu0 0.0
    %6257 = vmatpush1.msra.mxu0 0.0
    %6258 = vmatprep.subr.mxu0 0.0
    %6259 = vmatpush1.msra.mxu0 0.0
    %6260 = vmatprep.subr.mxu0 0.0
    %6261 = vmatpush1.msra.mxu0 0.0
    %6262 = vmatprep.subr.mxu0 0.0
    %6263 = vmatpush1.msra.mxu0 0.0
    %6264 = vmatprep.subr.mxu0 0.0
    %6265 = vmatpush1.msra.mxu0 0.0
    %6266 = vmatprep.subr.mxu0 0.0
    %6267 = vmatpush1.msra.mxu0 0.0
    %6268 = vmatprep.subr.mxu0 0.0
    %6269 = vmatpush1.msra.mxu0 0.0
    %6270 = vmatprep.subr.mxu0 0.0
    %6271 = vmatpush1.msra.mxu0 0.0
    %6272 = vmatprep.subr.mxu0 0.0
    %6273 = vmatpush1.msra.mxu0 0.0
    %6274 = vmatprep.subr.mxu0 0.0
    %6275 = vmatpush1.msra.mxu0 0.0
    %6276 = vmatprep.subr.mxu0 0.0
    %6277 = vmatpush1.msra.mxu0 0.0
    %6278 = vmatprep.subr.mxu0 0.0
    %6279 = vmatpush1.msra.mxu0 0.0
    %6280 = vmatprep.subr.mxu0 0.0
    %6281 = vmatpush1.msra.mxu0 0.0
    %6282 = vmatprep.subr.mxu0 0.0
    %6283 = vmatpush1.msra.mxu0 0.0
    %6284 = vmatprep.subr.mxu0 0.0
    %6285 = vmatpush1.msra.mxu0 0.0
    %6286 = vmatprep.subr.mxu0 0.0
    %6287 = vmatpush1.msra.mxu0 0.0
    %6288 = vmatprep.subr.mxu0 0.0
    %6289 = vmatpush1.msra.mxu0 0.0
    %6290 = vmatprep.subr.mxu0 0.0
    %6291 = vmatpush1.msra.mxu0 0.0
    %6292 = vmatprep.subr.mxu0 0.0
    %6293 = vmatpush1.msra.mxu0 0.0
    %6294 = vmatprep.subr.mxu0 0.0
    %6295 = vmatpush1.msra.mxu0 0.0
    %6296 = vmatprep.mubr.f32.mxu0 0.0
    %6297 = vmatmul.mubr.f32.gmra.mrb[0].mxu0 %v1788
    %v6298 = vpop.f32.mrb[0].mxu0
    %v6299 = vadd.f32 0.0, %v6298
    %v6300 = vpop.f32.mrb[0].mxu0
    %6301 = vmatprep.mubr.f32.mxu0 0.0
    %6302 = vmatmul.mubr.f32.gmra.mrb[0].mxu0 %v1791
    %v6303 = vpop.f32.mrb[0].mxu0
    %v6304 = vadd.f32 0.0, %v6303
    %v6305 = vpop.f32.mrb[0].mxu0
    %6306 = vmatprep.mubr.f32.mxu0 0.0
    %6307 = vmatmul.mubr.f32.gmra.mrb[0].mxu0 %v1794
    %v6308 = vpop.f32.mrb[0].mxu0
    %v6309 = vadd.f32 0.0, %v6308
    %v6310 = vpop.f32.mrb[0].mxu0
    %6311 = vmatprep.mubr.f32.mxu0 0.0
    %6312 = vmatmul.mubr.f32.gmra.mrb[0].mxu0 %v1797
    %v6313 = vpop.f32.mrb[0].mxu0
    %v6314 = vadd.f32 0.0, %v6313
    %v6315 = vpop.f32.mrb[0].mxu0
    %6316 = vdwg.mxu0
    %v6318 = vsel %vm171, %v6225, 0
    %v6321 = vsel %vm171, %v6226, 0
    %6323 = vmatprep.subr.mxu0 0.0
    %6324 = vmatpush1.msra.mxu0 %v6299
    %6325 = vmatprep.subr.mxu0 0.0
    %6326 = vmatpush1.msra.mxu0 %v6304
    %6327 = vmatprep.subr.mxu0 0.0
    %6328 = vmatpush1.msra.mxu0 %v6309
    %6329 = vmatprep.subr.mxu0 0.0
    %6330 = vmatpush1.msra.mxu0 %v6314
    %6331 = vmatprep.subr.mxu0 0.0
    %6332 = vmatpush1.msra.mxu0 0.0
    %6333 = vmatprep.subr.mxu0 0.0
    %6334 = vmatpush1.msra.mxu0 0.0
    %6335 = vmatprep.subr.mxu0 0.0
    %6336 = vmatpush1.msra.mxu0 0.0
    %6337 = vmatprep.subr.mxu0 0.0
    %6338 = vmatpush1.msra.mxu0 0.0
    %6339 = vmatprep.subr.mxu0 0.0
    %6340 = vmatpush1.msra.mxu0 0.0
    %6341 = vmatprep.subr.mxu0 0.0
    %6342 = vmatpush1.msra.mxu0 0.0
    %6343 = vmatprep.subr.mxu0 0.0
    %6344 = vmatpush1.msra.mxu0 0.0
    %6345 = vmatprep.subr.mxu0 0.0
    %6346 = vmatpush1.msra.mxu0 0.0
    %6347 = vmatprep.subr.mxu0 0.0
    %6348 = vmatpush1.msra.mxu0 0.0
    %6349 = vmatprep.subr.mxu0 0.0
    %6350 = vmatpush1.msra.mxu0 0.0
    %6351 = vmatprep.subr.mxu0 0.0
    %6352 = vmatpush1.msra.mxu0 0.0
    %6353 = vmatprep.subr.mxu0 0.0
    %6354 = vmatpush1.msra.mxu0 0.0
    %6355 = vmatprep.subr.mxu0 0.0
    %6356 = vmatpush1.msra.mxu0 0.0
    %6357 = vmatprep.subr.mxu0 0.0
    %6358 = vmatpush1.msra.mxu0 0.0
    %6359 = vmatprep.subr.mxu0 0.0
    %6360 = vmatpush1.msra.mxu0 0.0
    %6361 = vmatprep.subr.mxu0 0.0
    %6362 = vmatpush1.msra.mxu0 0.0
    %6363 = vmatprep.subr.mxu0 0.0
    %6364 = vmatpush1.msra.mxu0 0.0
    %6365 = vmatprep.subr.mxu0 0.0
    %6366 = vmatpush1.msra.mxu0 0.0
    %6367 = vmatprep.subr.mxu0 0.0
    %6368 = vmatpush1.msra.mxu0 0.0
    %6369 = vmatprep.subr.mxu0 0.0
    %6370 = vmatpush1.msra.mxu0 0.0
    %6371 = vmatprep.subr.mxu0 0.0
    %6372 = vmatpush1.msra.mxu0 0.0
    %6373 = vmatprep.subr.mxu0 0.0
    %6374 = vmatpush1.msra.mxu0 0.0
    %6375 = vmatprep.subr.mxu0 0.0
    %6376 = vmatpush1.msra.mxu0 0.0
    %6377 = vmatprep.subr.mxu0 0.0
    %6378 = vmatpush1.msra.mxu0 0.0
    %6379 = vmatprep.subr.mxu0 0.0
    %6380 = vmatpush1.msra.mxu0 0.0
    %6381 = vmatprep.subr.mxu0 0.0
    %6382 = vmatpush1.msra.mxu0 0.0
    %6383 = vmatprep.subr.mxu0 0.0
    %6384 = vmatpush1.msra.mxu0 0.0
    %6385 = vmatprep.subr.mxu0 0.0
    %6386 = vmatpush1.msra.mxu0 0.0
    %6387 = vmatprep.mubr.f32.mxu0 0.0
    %6388 = vmatmul.mubr.f32.gmra.mrb[0].mxu0 %v6318
    %v6389 = vpop.f32.mrb[0].mxu0
    %v6390 = vadd.f32 0.0, %v6389
    %v6391 = vpop.f32.mrb[0].mxu0
    %6392 = vmatprep.mubr.f32.mxu0 0.0
    %6393 = vmatmul.mubr.f32.gmra.mrb[0].mxu0 %v6321
    %v6394 = vpop.f32.mrb[0].mxu0
    %v6395 = vadd.f32 0.0, %v6394
    %v6396 = vpop.f32.mrb[0].mxu0
    %6397 = vdwg.mxu0
    %v6398 = vadd.f32 %v6034, %v6390
    %v6399 = vadd.f32 %v6035, %v6395
    %v6400 = vadd.f32 %v4928, %v6398
    %v6401 = vadd.f32 %v4929, %v6399
    %v6402 = vld [vmem:[%s4889 + $0x2] sm:$0x1]
    %v6403 = vld [vmem:[%s4889 + $0x3] sm:$0x1]
    %v6404 = vsel %vm171, %v6400, 0.0
    %6405 = vadd.xlane.f32.xlu0 %v6404
    %v6406 = vpop.xlane.xlu0 %6405
    %v6407 = vsel %vm171, %v6401, 0.0
    %6408 = vadd.xlane.f32.xlu0 %v6407
    %v6409 = vpop.xlane.xlu0 %6408
    %v6410 = vmul.f32 %v6406, %v178
    %v6411 = vmul.f32 %v6409, %v178
    %v6412 = vsub.f32 %v6400, %v6410
    %v6413 = vsub.f32 %v6401, %v6411
    %v6414 = vmul.f32 %v6412, %v6412
    %v6415 = vmul.f32 %v6413, %v6413
    %v6416 = vsel %vm171, %v6414, 0.0
    %6417 = vadd.xlane.f32.xlu0 %v6416
    %v6418 = vpop.xlane.xlu0 %6417
    %v6419 = vsel %vm171, %v6415, 0.0
    %6420 = vadd.xlane.f32.xlu0 %v6419
    %v6421 = vpop.xlane.xlu0 %6420
    %v6422 = vmul.f32 %v6418, %v178
    %v6423 = vmul.f32 %v6421, %v178
    %v6424 = vadd.f32 %v6422, 1e-05
    %v6425 = vadd.f32 %v6423, 1e-05
    %v6426 = vrsqrt.pop %v6424
    %v6427 = vrsqrt.pop %v6425
    %v6428 = vmul.f32 %v6412, %v6426
    %v6429 = vmul.f32 %v6413, %v6427
    %v6430 = vlaneseq
    %v6431 = vshrl.u32 %v6430, 7
    %v6432 = vsub.s32 0, %v6431
    %v6433 = vrot.slane %v6402, %v6432
    %v6434 = vmul.f32 %v6428, %v6433
    %v6435 = vmul.f32 %v6429, %v6433
    %v6436 = vlaneseq
    %v6437 = vshrl.u32 %v6436, 7
    %v6438 = vsub.s32 0, %v6437
    %v6439 = vrot.slane %v6403, %v6438
    %v6440 = vadd.f32 %v6434, %v6439
    %v6441 = vadd.f32 %v6435, %v6439
    %s6442 = scalar_lea.vmem %s13, 32
    %v6443 = vld [vmem:[%s6442] sm:$0xff]
    %v6444 = vld [vmem:[%s6442 + $0x8] sm:$0xff]
    %v6445 = vld [vmem:[%s6442 + $0x10] sm:$0xff]
    %v6446 = vld [vmem:[%s6442 + $0x18] sm:$0xff]
    %s6447 = scalar_lea.vmem [#allocation13], 1
    %v6448 = vld [vmem:[%s6447] sm:$0x1]
    %v6450 = vlaneseq
    %v6451 = vshrl.u32 %v6450, 7
    %v6452 = vsub.s32 0, %v6451
    %v6453 = vrot.slane %v6448, %v6452
    %v6456 = vsel %vm171, %v6440, 0
    %v6459 = vsel %vm171, %v6441, 0
    %6461 = vmatprep.subr.mxu0 0.0
    %6462 = vmatpush1.msra.mxu0 %v6443
    %6463 = vmatprep.subr.mxu0 0.0
    %6464 = vmatpush1.msra.mxu0 %v6444
    %6465 = vmatprep.subr.mxu0 0.0
    %6466 = vmatpush1.msra.mxu0 %v6445
    %6467 = vmatprep.subr.mxu0 0.0
    %6468 = vmatpush1.msra.mxu0 %v6446
    %6469 = vmatprep.subr.mxu0 0.0
    %6470 = vmatpush1.msra.mxu0 0.0
    %6471 = vmatprep.subr.mxu0 0.0
    %6472 = vmatpush1.msra.mxu0 0.0
    %6473 = vmatprep.subr.mxu0 0.0
    %6474 = vmatpush1.msra.mxu0 0.0
    %6475 = vmatprep.subr.mxu0 0.0
    %6476 = vmatpush1.msra.mxu0 0.0
    %6477 = vmatprep.subr.mxu0 0.0
    %6478 = vmatpush1.msra.mxu0 0.0
    %6479 = vmatprep.subr.mxu0 0.0
    %6480 = vmatpush1.msra.mxu0 0.0
    %6481 = vmatprep.subr.mxu0 0.0
    %6482 = vmatpush1.msra.mxu0 0.0
    %6483 = vmatprep.subr.mxu0 0.0
    %6484 = vmatpush1.msra.mxu0 0.0
    %6485 = vmatprep.subr.mxu0 0.0
    %6486 = vmatpush1.msra.mxu0 0.0
    %6487 = vmatprep.subr.mxu0 0.0
    %6488 = vmatpush1.msra.mxu0 0.0
    %6489 = vmatprep.subr.mxu0 0.0
    %6490 = vmatpush1.msra.mxu0 0.0
    %6491 = vmatprep.subr.mxu0 0.0
    %6492 = vmatpush1.msra.mxu0 0.0
    %6493 = vmatprep.subr.mxu0 0.0
    %6494 = vmatpush1.msra.mxu0 0.0
    %6495 = vmatprep.subr.mxu0 0.0
    %6496 = vmatpush1.msra.mxu0 0.0
    %6497 = vmatprep.subr.mxu0 0.0
    %6498 = vmatpush1.msra.mxu0 0.0
    %6499 = vmatprep.subr.mxu0 0.0
    %6500 = vmatpush1.msra.mxu0 0.0
    %6501 = vmatprep.subr.mxu0 0.0
    %6502 = vmatpush1.msra.mxu0 0.0
    %6503 = vmatprep.subr.mxu0 0.0
    %6504 = vmatpush1.msra.mxu0 0.0
    %6505 = vmatprep.subr.mxu0 0.0
    %6506 = vmatpush1.msra.mxu0 0.0
    %6507 = vmatprep.subr.mxu0 0.0
    %6508 = vmatpush1.msra.mxu0 0.0
    %6509 = vmatprep.subr.mxu0 0.0
    %6510 = vmatpush1.msra.mxu0 0.0
    %6511 = vmatprep.subr.mxu0 0.0
    %6512 = vmatpush1.msra.mxu0 0.0
    %6513 = vmatprep.subr.mxu0 0.0
    %6514 = vmatpush1.msra.mxu0 0.0
    %6515 = vmatprep.subr.mxu0 0.0
    %6516 = vmatpush1.msra.mxu0 0.0
    %6517 = vmatprep.subr.mxu0 0.0
    %6518 = vmatpush1.msra.mxu0 0.0
    %6519 = vmatprep.subr.mxu0 0.0
    %6520 = vmatpush1.msra.mxu0 0.0
    %6521 = vmatprep.subr.mxu0 0.0
    %6522 = vmatpush1.msra.mxu0 0.0
    %6523 = vmatprep.subr.mxu0 0.0
    %6524 = vmatpush1.msra.mxu0 0.0
    %6525 = vmatprep.mubr.f32.mxu0 0.0
    %6526 = vmatmul.mubr.f32.gmra.mrb[0].mxu0 %v6456
    %v6527 = vpop.f32.mrb[0].mxu0
    %v6528 = vadd.f32 %v6453, %v6527
    %v6529 = vpop.f32.mrb[0].mxu0
    %6530 = vmatprep.mubr.f32.mxu0 0.0
    %6531 = vmatmul.mubr.f32.gmra.mrb[0].mxu0 %v6459
    %v6532 = vpop.f32.mrb[0].mxu0
    %v6533 = vadd.f32 %v6453, %v6532
    %v6534 = vpop.f32.mrb[0].mxu0
    %6535 = vdwg.mxu0
    %v6536 = vmul.f32 %v6528, %v6528
    %v6537 = vmul.f32 %v6533, %v6533
    %v6538 = vmul.f32 %v6528, %v6536
    %v6539 = vmul.f32 %v6533, %v6537
    %v6540 = vmul.f32 %v6538, 0.044715
    %v6541 = vmul.f32 %v6539, 0.044715
    %v6542 = vadd.f32 %v6528, %v6540
    %v6543 = vadd.f32 %v6533, %v6541
    %v6544 = vmul.f32 %v6542, 0.7978846
    %v6545 = vmul.f32 %v6543, 0.7978846
    %v6546 = vtanh.pop %v6544
    %v6547 = vtanh.pop %v6545
    %v6548 = vadd.f32 %v6546, 1.0
    %v6549 = vadd.f32 %v6547, 1.0
    %v6550 = vmul.f32 %v6548, 0.5
    %v6551 = vmul.f32 %v6549, 0.5
    %v6552 = vmul.f32 %v6528, %v6550
    %v6553 = vmul.f32 %v6533, %v6551
    %s6554 = scalar_lea.vmem %s15, 64
    %v6555 = vld [vmem:[%s6554] sm:$0xff]
    %v6556 = vld [vmem:[%s6554 + $0x8] sm:$0xff]
    %v6557 = vld [vmem:[%s6554 + $0x10] sm:$0xff]
    %v6558 = vld [vmem:[%s6554 + $0x18] sm:$0xff]
    %v6559 = vld [vmem:[%s6554 + $0x20] sm:$0xff]
    %v6560 = vld [vmem:[%s6554 + $0x28] sm:$0xff]
    %v6561 = vld [vmem:[%s6554 + $0x30] sm:$0xff]
    %v6562 = vld [vmem:[%s6554 + $0x38] sm:$0xff]
    %s6563 = scalar_lea.vmem [#allocation14], 1
    %v6564 = vld [vmem:[%s6563] sm:$0x1]
    %v6566 = vlaneseq
    %v6567 = vshrl.u32 %v6566, 7
    %v6568 = vsub.s32 0, %v6567
    %v6569 = vrot.slane %v6564, %v6568
    %v6572 = vsel %vm3333, %v6552, 0
    %v6575 = vsel %vm3333, %v6553, 0
    %6577 = vmatprep.subr.mxu0 0.0
    %6578 = vmatpush1.msra.mxu0 %v6555
    %6579 = vmatprep.subr.mxu0 0.0
    %6580 = vmatpush1.msra.mxu0 %v6556
    %6581 = vmatprep.subr.mxu0 0.0
    %6582 = vmatpush1.msra.mxu0 %v6557
    %6583 = vmatprep.subr.mxu0 0.0
    %6584 = vmatpush1.msra.mxu0 %v6558
    %6585 = vmatprep.subr.mxu0 0.0
    %6586 = vmatpush1.msra.mxu0 %v6559
    %6587 = vmatprep.subr.mxu0 0.0
    %6588 = vmatpush1.msra.mxu0 %v6560
    %6589 = vmatprep.subr.mxu0 0.0
    %6590 = vmatpush1.msra.mxu0 %v6561
    %6591 = vmatprep.subr.mxu0 0.0
    %6592 = vmatpush1.msra.mxu0 %v6562
    %6593 = vmatprep.subr.mxu0 0.0
    %6594 = vmatpush1.msra.mxu0 0.0
    %6595 = vmatprep.subr.mxu0 0.0
    %6596 = vmatpush1.msra.mxu0 0.0
    %6597 = vmatprep.subr.mxu0 0.0
    %6598 = vmatpush1.msra.mxu0 0.0
    %6599 = vmatprep.subr.mxu0 0.0
    %6600 = vmatpush1.msra.mxu0 0.0
    %6601 = vmatprep.subr.mxu0 0.0
    %6602 = vmatpush1.msra.mxu0 0.0
    %6603 = vmatprep.subr.mxu0 0.0
    %6604 = vmatpush1.msra.mxu0 0.0
    %6605 = vmatprep.subr.mxu0 0.0
    %6606 = vmatpush1.msra.mxu0 0.0
    %6607 = vmatprep.subr.mxu0 0.0
    %6608 = vmatpush1.msra.mxu0 0.0
    %6609 = vmatprep.subr.mxu0 0.0
    %6610 = vmatpush1.msra.mxu0 0.0
    %6611 = vmatprep.subr.mxu0 0.0
    %6612 = vmatpush1.msra.mxu0 0.0
    %6613 = vmatprep.subr.mxu0 0.0
    %6614 = vmatpush1.msra.mxu0 0.0
    %6615 = vmatprep.subr.mxu0 0.0
    %6616 = vmatpush1.msra.mxu0 0.0
    %6617 = vmatprep.subr.mxu0 0.0
    %6618 = vmatpush1.msra.mxu0 0.0
    %6619 = vmatprep.subr.mxu0 0.0
    %6620 = vmatpush1.msra.mxu0 0.0
    %6621 = vmatprep.subr.mxu0 0.0
    %6622 = vmatpush1.msra.mxu0 0.0
    %6623 = vmatprep.subr.mxu0 0.0
    %6624 = vmatpush1.msra.mxu0 0.0
    %6625 = vmatprep.subr.mxu0 0.0
    %6626 = vmatpush1.msra.mxu0 0.0
    %6627 = vmatprep.subr.mxu0 0.0
    %6628 = vmatpush1.msra.mxu0 0.0
    %6629 = vmatprep.subr.mxu0 0.0
    %6630 = vmatpush1.msra.mxu0 0.0
    %6631 = vmatprep.subr.mxu0 0.0
    %6632 = vmatpush1.msra.mxu0 0.0
    %6633 = vmatprep.subr.mxu0 0.0
    %6634 = vmatpush1.msra.mxu0 0.0
    %6635 = vmatprep.subr.mxu0 0.0
    %6636 = vmatpush1.msra.mxu0 0.0
    %6637 = vmatprep.subr.mxu0 0.0
    %6638 = vmatpush1.msra.mxu0 0.0
    %6639 = vmatprep.subr.mxu0 0.0
    %6640 = vmatpush1.msra.mxu0 0.0
    %6641 = vmatprep.mubr.f32.mxu0 0.0
    %6642 = vmatmul.mubr.f32.gmra.mrb[0].mxu0 %v6572
    %v6643 = vpop.f32.mrb[0].mxu0
    %v6644 = vadd.f32 %v6569, %v6643
    %v6645 = vpop.f32.mrb[0].mxu0
    %6646 = vmatprep.mubr.f32.mxu0 0.0
    %6647 = vmatmul.mubr.f32.gmra.mrb[0].mxu0 %v6575
    %v6648 = vpop.f32.mrb[0].mxu0
    %v6649 = vadd.f32 %v6569, %v6648
    %v6650 = vpop.f32.mrb[0].mxu0
    %6651 = vdwg.mxu0
    %v6652 = vadd.f32 %v6440, %v6644
    %v6653 = vadd.f32 %v6441, %v6649
    %v6654 = vld [vmem:[%s4889 + $0x4] sm:$0x1]
    %v6655 = vld [vmem:[%s4889 + $0x5] sm:$0x1]
    %v6656 = vsel %vm171, %v6652, 0.0
    %6657 = vadd.xlane.f32.xlu0 %v6656
    %v6658 = vpop.xlane.xlu0 %6657
    %v6659 = vsel %vm171, %v6653, 0.0
    %6660 = vadd.xlane.f32.xlu0 %v6659
    %v6661 = vpop.xlane.xlu0 %6660
    %v6662 = vmul.f32 %v6658, %v178
    %v6663 = vmul.f32 %v6661, %v178
    %v6664 = vsub.f32 %v6652, %v6662
    %v6665 = vsub.f32 %v6653, %v6663
    %v6666 = vmul.f32 %v6664, %v6664
    %v6667 = vmul.f32 %v6665, %v6665
    %v6668 = vsel %vm171, %v6666, 0.0
    %6669 = vadd.xlane.f32.xlu0 %v6668
    %v6670 = vpop.xlane.xlu0 %6669
    %v6671 = vsel %vm171, %v6667, 0.0
    %6672 = vadd.xlane.f32.xlu0 %v6671
    %v6673 = vpop.xlane.xlu0 %6672
    %v6674 = vmul.f32 %v6670, %v178
    %v6675 = vmul.f32 %v6673, %v178
    %v6676 = vadd.f32 %v6674, 1e-05
    %v6677 = vadd.f32 %v6675, 1e-05
    %v6678 = vrsqrt.pop %v6676
    %v6679 = vrsqrt.pop %v6677
    %v6680 = vmul.f32 %v6664, %v6678
    %v6681 = vmul.f32 %v6665, %v6679
    %v6682 = vlaneseq
    %v6683 = vshrl.u32 %v6682, 7
    %v6684 = vsub.s32 0, %v6683
    %v6685 = vrot.slane %v6654, %v6684
    %v6686 = vmul.f32 %v6680, %v6685
    %v6687 = vmul.f32 %v6681, %v6685
    %v6688 = vlaneseq
    %v6689 = vshrl.u32 %v6688, 7
    %v6690 = vsub.s32 0, %v6689
    %v6691 = vrot.slane %v6655, %v6690
    %v6692 = vadd.f32 %v6686, %v6691
    %v6693 = vadd.f32 %v6687, %v6691
    %6694 = vst.msk [vmem:[#allocation16] sm:$0xff] %vm171, %v6692
    %6695 = vst.msk [vmem:[#allocation16 + $0x8] sm:$0xff] %vm171, %v6693
    // Predicated region
    $region106: #{bart_decoder_forward.1} parent=1 // pred_check
      _
    $region107: #{bart_decoder_forward.1} parent=1 // pred_check_branch
      %6697 = sbr.rel (0) target = $region109
    $region108: #{bart_decoder_forward.1} parent=1 // pred_region
      %s6699 = ssub.s32 256, 256
      %6700 = vsyncadd [#allocation4], %s6699
      %s6701 = sshll.u32 [#allocation16], 4
      %s6702 = int_to_ptr.vmem [resolvable:$true] %s6701
      %6707 = dma.vmem_to_hbm [thread:$0]  %s6702, 256, %s18, [#allocation4], 128, 128, 8
    $region109: #{bart_decoder_forward.1} parent=1 // pred_fallthru
      _
    // Predicated region
    $region110: #{bart_decoder_forward.1} parent=1 // pred_check
      _
    $region111: #{bart_decoder_forward.1} parent=1 // pred_check_branch
      %6709 = sbr.rel (0) target = $region113
    $region112: #{bart_decoder_forward.1} parent=1 // pred_region
      %6710 = dma.done [#allocation4], 256
    $region113: #{bart_decoder_forward.1} parent=1 // pred_fallthru
      _
    %6711 = vsyncpa [#allocation3], 1
    %6712 = vsyncpa [#allocation6], 1
    %6713 = vsyncpa [#allocation9], 1
    %6714 = vsyncpa [#allocation12], 1
    %6715 = vsyncpa [#allocation15], 1
    %6716 = vsyncpa [#allocation4], 1

</llo_original>
